<compile_context>
chip_gen: v5e
topology: v5e:2x2
jax: 0.10.0
libtpu: 0.0.40
codegen_flags: <defaults>
</compile_context>

<pallas_src>
import jax
import jax.numpy as jnp
import numpy as np
from jax.experimental import pallas as pl
from jax.experimental.pallas import tpu as pltpu


# Geometry implied by the module (d_out = 11  =>  116x116 single-channel input):
#   conv1: (116-8)/4+1 = 28,  conv2: (28-4)/2+1 = 13,  conv3: 13-3+1 = 11.
IN_HW = 116
PAD_HW = 120                      # zero-pad to a multiple of 8 for space-to-depth(8)
W_STORE = 15                      # stored row-stride inside an element (true widths 14/13/11)
ROW_STRIDE = 232                  # per-element row stride of every slab (multiple of 8)
A0_ROWS = 15 * 15                 # 225 valid s2d(8) rows per element (rows 225..231 zero)
FEAT_DIM = 11 * 11 * 64           # 7744 true conv features (PyTorch (c,h,w) order)
FEAT_PAD = ROW_STRIDE * 64        # 14848 padded per-element feature dim (kernel layout)
TAPS2 = (0, 1, W_STORE, W_STORE + 1)                                   # 2x2 stride-1 taps
TAPS3 = tuple(i * W_STORE + j for i in range(3) for j in range(3))     # 3x3 taps
TAIL = 64                         # slab rows per block never computed by conv3 (zero-filled)


# ----------------------------------------------------------------------------
# Kernel 1: fused conv stack (Bt batch elements per grid step, K-stacked taps)
# ----------------------------------------------------------------------------
def _make_conv_kernel(Bt):
    M = Bt * ROW_STRIDE
    M1, M2, M3 = M - 16, M - 32, M - 64   # multiples of 8; cover all valid rows of the
                                          # last element and never read unwritten rows.

    def kernel(x_ref, w1_ref, b1_ref, w2_ref, b2_ref, w3_ref, b3_ref, o_ref,
               a1_ref, a2_ref):
        f32, bf16 = jnp.float32, jnp.bfloat16

        # conv1 (8x8 /4)  ==  2x2 stride-1 conv on the s2d(8) slab: K = 4*64 = 256.
        x1 = jnp.concatenate([x_ref[off:off + M1, :] for off in TAPS2], axis=1)
        a1 = jnp.dot(x1, w1_ref[...], preferred_element_type=f32)
        a1_ref[...] = jnp.maximum(a1 + b1_ref[...], 0.0).astype(bf16)

        # conv2 (4x4 /2)  ==  2x2 stride-1 conv on the s2d(2) conv1 output: K = 4*128 = 512.
        x2 = jnp.concatenate([a1_ref[off:off + M2, :] for off in TAPS2], axis=1)
        a2 = jnp.dot(x2, w2_ref[...], preferred_element_type=f32)
        a2_ref[...] = jnp.maximum(a2 + b2_ref[...], 0.0).astype(bf16)

        # conv3 (3x3 /1): K = 9*64 = 576.
        x3 = jnp.concatenate([a2_ref[off:off + M3, :] for off in TAPS3], axis=1)
        a3 = jnp.dot(x3, w3_ref[...], preferred_element_type=f32)
        a3 = jnp.maximum(a3 + b3_ref[...], 0.0).astype(bf16)

        # Store the full slab (junk rows/cols are absorbed by zero rows in lin1's
        # weight); keep the uncomputed tail finite & deterministic.
        o_ref[0:M3, :] = a3
        o_ref[M3:M3 + TAIL, :] = jnp.zeros((TAIL, 64), bf16)

    return kernel, M1, M2


def conv_stack(x_slab, kp, Bt):
    rows = x_slab.shape[0]                # Bp * 232
    blk = Bt * ROW_STRIDE
    kernel, M1, M2 = _make_conv_kernel(Bt)
    return pl.pallas_call(
        kernel,
        out_shape=jax.ShapeDtypeStruct((rows, 64), jnp.bfloat16),
        grid_spec=pltpu.PrefetchScalarGridSpec(
            num_scalar_prefetch=0,
            grid=(rows // blk,),
            in_specs=[
                pl.BlockSpec((blk, 64), lambda i: (i, 0)),     # input slab
                pl.BlockSpec((256, 128), lambda i: (0, 0)),    # w1 (resident)
                pl.BlockSpec((1, 128), lambda i: (0, 0)),      # b1
                pl.BlockSpec((512, 64), lambda i: (0, 0)),     # w2
                pl.BlockSpec((1, 64), lambda i: (0, 0)),       # b2
                pl.BlockSpec((576, 64), lambda i: (0, 0)),     # w3
                pl.BlockSpec((1, 64), lambda i: (0, 0)),       # b3
            ],
            out_specs=pl.BlockSpec((blk, 64), lambda i: (i, 0)),
            scratch_shapes=[
                pltpu.VMEM((M1, 128), jnp.bfloat16),           # conv1 activations
                pltpu.VMEM((M2, 64), jnp.bfloat16),            # conv2 activations
            ],
        ),
        compiler_params=pltpu.CompilerParams(
            dimension_semantics=("parallel",),
            vmem_limit_bytes=32 * 1024 * 1024),
    )(x_slab, kp["w1"], kp["b1"], kp["w2"], kp["b2"], kp["w3"], kp["b3"])


# ----------------------------------------------------------------------------
# Kernel 2: linear head (lin1 K-tiled + ReLU + lin2 + clip + softmax)
# ----------------------------------------------------------------------------
def _head_kernel(x_ref, w1_ref, b1_ref, w2_ref, b2_ref, o_ref, h_acc):
    f32, bf16 = jnp.float32, jnp.bfloat16
    k = pl.program_id(1)

    @pl.when(k == 0)
    def _():
        h_acc[...] = jnp.zeros_like(h_acc)

    h_acc[...] += jnp.dot(x_ref[...], w1_ref[...], preferred_element_type=f32)

    @pl.when(k == pl.num_programs(1) - 1)
    def _():
        h = jnp.maximum(h_acc[...] + b1_ref[...], 0.0).astype(bf16)
        z = jnp.dot(h, w2_ref[...], preferred_element_type=f32) + b2_ref[...]
        z = jnp.clip(z, -10.0, 10.0)
        z = z - jnp.max(z, axis=-1, keepdims=True)
        e = jnp.exp(z)
        o_ref[...] = (e / jnp.sum(e, axis=-1, keepdims=True)).astype(o_ref.dtype)


def linear_head(x, kp):
    B, F = x.shape
    H = kp["l1w"].shape[1]                 # padded hidden dim (multiple of 128)
    A = kp["l2w"].shape[1]                 # true n_actions (NOT padded)
    tb = min(B, 128)
    # K-tile lin1 over F so the resident weight block stays <= ~4 MiB (v7x VMEM
    # guard).  F = 232*64 = 128*116, so each candidate keeps tk a multiple of 128.
    nk = 116
    for cand in (1, 2, 4, 29, 58, 116):
        if (F // cand) * H * 2 <= 4 * 1024 * 1024:
            nk = cand
            break
    tk = F // nk
    return pl.pallas_call(
        _head_kernel,
        out_shape=jax.ShapeDtypeStruct((B, A), jnp.float32),
        grid_spec=pltpu.PrefetchScalarGridSpec(
            num_scalar_prefetch=0,
            grid=(pl.cdiv(B, tb), nk),
            in_specs=[
                pl.BlockSpec((tb, tk), lambda i, k: (i, k)),   # features
                pl.BlockSpec((tk, H), lambda i, k: (k, 0)),    # lin1 weight
                pl.BlockSpec((1, H), lambda i, k: (0, 0)),     # lin1 bias
                pl.BlockSpec((H, A), lambda i, k: (0, 0)),     # lin2 weight
                pl.BlockSpec((1, A), lambda i, k: (0, 0)),     # lin2 bias
            ],
            out_specs=pl.BlockSpec((tb, A), lambda i, k: (i, 0)),
            scratch_shapes=[pltpu.VMEM((tb, H), jnp.float32)],
        ),
        compiler_params=pltpu.CompilerParams(
            dimension_semantics=("parallel", "arbitrary"),
            vmem_limit_bytes=32 * 1024 * 1024),
    )(x, kp["l1w"], kp["l1b"], kp["l2w"], kp["l2b"])


# ----------------------------------------------------------------------------
# Wrapper-side layout prep (cheap, no data blow-up)
# ----------------------------------------------------------------------------
def _space_to_depth8(state, Bp):
    """(B,1,116,116) f32 -> (Bp*232, 64) bf16 slab.  Row e*232 + a*15 + b holds
    the 64 pixels of 8x8 sub-block (a,b) of the zero-padded 120x120 image of
    element e (channel r*8+c); rows 225..231 of each element are zero."""
    B = state.shape[0]
    x = state[:, 0]
    x = jnp.pad(x, ((0, Bp - B), (0, PAD_HW - IN_HW), (0, PAD_HW - IN_HW)))
    x = x.reshape(Bp, 15, 8, 15, 8).transpose(0, 1, 3, 2, 4).reshape(Bp, A0_ROWS, 64)
    x = jnp.pad(x, ((0, 0), (0, ROW_STRIDE - A0_ROWS), (0, 0)))
    return x.reshape(Bp * ROW_STRIDE, 64).astype(jnp.bfloat16)


def _pick_bt(B):
    # Keep >= 2 grid steps when B >= 2 (both v7x TensorCores busy), cap Bt at 8.
    return max(1, min(8, B // 2)) if B >= 2 else 1


@jax.jit
def soft_pi_forward(kparams, state):
    """state: (B, 1, 116, 116) f32 -> action probabilities (B, n_actions) f32."""
    B = state.shape[0]
    Bt = _pick_bt(B)
    Bp = ((B + Bt - 1) // Bt) * Bt
    x = _space_to_depth8(state, Bp)             # (Bp*232, 64) bf16 slab
    feats = conv_stack(x, kparams, Bt)          # (Bp*232, 64) bf16 slab
    feats = feats.reshape(Bp, FEAT_PAD)[:B]     # bitcast view + cheap slice
    return linear_head(feats, kparams)          # (B, n_actions) f32


def prepare_kernel_params(p):
    """One-time host-side repack of PyTorch-layout params into kernel layouts."""
    w1 = np.asarray(p["conv1_w"], np.float32)   # (32, 1, 8, 8)
    b1 = np.asarray(p["conv1_b"], np.float32)
    w2 = np.asarray(p["conv2_w"], np.float32)   # (64, 32, 4, 4)
    b2 = np.asarray(p["conv2_b"], np.float32)
    w3 = np.asarray(p["conv3_w"], np.float32)   # (64, 64, 3, 3)
    b3 = np.asarray(p["conv3_b"], np.float32)
    l1w = np.asarray(p["lin1_w"], np.float32)   # (h_dim, 7744), cols in (c,h,w) order
    l1b = np.asarray(p["lin1_b"], np.float32)
    l2w = np.asarray(p["lin2_w"], np.float32)   # (n_actions, h_dim)
    l2b = np.asarray(p["lin2_b"], np.float32)
    h_dim = l1w.shape[0]
    n_act = l2w.shape[0]
    h_pad = max(128, ((h_dim + 127) // 128) * 128)

    # conv1: input is s2d(8), output produced in s2d(2) form (output parity folded
    # into channels).  W1p[a,b, r*8+c, (dy*2+dx)*32+oc] = w1[oc,0,8a+r-4dy,8b+c-4dx].
    W1p = np.zeros((2, 2, 8, 8, 2, 2, 32), np.float32)
    for a in range(2):
        for b in range(2):
            for r in range(8):
                for c in range(8):
                    for dy in range(2):
                        for dx in range(2):
                            i = 8 * a + r - 4 * dy
                            j = 8 * b + c - 4 * dx
                            if 0 <= i < 8 and 0 <= j < 8:
                                W1p[a, b, r, c, dy, dx, :] = w1[:, 0, i, j]
    W1p = W1p.reshape(256, 128)                 # K-stacked in TAPS2 order
    B1p = np.tile(b1, 4).reshape(1, 128)

    # conv2 on the s2d(2) conv1 output: W2p[tap=(a,b), (p*2+q)*32+c, oc] = w2[oc,c,2a+p,2b+q].
    W2p = np.zeros((2, 2, 2, 2, 32, 64), np.float32)
    for a in range(2):
        for b in range(2):
            for pp in range(2):
                for q in range(2):
                    W2p[a, b, pp, q, :, :] = w2[:, :, 2 * a + pp, 2 * b + q].T
    W2p = W2p.reshape(512, 64)                  # K-stacked in TAPS2 order

    # conv3: W3p[tap=i*3+j, c, oc] = w3[oc, c, i, j]  (K-stacked in TAPS3 order).
    W3p = np.transpose(w3, (2, 3, 1, 0)).reshape(576, 64)

    # lin1: kernel features per element are the (232, 64) conv slab flattened as
    # (row = h*15 + w, c).  Valid (h,w <= 10) rows map to PyTorch's (c,h,w) flat
    # index; every junk row/column gets a zero weight.  Hidden dim padded to 128.
    L1p = np.zeros((FEAT_PAD, h_pad), np.float32)
    lw = l1w.reshape(h_dim, 64, 11, 11).transpose(2, 3, 1, 0)   # (h, w, c, h_dim)
    blk = np.zeros((11, W_STORE, 64, h_dim), np.float32)
    blk[:, :11] = lw
    L1p[: 11 * W_STORE * 64, :h_dim] = blk.reshape(11 * W_STORE * 64, h_dim)
    L1b = np.zeros((1, h_pad), np.float32)
    L1b[0, :h_dim] = l1b
    L2p = np.zeros((h_pad, n_act), np.float32)
    L2p[:h_dim, :] = l2w.T
    L2b = l2b.reshape(1, n_act)

    bf16, f32 = jnp.bfloat16, jnp.float32
    return {
        "w1": jnp.asarray(W1p, bf16), "b1": jnp.asarray(B1p, f32),
        "w2": jnp.asarray(W2p, bf16), "b2": jnp.asarray(b2.reshape(1, 64), f32),
        "w3": jnp.asarray(W3p, bf16), "b3": jnp.asarray(b3.reshape(1, 64), f32),
        "l1w": jnp.asarray(L1p, bf16), "l1b": jnp.asarray(L1b, f32),
        "l2w": jnp.asarray(L2p, bf16), "l2b": jnp.asarray(L2b, f32),
    }


# ----------------------------------------------------------------------------
# PyTorch-layout init + pure-JAX reference (same bf16/f32 discipline)
# ----------------------------------------------------------------------------
def init_params(key, h_dim, n_actions):
    def uni(k, shape, fan_in):
        bound = 1.0 / float(np.sqrt(fan_in))
        return jax.random.uniform(k, shape, jnp.float32, -bound, bound)

    ks = jax.random.split(key, 10)
    return {
        "conv1_w": uni(ks[0], (32, 1, 8, 8), 64),
        "conv1_b": uni(ks[1], (32,), 64),
        "conv2_w": uni(ks[2], (64, 32, 4, 4), 512),
        "conv2_b": uni(ks[3], (64,), 512),
        "conv3_w": uni(ks[4], (64, 64, 3, 3), 576),
        "conv3_b": uni(ks[5], (64,), 576),
        "lin1_w": uni(ks[6], (h_dim, FEAT_DIM), FEAT_DIM),
        "lin1_b": uni(ks[7], (h_dim,), FEAT_DIM),
        "lin2_w": uni(ks[8], (n_actions, h_dim), h_dim),
        "lin2_b": uni(ks[9], (n_actions,), h_dim),
    }


@jax.jit
def reference_forward(params, state):
    bf16, f32 = jnp.bfloat16, jnp.float32

    def conv(x, w, b, stride):
        y = jax.lax.conv_general_dilated(
            x.astype(bf16), w.astype(bf16), (stride, stride), "VALID",
            dimension_numbers=("NCHW", "OIHW", "NCHW"),
            preferred_element_type=f32)
        return jnp.maximum(y + b[None, :, None, None], 0.0)

    x = conv(state, params["conv1_w"], params["conv1_b"], 4)
    x = conv(x, params["conv2_w"], params["conv2_b"], 2)
    x = conv(x, params["conv3_w"], params["conv3_b"], 1)
    x = x.reshape(x.shape[0], -1)                               # (B, 7744) (c,h,w)
    h = jnp.dot(x.astype(bf16), params["lin1_w"].T.astype(bf16),
                preferred_element_type=f32) + params["lin1_b"]
    h = jnp.maximum(h, 0.0)
    z = jnp.dot(h.astype(bf16), params["lin2_w"].T.astype(bf16),
                preferred_element_type=f32) + params["lin2_b"]
    z = jnp.clip(z, -10.0, 10.0)
    return jax.nn.softmax(z, axis=-1)


if __name__ == "__main__":
    B = 2
    h_dim, n_actions = 32, 8

    key = jax.random.PRNGKey(0)
    k_param, k_state = jax.random.split(key)
    params = init_params(k_param, h_dim, n_actions)
    kparams = prepare_kernel_params(params)
    state = jax.random.normal(k_state, (B, 1, IN_HW, IN_HW), dtype=jnp.float32)

    probs = jax.block_until_ready(soft_pi_forward(kparams, state))
    ref = jax.block_until_ready(reference_forward(params, state))

    assert probs.shape == (B, n_actions)
    assert bool(jnp.all(jnp.isfinite(probs)))
    assert bool(jnp.allclose(jnp.sum(probs, axis=-1), 1.0, atol=1e-5))
    assert bool(jnp.allclose(probs, ref, atol=5e-3, rtol=5e-2)), (probs, ref)

    # TODO(synk): sample() uses torch.distributions.Categorical sampling; only the
    # deterministic forward (action probabilities / get_prob) is implemented here.
    print("KERNEL_OK")
</pallas_src>

<mosaic_0001>
module attributes {stable_mosaic.version = 11 : i64} {
  func.func @kernel(%arg0: i32, %arg1: memref<232x64xbf16, #tpu.memory_space<vmem>>, %arg2: memref<256x128xbf16, #tpu.memory_space<vmem>>, %arg3: memref<1x128xf32, #tpu.memory_space<vmem>>, %arg4: memref<512x64xbf16, #tpu.memory_space<vmem>>, %arg5: memref<1x64xf32, #tpu.memory_space<vmem>>, %arg6: memref<576x64xbf16, #tpu.memory_space<vmem>>, %arg7: memref<1x64xf32, #tpu.memory_space<vmem>>, %arg8: memref<232x64xbf16, #tpu.memory_space<vmem>>, %arg9: memref<216x128xbf16, #tpu.memory_space<vmem>>, %arg10: memref<200x64xbf16, #tpu.memory_space<vmem>>) attributes {dimension_semantics = [#tpu.dimension_semantics<parallel>], iteration_bounds = array<i64: 2>, scalar_prefetch = 0 : i64, scratch_operands = 2 : i64, tpu.core_type = #tpu.core_type<tc>, window_params = [{transform_indices = @transform_0, window_bounds = array<i64: 232, 64>}, {pipeline_mode = #tpu.pipeline_mode<synchronous>, transform_indices = @transform_1, window_bounds = array<i64: 256, 128>}, {pipeline_mode = #tpu.pipeline_mode<synchronous>, transform_indices = @transform_2, window_bounds = array<i64: 1, 128>}, {pipeline_mode = #tpu.pipeline_mode<synchronous>, transform_indices = @transform_3, window_bounds = array<i64: 512, 64>}, {pipeline_mode = #tpu.pipeline_mode<synchronous>, transform_indices = @transform_4, window_bounds = array<i64: 1, 64>}, {pipeline_mode = #tpu.pipeline_mode<synchronous>, transform_indices = @transform_5, window_bounds = array<i64: 576, 64>}, {pipeline_mode = #tpu.pipeline_mode<synchronous>, transform_indices = @transform_6, window_bounds = array<i64: 1, 64>}, {transform_indices = @transform_7, window_bounds = array<i64: 232, 64>}]} {
    %c0 = arith.constant 0 : index
    %c0_0 = arith.constant 0 : index
    %0 = vector.load %arg1[%c0, %c0_0] : memref<232x64xbf16, #tpu.memory_space<vmem>>, vector<216x64xbf16>
    %c1 = arith.constant 1 : index
    %c0_1 = arith.constant 0 : index
    %1 = vector.load %arg1[%c1, %c0_1] : memref<232x64xbf16, #tpu.memory_space<vmem>>, vector<216x64xbf16>
    %c15 = arith.constant 15 : index
    %c0_2 = arith.constant 0 : index
    %2 = vector.load %arg1[%c15, %c0_2] : memref<232x64xbf16, #tpu.memory_space<vmem>>, vector<216x64xbf16>
    %c16 = arith.constant 16 : index
    %c0_3 = arith.constant 0 : index
    %3 = vector.load %arg1[%c16, %c0_3] : memref<232x64xbf16, #tpu.memory_space<vmem>>, vector<216x64xbf16>
    %4 = tpu.concatenate %0, %1, %2, %3 in 1 : vector<216x64xbf16>, vector<216x64xbf16>, vector<216x64xbf16>, vector<216x64xbf16> -> vector<216x256xbf16>
    %c0_4 = arith.constant 0 : index
    %c0_5 = arith.constant 0 : index
    %5 = vector.load %arg2[%c0_4, %c0_5] : memref<256x128xbf16, #tpu.memory_space<vmem>>, vector<256x128xbf16>
    %cst = arith.constant dense<0.000000e+00> : vector<216x128xf32>
    %6 = tpu.matmul %4, %5, %cst {dimension_numbers = #tpu.dot_dimension_numbers<[1], [0], [0], [1], [0, 0, 1, 1], [], []>} : vector<216x256xbf16>, vector<256x128xbf16>, vector<216x128xf32> -> vector<216x128xf32>
    %c0_6 = arith.constant 0 : index
    %c0_7 = arith.constant 0 : index
    %7 = vector.load %arg3[%c0_6, %c0_7] : memref<1x128xf32, #tpu.memory_space<vmem>>, vector<1x128xf32>
    %8 = vector.broadcast %7 : vector<1x128xf32> to vector<216x128xf32>
    %9 = arith.addf %6, %8 : vector<216x128xf32>
    %cst_8 = arith.constant 0.000000e+00 : f32
    %10 = vector.broadcast %cst_8 : f32 to vector<216x128xf32>
    %11 = arith.maximumf %9, %10 : vector<216x128xf32>
    %12 = arith.truncf %11 : vector<216x128xf32> to vector<216x128xbf16>
    %c0_9 = arith.constant 0 : index
    %c0_10 = arith.constant 0 : index
    %13 = vector.load %arg9[%c0_9, %c0_10] : memref<216x128xbf16, #tpu.memory_space<vmem>>, vector<216x128xbf16>
    tpu.vector_store %arg9[%c0_9, %c0_10], %12 {strides = array<i32>} : memref<216x128xbf16, #tpu.memory_space<vmem>>, vector<216x128xbf16>,
    %c0_11 = arith.constant 0 : index
    %c0_12 = arith.constant 0 : index
    %14 = vector.load %arg9[%c0_11, %c0_12] : memref<216x128xbf16, #tpu.memory_space<vmem>>, vector<200x128xbf16>
    %c1_13 = arith.constant 1 : index
    %c0_14 = arith.constant 0 : index
    %15 = vector.load %arg9[%c1_13, %c0_14] : memref<216x128xbf16, #tpu.memory_space<vmem>>, vector<200x128xbf16>
    %c15_15 = arith.constant 15 : index
    %c0_16 = arith.constant 0 : index
    %16 = vector.load %arg9[%c15_15, %c0_16] : memref<216x128xbf16, #tpu.memory_space<vmem>>, vector<200x128xbf16>
    %c16_17 = arith.constant 16 : index
    %c0_18 = arith.constant 0 : index
    %17 = vector.load %arg9[%c16_17, %c0_18] : memref<216x128xbf16, #tpu.memory_space<vmem>>, vector<200x128xbf16>
    %18 = tpu.concatenate %14, %15, %16, %17 in 1 : vector<200x128xbf16>, vector<200x128xbf16>, vector<200x128xbf16>, vector<200x128xbf16> -> vector<200x512xbf16>
    %c0_19 = arith.constant 0 : index
    %c0_20 = arith.constant 0 : index
    %19 = vector.load %arg4[%c0_19, %c0_20] : memref<512x64xbf16, #tpu.memory_space<vmem>>, vector<512x64xbf16>
    %cst_21 = arith.constant dense<0.000000e+00> : vector<200x64xf32>
    %20 = tpu.matmul %18, %19, %cst_21 {dimension_numbers = #tpu.dot_dimension_numbers<[1], [0], [0], [1], [0, 0, 1, 1], [], []>} : vector<200x512xbf16>, vector<512x64xbf16>, vector<200x64xf32> -> vector<200x64xf32>
    %c0_22 = arith.constant 0 : index
    %c0_23 = arith.constant 0 : index
    %21 = vector.load %arg5[%c0_22, %c0_23] : memref<1x64xf32, #tpu.memory_space<vmem>>, vector<1x64xf32>
    %22 = vector.broadcast %21 : vector<1x64xf32> to vector<200x64xf32>
    %23 = arith.addf %20, %22 : vector<200x64xf32>
    %cst_24 = arith.constant 0.000000e+00 : f32
    %24 = vector.broadcast %cst_24 : f32 to vector<200x64xf32>
    %25 = arith.maximumf %23, %24 : vector<200x64xf32>
    %26 = arith.truncf %25 : vector<200x64xf32> to vector<200x64xbf16>
    %c0_25 = arith.constant 0 : index
    %c0_26 = arith.constant 0 : index
    %27 = vector.load %arg10[%c0_25, %c0_26] : memref<200x64xbf16, #tpu.memory_space<vmem>>, vector<200x64xbf16>
    tpu.vector_store %arg10[%c0_25, %c0_26], %26 {strides = array<i32>} : memref<200x64xbf16, #tpu.memory_space<vmem>>, vector<200x64xbf16>,
    %c0_27 = arith.constant 0 : index
    %c0_28 = arith.constant 0 : index
    %28 = vector.load %arg10[%c0_27, %c0_28] : memref<200x64xbf16, #tpu.memory_space<vmem>>, vector<168x64xbf16>
    %c1_29 = arith.constant 1 : index
    %c0_30 = arith.constant 0 : index
    %29 = vector.load %arg10[%c1_29, %c0_30] : memref<200x64xbf16, #tpu.memory_space<vmem>>, vector<168x64xbf16>
    %c2 = arith.constant 2 : index
    %c0_31 = arith.constant 0 : index
    %30 = vector.load %arg10[%c2, %c0_31] : memref<200x64xbf16, #tpu.memory_space<vmem>>, vector<168x64xbf16>
    %c15_32 = arith.constant 15 : index
    %c0_33 = arith.constant 0 : index
    %31 = vector.load %arg10[%c15_32, %c0_33] : memref<200x64xbf16, #tpu.memory_space<vmem>>, vector<168x64xbf16>
    %c16_34 = arith.constant 16 : index
    %c0_35 = arith.constant 0 : index
    %32 = vector.load %arg10[%c16_34, %c0_35] : memref<200x64xbf16, #tpu.memory_space<vmem>>, vector<168x64xbf16>
    %c17 = arith.constant 17 : index
    %c0_36 = arith.constant 0 : index
    %33 = vector.load %arg10[%c17, %c0_36] : memref<200x64xbf16, #tpu.memory_space<vmem>>, vector<168x64xbf16>
    %c30 = arith.constant 30 : index
    %c0_37 = arith.constant 0 : index
    %34 = vector.load %arg10[%c30, %c0_37] : memref<200x64xbf16, #tpu.memory_space<vmem>>, vector<168x64xbf16>
    %c31 = arith.constant 31 : index
    %c0_38 = arith.constant 0 : index
    %35 = vector.load %arg10[%c31, %c0_38] : memref<200x64xbf16, #tpu.memory_space<vmem>>, vector<168x64xbf16>
    %c32 = arith.constant 32 : index
    %c0_39 = arith.constant 0 : index
    %36 = vector.load %arg10[%c32, %c0_39] : memref<200x64xbf16, #tpu.memory_space<vmem>>, vector<168x64xbf16>
    %37 = tpu.concatenate %28, %29, %30, %31, %32, %33, %34, %35, %36 in 1 : vector<168x64xbf16>, vector<168x64xbf16>, vector<168x64xbf16>, vector<168x64xbf16>, vector<168x64xbf16>, vector<168x64xbf16>, vector<168x64xbf16>, vector<168x64xbf16>, vector<168x64xbf16> -> vector<168x576xbf16>
    %c0_40 = arith.constant 0 : index
    %c0_41 = arith.constant 0 : index
    %38 = vector.load %arg6[%c0_40, %c0_41] : memref<576x64xbf16, #tpu.memory_space<vmem>>, vector<576x64xbf16>
    %cst_42 = arith.constant dense<0.000000e+00> : vector<168x64xf32>
    %39 = tpu.matmul %37, %38, %cst_42 {dimension_numbers = #tpu.dot_dimension_numbers<[1], [0], [0], [1], [0, 0, 1, 1], [], []>} : vector<168x576xbf16>, vector<576x64xbf16>, vector<168x64xf32> -> vector<168x64xf32>
    %c0_43 = arith.constant 0 : index
    %c0_44 = arith.constant 0 : index
    %40 = vector.load %arg7[%c0_43, %c0_44] : memref<1x64xf32, #tpu.memory_space<vmem>>, vector<1x64xf32>
    %41 = vector.broadcast %40 : vector<1x64xf32> to vector<168x64xf32>
    %42 = arith.addf %39, %41 : vector<168x64xf32>
    %cst_45 = arith.constant 0.000000e+00 : f32
    %43 = vector.broadcast %cst_45 : f32 to vector<168x64xf32>
    %44 = arith.maximumf %42, %43 : vector<168x64xf32>
    %45 = arith.truncf %44 : vector<168x64xf32> to vector<168x64xbf16>
    %c0_46 = arith.constant 0 : index
    %c0_47 = arith.constant 0 : index
    %46 = vector.load %arg8[%c0_46, %c0_47] : memref<232x64xbf16, #tpu.memory_space<vmem>>, vector<168x64xbf16>
    tpu.vector_store %arg8[%c0_46, %c0_47], %45 {strides = array<i32>} : memref<232x64xbf16, #tpu.memory_space<vmem>>, vector<168x64xbf16>,
    %cst_48 = arith.constant 0.000000e+00 : bf16
    %47 = vector.broadcast %cst_48 : bf16 to vector<64x64xbf16>
    %c168 = arith.constant 168 : index
    %c0_49 = arith.constant 0 : index
    %48 = vector.load %arg8[%c168, %c0_49] : memref<232x64xbf16, #tpu.memory_space<vmem>>, vector<64x64xbf16>
    tpu.vector_store %arg8[%c168, %c0_49], %47 {strides = array<i32>} : memref<232x64xbf16, #tpu.memory_space<vmem>>, vector<64x64xbf16>,
    return
  }
  func.func @transform_0(%arg0: i32) -> (i32, i32) {
    %c0_i32 = arith.constant 0 : i32
    %c0_i32_0 = arith.constant 0 : i32
    return %arg0, %c0_i32 : i32, i32
  }
  func.func @transform_1(%arg0: i32) -> (i32, i32) {
    %c0_i32 = arith.constant 0 : i32
    %c0_i32_0 = arith.constant 0 : i32
    %c0_i32_1 = arith.constant 0 : i32
    return %c0_i32, %c0_i32_0 : i32, i32
  }
  func.func @transform_2(%arg0: i32) -> (i32, i32) {
    %c0_i32 = arith.constant 0 : i32
    %c0_i32_0 = arith.constant 0 : i32
    %c0_i32_1 = arith.constant 0 : i32
    return %c0_i32, %c0_i32_0 : i32, i32
  }
  func.func @transform_3(%arg0: i32) -> (i32, i32) {
    %c0_i32 = arith.constant 0 : i32
    %c0_i32_0 = arith.constant 0 : i32
    %c0_i32_1 = arith.constant 0 : i32
    return %c0_i32, %c0_i32_0 : i32, i32
  }
  func.func @transform_4(%arg0: i32) -> (i32, i32) {
    %c0_i32 = arith.constant 0 : i32
    %c0_i32_0 = arith.constant 0 : i32
    %c0_i32_1 = arith.constant 0 : i32
    return %c0_i32, %c0_i32_0 : i32, i32
  }
  func.func @transform_5(%arg0: i32) -> (i32, i32) {
    %c0_i32 = arith.constant 0 : i32
    %c0_i32_0 = arith.constant 0 : i32
    %c0_i32_1 = arith.constant 0 : i32
    return %c0_i32, %c0_i32_0 : i32, i32
  }
  func.func @transform_6(%arg0: i32) -> (i32, i32) {
    %c0_i32 = arith.constant 0 : i32
    %c0_i32_0 = arith.constant 0 : i32
    %c0_i32_1 = arith.constant 0 : i32
    return %c0_i32, %c0_i32_0 : i32, i32
  }
  func.func @transform_7(%arg0: i32) -> (i32, i32) {
    %c0_i32 = arith.constant 0 : i32
    %c0_i32_0 = arith.constant 0 : i32
    return %arg0, %c0_i32 : i32, i32
  }
}

module attributes {stable_mosaic.version = 11 : i64} {
  func.func @_head_kernel(%arg0: i32, %arg1: i32, %arg2: memref<2x14848xbf16, #tpu.memory_space<vmem>>, %arg3: memref<14848x128xbf16, #tpu.memory_space<vmem>>, %arg4: memref<1x128xf32, #tpu.memory_space<vmem>>, %arg5: memref<128x8xbf16, #tpu.memory_space<vmem>>, %arg6: memref<1x8xf32, #tpu.memory_space<vmem>>, %arg7: memref<2x8xf32, #tpu.memory_space<vmem>>, %arg8: memref<2x128xf32, #tpu.memory_space<vmem>>) attributes {dimension_semantics = [#tpu.dimension_semantics<parallel>, #tpu.dimension_semantics<arbitrary>], iteration_bounds = array<i64: 1, 1>, scalar_prefetch = 0 : i64, scratch_operands = 1 : i64, tpu.core_type = #tpu.core_type<tc>, window_params = [{transform_indices = @transform_0, window_bounds = array<i64: 2, 14848>}, {transform_indices = @transform_1, window_bounds = array<i64: 14848, 128>}, {pipeline_mode = #tpu.pipeline_mode<synchronous>, transform_indices = @transform_2, window_bounds = array<i64: 1, 128>}, {pipeline_mode = #tpu.pipeline_mode<synchronous>, transform_indices = @transform_3, window_bounds = array<i64: 128, 8>}, {pipeline_mode = #tpu.pipeline_mode<synchronous>, transform_indices = @transform_4, window_bounds = array<i64: 1, 8>}, {transform_indices = @transform_5, window_bounds = array<i64: 2, 8>}]} {
    %c0_i32 = arith.constant 0 : i32
    %0 = arith.cmpi eq, %arg1, %c0_i32 : i32
    %1 = arith.extui %0 : i1 to i32
    %c0_i32_0 = arith.constant 0 : i32
    %2 = arith.cmpi ne, %1, %c0_i32_0 : i32
    scf.if %2 {
      %cst_10 = arith.constant 0.000000e+00 : f32
      %12 = vector.broadcast %cst_10 : f32 to vector<2x128xf32>
      %c0_11 = arith.constant 0 : index
      %c0_12 = arith.constant 0 : index
      %13 = vector.load %arg8[%c0_11, %c0_12] : memref<2x128xf32, #tpu.memory_space<vmem>>, vector<2x128xf32>
      tpu.vector_store %arg8[%c0_11, %c0_12], %12 {strides = array<i32>} : memref<2x128xf32, #tpu.memory_space<vmem>>, vector<2x128xf32>,
    } else {
    }
    %c0 = arith.constant 0 : index
    %c0_1 = arith.constant 0 : index
    %3 = vector.load %arg8[%c0, %c0_1] : memref<2x128xf32, #tpu.memory_space<vmem>>, vector<2x128xf32>
    %c0_2 = arith.constant 0 : index
    %c0_3 = arith.constant 0 : index
    %4 = vector.load %arg2[%c0_2, %c0_3] : memref<2x14848xbf16, #tpu.memory_space<vmem>>, vector<2x14848xbf16>
    %c0_4 = arith.constant 0 : index
    %c0_5 = arith.constant 0 : index
    %5 = vector.load %arg3[%c0_4, %c0_5] : memref<14848x128xbf16, #tpu.memory_space<vmem>>, vector<14848x128xbf16>
    %cst = arith.constant dense<0.000000e+00> : vector<2x128xf32>
    %6 = tpu.matmul %4, %5, %cst {dimension_numbers = #tpu.dot_dimension_numbers<[1], [0], [0], [1], [0, 0, 1, 1], [], []>} : vector<2x14848xbf16>, vector<14848x128xbf16>, vector<2x128xf32> -> vector<2x128xf32>
    %7 = arith.addf %3, %6 : vector<2x128xf32>
    %c0_6 = arith.constant 0 : index
    %c0_7 = arith.constant 0 : index
    %8 = vector.load %arg8[%c0_6, %c0_7] : memref<2x128xf32, #tpu.memory_space<vmem>>, vector<2x128xf32>
    tpu.vector_store %arg8[%c0_6, %c0_7], %7 {strides = array<i32>} : memref<2x128xf32, #tpu.memory_space<vmem>>, vector<2x128xf32>,
    %c0_i32_8 = arith.constant 0 : i32
    %9 = arith.cmpi eq, %arg1, %c0_i32_8 : i32
    %10 = arith.extui %9 : i1 to i32
    %c0_i32_9 = arith.constant 0 : i32
    %11 = arith.cmpi ne, %10, %c0_i32_9 : i32
    scf.if %11 {
      %c0_10 = arith.constant 0 : index
      %c0_11 = arith.constant 0 : index
      %12 = vector.load %arg8[%c0_10, %c0_11] : memref<2x128xf32, #tpu.memory_space<vmem>>, vector<2x128xf32>
      %c0_12 = arith.constant 0 : index
      %c0_13 = arith.constant 0 : index
      %13 = vector.load %arg4[%c0_12, %c0_13] : memref<1x128xf32, #tpu.memory_space<vmem>>, vector<1x128xf32>
      %14 = vector.broadcast %13 : vector<1x128xf32> to vector<2x128xf32>
      %15 = arith.addf %12, %14 : vector<2x128xf32>
      %cst_14 = arith.constant 0.000000e+00 : f32
      %16 = vector.broadcast %cst_14 : f32 to vector<2x128xf32>
      %17 = arith.maximumf %15, %16 : vector<2x128xf32>
      %18 = arith.truncf %17 : vector<2x128xf32> to vector<2x128xbf16>
      %c0_15 = arith.constant 0 : index
      %c0_16 = arith.constant 0 : index
      %19 = vector.load %arg5[%c0_15, %c0_16] : memref<128x8xbf16, #tpu.memory_space<vmem>>, vector<128x8xbf16>
      %cst_17 = arith.constant dense<0.000000e+00> : vector<2x8xf32>
      %20 = tpu.matmul %18, %19, %cst_17 {dimension_numbers = #tpu.dot_dimension_numbers<[1], [0], [0], [1], [0, 0, 1, 1], [], []>} : vector<2x128xbf16>, vector<128x8xbf16>, vector<2x8xf32> -> vector<2x8xf32>
      %c0_18 = arith.constant 0 : index
      %c0_19 = arith.constant 0 : index
      %21 = vector.load %arg6[%c0_18, %c0_19] : memref<1x8xf32, #tpu.memory_space<vmem>>, vector<1x8xf32>
      %22 = vector.broadcast %21 : vector<1x8xf32> to vector<2x8xf32>
      %23 = arith.addf %20, %22 : vector<2x8xf32>
      %cst_20 = arith.constant -1.000000e+01 : f32
      %cst_21 = arith.constant 1.000000e+01 : f32
      %24 = vector.broadcast %cst_20 : f32 to vector<2x8xf32>
      %25 = arith.maximumf %24, %23 : vector<2x8xf32>
      %26 = vector.broadcast %cst_21 : f32 to vector<2x8xf32>
      %27 = arith.minimumf %26, %25 : vector<2x8xf32>
      %cst_22 = arith.constant dense<0xFF800000> : vector<2xf32>
      %28 = vector.multi_reduction <maximumf>, %27, %cst_22 [1] : vector<2x8xf32> to vector<2xf32>
      %29 = vector.shape_cast %28 : vector<2xf32> to vector<2x1xf32>
      %30 = vector.broadcast %29 : vector<2x1xf32> to vector<2x8xf32>
      %31 = arith.subf %27, %30 : vector<2x8xf32>
      %32 = math.exp %31 : vector<2x8xf32>
      %cst_23 = arith.constant dense<0.000000e+00> : vector<2xf32>
      %33 = vector.multi_reduction <add>, %32, %cst_23 [1] : vector<2x8xf32> to vector<2xf32>
      %34 = vector.shape_cast %33 : vector<2xf32> to vector<2x1xf32>
      %35 = vector.broadcast %34 : vector<2x1xf32> to vector<2x8xf32>
      %36 = arith.divf %32, %35 : vector<2x8xf32>
      %c0_24 = arith.constant 0 : index
      %c0_25 = arith.constant 0 : index
      %37 = vector.load %arg7[%c0_24, %c0_25] : memref<2x8xf32, #tpu.memory_space<vmem>>, vector<2x8xf32>
      tpu.vector_store %arg7[%c0_24, %c0_25], %36 {strides = array<i32>} : memref<2x8xf32, #tpu.memory_space<vmem>>, vector<2x8xf32>,
    } else {
    }
    return
  }
  func.func @transform_0(%arg0: i32, %arg1: i32) -> (i32, i32) {
    %c0_i32 = arith.constant 0 : i32
    return %arg0, %arg1 : i32, i32
  }
  func.func @transform_1(%arg0: i32, %arg1: i32) -> (i32, i32) {
    %c0_i32 = arith.constant 0 : i32
    %c0_i32_0 = arith.constant 0 : i32
    return %arg1, %c0_i32 : i32, i32
  }
  func.func @transform_2(%arg0: i32, %arg1: i32) -> (i32, i32) {
    %c0_i32 = arith.constant 0 : i32
    %c0_i32_0 = arith.constant 0 : i32
    %c0_i32_1 = arith.constant 0 : i32
    return %c0_i32, %c0_i32_0 : i32, i32
  }
  func.func @transform_3(%arg0: i32, %arg1: i32) -> (i32, i32) {
    %c0_i32 = arith.constant 0 : i32
    %c0_i32_0 = arith.constant 0 : i32
    %c0_i32_1 = arith.constant 0 : i32
    return %c0_i32, %c0_i32_0 : i32, i32
  }
  func.func @transform_4(%arg0: i32, %arg1: i32) -> (i32, i32) {
    %c0_i32 = arith.constant 0 : i32
    %c0_i32_0 = arith.constant 0 : i32
    %c0_i32_1 = arith.constant 0 : i32
    return %c0_i32, %c0_i32_0 : i32, i32
  }
  func.func @transform_5(%arg0: i32, %arg1: i32) -> (i32, i32) {
    %c0_i32 = arith.constant 0 : i32
    %c0_i32_0 = arith.constant 0 : i32
    return %arg0, %c0_i32 : i32, i32
  }
}

</mosaic_0001>

<llo_original>
// kernel: soft_pi_forward.2
$region0: #{soft_pi_forward.2}
  #allocation0 [shape = 'u32[]', space=smem, size = 0x4, offset = 0x4, fixed_abs, tag = 'smem constant byte address 0x4 - core index']
  #allocation1 [shape = 'u32[72,128]{1,0:T(1,128)}', space=vmem, size = 0x9000, scoped, tag = 'internal scratch']
  #allocation2 [shape = 'bf16[216,128]{1,0:T(8,128)(2,1)}', space=vmem, size = 0xd800, scoped, tag = 'scratch operand']
  #allocation3 [shape = 'bf16[200,64]{1,0:T(8,128)(2,1)}', space=vmem, size = 0xc800, scoped, tag = 'scratch operand']
  %s0 = inlined_call_operand.vmem [shape: bf16[464,64], index: 0, kind: input, shape index: {}]
  %s1 = inlined_call_operand.vmem [shape: bf16[256,128], index: 1, kind: input, shape index: {}]
  %s2 = inlined_call_operand.vmem [shape: f32[1,128], index: 2, kind: input, shape index: {}]
  %s3 = inlined_call_operand.vmem [shape: bf16[512,64], index: 3, kind: input, shape index: {}]
  %s4 = inlined_call_operand.vmem [shape: f32[1,64], index: 4, kind: input, shape index: {}]
  %s5 = inlined_call_operand.vmem [shape: bf16[576,64], index: 5, kind: input, shape index: {}]
  %s6 = inlined_call_operand.vmem [shape: f32[1,64], index: 6, kind: input, shape index: {}]
  %s7 = inlined_call_operand.vmem [shape: bf16[464,64], index: 7, kind: output, shape index: {}]
  %s8 = sld [smem:[#allocation0]]
  $region61: #{soft_pi_forward.2} parent=0
    _
  %s10 = ssub.s32 1, %s8
  %s11 = scalar_select 0, %s10, %s8
  loop: start=0, step=1, limit=4
  $region2: #{soft_pi_forward.2} parent=0 // loop_pre_header
    _
  $region3: #{soft_pi_forward.2} parent=0 // loop_header
    %s13 = sphi 0, %s17
    %p14 = scmp.ge.s32.totalorder %s13, 4
    %s23 = sphi 0, %s25
    %s26 = sphi 0, %s23
    %s27 = sphi 0, %s26
    %s43 = sphi 0, %s27
    %s47 = sphi 0, %s47
    %s49 = sphi 0, %s47
    %s50 = sphi 0, %s49
    %s64 = sphi 0, %s50
    %s68 = sphi 0, %s68
    %s70 = sphi 0, %s68
    %s71 = sphi 0, %s70
    %s85 = sphi 0, %s71
    %s89 = sphi 0, %s89
    %s91 = sphi 0, %s89
    %s92 = sphi 0, %s91
    %s106 = sphi 0, %s92
    %s110 = sphi 0, %s110
    %s112 = sphi 0, %s110
    %s113 = sphi 0, %s112
    %s127 = sphi 0, %s113
    %s131 = sphi 0, %s131
    %s133 = sphi 0, %s131
    %s134 = sphi 0, %s133
    %s148 = sphi 0, %s134
    %s152 = sphi 0, %s152
    %s154 = sphi 0, %s152
    %s155 = sphi 0, %s154
    %s169 = sphi 0, %s155
    %s175 = sphi 0, %s177
    %s178 = sphi 0, %s175
    %s179 = sphi 0, %s178
    %s195 = sphi 0, %s179
  $region4: #{soft_pi_forward.2} parent=0 // loop_header_branch
    %16 = sbr.rel (%p14) target = $region8
  $region5: #{soft_pi_forward.2} parent=0 // loop_body
    %s18 = ssub.s32 %s13, 1
    %s19 = ssub.s32 %s13, 2
    %s20 = sadd.s32 %s13, 1
    %s21 = ssub.s32 %s13, %s20
    %p22 = scmp.eq.s32.totalorder %s21, 0
    %s24 = sadd.s32 %s23, 1
    %s25 = scalar_select %p22, %s23, %s24
    %p28 = pneg %p22
    %p29 = scmp.eq.s32.totalorder %s13, 1
    %p30 = por %p28, %p29
    %p31 = scmp.ne.s32.totalorder %s23, %s26
    %p32 = scmp.eq.s32.totalorder %s13, 0
    %p33 = por %p31, %p32
    %p34 = scmp.ne.s32.totalorder %s23, %s26
    %p35 = scmp.eq.s32.totalorder %s18, 1
    %p36 = por %p34, %p35
    %p37 = scmp.ne.s32.totalorder %s26, %s27
    %p38 = scmp.eq.s32.totalorder %s18, 0
    %p39 = por %p37, %p38
    %p40 = scmp.ne.s32.totalorder %s26, %s27
    %p41 = scmp.eq.s32.totalorder %s19, 1
    %p42 = por %p40, %p41
    %p44 = scmp.ne.s32.totalorder %s27, %s43
    %p45 = scmp.eq.s32.totalorder %s19, 0
    %p46 = por %p44, %p45
    %s48 = sadd.s32 %s47, 1
    %p51 = scmp.eq.s32.totalorder %s13, 1
    %p52 = scmp.ne.s32.totalorder %s47, %s49
    %p53 = scmp.eq.s32.totalorder %s13, 0
    %p54 = por %p52, %p53
    %p55 = scmp.ne.s32.totalorder %s47, %s49
    %p56 = scmp.eq.s32.totalorder %s18, 1
    %p57 = por %p55, %p56
    %p58 = scmp.ne.s32.totalorder %s49, %s50
    %p59 = scmp.eq.s32.totalorder %s18, 0
    %p60 = por %p58, %p59
    %p61 = scmp.ne.s32.totalorder %s49, %s50
    %p62 = scmp.eq.s32.totalorder %s19, 1
    %p63 = por %p61, %p62
    %p65 = scmp.ne.s32.totalorder %s50, %s64
    %p66 = scmp.eq.s32.totalorder %s19, 0
    %p67 = por %p65, %p66
    %s69 = sadd.s32 %s68, 1
    %p72 = scmp.eq.s32.totalorder %s13, 1
    %p73 = scmp.ne.s32.totalorder %s68, %s70
    %p74 = scmp.eq.s32.totalorder %s13, 0
    %p75 = por %p73, %p74
    %p76 = scmp.ne.s32.totalorder %s68, %s70
    %p77 = scmp.eq.s32.totalorder %s18, 1
    %p78 = por %p76, %p77
    %p79 = scmp.ne.s32.totalorder %s70, %s71
    %p80 = scmp.eq.s32.totalorder %s18, 0
    %p81 = por %p79, %p80
    %p82 = scmp.ne.s32.totalorder %s70, %s71
    %p83 = scmp.eq.s32.totalorder %s19, 1
    %p84 = por %p82, %p83
    %p86 = scmp.ne.s32.totalorder %s71, %s85
    %p87 = scmp.eq.s32.totalorder %s19, 0
    %p88 = por %p86, %p87
    %s90 = sadd.s32 %s89, 1
    %p93 = scmp.eq.s32.totalorder %s13, 1
    %p94 = scmp.ne.s32.totalorder %s89, %s91
    %p95 = scmp.eq.s32.totalorder %s13, 0
    %p96 = por %p94, %p95
    %p97 = scmp.ne.s32.totalorder %s89, %s91
    %p98 = scmp.eq.s32.totalorder %s18, 1
    %p99 = por %p97, %p98
    %p100 = scmp.ne.s32.totalorder %s91, %s92
    %p101 = scmp.eq.s32.totalorder %s18, 0
    %p102 = por %p100, %p101
    %p103 = scmp.ne.s32.totalorder %s91, %s92
    %p104 = scmp.eq.s32.totalorder %s19, 1
    %p105 = por %p103, %p104
    %p107 = scmp.ne.s32.totalorder %s92, %s106
    %p108 = scmp.eq.s32.totalorder %s19, 0
    %p109 = por %p107, %p108
    %s111 = sadd.s32 %s110, 1
    %p114 = scmp.eq.s32.totalorder %s13, 1
    %p115 = scmp.ne.s32.totalorder %s110, %s112
    %p116 = scmp.eq.s32.totalorder %s13, 0
    %p117 = por %p115, %p116
    %p118 = scmp.ne.s32.totalorder %s110, %s112
    %p119 = scmp.eq.s32.totalorder %s18, 1
    %p120 = por %p118, %p119
    %p121 = scmp.ne.s32.totalorder %s112, %s113
    %p122 = scmp.eq.s32.totalorder %s18, 0
    %p123 = por %p121, %p122
    %p124 = scmp.ne.s32.totalorder %s112, %s113
    %p125 = scmp.eq.s32.totalorder %s19, 1
    %p126 = por %p124, %p125
    %p128 = scmp.ne.s32.totalorder %s113, %s127
    %p129 = scmp.eq.s32.totalorder %s19, 0
    %p130 = por %p128, %p129
    %s132 = sadd.s32 %s131, 1
    %p135 = scmp.eq.s32.totalorder %s13, 1
    %p136 = scmp.ne.s32.totalorder %s131, %s133
    %p137 = scmp.eq.s32.totalorder %s13, 0
    %p138 = por %p136, %p137
    %p139 = scmp.ne.s32.totalorder %s131, %s133
    %p140 = scmp.eq.s32.totalorder %s18, 1
    %p141 = por %p139, %p140
    %p142 = scmp.ne.s32.totalorder %s133, %s134
    %p143 = scmp.eq.s32.totalorder %s18, 0
    %p144 = por %p142, %p143
    %p145 = scmp.ne.s32.totalorder %s133, %s134
    %p146 = scmp.eq.s32.totalorder %s19, 1
    %p147 = por %p145, %p146
    %p149 = scmp.ne.s32.totalorder %s134, %s148
    %p150 = scmp.eq.s32.totalorder %s19, 0
    %p151 = por %p149, %p150
    %s153 = sadd.s32 %s152, 1
    %p156 = scmp.eq.s32.totalorder %s13, 1
    %p157 = scmp.ne.s32.totalorder %s152, %s154
    %p158 = scmp.eq.s32.totalorder %s13, 0
    %p159 = por %p157, %p158
    %p160 = scmp.ne.s32.totalorder %s152, %s154
    %p161 = scmp.eq.s32.totalorder %s18, 1
    %p162 = por %p160, %p161
    %p163 = scmp.ne.s32.totalorder %s154, %s155
    %p164 = scmp.eq.s32.totalorder %s18, 0
    %p165 = por %p163, %p164
    %p166 = scmp.ne.s32.totalorder %s154, %s155
    %p167 = scmp.eq.s32.totalorder %s19, 1
    %p168 = por %p166, %p167
    %p170 = scmp.ne.s32.totalorder %s155, %s169
    %p171 = scmp.eq.s32.totalorder %s19, 0
    %p172 = por %p170, %p171
    %s173 = ssub.s32 %s13, %s20
    %p174 = scmp.eq.s32.totalorder %s173, 0
    %s176 = sadd.s32 %s175, 1
    %s177 = scalar_select %p174, %s175, %s176
    %p180 = pneg %p174
    %p181 = scmp.eq.s32.totalorder %s13, 1
    %p182 = por %p180, %p181
    %p183 = scmp.ne.s32.totalorder %s175, %s178
    %p184 = scmp.eq.s32.totalorder %s13, 0
    %p185 = por %p183, %p184
    %p186 = scmp.ne.s32.totalorder %s175, %s178
    %p187 = scmp.eq.s32.totalorder %s18, 1
    %p188 = por %p186, %p187
    %p189 = scmp.ne.s32.totalorder %s178, %s179
    %p190 = scmp.eq.s32.totalorder %s18, 0
    %p191 = por %p189, %p190
    %p192 = scmp.ne.s32.totalorder %s178, %s179
    %p193 = scmp.eq.s32.totalorder %s19, 1
    %p194 = por %p192, %p193
    %p196 = scmp.ne.s32.totalorder %s179, %s195
    %p197 = scmp.eq.s32.totalorder %s19, 0
    %p198 = por %p196, %p197
    %p199 = scmp.le.s32.totalorder 1, %s13
    %p200 = scmp.lt.s32.totalorder %s13, 3
    %p201 = pnand %p199, %p200
    %p202 = pneg %p201
    // Predicated region
    $region9: #{soft_pi_forward.2} parent=5 // pred_check
      _
    $region10: #{soft_pi_forward.2} parent=5 // pred_check_branch
      %204 = sbr.rel (%p201) target = $region12
    $region11: #{soft_pi_forward.2} parent=5 // pred_region
      %s205 = ssub.s32 %s13, 1
      // Predicated region
      $region13: #{soft_pi_forward.2} parent=11 // pred_check
        %p206 = pneg %p60
      $region14: #{soft_pi_forward.2} parent=11 // pred_check_branch
        %208 = sbr.rel (%p206) target = $region16
      $region15: #{soft_pi_forward.2} parent=11 // pred_region
        _
      $region16: #{soft_pi_forward.2} parent=11 // pred_fallthru
        _
      // Predicated region
      $region17: #{soft_pi_forward.2} parent=11 // pred_check
        %p209 = pneg %p81
      $region18: #{soft_pi_forward.2} parent=11 // pred_check_branch
        %211 = sbr.rel (%p209) target = $region20
      $region19: #{soft_pi_forward.2} parent=11 // pred_region
        _
      $region20: #{soft_pi_forward.2} parent=11 // pred_fallthru
        _
      // Predicated region
      $region21: #{soft_pi_forward.2} parent=11 // pred_check
        %p212 = pneg %p102
      $region22: #{soft_pi_forward.2} parent=11 // pred_check_branch
        %214 = sbr.rel (%p212) target = $region24
      $region23: #{soft_pi_forward.2} parent=11 // pred_region
        _
      $region24: #{soft_pi_forward.2} parent=11 // pred_fallthru
        _
      // Predicated region
      $region25: #{soft_pi_forward.2} parent=11 // pred_check
        %p215 = pneg %p123
      $region26: #{soft_pi_forward.2} parent=11 // pred_check_branch
        %217 = sbr.rel (%p215) target = $region28
      $region27: #{soft_pi_forward.2} parent=11 // pred_region
        _
      $region28: #{soft_pi_forward.2} parent=11 // pred_fallthru
        _
      // Predicated region
      $region29: #{soft_pi_forward.2} parent=11 // pred_check
        %p218 = pneg %p144
      $region30: #{soft_pi_forward.2} parent=11 // pred_check_branch
        %220 = sbr.rel (%p218) target = $region32
      $region31: #{soft_pi_forward.2} parent=11 // pred_region
        _
      $region32: #{soft_pi_forward.2} parent=11 // pred_fallthru
        _
      // Predicated region
      $region33: #{soft_pi_forward.2} parent=11 // pred_check
        %p221 = pneg %p165
      $region34: #{soft_pi_forward.2} parent=11 // pred_check_branch
        %223 = sbr.rel (%p221) target = $region36
      $region35: #{soft_pi_forward.2} parent=11 // pred_region
        _
      $region36: #{soft_pi_forward.2} parent=11 // pred_fallthru
        _
    $region12: #{soft_pi_forward.2} parent=5 // pred_fallthru
      _
    %p224 = scmp.lt.s32.totalorder %s13, 2
    // Predicated region
    $region37: #{soft_pi_forward.2} parent=5 // pred_check
      %p225 = pneg %p224
    $region38: #{soft_pi_forward.2} parent=5 // pred_check_branch
      %227 = sbr.rel (%p225) target = $region40
    $region39: #{soft_pi_forward.2} parent=5 // pred_region
      // Predicated region
      $region41: #{soft_pi_forward.2} parent=39 // pred_check
        %p228 = pneg %p33
      $region42: #{soft_pi_forward.2} parent=39 // pred_check_branch
        %230 = sbr.rel (%p228) target = $region44
      $region43: #{soft_pi_forward.2} parent=39 // pred_region
        %s231 = smul.u32 29, %s13
        %p232 = scmp.lt.s32.totalorder %s231, 57
        %s233 = scalar_select %p232, %s231, 57
        %s234 = smul.addr %s233, 4
        %s235 = scalar_lea.vmem %s0, %s234
        %s236 = smul.u32 29, %s13
      $region44: #{soft_pi_forward.2} parent=39 // pred_fallthru
        _
    $region40: #{soft_pi_forward.2} parent=5 // pred_fallthru
      _
    %p237 = scmp.le.s32.totalorder 1, %s13
    %p238 = scmp.lt.s32.totalorder %s13, 3
    %p239 = pnand %p237, %p238
    %p240 = pneg %p239
    // Predicated region
    $region45: #{soft_pi_forward.2} parent=5 // pred_check
      _
    $region46: #{soft_pi_forward.2} parent=5 // pred_check_branch
      %242 = sbr.rel (%p239) target = $region48
    $region47: #{soft_pi_forward.2} parent=5 // pred_region
      %s243 = ssub.s32 %s13, 1
      %s244 = smul.u32 29, %s18
      %p245 = scmp.lt.s32.totalorder %s244, 57
      %s246 = scalar_select %p245, %s244, 57
      %s247 = smul.addr %s246, 4
      %s248 = scalar_lea.vmem %s0, %s247
      %p249 = pneg %p39
      %p250 = pneg %p36
      %p251 = pneg %p60
      %p252 = pneg %p57
      %p253 = pneg %p81
      %p254 = pneg %p78
      %p255 = pneg %p102
      %p256 = pneg %p99
      %p257 = pneg %p123
      %p258 = pneg %p120
      %p259 = pneg %p144
      %p260 = pneg %p141
      %p261 = pneg %p165
      %p262 = pneg %p162
      %p263 = pneg %p191
      %p264 = pneg %p188
      %s265 = smul.u32 29, %s18
      %p266 = scmp.lt.s32.totalorder %s265, 57
      %s267 = scalar_select %p266, %s265, 57
      %s268 = smul.addr %s267, 4
      %s269 = scalar_lea.vmem %s7, %s268
      %s270 = smul.u32 29, %s18
      %p271 = scmp.lt.s32.totalorder %s270, 57
      %s272 = scalar_select %p271, %s270, 57
      %s273 = smul.addr %s272, 4
      %s274 = scalar_lea.vmem %s0, %s273
      %s275 = smul.u32 29, %s18
      %s276 = smul.u32 29, %s18
      %p277 = scmp.lt.s32.totalorder %s276, 57
      %s278 = scalar_select %p277, %s276, 57
      %s279 = smul.addr %s278, 4
      %s280 = scalar_lea.vmem %s7, %s279
      %s281 = smul.u32 29, %s18
      %v283 = vld [vmem:[%s274] sm:$0xf]
      %v284 = vld [vmem:[%s274 + $0x4] sm:$0xf]
      %v285 = vld [vmem:[%s274 + $0x8] sm:$0xf]
      %v286 = vld [vmem:[%s274 + $0xc] sm:$0xf]
      %v287 = vld [vmem:[%s274 + $0x10] sm:$0xf]
      %v288 = vld [vmem:[%s274 + $0x14] sm:$0xf]
      %v289 = vld [vmem:[%s274 + $0x18] sm:$0xf]
      %v290 = vld [vmem:[%s274 + $0x1c] sm:$0xf]
      %v291 = vld [vmem:[%s274 + $0x20] sm:$0xf]
      %v292 = vld [vmem:[%s274 + $0x24] sm:$0xf]
      %v293 = vld [vmem:[%s274 + $0x28] sm:$0xf]
      %v294 = vld [vmem:[%s274 + $0x2c] sm:$0xf]
      %v295 = vld [vmem:[%s274 + $0x30] sm:$0xf]
      %v296 = vld [vmem:[%s274 + $0x34] sm:$0xf]
      %v297 = vld [vmem:[%s274 + $0x38] sm:$0xf]
      %v298 = vld [vmem:[%s274 + $0x3c] sm:$0xf]
      %v299 = vld [vmem:[%s274 + $0x40] sm:$0xf]
      %v300 = vld [vmem:[%s274 + $0x44] sm:$0xf]
      %v301 = vld [vmem:[%s274 + $0x48] sm:$0xf]
      %v302 = vld [vmem:[%s274 + $0x4c] sm:$0xf]
      %v303 = vld [vmem:[%s274 + $0x50] sm:$0xf]
      %v304 = vld [vmem:[%s274 + $0x54] sm:$0xf]
      %v305 = vld [vmem:[%s274 + $0x58] sm:$0xf]
      %v306 = vld [vmem:[%s274 + $0x5c] sm:$0xf]
      %v307 = vld [vmem:[%s274 + $0x60] sm:$0xf]
      %v308 = vld [vmem:[%s274 + $0x64] sm:$0xf]
      %v309 = vld [vmem:[%s274 + $0x68] sm:$0xf]
      %v310 = vld [vmem:[%s274 + $0x6c] sm:$0x1]
      %v311 = vld [vmem:[%s274 + $0x4] sm:$0x8]
      %v312 = vld [vmem:[%s274 + $0x6c] sm:$0xf]
      %v313 = vld [vmem:[%s274 + $0x70] sm:$0xf]
      %v341 = vunpack.c.l.b16 %v283
      %v342 = vunpack.c.l.b16 %v284
      %v343 = vunpack.c.l.b16 %v285
      %v344 = vunpack.c.l.b16 %v286
      %v345 = vunpack.c.l.b16 %v287
      %v346 = vunpack.c.l.b16 %v288
      %v347 = vunpack.c.l.b16 %v289
      %v348 = vunpack.c.l.b16 %v290
      %v349 = vunpack.c.l.b16 %v291
      %v350 = vunpack.c.l.b16 %v292
      %v351 = vunpack.c.l.b16 %v293
      %v352 = vunpack.c.l.b16 %v294
      %v353 = vunpack.c.l.b16 %v295
      %v354 = vunpack.c.l.b16 %v296
      %v355 = vunpack.c.l.b16 %v297
      %v356 = vunpack.c.l.b16 %v298
      %v357 = vunpack.c.l.b16 %v299
      %v358 = vunpack.c.l.b16 %v300
      %v359 = vunpack.c.l.b16 %v301
      %v360 = vunpack.c.l.b16 %v302
      %v361 = vunpack.c.l.b16 %v303
      %v362 = vunpack.c.l.b16 %v304
      %v363 = vunpack.c.l.b16 %v305
      %v364 = vunpack.c.l.b16 %v306
      %v365 = vunpack.c.l.b16 %v307
      %v366 = vunpack.c.l.b16 %v308
      %v367 = vunpack.c.l.b16 %v309
      %v368 = vpack.c.b16 %v342, %v341
      %v369 = vpack.c.b16 %v344, %v343
      %v370 = vpack.c.b16 %v346, %v345
      %v371 = vpack.c.b16 %v348, %v347
      %v372 = vpack.c.b16 %v350, %v349
      %v373 = vpack.c.b16 %v352, %v351
      %v374 = vpack.c.b16 %v354, %v353
      %v375 = vpack.c.b16 %v356, %v355
      %v376 = vpack.c.b16 %v358, %v357
      %v377 = vpack.c.b16 %v360, %v359
      %v378 = vpack.c.b16 %v362, %v361
      %v379 = vpack.c.b16 %v364, %v363
      %v380 = vpack.c.b16 %v366, %v365
      %v381 = vpack.c.b16 %v367, %v367
      %v383 = vunpack.c.l.b16 %v310
      %v384 = vpack.c.b16 %v383, %v367
      %vm385 = vsmask.f32 7424
      %v387 = vshrl.u32 %v368, 16
      %v389 = vshll.u32 %v368, 16
      %v391 = vrot.slane %v389, 1
      %v392 = vor.u32 %v387, %v391
      %v394 = vshll.u32 %v369, 16
      %v396 = vrot.slane %v394, 1
      %v397 = vsel %vm385, %v392, %v396
      %v398 = vshrl.u32 %v369, 16
      %v400 = vor.u32 %v398, %v396
      %v402 = vshll.u32 %v370, 16
      %v404 = vrot.slane %v402, 1
      %v405 = vsel %vm385, %v400, %v404
      %v406 = vshrl.u32 %v370, 16
      %v408 = vor.u32 %v406, %v404
      %v410 = vshll.u32 %v371, 16
      %v412 = vrot.slane %v410, 1
      %v413 = vsel %vm385, %v408, %v412
      %v414 = vshrl.u32 %v371, 16
      %v416 = vor.u32 %v414, %v412
      %v418 = vshll.u32 %v372, 16
      %v420 = vrot.slane %v418, 1
      %v421 = vsel %vm385, %v416, %v420
      %v422 = vshrl.u32 %v372, 16
      %v424 = vor.u32 %v422, %v420
      %v426 = vshll.u32 %v373, 16
      %v428 = vrot.slane %v426, 1
      %v429 = vsel %vm385, %v424, %v428
      %v430 = vshrl.u32 %v373, 16
      %v432 = vor.u32 %v430, %v428
      %v434 = vshll.u32 %v374, 16
      %v436 = vrot.slane %v434, 1
      %v437 = vsel %vm385, %v432, %v436
      %v438 = vshrl.u32 %v374, 16
      %v440 = vor.u32 %v438, %v436
      %v442 = vshll.u32 %v375, 16
      %v444 = vrot.slane %v442, 1
      %v445 = vsel %vm385, %v440, %v444
      %v446 = vshrl.u32 %v375, 16
      %v448 = vor.u32 %v446, %v444
      %v450 = vshll.u32 %v376, 16
      %v452 = vrot.slane %v450, 1
      %v453 = vsel %vm385, %v448, %v452
      %v454 = vshrl.u32 %v376, 16
      %v456 = vor.u32 %v454, %v452
      %v458 = vshll.u32 %v377, 16
      %v460 = vrot.slane %v458, 1
      %v461 = vsel %vm385, %v456, %v460
      %v462 = vshrl.u32 %v377, 16
      %v464 = vor.u32 %v462, %v460
      %v466 = vshll.u32 %v378, 16
      %v468 = vrot.slane %v466, 1
      %v469 = vsel %vm385, %v464, %v468
      %v470 = vshrl.u32 %v378, 16
      %v472 = vor.u32 %v470, %v468
      %v474 = vshll.u32 %v379, 16
      %v476 = vrot.slane %v474, 1
      %v477 = vsel %vm385, %v472, %v476
      %v478 = vshrl.u32 %v379, 16
      %v480 = vor.u32 %v478, %v476
      %v482 = vshll.u32 %v380, 16
      %v484 = vrot.slane %v482, 1
      %v485 = vsel %vm385, %v480, %v484
      %v486 = vshrl.u32 %v380, 16
      %v488 = vor.u32 %v486, %v484
      %v490 = vshll.u32 %v384, 16
      %v492 = vrot.slane %v490, 1
      %v493 = vsel %vm385, %v488, %v492
      %v494 = vshrl.u32 %v384, 16
      %v496 = vor.u32 %v494, %v492
      %497 = vrot.lane.b32.xlu0 %v397, 64
      %v498 = vpop.permute.xlu0 %497
      %499 = vrot.lane.b32.xlu0 %v405, 64
      %v500 = vpop.permute.xlu0 %499
      %501 = vrot.lane.b32.xlu0 %v413, 64
      %v502 = vpop.permute.xlu0 %501
      %503 = vrot.lane.b32.xlu0 %v421, 64
      %v504 = vpop.permute.xlu0 %503
      %505 = vrot.lane.b32.xlu0 %v429, 64
      %v506 = vpop.permute.xlu0 %505
      %507 = vrot.lane.b32.xlu0 %v437, 64
      %v508 = vpop.permute.xlu0 %507
      %509 = vrot.lane.b32.xlu0 %v445, 64
      %v510 = vpop.permute.xlu0 %509
      %511 = vrot.lane.b32.xlu0 %v453, 64
      %v512 = vpop.permute.xlu0 %511
      %513 = vrot.lane.b32.xlu0 %v461, 64
      %v514 = vpop.permute.xlu0 %513
      %515 = vrot.lane.b32.xlu0 %v469, 64
      %v516 = vpop.permute.xlu0 %515
      %517 = vrot.lane.b32.xlu0 %v477, 64
      %v518 = vpop.permute.xlu0 %517
      %519 = vrot.lane.b32.xlu0 %v485, 64
      %v520 = vpop.permute.xlu0 %519
      %521 = vrot.lane.b32.xlu0 %v493, 64
      %v522 = vpop.permute.xlu0 %521
      %523 = vrot.lane.b32.xlu0 %v496, 64
      %v524 = vpop.permute.xlu0 %523
      %v528 = vunpack.c.l.b16 %v311
      %v529 = vunpack.c.l.b16 %v312
      %v530 = vunpack.c.l.b16 %v313
      %v531 = vpack.c.b16 %v343, %v528
      %v532 = vpack.c.b16 %v345, %v344
      %v533 = vpack.c.b16 %v347, %v346
      %v534 = vpack.c.b16 %v349, %v348
      %v535 = vpack.c.b16 %v351, %v350
      %v536 = vpack.c.b16 %v353, %v352
      %v537 = vpack.c.b16 %v355, %v354
      %v538 = vpack.c.b16 %v357, %v356
      %v539 = vpack.c.b16 %v359, %v358
      %v540 = vpack.c.b16 %v361, %v360
      %v541 = vpack.c.b16 %v363, %v362
      %v542 = vpack.c.b16 %v365, %v364
      %v543 = vpack.c.b16 %v367, %v366
      %v544 = vpack.c.b16 %v530, %v529
      %vm545 = vsmask.f32 4352
      %v547 = vshrl.u32 %v531, 16
      %v549 = vrot.slane %v547, 3
      %v550 = vshll.u32 %v531, 16
      %v552 = vrot.slane %v550, 4
      %v553 = vor.u32 %v549, %v552
      %v555 = vshrl.u32 %v532, 16
      %v557 = vrot.slane %v555, 3
      %v558 = vshll.u32 %v532, 16
      %v560 = vrot.slane %v558, 4
      %v561 = vor.u32 %v557, %v560
      %v562 = vsel %vm545, %v553, %v561
      %v564 = vshrl.u32 %v533, 16
      %v566 = vrot.slane %v564, 3
      %v567 = vshll.u32 %v533, 16
      %v569 = vrot.slane %v567, 4
      %v570 = vor.u32 %v566, %v569
      %v571 = vsel %vm545, %v561, %v570
      %v573 = vshrl.u32 %v534, 16
      %v575 = vrot.slane %v573, 3
      %v576 = vshll.u32 %v534, 16
      %v578 = vrot.slane %v576, 4
      %v579 = vor.u32 %v575, %v578
      %v580 = vsel %vm545, %v570, %v579
      %v582 = vshrl.u32 %v535, 16
      %v584 = vrot.slane %v582, 3
      %v585 = vshll.u32 %v535, 16
      %v587 = vrot.slane %v585, 4
      %v588 = vor.u32 %v584, %v587
      %v589 = vsel %vm545, %v579, %v588
      %v591 = vshrl.u32 %v536, 16
      %v593 = vrot.slane %v591, 3
      %v594 = vshll.u32 %v536, 16
      %v596 = vrot.slane %v594, 4
      %v597 = vor.u32 %v593, %v596
      %v598 = vsel %vm545, %v588, %v597
      %v600 = vshrl.u32 %v537, 16
      %v602 = vrot.slane %v600, 3
      %v603 = vshll.u32 %v537, 16
      %v605 = vrot.slane %v603, 4
      %v606 = vor.u32 %v602, %v605
      %v607 = vsel %vm545, %v597, %v606
      %v609 = vshrl.u32 %v538, 16
      %v611 = vrot.slane %v609, 3
      %v612 = vshll.u32 %v538, 16
      %v614 = vrot.slane %v612, 4
      %v615 = vor.u32 %v611, %v614
      %v616 = vsel %vm545, %v606, %v615
      %v618 = vshrl.u32 %v539, 16
      %v620 = vrot.slane %v618, 3
      %v621 = vshll.u32 %v539, 16
      %v623 = vrot.slane %v621, 4
      %v624 = vor.u32 %v620, %v623
      %v625 = vsel %vm545, %v615, %v624
      %v627 = vshrl.u32 %v540, 16
      %v629 = vrot.slane %v627, 3
      %v630 = vshll.u32 %v540, 16
      %v632 = vrot.slane %v630, 4
      %v633 = vor.u32 %v629, %v632
      %v634 = vsel %vm545, %v624, %v633
      %v636 = vshrl.u32 %v541, 16
      %v638 = vrot.slane %v636, 3
      %v639 = vshll.u32 %v541, 16
      %v641 = vrot.slane %v639, 4
      %v642 = vor.u32 %v638, %v641
      %v643 = vsel %vm545, %v633, %v642
      %v645 = vshrl.u32 %v542, 16
      %v647 = vrot.slane %v645, 3
      %v648 = vshll.u32 %v542, 16
      %v650 = vrot.slane %v648, 4
      %v651 = vor.u32 %v647, %v650
      %v652 = vsel %vm545, %v642, %v651
      %v654 = vshrl.u32 %v543, 16
      %v656 = vrot.slane %v654, 3
      %v657 = vshll.u32 %v543, 16
      %v659 = vrot.slane %v657, 4
      %v660 = vor.u32 %v656, %v659
      %v661 = vsel %vm545, %v651, %v660
      %v663 = vshrl.u32 %v544, 16
      %v665 = vrot.slane %v663, 3
      %v666 = vshll.u32 %v544, 16
      %v668 = vrot.slane %v666, 4
      %v669 = vor.u32 %v665, %v668
      %v670 = vsel %vm545, %v660, %v669
      %v671 = vpack.c.b16 %v529, %v367
      %v672 = vpack.c.b16 %v530, %v530
      %673 = vrot.lane.b32.xlu0 %v369, 64
      %v674 = vpop.permute.xlu0 %673
      %675 = vrot.lane.b32.xlu0 %v370, 64
      %v676 = vpop.permute.xlu0 %675
      %677 = vrot.lane.b32.xlu0 %v371, 64
      %v678 = vpop.permute.xlu0 %677
      %679 = vrot.lane.b32.xlu0 %v372, 64
      %v680 = vpop.permute.xlu0 %679
      %681 = vrot.lane.b32.xlu0 %v373, 64
      %v682 = vpop.permute.xlu0 %681
      %683 = vrot.lane.b32.xlu0 %v374, 64
      %v684 = vpop.permute.xlu0 %683
      %685 = vrot.lane.b32.xlu0 %v375, 64
      %v686 = vpop.permute.xlu0 %685
      %687 = vrot.lane.b32.xlu0 %v376, 64
      %v688 = vpop.permute.xlu0 %687
      %689 = vrot.lane.b32.xlu0 %v377, 64
      %v690 = vpop.permute.xlu0 %689
      %691 = vrot.lane.b32.xlu0 %v378, 64
      %v692 = vpop.permute.xlu0 %691
      %693 = vrot.lane.b32.xlu0 %v379, 64
      %v694 = vpop.permute.xlu0 %693
      %695 = vrot.lane.b32.xlu0 %v380, 64
      %v696 = vpop.permute.xlu0 %695
      %697 = vrot.lane.b32.xlu0 %v671, 64
      %v698 = vpop.permute.xlu0 %697
      %699 = vrot.lane.b32.xlu0 %v672, 64
      %v700 = vpop.permute.xlu0 %699
      %vm701 = vcmask 523264
      %v703 = vsel %vm701, %v368, %v498
      %v706 = vsel %vm701, %v369, %v500
      %v709 = vsel %vm701, %v370, %v502
      %v712 = vsel %vm701, %v371, %v504
      %v715 = vsel %vm701, %v372, %v506
      %v718 = vsel %vm701, %v373, %v508
      %v721 = vsel %vm701, %v374, %v510
      %v724 = vsel %vm701, %v375, %v512
      %v727 = vsel %vm701, %v376, %v514
      %v730 = vsel %vm701, %v377, %v516
      %v733 = vsel %vm701, %v378, %v518
      %v736 = vsel %vm701, %v379, %v520
      %v739 = vsel %vm701, %v380, %v522
      %v743 = vsel %vm701, %v381, %v524
      %v747 = vsel %vm701, %v562, %v674
      %v751 = vsel %vm701, %v571, %v676
      %v755 = vsel %vm701, %v580, %v678
      %v759 = vsel %vm701, %v589, %v680
      %v763 = vsel %vm701, %v598, %v682
      %v767 = vsel %vm701, %v607, %v684
      %v771 = vsel %vm701, %v616, %v686
      %v775 = vsel %vm701, %v625, %v688
      %v779 = vsel %vm701, %v634, %v690
      %v783 = vsel %vm701, %v643, %v692
      %v787 = vsel %vm701, %v652, %v694
      %v791 = vsel %vm701, %v661, %v696
      %v795 = vsel %vm701, %v670, %v698
      %v799 = vsel %vm701, %v669, %v700
      %v801 = vld [vmem:[%s1] sm:$0xf]
      %v802 = vld [vmem:[%s1 + $0x4] sm:$0xf]
      %v803 = vld [vmem:[%s1 + $0x8] sm:$0xf]
      %v804 = vld [vmem:[%s1 + $0xc] sm:$0xf]
      %v805 = vld [vmem:[%s1 + $0x10] sm:$0xf]
      %v806 = vld [vmem:[%s1 + $0x14] sm:$0xf]
      %v807 = vld [vmem:[%s1 + $0x18] sm:$0xf]
      %v808 = vld [vmem:[%s1 + $0x1c] sm:$0xf]
      %v809 = vld [vmem:[%s1 + $0x20] sm:$0xf]
      %v810 = vld [vmem:[%s1 + $0x24] sm:$0xf]
      %v811 = vld [vmem:[%s1 + $0x28] sm:$0xf]
      %v812 = vld [vmem:[%s1 + $0x2c] sm:$0xf]
      %v813 = vld [vmem:[%s1 + $0x30] sm:$0xf]
      %v814 = vld [vmem:[%s1 + $0x34] sm:$0xf]
      %v815 = vld [vmem:[%s1 + $0x38] sm:$0xf]
      %v816 = vld [vmem:[%s1 + $0x3c] sm:$0xf]
      %v817 = vld [vmem:[%s1 + $0x40] sm:$0xf]
      %v818 = vld [vmem:[%s1 + $0x44] sm:$0xf]
      %v819 = vld [vmem:[%s1 + $0x48] sm:$0xf]
      %v820 = vld [vmem:[%s1 + $0x4c] sm:$0xf]
      %v821 = vld [vmem:[%s1 + $0x50] sm:$0xf]
      %v822 = vld [vmem:[%s1 + $0x54] sm:$0xf]
      %v823 = vld [vmem:[%s1 + $0x58] sm:$0xf]
      %v824 = vld [vmem:[%s1 + $0x5c] sm:$0xf]
      %v825 = vld [vmem:[%s1 + $0x60] sm:$0xf]
      %v826 = vld [vmem:[%s1 + $0x64] sm:$0xf]
      %v827 = vld [vmem:[%s1 + $0x68] sm:$0xf]
      %v828 = vld [vmem:[%s1 + $0x6c] sm:$0xf]
      %v829 = vld [vmem:[%s1 + $0x70] sm:$0xf]
      %v830 = vld [vmem:[%s1 + $0x74] sm:$0xf]
      %v831 = vld [vmem:[%s1 + $0x78] sm:$0xf]
      %v832 = vld [vmem:[%s1 + $0x7c] sm:$0xf]
      %v833 = vld [vmem:[%s2] sm:$0x1]
      %v835 = vperm.slane %v833, 0
      %v869 = vunpack.c.l.b16 %v801
      %v870 = vunpack.c.l.b16 %v802
      %v871 = vunpack.c.l.b16 %v803
      %v872 = vunpack.c.l.b16 %v804
      %v873 = vunpack.c.l.b16 %v805
      %v874 = vunpack.c.l.b16 %v806
      %v875 = vunpack.c.l.b16 %v807
      %v876 = vunpack.c.l.b16 %v808
      %v877 = vunpack.c.l.b16 %v809
      %v878 = vunpack.c.l.b16 %v810
      %v879 = vunpack.c.l.b16 %v811
      %v880 = vunpack.c.l.b16 %v812
      %v881 = vunpack.c.l.b16 %v813
      %v882 = vunpack.c.l.b16 %v814
      %v883 = vunpack.c.l.b16 %v815
      %v884 = vunpack.c.l.b16 %v816
      %v885 = vunpack.c.l.b16 %v817
      %v886 = vunpack.c.l.b16 %v818
      %v887 = vunpack.c.l.b16 %v819
      %v888 = vunpack.c.l.b16 %v820
      %v889 = vunpack.c.l.b16 %v821
      %v890 = vunpack.c.l.b16 %v822
      %v891 = vunpack.c.l.b16 %v823
      %v892 = vunpack.c.l.b16 %v824
      %v893 = vunpack.c.l.b16 %v825
      %v894 = vunpack.c.l.b16 %v826
      %v895 = vunpack.c.l.b16 %v827
      %v896 = vunpack.c.l.b16 %v828
      %v897 = vunpack.c.l.b16 %v829
      %v898 = vunpack.c.l.b16 %v830
      %v899 = vunpack.c.l.b16 %v831
      %v900 = vunpack.c.l.b16 %v832
      %v901 = vpack.c.b16 %v870, %v869
      %v902 = vpack.c.b16 %v872, %v871
      %v903 = vpack.c.b16 %v874, %v873
      %v904 = vpack.c.b16 %v876, %v875
      %v905 = vpack.c.b16 %v878, %v877
      %v906 = vpack.c.b16 %v880, %v879
      %v907 = vpack.c.b16 %v882, %v881
      %v908 = vpack.c.b16 %v884, %v883
      %v909 = vpack.c.b16 %v886, %v885
      %v910 = vpack.c.b16 %v888, %v887
      %v911 = vpack.c.b16 %v890, %v889
      %v912 = vpack.c.b16 %v892, %v891
      %v913 = vpack.c.b16 %v894, %v893
      %v914 = vpack.c.b16 %v896, %v895
      %v915 = vpack.c.b16 %v898, %v897
      %v916 = vpack.c.b16 %v900, %v899
      %933 = vmatpush.bf16.msra.mxu0 %v908
      %934 = vmatpush.bf16.msra.mxu0 %v907
      %935 = vmatpush.bf16.msra.mxu0 %v906
      %936 = vmatpush.bf16.msra.mxu0 %v905
      %937 = vmatpush.bf16.msra.mxu0 %v904
      %938 = vmatpush.bf16.msra.mxu0 %v903
      %939 = vmatpush.bf16.msra.mxu0 %v902
      %940 = vmatpush.bf16.msra.mxu0 %v901
      %941 = vmatmul.bf16.gmra.mxu0 %v703
      %v942 = vpop.f32.mrf.mxu0
      %v943 = vadd.f32 %v835, %v942
      %v944 = vpop.f32.mrf.mxu0
      %v945 = vadd.f32 %v835, %v944
      %946 = vmatmul.bf16.gmra.mxu0 %v706
      %v947 = vpop.f32.mrf.mxu0
      %v948 = vadd.f32 %v835, %v947
      %v949 = vpop.f32.mrf.mxu0
      %v950 = vadd.f32 %v835, %v949
      %951 = vmatmul.bf16.gmra.mxu0 %v709
      %v952 = vpop.f32.mrf.mxu0
      %v953 = vadd.f32 %v835, %v952
      %v954 = vpop.f32.mrf.mxu0
      %v955 = vadd.f32 %v835, %v954
      %956 = vmatmul.bf16.gmra.mxu0 %v712
      %v957 = vpop.f32.mrf.mxu0
      %v958 = vadd.f32 %v835, %v957
      %v959 = vpop.f32.mrf.mxu0
      %v960 = vadd.f32 %v835, %v959
      %961 = vmatmul.bf16.gmra.mxu0 %v715
      %v962 = vpop.f32.mrf.mxu0
      %v963 = vadd.f32 %v835, %v962
      %v964 = vpop.f32.mrf.mxu0
      %v965 = vadd.f32 %v835, %v964
      %966 = vmatmul.bf16.gmra.mxu0 %v718
      %v967 = vpop.f32.mrf.mxu0
      %v968 = vadd.f32 %v835, %v967
      %v969 = vpop.f32.mrf.mxu0
      %v970 = vadd.f32 %v835, %v969
      %971 = vmatmul.bf16.gmra.mxu0 %v721
      %v972 = vpop.f32.mrf.mxu0
      %v973 = vadd.f32 %v835, %v972
      %v974 = vpop.f32.mrf.mxu0
      %v975 = vadd.f32 %v835, %v974
      %976 = vmatmul.bf16.gmra.mxu0 %v724
      %v977 = vpop.f32.mrf.mxu0
      %v978 = vadd.f32 %v835, %v977
      %v979 = vpop.f32.mrf.mxu0
      %v980 = vadd.f32 %v835, %v979
      %981 = vmatmul.bf16.gmra.mxu0 %v727
      %v982 = vpop.f32.mrf.mxu0
      %v983 = vadd.f32 %v835, %v982
      %v984 = vpop.f32.mrf.mxu0
      %v985 = vadd.f32 %v835, %v984
      %986 = vmatmul.bf16.gmra.mxu0 %v730
      %v987 = vpop.f32.mrf.mxu0
      %v988 = vadd.f32 %v835, %v987
      %v989 = vpop.f32.mrf.mxu0
      %v990 = vadd.f32 %v835, %v989
      %991 = vmatmul.bf16.gmra.mxu0 %v733
      %v992 = vpop.f32.mrf.mxu0
      %v993 = vadd.f32 %v835, %v992
      %v994 = vpop.f32.mrf.mxu0
      %v995 = vadd.f32 %v835, %v994
      %996 = vmatmul.bf16.gmra.mxu0 %v736
      %v997 = vpop.f32.mrf.mxu0
      %v998 = vadd.f32 %v835, %v997
      %v999 = vpop.f32.mrf.mxu0
      %v1000 = vadd.f32 %v835, %v999
      %1001 = vmatmul.bf16.gmra.mxu0 %v739
      %v1002 = vpop.f32.mrf.mxu0
      %v1003 = vadd.f32 %v835, %v1002
      %v1004 = vpop.f32.mrf.mxu0
      %v1005 = vadd.f32 %v835, %v1004
      %1006 = vmatmul.bf16.gmra.mxu0 %v743
      %v1007 = vpop.f32.mrf.mxu0
      %v1008 = vadd.f32 %v835, %v1007
      %v1009 = vpop.f32.mrf.mxu0
      %1010 = vdwg.mxu0
      %1011 = vmatpush.bf16.msra.mxu0 %v916
      %1012 = vmatpush.bf16.msra.mxu0 %v915
      %1013 = vmatpush.bf16.msra.mxu0 %v914
      %1014 = vmatpush.bf16.msra.mxu0 %v913
      %1015 = vmatpush.bf16.msra.mxu0 %v912
      %1016 = vmatpush.bf16.msra.mxu0 %v911
      %1017 = vmatpush.bf16.msra.mxu0 %v910
      %1018 = vmatpush.bf16.msra.mxu0 %v909
      %1019 = vmatmul.bf16.gmra.mxu0 %v747
      %v1020 = vpop.f32.mrf.mxu0
      %v1021 = vadd.f32 %v943, %v1020
      %v1022 = vpop.f32.mrf.mxu0
      %v1023 = vadd.f32 %v945, %v1022
      %1024 = vmatmul.bf16.gmra.mxu0 %v751
      %v1025 = vpop.f32.mrf.mxu0
      %v1026 = vadd.f32 %v948, %v1025
      %v1027 = vpop.f32.mrf.mxu0
      %v1028 = vadd.f32 %v950, %v1027
      %1029 = vmatmul.bf16.gmra.mxu0 %v755
      %v1030 = vpop.f32.mrf.mxu0
      %v1031 = vadd.f32 %v953, %v1030
      %v1032 = vpop.f32.mrf.mxu0
      %v1033 = vadd.f32 %v955, %v1032
      %1034 = vmatmul.bf16.gmra.mxu0 %v759
      %v1035 = vpop.f32.mrf.mxu0
      %v1036 = vadd.f32 %v958, %v1035
      %v1037 = vpop.f32.mrf.mxu0
      %v1038 = vadd.f32 %v960, %v1037
      %1039 = vmatmul.bf16.gmra.mxu0 %v763
      %v1040 = vpop.f32.mrf.mxu0
      %v1041 = vadd.f32 %v963, %v1040
      %v1042 = vpop.f32.mrf.mxu0
      %v1043 = vadd.f32 %v965, %v1042
      %1044 = vmatmul.bf16.gmra.mxu0 %v767
      %v1045 = vpop.f32.mrf.mxu0
      %v1046 = vadd.f32 %v968, %v1045
      %v1047 = vpop.f32.mrf.mxu0
      %v1048 = vadd.f32 %v970, %v1047
      %1049 = vmatmul.bf16.gmra.mxu0 %v771
      %v1050 = vpop.f32.mrf.mxu0
      %v1051 = vadd.f32 %v973, %v1050
      %v1052 = vpop.f32.mrf.mxu0
      %v1053 = vadd.f32 %v975, %v1052
      %1054 = vmatmul.bf16.gmra.mxu0 %v775
      %v1055 = vpop.f32.mrf.mxu0
      %v1056 = vadd.f32 %v978, %v1055
      %v1057 = vpop.f32.mrf.mxu0
      %v1058 = vadd.f32 %v980, %v1057
      %1059 = vmatmul.bf16.gmra.mxu0 %v779
      %v1060 = vpop.f32.mrf.mxu0
      %v1061 = vadd.f32 %v983, %v1060
      %v1062 = vpop.f32.mrf.mxu0
      %v1063 = vadd.f32 %v985, %v1062
      %1064 = vmatmul.bf16.gmra.mxu0 %v783
      %v1065 = vpop.f32.mrf.mxu0
      %v1066 = vadd.f32 %v988, %v1065
      %v1067 = vpop.f32.mrf.mxu0
      %v1068 = vadd.f32 %v990, %v1067
      %1069 = vmatmul.bf16.gmra.mxu0 %v787
      %v1070 = vpop.f32.mrf.mxu0
      %v1071 = vadd.f32 %v993, %v1070
      %v1072 = vpop.f32.mrf.mxu0
      %v1073 = vadd.f32 %v995, %v1072
      %1074 = vmatmul.bf16.gmra.mxu0 %v791
      %v1075 = vpop.f32.mrf.mxu0
      %v1076 = vadd.f32 %v998, %v1075
      %v1077 = vpop.f32.mrf.mxu0
      %v1078 = vadd.f32 %v1000, %v1077
      %1079 = vmatmul.bf16.gmra.mxu0 %v795
      %v1080 = vpop.f32.mrf.mxu0
      %v1081 = vadd.f32 %v1003, %v1080
      %v1082 = vpop.f32.mrf.mxu0
      %v1083 = vadd.f32 %v1005, %v1082
      %1084 = vmatmul.bf16.gmra.mxu0 %v799
      %v1085 = vpop.f32.mrf.mxu0
      %v1086 = vadd.f32 %v1008, %v1085
      %v1087 = vpop.f32.mrf.mxu0
      %1088 = vdwg.mxu0
      %v1089 = vmax.f32 %v1021, 0.0
      %v1090 = vmax.f32 %v1023, 0.0
      %v1091 = vmax.f32 %v1026, 0.0
      %v1092 = vmax.f32 %v1028, 0.0
      %v1093 = vmax.f32 %v1031, 0.0
      %v1094 = vmax.f32 %v1033, 0.0
      %v1095 = vmax.f32 %v1036, 0.0
      %v1096 = vmax.f32 %v1038, 0.0
      %v1097 = vmax.f32 %v1041, 0.0
      %v1098 = vmax.f32 %v1043, 0.0
      %v1099 = vmax.f32 %v1046, 0.0
      %v1100 = vmax.f32 %v1048, 0.0
      %v1101 = vmax.f32 %v1051, 0.0
      %v1102 = vmax.f32 %v1053, 0.0
      %v1103 = vmax.f32 %v1056, 0.0
      %v1104 = vmax.f32 %v1058, 0.0
      %v1105 = vmax.f32 %v1061, 0.0
      %v1106 = vmax.f32 %v1063, 0.0
      %v1107 = vmax.f32 %v1066, 0.0
      %v1108 = vmax.f32 %v1068, 0.0
      %v1109 = vmax.f32 %v1071, 0.0
      %v1110 = vmax.f32 %v1073, 0.0
      %v1111 = vmax.f32 %v1076, 0.0
      %v1112 = vmax.f32 %v1078, 0.0
      %v1113 = vmax.f32 %v1081, 0.0
      %v1114 = vmax.f32 %v1083, 0.0
      %v1115 = vmax.f32 %v1086, 0.0
      %v1116 = vpack.c.bf16 %v1089, %v1089
      %v1117 = vpack.c.bf16 %v1090, %v1090
      %v1118 = vpack.c.bf16 %v1091, %v1091
      %v1119 = vpack.c.bf16 %v1092, %v1092
      %v1120 = vpack.c.bf16 %v1093, %v1093
      %v1121 = vpack.c.bf16 %v1094, %v1094
      %v1122 = vpack.c.bf16 %v1095, %v1095
      %v1123 = vpack.c.bf16 %v1096, %v1096
      %v1124 = vpack.c.bf16 %v1097, %v1097
      %v1125 = vpack.c.bf16 %v1098, %v1098
      %v1126 = vpack.c.bf16 %v1099, %v1099
      %v1127 = vpack.c.bf16 %v1100, %v1100
      %v1128 = vpack.c.bf16 %v1101, %v1101
      %v1129 = vpack.c.bf16 %v1102, %v1102
      %v1130 = vpack.c.bf16 %v1103, %v1103
      %v1131 = vpack.c.bf16 %v1104, %v1104
      %v1132 = vpack.c.bf16 %v1105, %v1105
      %v1133 = vpack.c.bf16 %v1106, %v1106
      %v1134 = vpack.c.bf16 %v1107, %v1107
      %v1135 = vpack.c.bf16 %v1108, %v1108
      %v1136 = vpack.c.bf16 %v1109, %v1109
      %v1137 = vpack.c.bf16 %v1110, %v1110
      %v1138 = vpack.c.bf16 %v1111, %v1111
      %v1139 = vpack.c.bf16 %v1112, %v1112
      %v1140 = vpack.c.bf16 %v1113, %v1113
      %v1141 = vpack.c.bf16 %v1114, %v1114
      %v1142 = vpack.c.bf16 %v1115, %v1115
      %1143 = vst [vmem:[#allocation2] sm:$0xf] %v1116
      %1144 = vst [vmem:[#allocation2 + $0x4] sm:$0xf] %v1117
      %1145 = vst [vmem:[#allocation2 + $0x8] sm:$0xf] %v1118
      %1146 = vst [vmem:[#allocation2 + $0xc] sm:$0xf] %v1119
      %1147 = vst [vmem:[#allocation2 + $0x10] sm:$0xf] %v1120
      %1148 = vst [vmem:[#allocation2 + $0x14] sm:$0xf] %v1121
      %1149 = vst [vmem:[#allocation2 + $0x18] sm:$0xf] %v1122
      %1150 = vst [vmem:[#allocation2 + $0x1c] sm:$0xf] %v1123
      %1151 = vst [vmem:[#allocation2 + $0x20] sm:$0xf] %v1124
      %1152 = vst [vmem:[#allocation2 + $0x24] sm:$0xf] %v1125
      %1153 = vst [vmem:[#allocation2 + $0x28] sm:$0xf] %v1126
      %1154 = vst [vmem:[#allocation2 + $0x2c] sm:$0xf] %v1127
      %1155 = vst [vmem:[#allocation2 + $0x30] sm:$0xf] %v1128
      %1156 = vst [vmem:[#allocation2 + $0x34] sm:$0xf] %v1129
      %1157 = vst [vmem:[#allocation2 + $0x38] sm:$0xf] %v1130
      %1158 = vst [vmem:[#allocation2 + $0x3c] sm:$0xf] %v1131
      %1159 = vst [vmem:[#allocation2 + $0x40] sm:$0xf] %v1132
      %1160 = vst [vmem:[#allocation2 + $0x44] sm:$0xf] %v1133
      %1161 = vst [vmem:[#allocation2 + $0x48] sm:$0xf] %v1134
      %1162 = vst [vmem:[#allocation2 + $0x4c] sm:$0xf] %v1135
      %1163 = vst [vmem:[#allocation2 + $0x50] sm:$0xf] %v1136
      %1164 = vst [vmem:[#allocation2 + $0x54] sm:$0xf] %v1137
      %1165 = vst [vmem:[#allocation2 + $0x58] sm:$0xf] %v1138
      %1166 = vst [vmem:[#allocation2 + $0x5c] sm:$0xf] %v1139
      %1167 = vst [vmem:[#allocation2 + $0x60] sm:$0xf] %v1140
      %1168 = vst [vmem:[#allocation2 + $0x64] sm:$0xf] %v1141
      %1169 = vst [vmem:[#allocation2 + $0x68] sm:$0xf] %v1142
      %v1170 = vld [vmem:[#allocation2] sm:$0xf]
      %v1171 = vld [vmem:[#allocation2 + $0x4] sm:$0xf]
      %v1172 = vld [vmem:[#allocation2 + $0x8] sm:$0xf]
      %v1173 = vld [vmem:[#allocation2 + $0xc] sm:$0xf]
      %v1174 = vld [vmem:[#allocation2 + $0x10] sm:$0xf]
      %v1175 = vld [vmem:[#allocation2 + $0x14] sm:$0xf]
      %v1176 = vld [vmem:[#allocation2 + $0x18] sm:$0xf]
      %v1177 = vld [vmem:[#allocation2 + $0x1c] sm:$0xf]
      %v1178 = vld [vmem:[#allocation2 + $0x20] sm:$0xf]
      %v1179 = vld [vmem:[#allocation2 + $0x24] sm:$0xf]
      %v1180 = vld [vmem:[#allocation2 + $0x28] sm:$0xf]
      %v1181 = vld [vmem:[#allocation2 + $0x2c] sm:$0xf]
      %v1182 = vld [vmem:[#allocation2 + $0x30] sm:$0xf]
      %v1183 = vld [vmem:[#allocation2 + $0x34] sm:$0xf]
      %v1184 = vld [vmem:[#allocation2 + $0x38] sm:$0xf]
      %v1185 = vld [vmem:[#allocation2 + $0x3c] sm:$0xf]
      %v1186 = vld [vmem:[#allocation2 + $0x40] sm:$0xf]
      %v1187 = vld [vmem:[#allocation2 + $0x44] sm:$0xf]
      %v1188 = vld [vmem:[#allocation2 + $0x48] sm:$0xf]
      %v1189 = vld [vmem:[#allocation2 + $0x4c] sm:$0xf]
      %v1190 = vld [vmem:[#allocation2 + $0x50] sm:$0xf]
      %v1191 = vld [vmem:[#allocation2 + $0x54] sm:$0xf]
      %v1192 = vld [vmem:[#allocation2 + $0x58] sm:$0xf]
      %v1193 = vld [vmem:[#allocation2 + $0x5c] sm:$0xf]
      %v1194 = vld [vmem:[#allocation2 + $0x60] sm:$0xf]
      %v1195 = vld [vmem:[#allocation2 + $0x64] sm:$0x1]
      %v1196 = vld [vmem:[#allocation2 + $0x4] sm:$0x8]
      %v1197 = vld [vmem:[#allocation2 + $0x8] sm:$0xf]
      %v1198 = vld [vmem:[#allocation2 + $0xc] sm:$0xf]
      %v1199 = vld [vmem:[#allocation2 + $0x10] sm:$0xf]
      %v1200 = vld [vmem:[#allocation2 + $0x14] sm:$0xf]
      %v1201 = vld [vmem:[#allocation2 + $0x18] sm:$0xf]
      %v1202 = vld [vmem:[#allocation2 + $0x1c] sm:$0xf]
      %v1203 = vld [vmem:[#allocation2 + $0x20] sm:$0xf]
      %v1204 = vld [vmem:[#allocation2 + $0x24] sm:$0xf]
      %v1205 = vld [vmem:[#allocation2 + $0x28] sm:$0xf]
      %v1206 = vld [vmem:[#allocation2 + $0x2c] sm:$0xf]
      %v1207 = vld [vmem:[#allocation2 + $0x30] sm:$0xf]
      %v1208 = vld [vmem:[#allocation2 + $0x34] sm:$0xf]
      %v1209 = vld [vmem:[#allocation2 + $0x38] sm:$0xf]
      %v1210 = vld [vmem:[#allocation2 + $0x3c] sm:$0xf]
      %v1211 = vld [vmem:[#allocation2 + $0x40] sm:$0xf]
      %v1212 = vld [vmem:[#allocation2 + $0x44] sm:$0xf]
      %v1213 = vld [vmem:[#allocation2 + $0x48] sm:$0xf]
      %v1214 = vld [vmem:[#allocation2 + $0x4c] sm:$0xf]
      %v1215 = vld [vmem:[#allocation2 + $0x50] sm:$0xf]
      %v1216 = vld [vmem:[#allocation2 + $0x54] sm:$0xf]
      %v1217 = vld [vmem:[#allocation2 + $0x58] sm:$0xf]
      %v1218 = vld [vmem:[#allocation2 + $0x5c] sm:$0xf]
      %v1219 = vld [vmem:[#allocation2 + $0x60] sm:$0xf]
      %v1220 = vld [vmem:[#allocation2 + $0x64] sm:$0xf]
      %v1221 = vld [vmem:[#allocation2 + $0x68] sm:$0xf]
      %v1247 = vunpack.c.l.b16 %v1170
      %v1248 = vunpack.c.l.b16 %v1171
      %v1249 = vunpack.c.l.b16 %v1172
      %v1250 = vunpack.c.l.b16 %v1173
      %v1251 = vunpack.c.l.b16 %v1174
      %v1252 = vunpack.c.l.b16 %v1175
      %v1253 = vunpack.c.l.b16 %v1176
      %v1254 = vunpack.c.l.b16 %v1177
      %v1255 = vunpack.c.l.b16 %v1178
      %v1256 = vunpack.c.l.b16 %v1179
      %v1257 = vunpack.c.l.b16 %v1180
      %v1258 = vunpack.c.l.b16 %v1181
      %v1259 = vunpack.c.l.b16 %v1182
      %v1260 = vunpack.c.l.b16 %v1183
      %v1261 = vunpack.c.l.b16 %v1184
      %v1262 = vunpack.c.l.b16 %v1185
      %v1263 = vunpack.c.l.b16 %v1186
      %v1264 = vunpack.c.l.b16 %v1187
      %v1265 = vunpack.c.l.b16 %v1188
      %v1266 = vunpack.c.l.b16 %v1189
      %v1267 = vunpack.c.l.b16 %v1190
      %v1268 = vunpack.c.l.b16 %v1191
      %v1269 = vunpack.c.l.b16 %v1192
      %v1270 = vunpack.c.l.b16 %v1193
      %v1271 = vunpack.c.l.b16 %v1194
      %v1272 = vpack.c.b16 %v1248, %v1247
      %v1273 = vpack.c.b16 %v1250, %v1249
      %v1274 = vpack.c.b16 %v1252, %v1251
      %v1275 = vpack.c.b16 %v1254, %v1253
      %v1276 = vpack.c.b16 %v1256, %v1255
      %v1277 = vpack.c.b16 %v1258, %v1257
      %v1278 = vpack.c.b16 %v1260, %v1259
      %v1279 = vpack.c.b16 %v1262, %v1261
      %v1280 = vpack.c.b16 %v1264, %v1263
      %v1281 = vpack.c.b16 %v1266, %v1265
      %v1282 = vpack.c.b16 %v1268, %v1267
      %v1283 = vpack.c.b16 %v1270, %v1269
      %v1284 = vpack.c.b16 %v1271, %v1271
      %v1299 = vunpack.c.l.b16 %v1195
      %v1300 = vpack.c.b16 %v1299, %v1271
      %v1302 = vshrl.u32 %v1272, 16
      %v1304 = vshll.u32 %v1272, 16
      %v1306 = vrot.slane %v1304, 1
      %v1307 = vor.u32 %v1302, %v1306
      %v1309 = vshll.u32 %v1273, 16
      %v1311 = vrot.slane %v1309, 1
      %v1312 = vsel %vm385, %v1307, %v1311
      %v1313 = vshrl.u32 %v1273, 16
      %v1315 = vor.u32 %v1313, %v1311
      %v1317 = vshll.u32 %v1274, 16
      %v1319 = vrot.slane %v1317, 1
      %v1320 = vsel %vm385, %v1315, %v1319
      %v1321 = vshrl.u32 %v1274, 16
      %v1323 = vor.u32 %v1321, %v1319
      %v1325 = vshll.u32 %v1275, 16
      %v1327 = vrot.slane %v1325, 1
      %v1328 = vsel %vm385, %v1323, %v1327
      %v1329 = vshrl.u32 %v1275, 16
      %v1331 = vor.u32 %v1329, %v1327
      %v1333 = vshll.u32 %v1276, 16
      %v1335 = vrot.slane %v1333, 1
      %v1336 = vsel %vm385, %v1331, %v1335
      %v1337 = vshrl.u32 %v1276, 16
      %v1339 = vor.u32 %v1337, %v1335
      %v1341 = vshll.u32 %v1277, 16
      %v1343 = vrot.slane %v1341, 1
      %v1344 = vsel %vm385, %v1339, %v1343
      %v1345 = vshrl.u32 %v1277, 16
      %v1347 = vor.u32 %v1345, %v1343
      %v1349 = vshll.u32 %v1278, 16
      %v1351 = vrot.slane %v1349, 1
      %v1352 = vsel %vm385, %v1347, %v1351
      %v1353 = vshrl.u32 %v1278, 16
      %v1355 = vor.u32 %v1353, %v1351
      %v1357 = vshll.u32 %v1279, 16
      %v1359 = vrot.slane %v1357, 1
      %v1360 = vsel %vm385, %v1355, %v1359
      %v1361 = vshrl.u32 %v1279, 16
      %v1363 = vor.u32 %v1361, %v1359
      %v1365 = vshll.u32 %v1280, 16
      %v1367 = vrot.slane %v1365, 1
      %v1368 = vsel %vm385, %v1363, %v1367
      %v1369 = vshrl.u32 %v1280, 16
      %v1371 = vor.u32 %v1369, %v1367
      %v1373 = vshll.u32 %v1281, 16
      %v1375 = vrot.slane %v1373, 1
      %v1376 = vsel %vm385, %v1371, %v1375
      %v1377 = vshrl.u32 %v1281, 16
      %v1379 = vor.u32 %v1377, %v1375
      %v1381 = vshll.u32 %v1282, 16
      %v1383 = vrot.slane %v1381, 1
      %v1384 = vsel %vm385, %v1379, %v1383
      %v1385 = vshrl.u32 %v1282, 16
      %v1387 = vor.u32 %v1385, %v1383
      %v1389 = vshll.u32 %v1283, 16
      %v1391 = vrot.slane %v1389, 1
      %v1392 = vsel %vm385, %v1387, %v1391
      %v1393 = vshrl.u32 %v1283, 16
      %v1395 = vor.u32 %v1393, %v1391
      %v1397 = vshll.u32 %v1300, 16
      %v1399 = vrot.slane %v1397, 1
      %v1400 = vsel %vm385, %v1395, %v1399
      %v1401 = vshrl.u32 %v1300, 16
      %v1403 = vor.u32 %v1401, %v1399
      %v1443 = vunpack.c.l.b16 %v1196
      %v1444 = vunpack.c.l.b16 %v1197
      %v1445 = vunpack.c.l.b16 %v1198
      %v1446 = vunpack.c.l.b16 %v1199
      %v1447 = vunpack.c.l.b16 %v1200
      %v1448 = vunpack.c.l.b16 %v1201
      %v1449 = vunpack.c.l.b16 %v1202
      %v1450 = vunpack.c.l.b16 %v1203
      %v1451 = vunpack.c.l.b16 %v1204
      %v1452 = vunpack.c.l.b16 %v1205
      %v1453 = vunpack.c.l.b16 %v1206
      %v1454 = vunpack.c.l.b16 %v1207
      %v1455 = vunpack.c.l.b16 %v1208
      %v1456 = vunpack.c.l.b16 %v1209
      %v1457 = vunpack.c.l.b16 %v1210
      %v1458 = vunpack.c.l.b16 %v1211
      %v1459 = vunpack.c.l.b16 %v1212
      %v1460 = vunpack.c.l.b16 %v1213
      %v1461 = vunpack.c.l.b16 %v1214
      %v1462 = vunpack.c.l.b16 %v1215
      %v1463 = vunpack.c.l.b16 %v1216
      %v1464 = vunpack.c.l.b16 %v1217
      %v1465 = vunpack.c.l.b16 %v1218
      %v1466 = vunpack.c.l.b16 %v1219
      %v1467 = vunpack.c.l.b16 %v1220
      %v1468 = vunpack.c.l.b16 %v1221
      %v1469 = vpack.c.b16 %v1444, %v1443
      %v1470 = vpack.c.b16 %v1446, %v1445
      %v1471 = vpack.c.b16 %v1448, %v1447
      %v1472 = vpack.c.b16 %v1450, %v1449
      %v1473 = vpack.c.b16 %v1452, %v1451
      %v1474 = vpack.c.b16 %v1454, %v1453
      %v1475 = vpack.c.b16 %v1456, %v1455
      %v1476 = vpack.c.b16 %v1458, %v1457
      %v1477 = vpack.c.b16 %v1460, %v1459
      %v1478 = vpack.c.b16 %v1462, %v1461
      %v1479 = vpack.c.b16 %v1464, %v1463
      %v1480 = vpack.c.b16 %v1466, %v1465
      %v1481 = vpack.c.b16 %v1468, %v1467
      %v1483 = vshrl.u32 %v1469, 16
      %v1485 = vrot.slane %v1483, 3
      %v1486 = vshll.u32 %v1469, 16
      %v1488 = vrot.slane %v1486, 4
      %v1489 = vor.u32 %v1485, %v1488
      %v1491 = vshrl.u32 %v1470, 16
      %v1493 = vrot.slane %v1491, 3
      %v1494 = vshll.u32 %v1470, 16
      %v1496 = vrot.slane %v1494, 4
      %v1497 = vor.u32 %v1493, %v1496
      %v1498 = vsel %vm545, %v1489, %v1497
      %v1500 = vshrl.u32 %v1471, 16
      %v1502 = vrot.slane %v1500, 3
      %v1503 = vshll.u32 %v1471, 16
      %v1505 = vrot.slane %v1503, 4
      %v1506 = vor.u32 %v1502, %v1505
      %v1507 = vsel %vm545, %v1497, %v1506
      %v1509 = vshrl.u32 %v1472, 16
      %v1511 = vrot.slane %v1509, 3
      %v1512 = vshll.u32 %v1472, 16
      %v1514 = vrot.slane %v1512, 4
      %v1515 = vor.u32 %v1511, %v1514
      %v1516 = vsel %vm545, %v1506, %v1515
      %v1518 = vshrl.u32 %v1473, 16
      %v1520 = vrot.slane %v1518, 3
      %v1521 = vshll.u32 %v1473, 16
      %v1523 = vrot.slane %v1521, 4
      %v1524 = vor.u32 %v1520, %v1523
      %v1525 = vsel %vm545, %v1515, %v1524
      %v1527 = vshrl.u32 %v1474, 16
      %v1529 = vrot.slane %v1527, 3
      %v1530 = vshll.u32 %v1474, 16
      %v1532 = vrot.slane %v1530, 4
      %v1533 = vor.u32 %v1529, %v1532
      %v1534 = vsel %vm545, %v1524, %v1533
      %v1536 = vshrl.u32 %v1475, 16
      %v1538 = vrot.slane %v1536, 3
      %v1539 = vshll.u32 %v1475, 16
      %v1541 = vrot.slane %v1539, 4
      %v1542 = vor.u32 %v1538, %v1541
      %v1543 = vsel %vm545, %v1533, %v1542
      %v1545 = vshrl.u32 %v1476, 16
      %v1547 = vrot.slane %v1545, 3
      %v1548 = vshll.u32 %v1476, 16
      %v1550 = vrot.slane %v1548, 4
      %v1551 = vor.u32 %v1547, %v1550
      %v1552 = vsel %vm545, %v1542, %v1551
      %v1554 = vshrl.u32 %v1477, 16
      %v1556 = vrot.slane %v1554, 3
      %v1557 = vshll.u32 %v1477, 16
      %v1559 = vrot.slane %v1557, 4
      %v1560 = vor.u32 %v1556, %v1559
      %v1561 = vsel %vm545, %v1551, %v1560
      %v1563 = vshrl.u32 %v1478, 16
      %v1565 = vrot.slane %v1563, 3
      %v1566 = vshll.u32 %v1478, 16
      %v1568 = vrot.slane %v1566, 4
      %v1569 = vor.u32 %v1565, %v1568
      %v1570 = vsel %vm545, %v1560, %v1569
      %v1572 = vshrl.u32 %v1479, 16
      %v1574 = vrot.slane %v1572, 3
      %v1575 = vshll.u32 %v1479, 16
      %v1577 = vrot.slane %v1575, 4
      %v1578 = vor.u32 %v1574, %v1577
      %v1579 = vsel %vm545, %v1569, %v1578
      %v1581 = vshrl.u32 %v1480, 16
      %v1583 = vrot.slane %v1581, 3
      %v1584 = vshll.u32 %v1480, 16
      %v1586 = vrot.slane %v1584, 4
      %v1587 = vor.u32 %v1583, %v1586
      %v1588 = vsel %vm545, %v1578, %v1587
      %v1590 = vshrl.u32 %v1481, 16
      %v1592 = vrot.slane %v1590, 3
      %v1593 = vshll.u32 %v1481, 16
      %v1595 = vrot.slane %v1593, 4
      %v1596 = vor.u32 %v1592, %v1595
      %v1597 = vsel %vm545, %v1587, %v1596
      %v1611 = vpack.c.b16 %v1445, %v1444
      %v1612 = vpack.c.b16 %v1447, %v1446
      %v1613 = vpack.c.b16 %v1449, %v1448
      %v1614 = vpack.c.b16 %v1451, %v1450
      %v1615 = vpack.c.b16 %v1453, %v1452
      %v1616 = vpack.c.b16 %v1455, %v1454
      %v1617 = vpack.c.b16 %v1457, %v1456
      %v1618 = vpack.c.b16 %v1459, %v1458
      %v1619 = vpack.c.b16 %v1461, %v1460
      %v1620 = vpack.c.b16 %v1463, %v1462
      %v1621 = vpack.c.b16 %v1465, %v1464
      %v1622 = vpack.c.b16 %v1467, %v1466
      %v1623 = vpack.c.b16 %v1468, %v1468
      %v1637 = vld [vmem:[%s3] sm:$0xf]
      %v1638 = vld [vmem:[%s3 + $0x4] sm:$0xf]
      %v1639 = vld [vmem:[%s3 + $0x8] sm:$0xf]
      %v1640 = vld [vmem:[%s3 + $0xc] sm:$0xf]
      %v1641 = vld [vmem:[%s3 + $0x10] sm:$0xf]
      %v1642 = vld [vmem:[%s3 + $0x14] sm:$0xf]
      %v1643 = vld [vmem:[%s3 + $0x18] sm:$0xf]
      %v1644 = vld [vmem:[%s3 + $0x1c] sm:$0xf]
      %v1645 = vld [vmem:[%s3 + $0x20] sm:$0xf]
      %v1646 = vld [vmem:[%s3 + $0x24] sm:$0xf]
      %v1647 = vld [vmem:[%s3 + $0x28] sm:$0xf]
      %v1648 = vld [vmem:[%s3 + $0x2c] sm:$0xf]
      %v1649 = vld [vmem:[%s3 + $0x30] sm:$0xf]
      %v1650 = vld [vmem:[%s3 + $0x34] sm:$0xf]
      %v1651 = vld [vmem:[%s3 + $0x38] sm:$0xf]
      %v1652 = vld [vmem:[%s3 + $0x3c] sm:$0xf]
      %v1653 = vld [vmem:[%s3 + $0x40] sm:$0xf]
      %v1654 = vld [vmem:[%s3 + $0x44] sm:$0xf]
      %v1655 = vld [vmem:[%s3 + $0x48] sm:$0xf]
      %v1656 = vld [vmem:[%s3 + $0x4c] sm:$0xf]
      %v1657 = vld [vmem:[%s3 + $0x50] sm:$0xf]
      %v1658 = vld [vmem:[%s3 + $0x54] sm:$0xf]
      %v1659 = vld [vmem:[%s3 + $0x58] sm:$0xf]
      %v1660 = vld [vmem:[%s3 + $0x5c] sm:$0xf]
      %v1661 = vld [vmem:[%s3 + $0x60] sm:$0xf]
      %v1662 = vld [vmem:[%s3 + $0x64] sm:$0xf]
      %v1663 = vld [vmem:[%s3 + $0x68] sm:$0xf]
      %v1664 = vld [vmem:[%s3 + $0x6c] sm:$0xf]
      %v1665 = vld [vmem:[%s3 + $0x70] sm:$0xf]
      %v1666 = vld [vmem:[%s3 + $0x74] sm:$0xf]
      %v1667 = vld [vmem:[%s3 + $0x78] sm:$0xf]
      %v1668 = vld [vmem:[%s3 + $0x7c] sm:$0xf]
      %v1669 = vld [vmem:[%s3 + $0x80] sm:$0xf]
      %v1670 = vld [vmem:[%s3 + $0x84] sm:$0xf]
      %v1671 = vld [vmem:[%s3 + $0x88] sm:$0xf]
      %v1672 = vld [vmem:[%s3 + $0x8c] sm:$0xf]
      %v1673 = vld [vmem:[%s3 + $0x90] sm:$0xf]
      %v1674 = vld [vmem:[%s3 + $0x94] sm:$0xf]
      %v1675 = vld [vmem:[%s3 + $0x98] sm:$0xf]
      %v1676 = vld [vmem:[%s3 + $0x9c] sm:$0xf]
      %v1677 = vld [vmem:[%s3 + $0xa0] sm:$0xf]
      %v1678 = vld [vmem:[%s3 + $0xa4] sm:$0xf]
      %v1679 = vld [vmem:[%s3 + $0xa8] sm:$0xf]
      %v1680 = vld [vmem:[%s3 + $0xac] sm:$0xf]
      %v1681 = vld [vmem:[%s3 + $0xb0] sm:$0xf]
      %v1682 = vld [vmem:[%s3 + $0xb4] sm:$0xf]
      %v1683 = vld [vmem:[%s3 + $0xb8] sm:$0xf]
      %v1684 = vld [vmem:[%s3 + $0xbc] sm:$0xf]
      %v1685 = vld [vmem:[%s3 + $0xc0] sm:$0xf]
      %v1686 = vld [vmem:[%s3 + $0xc4] sm:$0xf]
      %v1687 = vld [vmem:[%s3 + $0xc8] sm:$0xf]
      %v1688 = vld [vmem:[%s3 + $0xcc] sm:$0xf]
      %v1689 = vld [vmem:[%s3 + $0xd0] sm:$0xf]
      %v1690 = vld [vmem:[%s3 + $0xd4] sm:$0xf]
      %v1691 = vld [vmem:[%s3 + $0xd8] sm:$0xf]
      %v1692 = vld [vmem:[%s3 + $0xdc] sm:$0xf]
      %v1693 = vld [vmem:[%s3 + $0xe0] sm:$0xf]
      %v1694 = vld [vmem:[%s3 + $0xe4] sm:$0xf]
      %v1695 = vld [vmem:[%s3 + $0xe8] sm:$0xf]
      %v1696 = vld [vmem:[%s3 + $0xec] sm:$0xf]
      %v1697 = vld [vmem:[%s3 + $0xf0] sm:$0xf]
      %v1698 = vld [vmem:[%s3 + $0xf4] sm:$0xf]
      %v1699 = vld [vmem:[%s3 + $0xf8] sm:$0xf]
      %v1700 = vld [vmem:[%s3 + $0xfc] sm:$0xf]
      %v1701 = vld [vmem:[%s4] sm:$0x1]
      %v1703 = vperm.slane %v1701, 0
      %v1769 = vunpack.c.l.b16 %v1637
      %v1770 = vunpack.c.l.b16 %v1638
      %v1771 = vunpack.c.l.b16 %v1639
      %v1772 = vunpack.c.l.b16 %v1640
      %v1773 = vunpack.c.l.b16 %v1641
      %v1774 = vunpack.c.l.b16 %v1642
      %v1775 = vunpack.c.l.b16 %v1643
      %v1776 = vunpack.c.l.b16 %v1644
      %v1777 = vunpack.c.l.b16 %v1645
      %v1778 = vunpack.c.l.b16 %v1646
      %v1779 = vunpack.c.l.b16 %v1647
      %v1780 = vunpack.c.l.b16 %v1648
      %v1781 = vunpack.c.l.b16 %v1649
      %v1782 = vunpack.c.l.b16 %v1650
      %v1783 = vunpack.c.l.b16 %v1651
      %v1784 = vunpack.c.l.b16 %v1652
      %v1785 = vunpack.c.l.b16 %v1653
      %v1786 = vunpack.c.l.b16 %v1654
      %v1787 = vunpack.c.l.b16 %v1655
      %v1788 = vunpack.c.l.b16 %v1656
      %v1789 = vunpack.c.l.b16 %v1657
      %v1790 = vunpack.c.l.b16 %v1658
      %v1791 = vunpack.c.l.b16 %v1659
      %v1792 = vunpack.c.l.b16 %v1660
      %v1793 = vunpack.c.l.b16 %v1661
      %v1794 = vunpack.c.l.b16 %v1662
      %v1795 = vunpack.c.l.b16 %v1663
      %v1796 = vunpack.c.l.b16 %v1664
      %v1797 = vunpack.c.l.b16 %v1665
      %v1798 = vunpack.c.l.b16 %v1666
      %v1799 = vunpack.c.l.b16 %v1667
      %v1800 = vunpack.c.l.b16 %v1668
      %v1801 = vunpack.c.l.b16 %v1669
      %v1802 = vunpack.c.l.b16 %v1670
      %v1803 = vunpack.c.l.b16 %v1671
      %v1804 = vunpack.c.l.b16 %v1672
      %v1805 = vunpack.c.l.b16 %v1673
      %v1806 = vunpack.c.l.b16 %v1674
      %v1807 = vunpack.c.l.b16 %v1675
      %v1808 = vunpack.c.l.b16 %v1676
      %v1809 = vunpack.c.l.b16 %v1677
      %v1810 = vunpack.c.l.b16 %v1678
      %v1811 = vunpack.c.l.b16 %v1679
      %v1812 = vunpack.c.l.b16 %v1680
      %v1813 = vunpack.c.l.b16 %v1681
      %v1814 = vunpack.c.l.b16 %v1682
      %v1815 = vunpack.c.l.b16 %v1683
      %v1816 = vunpack.c.l.b16 %v1684
      %v1817 = vunpack.c.l.b16 %v1685
      %v1818 = vunpack.c.l.b16 %v1686
      %v1819 = vunpack.c.l.b16 %v1687
      %v1820 = vunpack.c.l.b16 %v1688
      %v1821 = vunpack.c.l.b16 %v1689
      %v1822 = vunpack.c.l.b16 %v1690
      %v1823 = vunpack.c.l.b16 %v1691
      %v1824 = vunpack.c.l.b16 %v1692
      %v1825 = vunpack.c.l.b16 %v1693
      %v1826 = vunpack.c.l.b16 %v1694
      %v1827 = vunpack.c.l.b16 %v1695
      %v1828 = vunpack.c.l.b16 %v1696
      %v1829 = vunpack.c.l.b16 %v1697
      %v1830 = vunpack.c.l.b16 %v1698
      %v1831 = vunpack.c.l.b16 %v1699
      %v1832 = vunpack.c.l.b16 %v1700
      %v1833 = vpack.c.b16 %v1770, %v1769
      %v1834 = vpack.c.b16 %v1772, %v1771
      %v1835 = vpack.c.b16 %v1774, %v1773
      %v1836 = vpack.c.b16 %v1776, %v1775
      %v1837 = vpack.c.b16 %v1778, %v1777
      %v1838 = vpack.c.b16 %v1780, %v1779
      %v1839 = vpack.c.b16 %v1782, %v1781
      %v1840 = vpack.c.b16 %v1784, %v1783
      %v1841 = vpack.c.b16 %v1786, %v1785
      %v1842 = vpack.c.b16 %v1788, %v1787
      %v1843 = vpack.c.b16 %v1790, %v1789
      %v1844 = vpack.c.b16 %v1792, %v1791
      %v1845 = vpack.c.b16 %v1794, %v1793
      %v1846 = vpack.c.b16 %v1796, %v1795
      %v1847 = vpack.c.b16 %v1798, %v1797
      %v1848 = vpack.c.b16 %v1800, %v1799
      %v1849 = vpack.c.b16 %v1802, %v1801
      %v1850 = vpack.c.b16 %v1804, %v1803
      %v1851 = vpack.c.b16 %v1806, %v1805
      %v1852 = vpack.c.b16 %v1808, %v1807
      %v1853 = vpack.c.b16 %v1810, %v1809
      %v1854 = vpack.c.b16 %v1812, %v1811
      %v1855 = vpack.c.b16 %v1814, %v1813
      %v1856 = vpack.c.b16 %v1816, %v1815
      %v1857 = vpack.c.b16 %v1818, %v1817
      %v1858 = vpack.c.b16 %v1820, %v1819
      %v1859 = vpack.c.b16 %v1822, %v1821
      %v1860 = vpack.c.b16 %v1824, %v1823
      %v1861 = vpack.c.b16 %v1826, %v1825
      %v1862 = vpack.c.b16 %v1828, %v1827
      %v1863 = vpack.c.b16 %v1830, %v1829
      %v1864 = vpack.c.b16 %v1832, %v1831
      %1897 = vmatpush.bf16.msra.mxu0 %v1840
      %1898 = vmatpush.bf16.msra.mxu0 %v1839
      %1899 = vmatpush.bf16.msra.mxu0 %v1838
      %1900 = vmatpush.bf16.msra.mxu0 %v1837
      %1901 = vmatpush.bf16.msra.mxu0 %v1836
      %1902 = vmatpush.bf16.msra.mxu0 %v1835
      %1903 = vmatpush.bf16.msra.mxu0 %v1834
      %1904 = vmatpush.bf16.msra.mxu0 %v1833
      %1905 = vmatmul.bf16.gmra.mxu0 %v1272
      %v1906 = vpop.f32.mrf.mxu0
      %v1907 = vadd.f32 %v1703, %v1906
      %v1908 = vpop.f32.mrf.mxu0
      %v1909 = vadd.f32 %v1703, %v1908
      %1910 = vmatmul.bf16.gmra.mxu0 %v1273
      %v1911 = vpop.f32.mrf.mxu0
      %v1912 = vadd.f32 %v1703, %v1911
      %v1913 = vpop.f32.mrf.mxu0
      %v1914 = vadd.f32 %v1703, %v1913
      %1915 = vmatmul.bf16.gmra.mxu0 %v1274
      %v1916 = vpop.f32.mrf.mxu0
      %v1917 = vadd.f32 %v1703, %v1916
      %v1918 = vpop.f32.mrf.mxu0
      %v1919 = vadd.f32 %v1703, %v1918
      %1920 = vmatmul.bf16.gmra.mxu0 %v1275
      %v1921 = vpop.f32.mrf.mxu0
      %v1922 = vadd.f32 %v1703, %v1921
      %v1923 = vpop.f32.mrf.mxu0
      %v1924 = vadd.f32 %v1703, %v1923
      %1925 = vmatmul.bf16.gmra.mxu0 %v1276
      %v1926 = vpop.f32.mrf.mxu0
      %v1927 = vadd.f32 %v1703, %v1926
      %v1928 = vpop.f32.mrf.mxu0
      %v1929 = vadd.f32 %v1703, %v1928
      %1930 = vmatmul.bf16.gmra.mxu0 %v1277
      %v1931 = vpop.f32.mrf.mxu0
      %v1932 = vadd.f32 %v1703, %v1931
      %v1933 = vpop.f32.mrf.mxu0
      %v1934 = vadd.f32 %v1703, %v1933
      %1935 = vmatmul.bf16.gmra.mxu0 %v1278
      %v1936 = vpop.f32.mrf.mxu0
      %v1937 = vadd.f32 %v1703, %v1936
      %v1938 = vpop.f32.mrf.mxu0
      %v1939 = vadd.f32 %v1703, %v1938
      %1940 = vmatmul.bf16.gmra.mxu0 %v1279
      %v1941 = vpop.f32.mrf.mxu0
      %v1942 = vadd.f32 %v1703, %v1941
      %v1943 = vpop.f32.mrf.mxu0
      %v1944 = vadd.f32 %v1703, %v1943
      %1945 = vmatmul.bf16.gmra.mxu0 %v1280
      %v1946 = vpop.f32.mrf.mxu0
      %v1947 = vadd.f32 %v1703, %v1946
      %v1948 = vpop.f32.mrf.mxu0
      %v1949 = vadd.f32 %v1703, %v1948
      %1950 = vmatmul.bf16.gmra.mxu0 %v1281
      %v1951 = vpop.f32.mrf.mxu0
      %v1952 = vadd.f32 %v1703, %v1951
      %v1953 = vpop.f32.mrf.mxu0
      %v1954 = vadd.f32 %v1703, %v1953
      %1955 = vmatmul.bf16.gmra.mxu0 %v1282
      %v1956 = vpop.f32.mrf.mxu0
      %v1957 = vadd.f32 %v1703, %v1956
      %v1958 = vpop.f32.mrf.mxu0
      %v1959 = vadd.f32 %v1703, %v1958
      %1960 = vmatmul.bf16.gmra.mxu0 %v1283
      %v1961 = vpop.f32.mrf.mxu0
      %v1962 = vadd.f32 %v1703, %v1961
      %v1963 = vpop.f32.mrf.mxu0
      %v1964 = vadd.f32 %v1703, %v1963
      %1965 = vmatmul.bf16.gmra.mxu0 %v1284
      %v1966 = vpop.f32.mrf.mxu0
      %v1967 = vadd.f32 %v1703, %v1966
      %v1968 = vpop.f32.mrf.mxu0
      %1969 = vdwg.mxu0
      %1970 = vmatpush.bf16.msra.mxu0 %v1848
      %1971 = vmatpush.bf16.msra.mxu0 %v1847
      %1972 = vmatpush.bf16.msra.mxu0 %v1846
      %1973 = vmatpush.bf16.msra.mxu0 %v1845
      %1974 = vmatpush.bf16.msra.mxu0 %v1844
      %1975 = vmatpush.bf16.msra.mxu0 %v1843
      %1976 = vmatpush.bf16.msra.mxu0 %v1842
      %1977 = vmatpush.bf16.msra.mxu0 %v1841
      %1978 = vmatmul.bf16.gmra.mxu0 %v1312
      %v1979 = vpop.f32.mrf.mxu0
      %v1980 = vadd.f32 %v1907, %v1979
      %v1981 = vpop.f32.mrf.mxu0
      %v1982 = vadd.f32 %v1909, %v1981
      %1983 = vmatmul.bf16.gmra.mxu0 %v1320
      %v1984 = vpop.f32.mrf.mxu0
      %v1985 = vadd.f32 %v1912, %v1984
      %v1986 = vpop.f32.mrf.mxu0
      %v1987 = vadd.f32 %v1914, %v1986
      %1988 = vmatmul.bf16.gmra.mxu0 %v1328
      %v1989 = vpop.f32.mrf.mxu0
      %v1990 = vadd.f32 %v1917, %v1989
      %v1991 = vpop.f32.mrf.mxu0
      %v1992 = vadd.f32 %v1919, %v1991
      %1993 = vmatmul.bf16.gmra.mxu0 %v1336
      %v1994 = vpop.f32.mrf.mxu0
      %v1995 = vadd.f32 %v1922, %v1994
      %v1996 = vpop.f32.mrf.mxu0
      %v1997 = vadd.f32 %v1924, %v1996
      %1998 = vmatmul.bf16.gmra.mxu0 %v1344
      %v1999 = vpop.f32.mrf.mxu0
      %v2000 = vadd.f32 %v1927, %v1999
      %v2001 = vpop.f32.mrf.mxu0
      %v2002 = vadd.f32 %v1929, %v2001
      %2003 = vmatmul.bf16.gmra.mxu0 %v1352
      %v2004 = vpop.f32.mrf.mxu0
      %v2005 = vadd.f32 %v1932, %v2004
      %v2006 = vpop.f32.mrf.mxu0
      %v2007 = vadd.f32 %v1934, %v2006
      %2008 = vmatmul.bf16.gmra.mxu0 %v1360
      %v2009 = vpop.f32.mrf.mxu0
      %v2010 = vadd.f32 %v1937, %v2009
      %v2011 = vpop.f32.mrf.mxu0
      %v2012 = vadd.f32 %v1939, %v2011
      %2013 = vmatmul.bf16.gmra.mxu0 %v1368
      %v2014 = vpop.f32.mrf.mxu0
      %v2015 = vadd.f32 %v1942, %v2014
      %v2016 = vpop.f32.mrf.mxu0
      %v2017 = vadd.f32 %v1944, %v2016
      %2018 = vmatmul.bf16.gmra.mxu0 %v1376
      %v2019 = vpop.f32.mrf.mxu0
      %v2020 = vadd.f32 %v1947, %v2019
      %v2021 = vpop.f32.mrf.mxu0
      %v2022 = vadd.f32 %v1949, %v2021
      %2023 = vmatmul.bf16.gmra.mxu0 %v1384
      %v2024 = vpop.f32.mrf.mxu0
      %v2025 = vadd.f32 %v1952, %v2024
      %v2026 = vpop.f32.mrf.mxu0
      %v2027 = vadd.f32 %v1954, %v2026
      %2028 = vmatmul.bf16.gmra.mxu0 %v1392
      %v2029 = vpop.f32.mrf.mxu0
      %v2030 = vadd.f32 %v1957, %v2029
      %v2031 = vpop.f32.mrf.mxu0
      %v2032 = vadd.f32 %v1959, %v2031
      %2033 = vmatmul.bf16.gmra.mxu0 %v1400
      %v2034 = vpop.f32.mrf.mxu0
      %v2035 = vadd.f32 %v1962, %v2034
      %v2036 = vpop.f32.mrf.mxu0
      %v2037 = vadd.f32 %v1964, %v2036
      %2038 = vmatmul.bf16.gmra.mxu0 %v1403
      %v2039 = vpop.f32.mrf.mxu0
      %v2040 = vadd.f32 %v1967, %v2039
      %v2041 = vpop.f32.mrf.mxu0
      %2042 = vdwg.mxu0
      %2043 = vmatpush.bf16.msra.mxu0 %v1856
      %2044 = vmatpush.bf16.msra.mxu0 %v1855
      %2045 = vmatpush.bf16.msra.mxu0 %v1854
      %2046 = vmatpush.bf16.msra.mxu0 %v1853
      %2047 = vmatpush.bf16.msra.mxu0 %v1852
      %2048 = vmatpush.bf16.msra.mxu0 %v1851
      %2049 = vmatpush.bf16.msra.mxu0 %v1850
      %2050 = vmatpush.bf16.msra.mxu0 %v1849
      %2051 = vmatmul.bf16.gmra.mxu0 %v1498
      %v2052 = vpop.f32.mrf.mxu0
      %v2053 = vadd.f32 %v1980, %v2052
      %v2054 = vpop.f32.mrf.mxu0
      %v2055 = vadd.f32 %v1982, %v2054
      %2056 = vmatmul.bf16.gmra.mxu0 %v1507
      %v2057 = vpop.f32.mrf.mxu0
      %v2058 = vadd.f32 %v1985, %v2057
      %v2059 = vpop.f32.mrf.mxu0
      %v2060 = vadd.f32 %v1987, %v2059
      %2061 = vmatmul.bf16.gmra.mxu0 %v1516
      %v2062 = vpop.f32.mrf.mxu0
      %v2063 = vadd.f32 %v1990, %v2062
      %v2064 = vpop.f32.mrf.mxu0
      %v2065 = vadd.f32 %v1992, %v2064
      %2066 = vmatmul.bf16.gmra.mxu0 %v1525
      %v2067 = vpop.f32.mrf.mxu0
      %v2068 = vadd.f32 %v1995, %v2067
      %v2069 = vpop.f32.mrf.mxu0
      %v2070 = vadd.f32 %v1997, %v2069
      %2071 = vmatmul.bf16.gmra.mxu0 %v1534
      %v2072 = vpop.f32.mrf.mxu0
      %v2073 = vadd.f32 %v2000, %v2072
      %v2074 = vpop.f32.mrf.mxu0
      %v2075 = vadd.f32 %v2002, %v2074
      %2076 = vmatmul.bf16.gmra.mxu0 %v1543
      %v2077 = vpop.f32.mrf.mxu0
      %v2078 = vadd.f32 %v2005, %v2077
      %v2079 = vpop.f32.mrf.mxu0
      %v2080 = vadd.f32 %v2007, %v2079
      %2081 = vmatmul.bf16.gmra.mxu0 %v1552
      %v2082 = vpop.f32.mrf.mxu0
      %v2083 = vadd.f32 %v2010, %v2082
      %v2084 = vpop.f32.mrf.mxu0
      %v2085 = vadd.f32 %v2012, %v2084
      %2086 = vmatmul.bf16.gmra.mxu0 %v1561
      %v2087 = vpop.f32.mrf.mxu0
      %v2088 = vadd.f32 %v2015, %v2087
      %v2089 = vpop.f32.mrf.mxu0
      %v2090 = vadd.f32 %v2017, %v2089
      %2091 = vmatmul.bf16.gmra.mxu0 %v1570
      %v2092 = vpop.f32.mrf.mxu0
      %v2093 = vadd.f32 %v2020, %v2092
      %v2094 = vpop.f32.mrf.mxu0
      %v2095 = vadd.f32 %v2022, %v2094
      %2096 = vmatmul.bf16.gmra.mxu0 %v1579
      %v2097 = vpop.f32.mrf.mxu0
      %v2098 = vadd.f32 %v2025, %v2097
      %v2099 = vpop.f32.mrf.mxu0
      %v2100 = vadd.f32 %v2027, %v2099
      %2101 = vmatmul.bf16.gmra.mxu0 %v1588
      %v2102 = vpop.f32.mrf.mxu0
      %v2103 = vadd.f32 %v2030, %v2102
      %v2104 = vpop.f32.mrf.mxu0
      %v2105 = vadd.f32 %v2032, %v2104
      %2106 = vmatmul.bf16.gmra.mxu0 %v1597
      %v2107 = vpop.f32.mrf.mxu0
      %v2108 = vadd.f32 %v2035, %v2107
      %v2109 = vpop.f32.mrf.mxu0
      %v2110 = vadd.f32 %v2037, %v2109
      %2111 = vmatmul.bf16.gmra.mxu0 %v1596
      %v2112 = vpop.f32.mrf.mxu0
      %v2113 = vadd.f32 %v2040, %v2112
      %v2114 = vpop.f32.mrf.mxu0
      %2115 = vdwg.mxu0
      %2116 = vmatpush.bf16.msra.mxu0 %v1864
      %2117 = vmatpush.bf16.msra.mxu0 %v1863
      %2118 = vmatpush.bf16.msra.mxu0 %v1862
      %2119 = vmatpush.bf16.msra.mxu0 %v1861
      %2120 = vmatpush.bf16.msra.mxu0 %v1860
      %2121 = vmatpush.bf16.msra.mxu0 %v1859
      %2122 = vmatpush.bf16.msra.mxu0 %v1858
      %2123 = vmatpush.bf16.msra.mxu0 %v1857
      %2124 = vmatmul.bf16.gmra.mxu0 %v1611
      %v2125 = vpop.f32.mrf.mxu0
      %v2126 = vadd.f32 %v2053, %v2125
      %v2127 = vpop.f32.mrf.mxu0
      %v2128 = vadd.f32 %v2055, %v2127
      %2129 = vmatmul.bf16.gmra.mxu0 %v1612
      %v2130 = vpop.f32.mrf.mxu0
      %v2131 = vadd.f32 %v2058, %v2130
      %v2132 = vpop.f32.mrf.mxu0
      %v2133 = vadd.f32 %v2060, %v2132
      %2134 = vmatmul.bf16.gmra.mxu0 %v1613
      %v2135 = vpop.f32.mrf.mxu0
      %v2136 = vadd.f32 %v2063, %v2135
      %v2137 = vpop.f32.mrf.mxu0
      %v2138 = vadd.f32 %v2065, %v2137
      %2139 = vmatmul.bf16.gmra.mxu0 %v1614
      %v2140 = vpop.f32.mrf.mxu0
      %v2141 = vadd.f32 %v2068, %v2140
      %v2142 = vpop.f32.mrf.mxu0
      %v2143 = vadd.f32 %v2070, %v2142
      %2144 = vmatmul.bf16.gmra.mxu0 %v1615
      %v2145 = vpop.f32.mrf.mxu0
      %v2146 = vadd.f32 %v2073, %v2145
      %v2147 = vpop.f32.mrf.mxu0
      %v2148 = vadd.f32 %v2075, %v2147
      %2149 = vmatmul.bf16.gmra.mxu0 %v1616
      %v2150 = vpop.f32.mrf.mxu0
      %v2151 = vadd.f32 %v2078, %v2150
      %v2152 = vpop.f32.mrf.mxu0
      %v2153 = vadd.f32 %v2080, %v2152
      %2154 = vmatmul.bf16.gmra.mxu0 %v1617
      %v2155 = vpop.f32.mrf.mxu0
      %v2156 = vadd.f32 %v2083, %v2155
      %v2157 = vpop.f32.mrf.mxu0
      %v2158 = vadd.f32 %v2085, %v2157
      %2159 = vmatmul.bf16.gmra.mxu0 %v1618
      %v2160 = vpop.f32.mrf.mxu0
      %v2161 = vadd.f32 %v2088, %v2160
      %v2162 = vpop.f32.mrf.mxu0
      %v2163 = vadd.f32 %v2090, %v2162
      %2164 = vmatmul.bf16.gmra.mxu0 %v1619
      %v2165 = vpop.f32.mrf.mxu0
      %v2166 = vadd.f32 %v2093, %v2165
      %v2167 = vpop.f32.mrf.mxu0
      %v2168 = vadd.f32 %v2095, %v2167
      %2169 = vmatmul.bf16.gmra.mxu0 %v1620
      %v2170 = vpop.f32.mrf.mxu0
      %v2171 = vadd.f32 %v2098, %v2170
      %v2172 = vpop.f32.mrf.mxu0
      %v2173 = vadd.f32 %v2100, %v2172
      %2174 = vmatmul.bf16.gmra.mxu0 %v1621
      %v2175 = vpop.f32.mrf.mxu0
      %v2176 = vadd.f32 %v2103, %v2175
      %v2177 = vpop.f32.mrf.mxu0
      %v2178 = vadd.f32 %v2105, %v2177
      %2179 = vmatmul.bf16.gmra.mxu0 %v1622
      %v2180 = vpop.f32.mrf.mxu0
      %v2181 = vadd.f32 %v2108, %v2180
      %v2182 = vpop.f32.mrf.mxu0
      %v2183 = vadd.f32 %v2110, %v2182
      %2184 = vmatmul.bf16.gmra.mxu0 %v1623
      %v2185 = vpop.f32.mrf.mxu0
      %v2186 = vadd.f32 %v2113, %v2185
      %v2187 = vpop.f32.mrf.mxu0
      %2188 = vdwg.mxu0
      %v2189 = vmax.f32 %v2126, 0.0
      %v2190 = vmax.f32 %v2128, 0.0
      %v2191 = vmax.f32 %v2131, 0.0
      %v2192 = vmax.f32 %v2133, 0.0
      %v2193 = vmax.f32 %v2136, 0.0
      %v2194 = vmax.f32 %v2138, 0.0
      %v2195 = vmax.f32 %v2141, 0.0
      %v2196 = vmax.f32 %v2143, 0.0
      %v2197 = vmax.f32 %v2146, 0.0
      %v2198 = vmax.f32 %v2148, 0.0
      %v2199 = vmax.f32 %v2151, 0.0
      %v2200 = vmax.f32 %v2153, 0.0
      %v2201 = vmax.f32 %v2156, 0.0
      %v2202 = vmax.f32 %v2158, 0.0
      %v2203 = vmax.f32 %v2161, 0.0
      %v2204 = vmax.f32 %v2163, 0.0
      %v2205 = vmax.f32 %v2166, 0.0
      %v2206 = vmax.f32 %v2168, 0.0
      %v2207 = vmax.f32 %v2171, 0.0
      %v2208 = vmax.f32 %v2173, 0.0
      %v2209 = vmax.f32 %v2176, 0.0
      %v2210 = vmax.f32 %v2178, 0.0
      %v2211 = vmax.f32 %v2181, 0.0
      %v2212 = vmax.f32 %v2183, 0.0
      %v2213 = vmax.f32 %v2186, 0.0
      %v2214 = vpack.c.bf16 %v2189, %v2189
      %v2215 = vpack.c.bf16 %v2190, %v2190
      %v2216 = vpack.c.bf16 %v2191, %v2191
      %v2217 = vpack.c.bf16 %v2192, %v2192
      %v2218 = vpack.c.bf16 %v2193, %v2193
      %v2219 = vpack.c.bf16 %v2194, %v2194
      %v2220 = vpack.c.bf16 %v2195, %v2195
      %v2221 = vpack.c.bf16 %v2196, %v2196
      %v2222 = vpack.c.bf16 %v2197, %v2197
      %v2223 = vpack.c.bf16 %v2198, %v2198
      %v2224 = vpack.c.bf16 %v2199, %v2199
      %v2225 = vpack.c.bf16 %v2200, %v2200
      %v2226 = vpack.c.bf16 %v2201, %v2201
      %v2227 = vpack.c.bf16 %v2202, %v2202
      %v2228 = vpack.c.bf16 %v2203, %v2203
      %v2229 = vpack.c.bf16 %v2204, %v2204
      %v2230 = vpack.c.bf16 %v2205, %v2205
      %v2231 = vpack.c.bf16 %v2206, %v2206
      %v2232 = vpack.c.bf16 %v2207, %v2207
      %v2233 = vpack.c.bf16 %v2208, %v2208
      %v2234 = vpack.c.bf16 %v2209, %v2209
      %v2235 = vpack.c.bf16 %v2210, %v2210
      %v2236 = vpack.c.bf16 %v2211, %v2211
      %v2237 = vpack.c.bf16 %v2212, %v2212
      %v2238 = vpack.c.bf16 %v2213, %v2213
      %vm2239 = vcmask 519168
      %2240 = vst.msk [vmem:[#allocation3] sm:$0xf] %vm2239, %v2214
      %2241 = vst.msk [vmem:[#allocation3 + $0x4] sm:$0xf] %vm2239, %v2215
      %2242 = vst.msk [vmem:[#allocation3 + $0x8] sm:$0xf] %vm2239, %v2216
      %2243 = vst.msk [vmem:[#allocation3 + $0xc] sm:$0xf] %vm2239, %v2217
      %2244 = vst.msk [vmem:[#allocation3 + $0x10] sm:$0xf] %vm2239, %v2218
      %2245 = vst.msk [vmem:[#allocation3 + $0x14] sm:$0xf] %vm2239, %v2219
      %2246 = vst.msk [vmem:[#allocation3 + $0x18] sm:$0xf] %vm2239, %v2220
      %2247 = vst.msk [vmem:[#allocation3 + $0x1c] sm:$0xf] %vm2239, %v2221
      %2248 = vst.msk [vmem:[#allocation3 + $0x20] sm:$0xf] %vm2239, %v2222
      %2249 = vst.msk [vmem:[#allocation3 + $0x24] sm:$0xf] %vm2239, %v2223
      %2250 = vst.msk [vmem:[#allocation3 + $0x28] sm:$0xf] %vm2239, %v2224
      %2251 = vst.msk [vmem:[#allocation3 + $0x2c] sm:$0xf] %vm2239, %v2225
      %2252 = vst.msk [vmem:[#allocation3 + $0x30] sm:$0xf] %vm2239, %v2226
      %2253 = vst.msk [vmem:[#allocation3 + $0x34] sm:$0xf] %vm2239, %v2227
      %2254 = vst.msk [vmem:[#allocation3 + $0x38] sm:$0xf] %vm2239, %v2228
      %2255 = vst.msk [vmem:[#allocation3 + $0x3c] sm:$0xf] %vm2239, %v2229
      %2256 = vst.msk [vmem:[#allocation3 + $0x40] sm:$0xf] %vm2239, %v2230
      %2257 = vst.msk [vmem:[#allocation3 + $0x44] sm:$0xf] %vm2239, %v2231
      %2258 = vst.msk [vmem:[#allocation3 + $0x48] sm:$0xf] %vm2239, %v2232
      %2259 = vst.msk [vmem:[#allocation3 + $0x4c] sm:$0xf] %vm2239, %v2233
      %2260 = vst.msk [vmem:[#allocation3 + $0x50] sm:$0xf] %vm2239, %v2234
      %2261 = vst.msk [vmem:[#allocation3 + $0x54] sm:$0xf] %vm2239, %v2235
      %2262 = vst.msk [vmem:[#allocation3 + $0x58] sm:$0xf] %vm2239, %v2236
      %2263 = vst.msk [vmem:[#allocation3 + $0x5c] sm:$0xf] %vm2239, %v2237
      %2264 = vst.msk [vmem:[#allocation3 + $0x60] sm:$0xf] %vm2239, %v2238
      %v2265 = vld [vmem:[#allocation3] sm:$0xf]
      %v2266 = vld [vmem:[#allocation3 + $0x4] sm:$0xf]
      %v2267 = vld [vmem:[#allocation3 + $0x8] sm:$0xf]
      %v2268 = vld [vmem:[#allocation3 + $0xc] sm:$0xf]
      %v2269 = vld [vmem:[#allocation3 + $0x10] sm:$0xf]
      %v2270 = vld [vmem:[#allocation3 + $0x14] sm:$0xf]
      %v2271 = vld [vmem:[#allocation3 + $0x18] sm:$0xf]
      %v2272 = vld [vmem:[#allocation3 + $0x1c] sm:$0xf]
      %v2273 = vld [vmem:[#allocation3 + $0x20] sm:$0xf]
      %v2274 = vld [vmem:[#allocation3 + $0x24] sm:$0xf]
      %v2275 = vld [vmem:[#allocation3 + $0x28] sm:$0xf]
      %v2276 = vld [vmem:[#allocation3 + $0x2c] sm:$0xf]
      %v2277 = vld [vmem:[#allocation3 + $0x30] sm:$0xf]
      %v2278 = vld [vmem:[#allocation3 + $0x34] sm:$0xf]
      %v2279 = vld [vmem:[#allocation3 + $0x38] sm:$0xf]
      %v2280 = vld [vmem:[#allocation3 + $0x3c] sm:$0xf]
      %v2281 = vld [vmem:[#allocation3 + $0x40] sm:$0xf]
      %v2282 = vld [vmem:[#allocation3 + $0x44] sm:$0xf]
      %v2283 = vld [vmem:[#allocation3 + $0x48] sm:$0xf]
      %v2284 = vld [vmem:[#allocation3 + $0x4c] sm:$0xf]
      %v2285 = vld [vmem:[#allocation3 + $0x50] sm:$0xf]
      %v2286 = vld [vmem:[#allocation3 + $0x54] sm:$0x1]
      %v2287 = vld [vmem:[#allocation3] sm:$0xe]
      %v2288 = vld [vmem:[#allocation3 + $0x4] sm:$0x8]
      %v2289 = vld [vmem:[#allocation3 + $0x54] sm:$0xf]
      %v2290 = vld [vmem:[#allocation3 + $0x58] sm:$0xf]
      %v2291 = vld [vmem:[#allocation3 + $0x5c] sm:$0x1]
      %v2292 = vld [vmem:[#allocation3 + $0xc] sm:$0x8]
      %v2293 = vld [vmem:[#allocation3 + $0x5c] sm:$0xf]
      %v2294 = vld [vmem:[#allocation3 + $0x60] sm:$0x7]
      %v2295 = vld [vmem:[#allocation3 + $0x60] sm:$0xf]
      %v2317 = vunpack.c.l.b16 %v2265
      %v2318 = vunpack.c.l.b16 %v2266
      %v2319 = vunpack.c.l.b16 %v2267
      %v2320 = vunpack.c.l.b16 %v2268
      %v2321 = vunpack.c.l.b16 %v2269
      %v2322 = vunpack.c.l.b16 %v2270
      %v2323 = vunpack.c.l.b16 %v2271
      %v2324 = vunpack.c.l.b16 %v2272
      %v2325 = vunpack.c.l.b16 %v2273
      %v2326 = vunpack.c.l.b16 %v2274
      %v2327 = vunpack.c.l.b16 %v2275
      %v2328 = vunpack.c.l.b16 %v2276
      %v2329 = vunpack.c.l.b16 %v2277
      %v2330 = vunpack.c.l.b16 %v2278
      %v2331 = vunpack.c.l.b16 %v2279
      %v2332 = vunpack.c.l.b16 %v2280
      %v2333 = vunpack.c.l.b16 %v2281
      %v2334 = vunpack.c.l.b16 %v2282
      %v2335 = vunpack.c.l.b16 %v2283
      %v2336 = vunpack.c.l.b16 %v2284
      %v2337 = vunpack.c.l.b16 %v2285
      %v2338 = vpack.c.b16 %v2318, %v2317
      %v2339 = vpack.c.b16 %v2320, %v2319
      %v2340 = vpack.c.b16 %v2322, %v2321
      %v2341 = vpack.c.b16 %v2324, %v2323
      %v2342 = vpack.c.b16 %v2326, %v2325
      %v2343 = vpack.c.b16 %v2328, %v2327
      %v2344 = vpack.c.b16 %v2330, %v2329
      %v2345 = vpack.c.b16 %v2332, %v2331
      %v2346 = vpack.c.b16 %v2334, %v2333
      %v2347 = vpack.c.b16 %v2336, %v2335
      %v2348 = vpack.c.b16 %v2337, %v2337
      %v2350 = vunpack.c.l.b16 %v2286
      %v2351 = vpack.c.b16 %v2350, %v2337
      %v2353 = vshrl.u32 %v2338, 16
      %v2355 = vshll.u32 %v2338, 16
      %v2357 = vrot.slane %v2355, 1
      %v2358 = vor.u32 %v2353, %v2357
      %v2360 = vshll.u32 %v2339, 16
      %v2362 = vrot.slane %v2360, 1
      %v2363 = vsel %vm385, %v2358, %v2362
      %v2364 = vshrl.u32 %v2339, 16
      %v2366 = vor.u32 %v2364, %v2362
      %v2368 = vshll.u32 %v2340, 16
      %v2370 = vrot.slane %v2368, 1
      %v2371 = vsel %vm385, %v2366, %v2370
      %v2372 = vshrl.u32 %v2340, 16
      %v2374 = vor.u32 %v2372, %v2370
      %v2376 = vshll.u32 %v2341, 16
      %v2378 = vrot.slane %v2376, 1
      %v2379 = vsel %vm385, %v2374, %v2378
      %v2380 = vshrl.u32 %v2341, 16
      %v2382 = vor.u32 %v2380, %v2378
      %v2384 = vshll.u32 %v2342, 16
      %v2386 = vrot.slane %v2384, 1
      %v2387 = vsel %vm385, %v2382, %v2386
      %v2388 = vshrl.u32 %v2342, 16
      %v2390 = vor.u32 %v2388, %v2386
      %v2392 = vshll.u32 %v2343, 16
      %v2394 = vrot.slane %v2392, 1
      %v2395 = vsel %vm385, %v2390, %v2394
      %v2396 = vshrl.u32 %v2343, 16
      %v2398 = vor.u32 %v2396, %v2394
      %v2400 = vshll.u32 %v2344, 16
      %v2402 = vrot.slane %v2400, 1
      %v2403 = vsel %vm385, %v2398, %v2402
      %v2404 = vshrl.u32 %v2344, 16
      %v2406 = vor.u32 %v2404, %v2402
      %v2408 = vshll.u32 %v2345, 16
      %v2410 = vrot.slane %v2408, 1
      %v2411 = vsel %vm385, %v2406, %v2410
      %v2412 = vshrl.u32 %v2345, 16
      %v2414 = vor.u32 %v2412, %v2410
      %v2416 = vshll.u32 %v2346, 16
      %v2418 = vrot.slane %v2416, 1
      %v2419 = vsel %vm385, %v2414, %v2418
      %v2420 = vshrl.u32 %v2346, 16
      %v2422 = vor.u32 %v2420, %v2418
      %v2424 = vshll.u32 %v2347, 16
      %v2426 = vrot.slane %v2424, 1
      %v2427 = vsel %vm385, %v2422, %v2426
      %v2428 = vshrl.u32 %v2347, 16
      %v2430 = vor.u32 %v2428, %v2426
      %v2432 = vshll.u32 %v2351, 16
      %v2434 = vrot.slane %v2432, 1
      %v2435 = vsel %vm385, %v2430, %v2434
      %v2436 = vshrl.u32 %v2351, 16
      %v2438 = vor.u32 %v2436, %v2434
      %2439 = vrot.lane.b32.xlu0 %v2363, 64
      %v2440 = vpop.permute.xlu0 %2439
      %2441 = vrot.lane.b32.xlu0 %v2371, 64
      %v2442 = vpop.permute.xlu0 %2441
      %2443 = vrot.lane.b32.xlu0 %v2379, 64
      %v2444 = vpop.permute.xlu0 %2443
      %2445 = vrot.lane.b32.xlu0 %v2387, 64
      %v2446 = vpop.permute.xlu0 %2445
      %2447 = vrot.lane.b32.xlu0 %v2395, 64
      %v2448 = vpop.permute.xlu0 %2447
      %2449 = vrot.lane.b32.xlu0 %v2403, 64
      %v2450 = vpop.permute.xlu0 %2449
      %2451 = vrot.lane.b32.xlu0 %v2411, 64
      %v2452 = vpop.permute.xlu0 %2451
      %2453 = vrot.lane.b32.xlu0 %v2419, 64
      %v2454 = vpop.permute.xlu0 %2453
      %2455 = vrot.lane.b32.xlu0 %v2427, 64
      %v2456 = vpop.permute.xlu0 %2455
      %2457 = vrot.lane.b32.xlu0 %v2435, 64
      %v2458 = vpop.permute.xlu0 %2457
      %2459 = vrot.lane.b32.xlu0 %v2438, 64
      %v2460 = vpop.permute.xlu0 %2459
      %v2462 = vunpack.c.l.b16 %v2287
      %v2463 = vpack.c.b16 %v2318, %v2462
      %vm2464 = vcmask 1046528
      %v2465 = vrot.slane %v2463, 1
      %v2466 = vrot.slane %v2339, 1
      %v2467 = vsel %vm2464, %v2465, %v2466
      %v2468 = vrot.slane %v2340, 1
      %v2469 = vsel %vm2464, %v2466, %v2468
      %v2470 = vrot.slane %v2341, 1
      %v2471 = vsel %vm2464, %v2468, %v2470
      %v2472 = vrot.slane %v2342, 1
      %v2473 = vsel %vm2464, %v2470, %v2472
      %v2474 = vrot.slane %v2343, 1
      %v2475 = vsel %vm2464, %v2472, %v2474
      %v2476 = vrot.slane %v2344, 1
      %v2477 = vsel %vm2464, %v2474, %v2476
      %v2478 = vrot.slane %v2345, 1
      %v2479 = vsel %vm2464, %v2476, %v2478
      %v2480 = vrot.slane %v2346, 1
      %v2481 = vsel %vm2464, %v2478, %v2480
      %v2482 = vrot.slane %v2347, 1
      %v2483 = vsel %vm2464, %v2480, %v2482
      %v2484 = vrot.slane %v2351, 1
      %v2485 = vsel %vm2464, %v2482, %v2484
      %v2489 = vunpack.c.l.b16 %v2288
      %v2490 = vunpack.c.l.b16 %v2289
      %v2491 = vunpack.c.l.b16 %v2290
      %v2492 = vpack.c.b16 %v2319, %v2489
      %v2493 = vpack.c.b16 %v2321, %v2320
      %v2494 = vpack.c.b16 %v2323, %v2322
      %v2495 = vpack.c.b16 %v2325, %v2324
      %v2496 = vpack.c.b16 %v2327, %v2326
      %v2497 = vpack.c.b16 %v2329, %v2328
      %v2498 = vpack.c.b16 %v2331, %v2330
      %v2499 = vpack.c.b16 %v2333, %v2332
      %v2500 = vpack.c.b16 %v2335, %v2334
      %v2501 = vpack.c.b16 %v2337, %v2336
      %v2502 = vpack.c.b16 %v2491, %v2490
      %v2504 = vshrl.u32 %v2492, 16
      %v2506 = vrot.slane %v2504, 3
      %v2507 = vshll.u32 %v2492, 16
      %v2509 = vrot.slane %v2507, 4
      %v2510 = vor.u32 %v2506, %v2509
      %v2512 = vshrl.u32 %v2493, 16
      %v2514 = vrot.slane %v2512, 3
      %v2515 = vshll.u32 %v2493, 16
      %v2517 = vrot.slane %v2515, 4
      %v2518 = vor.u32 %v2514, %v2517
      %v2519 = vsel %vm545, %v2510, %v2518
      %v2521 = vshrl.u32 %v2494, 16
      %v2523 = vrot.slane %v2521, 3
      %v2524 = vshll.u32 %v2494, 16
      %v2526 = vrot.slane %v2524, 4
      %v2527 = vor.u32 %v2523, %v2526
      %v2528 = vsel %vm545, %v2518, %v2527
      %v2530 = vshrl.u32 %v2495, 16
      %v2532 = vrot.slane %v2530, 3
      %v2533 = vshll.u32 %v2495, 16
      %v2535 = vrot.slane %v2533, 4
      %v2536 = vor.u32 %v2532, %v2535
      %v2537 = vsel %vm545, %v2527, %v2536
      %v2539 = vshrl.u32 %v2496, 16
      %v2541 = vrot.slane %v2539, 3
      %v2542 = vshll.u32 %v2496, 16
      %v2544 = vrot.slane %v2542, 4
      %v2545 = vor.u32 %v2541, %v2544
      %v2546 = vsel %vm545, %v2536, %v2545
      %v2548 = vshrl.u32 %v2497, 16
      %v2550 = vrot.slane %v2548, 3
      %v2551 = vshll.u32 %v2497, 16
      %v2553 = vrot.slane %v2551, 4
      %v2554 = vor.u32 %v2550, %v2553
      %v2555 = vsel %vm545, %v2545, %v2554
      %v2557 = vshrl.u32 %v2498, 16
      %v2559 = vrot.slane %v2557, 3
      %v2560 = vshll.u32 %v2498, 16
      %v2562 = vrot.slane %v2560, 4
      %v2563 = vor.u32 %v2559, %v2562
      %v2564 = vsel %vm545, %v2554, %v2563
      %v2566 = vshrl.u32 %v2499, 16
      %v2568 = vrot.slane %v2566, 3
      %v2569 = vshll.u32 %v2499, 16
      %v2571 = vrot.slane %v2569, 4
      %v2572 = vor.u32 %v2568, %v2571
      %v2573 = vsel %vm545, %v2563, %v2572
      %v2575 = vshrl.u32 %v2500, 16
      %v2577 = vrot.slane %v2575, 3
      %v2578 = vshll.u32 %v2500, 16
      %v2580 = vrot.slane %v2578, 4
      %v2581 = vor.u32 %v2577, %v2580
      %v2582 = vsel %vm545, %v2572, %v2581
      %v2584 = vshrl.u32 %v2501, 16
      %v2586 = vrot.slane %v2584, 3
      %v2587 = vshll.u32 %v2501, 16
      %v2589 = vrot.slane %v2587, 4
      %v2590 = vor.u32 %v2586, %v2589
      %v2591 = vsel %vm545, %v2581, %v2590
      %v2593 = vshrl.u32 %v2502, 16
      %v2595 = vrot.slane %v2593, 3
      %v2596 = vshll.u32 %v2502, 16
      %v2598 = vrot.slane %v2596, 4
      %v2599 = vor.u32 %v2595, %v2598
      %v2600 = vsel %vm545, %v2590, %v2599
      %2601 = vrot.lane.b32.xlu0 %v2519, 64
      %v2602 = vpop.permute.xlu0 %2601
      %2603 = vrot.lane.b32.xlu0 %v2528, 64
      %v2604 = vpop.permute.xlu0 %2603
      %2605 = vrot.lane.b32.xlu0 %v2537, 64
      %v2606 = vpop.permute.xlu0 %2605
      %2607 = vrot.lane.b32.xlu0 %v2546, 64
      %v2608 = vpop.permute.xlu0 %2607
      %2609 = vrot.lane.b32.xlu0 %v2555, 64
      %v2610 = vpop.permute.xlu0 %2609
      %2611 = vrot.lane.b32.xlu0 %v2564, 64
      %v2612 = vpop.permute.xlu0 %2611
      %2613 = vrot.lane.b32.xlu0 %v2573, 64
      %v2614 = vpop.permute.xlu0 %2613
      %2615 = vrot.lane.b32.xlu0 %v2582, 64
      %v2616 = vpop.permute.xlu0 %2615
      %2617 = vrot.lane.b32.xlu0 %v2591, 64
      %v2618 = vpop.permute.xlu0 %2617
      %2619 = vrot.lane.b32.xlu0 %v2600, 64
      %v2620 = vpop.permute.xlu0 %2619
      %2621 = vrot.lane.b32.xlu0 %v2599, 64
      %v2622 = vpop.permute.xlu0 %2621
      %v2623 = vpack.c.b16 %v2490, %v2337
      %v2624 = vpack.c.b16 %v2491, %v2491
      %v2626 = vunpack.c.l.b16 %v2291
      %v2627 = vpack.c.b16 %v2626, %v2491
      %v2629 = vshll.u32 %v2623, 16
      %v2631 = vrot.slane %v2629, 1
      %v2632 = vsel %vm385, %v2430, %v2631
      %v2633 = vshrl.u32 %v2623, 16
      %v2635 = vor.u32 %v2633, %v2631
      %v2637 = vshll.u32 %v2627, 16
      %v2639 = vrot.slane %v2637, 1
      %v2640 = vsel %vm385, %v2635, %v2639
      %v2641 = vshrl.u32 %v2627, 16
      %v2643 = vor.u32 %v2641, %v2639
      %2644 = vrot.lane.b32.xlu0 %v2632, 64
      %v2645 = vpop.permute.xlu0 %2644
      %2646 = vrot.lane.b32.xlu0 %v2640, 64
      %v2647 = vpop.permute.xlu0 %2646
      %2648 = vrot.lane.b32.xlu0 %v2643, 64
      %v2649 = vpop.permute.xlu0 %2648
      %v2653 = vunpack.c.l.b16 %v2292
      %v2654 = vunpack.c.l.b16 %v2293
      %v2655 = vunpack.c.l.b16 %v2294
      %v2656 = vpack.c.b16 %v2321, %v2653
      %v2657 = vpack.c.b16 %v2655, %v2654
      %vm2658 = vcmask 1044480
      %v2659 = vrot.slane %v2656, 3
      %v2660 = vrot.slane %v2494, 3
      %v2661 = vsel %vm2658, %v2659, %v2660
      %v2662 = vrot.slane %v2495, 3
      %v2663 = vsel %vm2658, %v2660, %v2662
      %v2664 = vrot.slane %v2496, 3
      %v2665 = vsel %vm2658, %v2662, %v2664
      %v2666 = vrot.slane %v2497, 3
      %v2667 = vsel %vm2658, %v2664, %v2666
      %v2668 = vrot.slane %v2498, 3
      %v2669 = vsel %vm2658, %v2666, %v2668
      %v2670 = vrot.slane %v2499, 3
      %v2671 = vsel %vm2658, %v2668, %v2670
      %v2672 = vrot.slane %v2500, 3
      %v2673 = vsel %vm2658, %v2670, %v2672
      %v2674 = vrot.slane %v2501, 3
      %v2675 = vsel %vm2658, %v2672, %v2674
      %v2676 = vrot.slane %v2502, 3
      %v2677 = vsel %vm2658, %v2674, %v2676
      %v2678 = vrot.slane %v2657, 3
      %v2679 = vsel %vm2658, %v2676, %v2678
      %v2681 = vunpack.c.l.b16 %v2295
      %v2682 = vpack.c.b16 %v2681, %v2654
      %v2684 = vshrl.u32 %v2656, 16
      %v2686 = vrot.slane %v2684, 3
      %v2687 = vshll.u32 %v2656, 16
      %v2689 = vrot.slane %v2687, 4
      %v2690 = vor.u32 %v2686, %v2689
      %v2691 = vsel %vm545, %v2690, %v2527
      %v2693 = vshrl.u32 %v2682, 16
      %v2695 = vrot.slane %v2693, 3
      %v2696 = vshll.u32 %v2682, 16
      %v2698 = vrot.slane %v2696, 4
      %v2699 = vor.u32 %v2695, %v2698
      %v2700 = vsel %vm545, %v2599, %v2699
      %2701 = vrot.lane.b32.xlu0 %v2691, 64
      %v2702 = vpop.permute.xlu0 %2701
      %2703 = vrot.lane.b32.xlu0 %v2700, 64
      %v2704 = vpop.permute.xlu0 %2703
      %2705 = vrot.lane.b32.xlu0 %v2699, 64
      %v2706 = vpop.permute.xlu0 %2705
      %v2707 = vpack.c.b16 %v2654, %v2491
      %v2708 = vpack.c.b16 %v2681, %v2681
      %v2710 = vsel %vm701, %v2338, %v2440
      %v2713 = vsel %vm701, %v2339, %v2442
      %v2716 = vsel %vm701, %v2340, %v2444
      %v2719 = vsel %vm701, %v2341, %v2446
      %v2722 = vsel %vm701, %v2342, %v2448
      %v2725 = vsel %vm701, %v2343, %v2450
      %v2728 = vsel %vm701, %v2344, %v2452
      %v2731 = vsel %vm701, %v2345, %v2454
      %v2734 = vsel %vm701, %v2346, %v2456
      %v2737 = vsel %vm701, %v2347, %v2458
      %v2741 = vsel %vm701, %v2348, %v2460
      %v2745 = vsel %vm701, %v2467, %v2602
      %v2749 = vsel %vm701, %v2469, %v2604
      %v2753 = vsel %vm701, %v2471, %v2606
      %v2757 = vsel %vm701, %v2473, %v2608
      %v2761 = vsel %vm701, %v2475, %v2610
      %v2765 = vsel %vm701, %v2477, %v2612
      %v2769 = vsel %vm701, %v2479, %v2614
      %v2773 = vsel %vm701, %v2481, %v2616
      %v2777 = vsel %vm701, %v2483, %v2618
      %v2781 = vsel %vm701, %v2485, %v2620
      %v2785 = vsel %vm701, %v2484, %v2622
      %v2788 = vsel %vm701, %v2347, %v2645
      %v2791 = vsel %vm701, %v2623, %v2647
      %v2795 = vsel %vm701, %v2624, %v2649
      %v2799 = vsel %vm701, %v2661, %v2702
      %v2802 = vsel %vm701, %v2663, %v2606
      %v2805 = vsel %vm701, %v2665, %v2608
      %v2808 = vsel %vm701, %v2667, %v2610
      %v2811 = vsel %vm701, %v2669, %v2612
      %v2814 = vsel %vm701, %v2671, %v2614
      %v2817 = vsel %vm701, %v2673, %v2616
      %v2820 = vsel %vm701, %v2675, %v2618
      %v2823 = vsel %vm701, %v2677, %v2620
      %v2827 = vsel %vm701, %v2679, %v2704
      %v2831 = vsel %vm701, %v2678, %v2706
      %v2833 = vld [vmem:[%s5] sm:$0xf]
      %v2834 = vld [vmem:[%s5 + $0x4] sm:$0xf]
      %v2835 = vld [vmem:[%s5 + $0x8] sm:$0xf]
      %v2836 = vld [vmem:[%s5 + $0xc] sm:$0xf]
      %v2837 = vld [vmem:[%s5 + $0x10] sm:$0xf]
      %v2838 = vld [vmem:[%s5 + $0x14] sm:$0xf]
      %v2839 = vld [vmem:[%s5 + $0x18] sm:$0xf]
      %v2840 = vld [vmem:[%s5 + $0x1c] sm:$0xf]
      %v2841 = vld [vmem:[%s5 + $0x20] sm:$0xf]
      %v2842 = vld [vmem:[%s5 + $0x24] sm:$0xf]
      %v2843 = vld [vmem:[%s5 + $0x28] sm:$0xf]
      %v2844 = vld [vmem:[%s5 + $0x2c] sm:$0xf]
      %v2845 = vld [vmem:[%s5 + $0x30] sm:$0xf]
      %v2846 = vld [vmem:[%s5 + $0x34] sm:$0xf]
      %v2847 = vld [vmem:[%s5 + $0x38] sm:$0xf]
      %v2848 = vld [vmem:[%s5 + $0x3c] sm:$0xf]
      %v2849 = vld [vmem:[%s5 + $0x40] sm:$0xf]
      %v2850 = vld [vmem:[%s5 + $0x44] sm:$0xf]
      %v2851 = vld [vmem:[%s5 + $0x48] sm:$0xf]
      %v2852 = vld [vmem:[%s5 + $0x4c] sm:$0xf]
      %v2853 = vld [vmem:[%s5 + $0x50] sm:$0xf]
      %v2854 = vld [vmem:[%s5 + $0x54] sm:$0xf]
      %v2855 = vld [vmem:[%s5 + $0x58] sm:$0xf]
      %v2856 = vld [vmem:[%s5 + $0x5c] sm:$0xf]
      %v2857 = vld [vmem:[%s5 + $0x60] sm:$0xf]
      %v2858 = vld [vmem:[%s5 + $0x64] sm:$0xf]
      %v2859 = vld [vmem:[%s5 + $0x68] sm:$0xf]
      %v2860 = vld [vmem:[%s5 + $0x6c] sm:$0xf]
      %v2861 = vld [vmem:[%s5 + $0x70] sm:$0xf]
      %v2862 = vld [vmem:[%s5 + $0x74] sm:$0xf]
      %v2863 = vld [vmem:[%s5 + $0x78] sm:$0xf]
      %v2864 = vld [vmem:[%s5 + $0x7c] sm:$0xf]
      %v2865 = vld [vmem:[%s5 + $0x80] sm:$0xf]
      %v2866 = vld [vmem:[%s5 + $0x84] sm:$0xf]
      %v2867 = vld [vmem:[%s5 + $0x88] sm:$0xf]
      %v2868 = vld [vmem:[%s5 + $0x8c] sm:$0xf]
      %v2869 = vld [vmem:[%s5 + $0x90] sm:$0xf]
      %v2870 = vld [vmem:[%s5 + $0x94] sm:$0xf]
      %v2871 = vld [vmem:[%s5 + $0x98] sm:$0xf]
      %v2872 = vld [vmem:[%s5 + $0x9c] sm:$0xf]
      %v2873 = vld [vmem:[%s5 + $0xa0] sm:$0xf]
      %v2874 = vld [vmem:[%s5 + $0xa4] sm:$0xf]
      %v2875 = vld [vmem:[%s5 + $0xa8] sm:$0xf]
      %v2876 = vld [vmem:[%s5 + $0xac] sm:$0xf]
      %v2877 = vld [vmem:[%s5 + $0xb0] sm:$0xf]
      %v2878 = vld [vmem:[%s5 + $0xb4] sm:$0xf]
      %v2879 = vld [vmem:[%s5 + $0xb8] sm:$0xf]
      %v2880 = vld [vmem:[%s5 + $0xbc] sm:$0xf]
      %v2881 = vld [vmem:[%s5 + $0xc0] sm:$0xf]
      %v2882 = vld [vmem:[%s5 + $0xc4] sm:$0xf]
      %v2883 = vld [vmem:[%s5 + $0xc8] sm:$0xf]
      %v2884 = vld [vmem:[%s5 + $0xcc] sm:$0xf]
      %v2885 = vld [vmem:[%s5 + $0xd0] sm:$0xf]
      %v2886 = vld [vmem:[%s5 + $0xd4] sm:$0xf]
      %v2887 = vld [vmem:[%s5 + $0xd8] sm:$0xf]
      %v2888 = vld [vmem:[%s5 + $0xdc] sm:$0xf]
      %v2889 = vld [vmem:[%s5 + $0xe0] sm:$0xf]
      %v2890 = vld [vmem:[%s5 + $0xe4] sm:$0xf]
      %v2891 = vld [vmem:[%s5 + $0xe8] sm:$0xf]
      %v2892 = vld [vmem:[%s5 + $0xec] sm:$0xf]
      %v2893 = vld [vmem:[%s5 + $0xf0] sm:$0xf]
      %v2894 = vld [vmem:[%s5 + $0xf4] sm:$0xf]
      %v2895 = vld [vmem:[%s5 + $0xf8] sm:$0xf]
      %v2896 = vld [vmem:[%s5 + $0xfc] sm:$0xf]
      %v2897 = vld [vmem:[%s5 + $0x100] sm:$0xf]
      %v2898 = vld [vmem:[%s5 + $0x104] sm:$0xf]
      %v2899 = vld [vmem:[%s5 + $0x108] sm:$0xf]
      %v2900 = vld [vmem:[%s5 + $0x10c] sm:$0xf]
      %v2901 = vld [vmem:[%s5 + $0x110] sm:$0xf]
      %v2902 = vld [vmem:[%s5 + $0x114] sm:$0xf]
      %v2903 = vld [vmem:[%s5 + $0x118] sm:$0xf]
      %v2904 = vld [vmem:[%s5 + $0x11c] sm:$0xf]
      %v2905 = vld [vmem:[%s6] sm:$0x1]
      %v2907 = vperm.slane %v2905, 0
      %v2981 = vunpack.c.l.b16 %v2833
      %v2982 = vunpack.c.l.b16 %v2834
      %v2983 = vunpack.c.l.b16 %v2835
      %v2984 = vunpack.c.l.b16 %v2836
      %v2985 = vunpack.c.l.b16 %v2837
      %v2986 = vunpack.c.l.b16 %v2838
      %v2987 = vunpack.c.l.b16 %v2839
      %v2988 = vunpack.c.l.b16 %v2840
      %v2989 = vunpack.c.l.b16 %v2841
      %v2990 = vunpack.c.l.b16 %v2842
      %v2991 = vunpack.c.l.b16 %v2843
      %v2992 = vunpack.c.l.b16 %v2844
      %v2993 = vunpack.c.l.b16 %v2845
      %v2994 = vunpack.c.l.b16 %v2846
      %v2995 = vunpack.c.l.b16 %v2847
      %v2996 = vunpack.c.l.b16 %v2848
      %v2997 = vunpack.c.l.b16 %v2849
      %v2998 = vunpack.c.l.b16 %v2850
      %v2999 = vunpack.c.l.b16 %v2851
      %v3000 = vunpack.c.l.b16 %v2852
      %v3001 = vunpack.c.l.b16 %v2853
      %v3002 = vunpack.c.l.b16 %v2854
      %v3003 = vunpack.c.l.b16 %v2855
      %v3004 = vunpack.c.l.b16 %v2856
      %v3005 = vunpack.c.l.b16 %v2857
      %v3006 = vunpack.c.l.b16 %v2858
      %v3007 = vunpack.c.l.b16 %v2859
      %v3008 = vunpack.c.l.b16 %v2860
      %v3009 = vunpack.c.l.b16 %v2861
      %v3010 = vunpack.c.l.b16 %v2862
      %v3011 = vunpack.c.l.b16 %v2863
      %v3012 = vunpack.c.l.b16 %v2864
      %v3013 = vunpack.c.l.b16 %v2865
      %v3014 = vunpack.c.l.b16 %v2866
      %v3015 = vunpack.c.l.b16 %v2867
      %v3016 = vunpack.c.l.b16 %v2868
      %v3017 = vunpack.c.l.b16 %v2869
      %v3018 = vunpack.c.l.b16 %v2870
      %v3019 = vunpack.c.l.b16 %v2871
      %v3020 = vunpack.c.l.b16 %v2872
      %v3021 = vunpack.c.l.b16 %v2873
      %v3022 = vunpack.c.l.b16 %v2874
      %v3023 = vunpack.c.l.b16 %v2875
      %v3024 = vunpack.c.l.b16 %v2876
      %v3025 = vunpack.c.l.b16 %v2877
      %v3026 = vunpack.c.l.b16 %v2878
      %v3027 = vunpack.c.l.b16 %v2879
      %v3028 = vunpack.c.l.b16 %v2880
      %v3029 = vunpack.c.l.b16 %v2881
      %v3030 = vunpack.c.l.b16 %v2882
      %v3031 = vunpack.c.l.b16 %v2883
      %v3032 = vunpack.c.l.b16 %v2884
      %v3033 = vunpack.c.l.b16 %v2885
      %v3034 = vunpack.c.l.b16 %v2886
      %v3035 = vunpack.c.l.b16 %v2887
      %v3036 = vunpack.c.l.b16 %v2888
      %v3037 = vunpack.c.l.b16 %v2889
      %v3038 = vunpack.c.l.b16 %v2890
      %v3039 = vunpack.c.l.b16 %v2891
      %v3040 = vunpack.c.l.b16 %v2892
      %v3041 = vunpack.c.l.b16 %v2893
      %v3042 = vunpack.c.l.b16 %v2894
      %v3043 = vunpack.c.l.b16 %v2895
      %v3044 = vunpack.c.l.b16 %v2896
      %v3045 = vunpack.c.l.b16 %v2897
      %v3046 = vunpack.c.l.b16 %v2898
      %v3047 = vunpack.c.l.b16 %v2899
      %v3048 = vunpack.c.l.b16 %v2900
      %v3049 = vunpack.c.l.b16 %v2901
      %v3050 = vunpack.c.l.b16 %v2902
      %v3051 = vunpack.c.l.b16 %v2903
      %v3052 = vunpack.c.l.b16 %v2904
      %v3053 = vpack.c.b16 %v2982, %v2981
      %v3054 = vpack.c.b16 %v2984, %v2983
      %v3055 = vpack.c.b16 %v2986, %v2985
      %v3056 = vpack.c.b16 %v2988, %v2987
      %v3057 = vpack.c.b16 %v2990, %v2989
      %v3058 = vpack.c.b16 %v2992, %v2991
      %v3059 = vpack.c.b16 %v2994, %v2993
      %v3060 = vpack.c.b16 %v2996, %v2995
      %v3061 = vpack.c.b16 %v2998, %v2997
      %v3062 = vpack.c.b16 %v3000, %v2999
      %v3063 = vpack.c.b16 %v3002, %v3001
      %v3064 = vpack.c.b16 %v3004, %v3003
      %v3065 = vpack.c.b16 %v3006, %v3005
      %v3066 = vpack.c.b16 %v3008, %v3007
      %v3067 = vpack.c.b16 %v3010, %v3009
      %v3068 = vpack.c.b16 %v3012, %v3011
      %v3069 = vpack.c.b16 %v3014, %v3013
      %v3070 = vpack.c.b16 %v3016, %v3015
      %v3071 = vpack.c.b16 %v3018, %v3017
      %v3072 = vpack.c.b16 %v3020, %v3019
      %v3073 = vpack.c.b16 %v3022, %v3021
      %v3074 = vpack.c.b16 %v3024, %v3023
      %v3075 = vpack.c.b16 %v3026, %v3025
      %v3076 = vpack.c.b16 %v3028, %v3027
      %v3077 = vpack.c.b16 %v3030, %v3029
      %v3078 = vpack.c.b16 %v3032, %v3031
      %v3079 = vpack.c.b16 %v3034, %v3033
      %v3080 = vpack.c.b16 %v3036, %v3035
      %v3081 = vpack.c.b16 %v3038, %v3037
      %v3082 = vpack.c.b16 %v3040, %v3039
      %v3083 = vpack.c.b16 %v3042, %v3041
      %v3084 = vpack.c.b16 %v3044, %v3043
      %v3085 = vpack.c.b16 %v3046, %v3045
      %v3086 = vpack.c.b16 %v3048, %v3047
      %v3087 = vpack.c.b16 %v3050, %v3049
      %v3088 = vpack.c.b16 %v3052, %v3051
      %v3125 = vsel %vm701, %v2340, 0
      %v3127 = vsel %vm701, %v2341, 0
      %v3129 = vsel %vm701, %v2342, 0
      %v3131 = vsel %vm701, %v2343, 0
      %v3133 = vsel %vm701, %v2344, 0
      %v3135 = vsel %vm701, %v2345, 0
      %v3137 = vsel %vm701, %v2346, 0
      %v3139 = vsel %vm701, %v2347, 0
      %v3141 = vsel %vm701, %v2623, 0
      %v3144 = vsel %vm701, %v2707, 0
      %v3147 = vsel %vm701, %v2708, 0
      %3149 = vmatpush.bf16.msra.mxu0 %v3060
      %3150 = vmatpush.bf16.msra.mxu0 %v3059
      %3151 = vmatpush.bf16.msra.mxu0 %v3058
      %3152 = vmatpush.bf16.msra.mxu0 %v3057
      %3153 = vmatpush.bf16.msra.mxu0 %v3056
      %3154 = vmatpush.bf16.msra.mxu0 %v3055
      %3155 = vmatpush.bf16.msra.mxu0 %v3054
      %3156 = vmatpush.bf16.msra.mxu0 %v3053
      %3157 = vmatmul.bf16.gmra.mxu0 %v2710
      %v3158 = vpop.f32.mrf.mxu0
      %v3159 = vadd.f32 %v2907, %v3158
      %v3160 = vpop.f32.mrf.mxu0
      %v3161 = vadd.f32 %v2907, %v3160
      %3162 = vmatmul.bf16.gmra.mxu0 %v2713
      %v3163 = vpop.f32.mrf.mxu0
      %v3164 = vadd.f32 %v2907, %v3163
      %v3165 = vpop.f32.mrf.mxu0
      %v3166 = vadd.f32 %v2907, %v3165
      %3167 = vmatmul.bf16.gmra.mxu0 %v2716
      %v3168 = vpop.f32.mrf.mxu0
      %v3169 = vadd.f32 %v2907, %v3168
      %v3170 = vpop.f32.mrf.mxu0
      %v3171 = vadd.f32 %v2907, %v3170
      %3172 = vmatmul.bf16.gmra.mxu0 %v2719
      %v3173 = vpop.f32.mrf.mxu0
      %v3174 = vadd.f32 %v2907, %v3173
      %v3175 = vpop.f32.mrf.mxu0
      %v3176 = vadd.f32 %v2907, %v3175
      %3177 = vmatmul.bf16.gmra.mxu0 %v2722
      %v3178 = vpop.f32.mrf.mxu0
      %v3179 = vadd.f32 %v2907, %v3178
      %v3180 = vpop.f32.mrf.mxu0
      %v3181 = vadd.f32 %v2907, %v3180
      %3182 = vmatmul.bf16.gmra.mxu0 %v2725
      %v3183 = vpop.f32.mrf.mxu0
      %v3184 = vadd.f32 %v2907, %v3183
      %v3185 = vpop.f32.mrf.mxu0
      %v3186 = vadd.f32 %v2907, %v3185
      %3187 = vmatmul.bf16.gmra.mxu0 %v2728
      %v3188 = vpop.f32.mrf.mxu0
      %v3189 = vadd.f32 %v2907, %v3188
      %v3190 = vpop.f32.mrf.mxu0
      %v3191 = vadd.f32 %v2907, %v3190
      %3192 = vmatmul.bf16.gmra.mxu0 %v2731
      %v3193 = vpop.f32.mrf.mxu0
      %v3194 = vadd.f32 %v2907, %v3193
      %v3195 = vpop.f32.mrf.mxu0
      %v3196 = vadd.f32 %v2907, %v3195
      %3197 = vmatmul.bf16.gmra.mxu0 %v2734
      %v3198 = vpop.f32.mrf.mxu0
      %v3199 = vadd.f32 %v2907, %v3198
      %v3200 = vpop.f32.mrf.mxu0
      %v3201 = vadd.f32 %v2907, %v3200
      %3202 = vmatmul.bf16.gmra.mxu0 %v2737
      %v3203 = vpop.f32.mrf.mxu0
      %v3204 = vadd.f32 %v2907, %v3203
      %v3205 = vpop.f32.mrf.mxu0
      %v3206 = vadd.f32 %v2907, %v3205
      %3207 = vmatmul.bf16.gmra.mxu0 %v2741
      %v3208 = vpop.f32.mrf.mxu0
      %v3209 = vadd.f32 %v2907, %v3208
      %v3210 = vpop.f32.mrf.mxu0
      %3211 = vdwg.mxu0
      %3212 = vmatpush.bf16.msra.mxu0 %v3068
      %3213 = vmatpush.bf16.msra.mxu0 %v3067
      %3214 = vmatpush.bf16.msra.mxu0 %v3066
      %3215 = vmatpush.bf16.msra.mxu0 %v3065
      %3216 = vmatpush.bf16.msra.mxu0 %v3064
      %3217 = vmatpush.bf16.msra.mxu0 %v3063
      %3218 = vmatpush.bf16.msra.mxu0 %v3062
      %3219 = vmatpush.bf16.msra.mxu0 %v3061
      %3220 = vmatmul.bf16.gmra.mxu0 %v2745
      %v3221 = vpop.f32.mrf.mxu0
      %v3222 = vadd.f32 %v3159, %v3221
      %v3223 = vpop.f32.mrf.mxu0
      %v3224 = vadd.f32 %v3161, %v3223
      %3225 = vmatmul.bf16.gmra.mxu0 %v2749
      %v3226 = vpop.f32.mrf.mxu0
      %v3227 = vadd.f32 %v3164, %v3226
      %v3228 = vpop.f32.mrf.mxu0
      %v3229 = vadd.f32 %v3166, %v3228
      %3230 = vmatmul.bf16.gmra.mxu0 %v2753
      %v3231 = vpop.f32.mrf.mxu0
      %v3232 = vadd.f32 %v3169, %v3231
      %v3233 = vpop.f32.mrf.mxu0
      %v3234 = vadd.f32 %v3171, %v3233
      %3235 = vmatmul.bf16.gmra.mxu0 %v2757
      %v3236 = vpop.f32.mrf.mxu0
      %v3237 = vadd.f32 %v3174, %v3236
      %v3238 = vpop.f32.mrf.mxu0
      %v3239 = vadd.f32 %v3176, %v3238
      %3240 = vmatmul.bf16.gmra.mxu0 %v2761
      %v3241 = vpop.f32.mrf.mxu0
      %v3242 = vadd.f32 %v3179, %v3241
      %v3243 = vpop.f32.mrf.mxu0
      %v3244 = vadd.f32 %v3181, %v3243
      %3245 = vmatmul.bf16.gmra.mxu0 %v2765
      %v3246 = vpop.f32.mrf.mxu0
      %v3247 = vadd.f32 %v3184, %v3246
      %v3248 = vpop.f32.mrf.mxu0
      %v3249 = vadd.f32 %v3186, %v3248
      %3250 = vmatmul.bf16.gmra.mxu0 %v2769
      %v3251 = vpop.f32.mrf.mxu0
      %v3252 = vadd.f32 %v3189, %v3251
      %v3253 = vpop.f32.mrf.mxu0
      %v3254 = vadd.f32 %v3191, %v3253
      %3255 = vmatmul.bf16.gmra.mxu0 %v2773
      %v3256 = vpop.f32.mrf.mxu0
      %v3257 = vadd.f32 %v3194, %v3256
      %v3258 = vpop.f32.mrf.mxu0
      %v3259 = vadd.f32 %v3196, %v3258
      %3260 = vmatmul.bf16.gmra.mxu0 %v2777
      %v3261 = vpop.f32.mrf.mxu0
      %v3262 = vadd.f32 %v3199, %v3261
      %v3263 = vpop.f32.mrf.mxu0
      %v3264 = vadd.f32 %v3201, %v3263
      %3265 = vmatmul.bf16.gmra.mxu0 %v2781
      %v3266 = vpop.f32.mrf.mxu0
      %v3267 = vadd.f32 %v3204, %v3266
      %v3268 = vpop.f32.mrf.mxu0
      %v3269 = vadd.f32 %v3206, %v3268
      %3270 = vmatmul.bf16.gmra.mxu0 %v2785
      %v3271 = vpop.f32.mrf.mxu0
      %v3272 = vadd.f32 %v3209, %v3271
      %v3273 = vpop.f32.mrf.mxu0
      %3274 = vdwg.mxu0
      %3275 = vmatpush.bf16.msra.mxu0 %v3076
      %3276 = vmatpush.bf16.msra.mxu0 %v3075
      %3277 = vmatpush.bf16.msra.mxu0 %v3074
      %3278 = vmatpush.bf16.msra.mxu0 %v3073
      %3279 = vmatpush.bf16.msra.mxu0 %v3072
      %3280 = vmatpush.bf16.msra.mxu0 %v3071
      %3281 = vmatpush.bf16.msra.mxu0 %v3070
      %3282 = vmatpush.bf16.msra.mxu0 %v3069
      %3283 = vmatmul.bf16.gmra.mxu0 %v2713
      %v3284 = vpop.f32.mrf.mxu0
      %v3285 = vadd.f32 %v3222, %v3284
      %v3286 = vpop.f32.mrf.mxu0
      %v3287 = vadd.f32 %v3224, %v3286
      %3288 = vmatmul.bf16.gmra.mxu0 %v2716
      %v3289 = vpop.f32.mrf.mxu0
      %v3290 = vadd.f32 %v3227, %v3289
      %v3291 = vpop.f32.mrf.mxu0
      %v3292 = vadd.f32 %v3229, %v3291
      %3293 = vmatmul.bf16.gmra.mxu0 %v2719
      %v3294 = vpop.f32.mrf.mxu0
      %v3295 = vadd.f32 %v3232, %v3294
      %v3296 = vpop.f32.mrf.mxu0
      %v3297 = vadd.f32 %v3234, %v3296
      %3298 = vmatmul.bf16.gmra.mxu0 %v2722
      %v3299 = vpop.f32.mrf.mxu0
      %v3300 = vadd.f32 %v3237, %v3299
      %v3301 = vpop.f32.mrf.mxu0
      %v3302 = vadd.f32 %v3239, %v3301
      %3303 = vmatmul.bf16.gmra.mxu0 %v2725
      %v3304 = vpop.f32.mrf.mxu0
      %v3305 = vadd.f32 %v3242, %v3304
      %v3306 = vpop.f32.mrf.mxu0
      %v3307 = vadd.f32 %v3244, %v3306
      %3308 = vmatmul.bf16.gmra.mxu0 %v2728
      %v3309 = vpop.f32.mrf.mxu0
      %v3310 = vadd.f32 %v3247, %v3309
      %v3311 = vpop.f32.mrf.mxu0
      %v3312 = vadd.f32 %v3249, %v3311
      %3313 = vmatmul.bf16.gmra.mxu0 %v2731
      %v3314 = vpop.f32.mrf.mxu0
      %v3315 = vadd.f32 %v3252, %v3314
      %v3316 = vpop.f32.mrf.mxu0
      %v3317 = vadd.f32 %v3254, %v3316
      %3318 = vmatmul.bf16.gmra.mxu0 %v2734
      %v3319 = vpop.f32.mrf.mxu0
      %v3320 = vadd.f32 %v3257, %v3319
      %v3321 = vpop.f32.mrf.mxu0
      %v3322 = vadd.f32 %v3259, %v3321
      %3323 = vmatmul.bf16.gmra.mxu0 %v2788
      %v3324 = vpop.f32.mrf.mxu0
      %v3325 = vadd.f32 %v3262, %v3324
      %v3326 = vpop.f32.mrf.mxu0
      %v3327 = vadd.f32 %v3264, %v3326
      %3328 = vmatmul.bf16.gmra.mxu0 %v2791
      %v3329 = vpop.f32.mrf.mxu0
      %v3330 = vadd.f32 %v3267, %v3329
      %v3331 = vpop.f32.mrf.mxu0
      %v3332 = vadd.f32 %v3269, %v3331
      %3333 = vmatmul.bf16.gmra.mxu0 %v2795
      %v3334 = vpop.f32.mrf.mxu0
      %v3335 = vadd.f32 %v3272, %v3334
      %v3336 = vpop.f32.mrf.mxu0
      %3337 = vdwg.mxu0
      %3338 = vmatpush.bf16.msra.mxu0 %v3084
      %3339 = vmatpush.bf16.msra.mxu0 %v3083
      %3340 = vmatpush.bf16.msra.mxu0 %v3082
      %3341 = vmatpush.bf16.msra.mxu0 %v3081
      %3342 = vmatpush.bf16.msra.mxu0 %v3080
      %3343 = vmatpush.bf16.msra.mxu0 %v3079
      %3344 = vmatpush.bf16.msra.mxu0 %v3078
      %3345 = vmatpush.bf16.msra.mxu0 %v3077
      %3346 = vmatmul.bf16.gmra.mxu0 %v2799
      %v3347 = vpop.f32.mrf.mxu0
      %v3348 = vadd.f32 %v3285, %v3347
      %v3349 = vpop.f32.mrf.mxu0
      %v3350 = vadd.f32 %v3287, %v3349
      %3351 = vmatmul.bf16.gmra.mxu0 %v2802
      %v3352 = vpop.f32.mrf.mxu0
      %v3353 = vadd.f32 %v3290, %v3352
      %v3354 = vpop.f32.mrf.mxu0
      %v3355 = vadd.f32 %v3292, %v3354
      %3356 = vmatmul.bf16.gmra.mxu0 %v2805
      %v3357 = vpop.f32.mrf.mxu0
      %v3358 = vadd.f32 %v3295, %v3357
      %v3359 = vpop.f32.mrf.mxu0
      %v3360 = vadd.f32 %v3297, %v3359
      %3361 = vmatmul.bf16.gmra.mxu0 %v2808
      %v3362 = vpop.f32.mrf.mxu0
      %v3363 = vadd.f32 %v3300, %v3362
      %v3364 = vpop.f32.mrf.mxu0
      %v3365 = vadd.f32 %v3302, %v3364
      %3366 = vmatmul.bf16.gmra.mxu0 %v2811
      %v3367 = vpop.f32.mrf.mxu0
      %v3368 = vadd.f32 %v3305, %v3367
      %v3369 = vpop.f32.mrf.mxu0
      %v3370 = vadd.f32 %v3307, %v3369
      %3371 = vmatmul.bf16.gmra.mxu0 %v2814
      %v3372 = vpop.f32.mrf.mxu0
      %v3373 = vadd.f32 %v3310, %v3372
      %v3374 = vpop.f32.mrf.mxu0
      %v3375 = vadd.f32 %v3312, %v3374
      %3376 = vmatmul.bf16.gmra.mxu0 %v2817
      %v3377 = vpop.f32.mrf.mxu0
      %v3378 = vadd.f32 %v3315, %v3377
      %v3379 = vpop.f32.mrf.mxu0
      %v3380 = vadd.f32 %v3317, %v3379
      %3381 = vmatmul.bf16.gmra.mxu0 %v2820
      %v3382 = vpop.f32.mrf.mxu0
      %v3383 = vadd.f32 %v3320, %v3382
      %v3384 = vpop.f32.mrf.mxu0
      %v3385 = vadd.f32 %v3322, %v3384
      %3386 = vmatmul.bf16.gmra.mxu0 %v2823
      %v3387 = vpop.f32.mrf.mxu0
      %v3388 = vadd.f32 %v3325, %v3387
      %v3389 = vpop.f32.mrf.mxu0
      %v3390 = vadd.f32 %v3327, %v3389
      %3391 = vmatmul.bf16.gmra.mxu0 %v2827
      %v3392 = vpop.f32.mrf.mxu0
      %v3393 = vadd.f32 %v3330, %v3392
      %v3394 = vpop.f32.mrf.mxu0
      %v3395 = vadd.f32 %v3332, %v3394
      %3396 = vmatmul.bf16.gmra.mxu0 %v2831
      %v3397 = vpop.f32.mrf.mxu0
      %v3398 = vadd.f32 %v3335, %v3397
      %v3399 = vpop.f32.mrf.mxu0
      %3400 = vdwg.mxu0
      %3401 = vmatpush.bf16.msra.mxu0 0
      %3402 = vmatpush.bf16.msra.mxu0 0
      %3403 = vmatpush.bf16.msra.mxu0 0
      %3404 = vmatpush.bf16.msra.mxu0 0
      %3405 = vmatpush.bf16.msra.mxu0 %v3088
      %3406 = vmatpush.bf16.msra.mxu0 %v3087
      %3407 = vmatpush.bf16.msra.mxu0 %v3086
      %3408 = vmatpush.bf16.msra.mxu0 %v3085
      %3409 = vmatmul.bf16.gmra.mxu0 %v3125
      %v3410 = vpop.f32.mrf.mxu0
      %v3411 = vadd.f32 %v3348, %v3410
      %v3412 = vpop.f32.mrf.mxu0
      %v3413 = vadd.f32 %v3350, %v3412
      %3414 = vmatmul.bf16.gmra.mxu0 %v3127
      %v3415 = vpop.f32.mrf.mxu0
      %v3416 = vadd.f32 %v3353, %v3415
      %v3417 = vpop.f32.mrf.mxu0
      %v3418 = vadd.f32 %v3355, %v3417
      %3419 = vmatmul.bf16.gmra.mxu0 %v3129
      %v3420 = vpop.f32.mrf.mxu0
      %v3421 = vadd.f32 %v3358, %v3420
      %v3422 = vpop.f32.mrf.mxu0
      %v3423 = vadd.f32 %v3360, %v3422
      %3424 = vmatmul.bf16.gmra.mxu0 %v3131
      %v3425 = vpop.f32.mrf.mxu0
      %v3426 = vadd.f32 %v3363, %v3425
      %v3427 = vpop.f32.mrf.mxu0
      %v3428 = vadd.f32 %v3365, %v3427
      %3429 = vmatmul.bf16.gmra.mxu0 %v3133
      %v3430 = vpop.f32.mrf.mxu0
      %v3431 = vadd.f32 %v3368, %v3430
      %v3432 = vpop.f32.mrf.mxu0
      %v3433 = vadd.f32 %v3370, %v3432
      %3434 = vmatmul.bf16.gmra.mxu0 %v3135
      %v3435 = vpop.f32.mrf.mxu0
      %v3436 = vadd.f32 %v3373, %v3435
      %v3437 = vpop.f32.mrf.mxu0
      %v3438 = vadd.f32 %v3375, %v3437
      %3439 = vmatmul.bf16.gmra.mxu0 %v3137
      %v3440 = vpop.f32.mrf.mxu0
      %v3441 = vadd.f32 %v3378, %v3440
      %v3442 = vpop.f32.mrf.mxu0
      %v3443 = vadd.f32 %v3380, %v3442
      %3444 = vmatmul.bf16.gmra.mxu0 %v3139
      %v3445 = vpop.f32.mrf.mxu0
      %v3446 = vadd.f32 %v3383, %v3445
      %v3447 = vpop.f32.mrf.mxu0
      %v3448 = vadd.f32 %v3385, %v3447
      %3449 = vmatmul.bf16.gmra.mxu0 %v3141
      %v3450 = vpop.f32.mrf.mxu0
      %v3451 = vadd.f32 %v3388, %v3450
      %v3452 = vpop.f32.mrf.mxu0
      %v3453 = vadd.f32 %v3390, %v3452
      %3454 = vmatmul.bf16.gmra.mxu0 %v3144
      %v3455 = vpop.f32.mrf.mxu0
      %v3456 = vadd.f32 %v3393, %v3455
      %v3457 = vpop.f32.mrf.mxu0
      %v3458 = vadd.f32 %v3395, %v3457
      %3459 = vmatmul.bf16.gmra.mxu0 %v3147
      %v3460 = vpop.f32.mrf.mxu0
      %v3461 = vadd.f32 %v3398, %v3460
      %v3462 = vpop.f32.mrf.mxu0
      %3463 = vdwg.mxu0
      %v3464 = vmax.f32 %v3411, 0.0
      %v3465 = vmax.f32 %v3413, 0.0
      %v3466 = vmax.f32 %v3416, 0.0
      %v3467 = vmax.f32 %v3418, 0.0
      %v3468 = vmax.f32 %v3421, 0.0
      %v3469 = vmax.f32 %v3423, 0.0
      %v3470 = vmax.f32 %v3426, 0.0
      %v3471 = vmax.f32 %v3428, 0.0
      %v3472 = vmax.f32 %v3431, 0.0
      %v3473 = vmax.f32 %v3433, 0.0
      %v3474 = vmax.f32 %v3436, 0.0
      %v3475 = vmax.f32 %v3438, 0.0
      %v3476 = vmax.f32 %v3441, 0.0
      %v3477 = vmax.f32 %v3443, 0.0
      %v3478 = vmax.f32 %v3446, 0.0
      %v3479 = vmax.f32 %v3448, 0.0
      %v3480 = vmax.f32 %v3451, 0.0
      %v3481 = vmax.f32 %v3453, 0.0
      %v3482 = vmax.f32 %v3456, 0.0
      %v3483 = vmax.f32 %v3458, 0.0
      %v3484 = vmax.f32 %v3461, 0.0
      %v3485 = vpack.c.bf16 %v3464, %v3464
      %v3486 = vpack.c.bf16 %v3465, %v3465
      %v3487 = vpack.c.bf16 %v3466, %v3466
      %v3488 = vpack.c.bf16 %v3467, %v3467
      %v3489 = vpack.c.bf16 %v3468, %v3468
      %v3490 = vpack.c.bf16 %v3469, %v3469
      %v3491 = vpack.c.bf16 %v3470, %v3470
      %v3492 = vpack.c.bf16 %v3471, %v3471
      %v3493 = vpack.c.bf16 %v3472, %v3472
      %v3494 = vpack.c.bf16 %v3473, %v3473
      %v3495 = vpack.c.bf16 %v3474, %v3474
      %v3496 = vpack.c.bf16 %v3475, %v3475
      %v3497 = vpack.c.bf16 %v3476, %v3476
      %v3498 = vpack.c.bf16 %v3477, %v3477
      %v3499 = vpack.c.bf16 %v3478, %v3478
      %v3500 = vpack.c.bf16 %v3479, %v3479
      %v3501 = vpack.c.bf16 %v3480, %v3480
      %v3502 = vpack.c.bf16 %v3481, %v3481
      %v3503 = vpack.c.bf16 %v3482, %v3482
      %v3504 = vpack.c.bf16 %v3483, %v3483
      %v3505 = vpack.c.bf16 %v3484, %v3484
      %3506 = vst.msk [vmem:[%s280] sm:$0xf] %vm2239, %v3485
      %3507 = vst.msk [vmem:[%s280 + $0x4] sm:$0xf] %vm2239, %v3486
      %3508 = vst.msk [vmem:[%s280 + $0x8] sm:$0xf] %vm2239, %v3487
      %3509 = vst.msk [vmem:[%s280 + $0xc] sm:$0xf] %vm2239, %v3488
      %3510 = vst.msk [vmem:[%s280 + $0x10] sm:$0xf] %vm2239, %v3489
      %3511 = vst.msk [vmem:[%s280 + $0x14] sm:$0xf] %vm2239, %v3490
      %3512 = vst.msk [vmem:[%s280 + $0x18] sm:$0xf] %vm2239, %v3491
      %3513 = vst.msk [vmem:[%s280 + $0x1c] sm:$0xf] %vm2239, %v3492
      %3514 = vst.msk [vmem:[%s280 + $0x20] sm:$0xf] %vm2239, %v3493
      %3515 = vst.msk [vmem:[%s280 + $0x24] sm:$0xf] %vm2239, %v3494
      %3516 = vst.msk [vmem:[%s280 + $0x28] sm:$0xf] %vm2239, %v3495
      %3517 = vst.msk [vmem:[%s280 + $0x2c] sm:$0xf] %vm2239, %v3496
      %3518 = vst.msk [vmem:[%s280 + $0x30] sm:$0xf] %vm2239, %v3497
      %3519 = vst.msk [vmem:[%s280 + $0x34] sm:$0xf] %vm2239, %v3498
      %3520 = vst.msk [vmem:[%s280 + $0x38] sm:$0xf] %vm2239, %v3499
      %3521 = vst.msk [vmem:[%s280 + $0x3c] sm:$0xf] %vm2239, %v3500
      %3522 = vst.msk [vmem:[%s280 + $0x40] sm:$0xf] %vm2239, %v3501
      %3523 = vst.msk [vmem:[%s280 + $0x44] sm:$0xf] %vm2239, %v3502
      %3524 = vst.msk [vmem:[%s280 + $0x48] sm:$0xf] %vm2239, %v3503
      %3525 = vst.msk [vmem:[%s280 + $0x4c] sm:$0xf] %vm2239, %v3504
      %3526 = vst.msk [vmem:[%s280 + $0x50] sm:$0xf] %vm2239, %v3505
      %3527 = vst.msk [vmem:[%s280 + $0x54] sm:$0xf] %vm2239, 0
      %3528 = vst.msk [vmem:[%s280 + $0x58] sm:$0xf] %vm2239, 0
      %3529 = vst.msk [vmem:[%s280 + $0x5c] sm:$0xf] %vm2239, 0
      %3530 = vst.msk [vmem:[%s280 + $0x60] sm:$0xf] %vm2239, 0
      %3531 = vst.msk [vmem:[%s280 + $0x64] sm:$0xf] %vm2239, 0
      %3532 = vst.msk [vmem:[%s280 + $0x68] sm:$0xf] %vm2239, 0
      %3533 = vst.msk [vmem:[%s280 + $0x6c] sm:$0xf] %vm2239, 0
      %3534 = vst.msk [vmem:[%s280 + $0x70] sm:$0xf] %vm2239, 0
      %s3535 = smul.u32 29, %s18
      %p3536 = scmp.lt.s32.totalorder %s3535, 57
      %s3537 = scalar_select %p3536, %s3535, 57
      %s3538 = smul.addr %s3537, 4
      %s3539 = scalar_lea.vmem %s7, %s3538
      // Predicated region
      $region49: #{soft_pi_forward.2} parent=47 // pred_check
        %p3540 = pneg %p188
      $region50: #{soft_pi_forward.2} parent=47 // pred_check_branch
        %3542 = sbr.rel (%p3540) target = $region52
      $region51: #{soft_pi_forward.2} parent=47 // pred_region
        %s3543 = smul.u32 29, %s18
      $region52: #{soft_pi_forward.2} parent=47 // pred_fallthru
        _
    $region48: #{soft_pi_forward.2} parent=5 // pred_fallthru
      _
    %p3544 = scmp.le.s32.totalorder 2, %s13
    // Predicated region
    $region53: #{soft_pi_forward.2} parent=5 // pred_check
      %p3545 = pneg %p3544
    $region54: #{soft_pi_forward.2} parent=5 // pred_check_branch
      %3547 = sbr.rel (%p3545) target = $region56
    $region55: #{soft_pi_forward.2} parent=5 // pred_region
      %s3548 = ssub.s32 %s13, 2
      // Predicated region
      $region57: #{soft_pi_forward.2} parent=55 // pred_check
        %p3549 = pneg %p194
      $region58: #{soft_pi_forward.2} parent=55 // pred_check_branch
        %3551 = sbr.rel (%p3549) target = $region60
      $region59: #{soft_pi_forward.2} parent=55 // pred_region
        %s3552 = smul.u32 29, %s19
        %p3553 = scmp.lt.s32.totalorder %s3552, 57
        %s3554 = scalar_select %p3553, %s3552, 57
        %s3555 = smul.addr %s3554, 4
        %s3556 = scalar_lea.vmem %s7, %s3555
      $region60: #{soft_pi_forward.2} parent=55 // pred_fallthru
        _
    $region56: #{soft_pi_forward.2} parent=5 // pred_fallthru
      _
  $region6: #{soft_pi_forward.2} parent=0 // loop_footer
    %s17 = sadd.s32 1, %s13
  $region7: #{soft_pi_forward.2} parent=0 // loop_footer_branch
    %12 = sbr.rel target = $region3
  $region8: #{soft_pi_forward.2} parent=0 // loop_exit
    _

// kernel: soft_pi_forward.3
$region0: #{soft_pi_forward.3}
  #allocation0 [shape = 'u32[]', space=smem, size = 0x4, offset = 0x4, fixed_abs, tag = 'smem constant byte address 0x4 - core index']
  #allocation1 [shape = 'u32[72,128]{1,0:T(1,128)}', space=vmem, size = 0x9000, scoped, tag = 'internal scratch']
  #allocation2 [shape = 'f32[2,128]{1,0:T(2,128)}', space=vmem, size = 0x400, scoped, tag = 'scratch operand']
  %s0 = inlined_call_operand.vmem [shape: bf16[2,14848], index: 0, kind: input, shape index: {}]
  %s1 = inlined_call_operand.vmem [shape: bf16[14848,128], index: 1, kind: input, shape index: {}]
  %s2 = inlined_call_operand.vmem [shape: f32[1,128], index: 2, kind: input, shape index: {}]
  %s3 = inlined_call_operand.vmem [shape: bf16[128,8], index: 3, kind: input, shape index: {}]
  %s4 = inlined_call_operand.vmem [shape: f32[1,8], index: 4, kind: input, shape index: {}]
  %s5 = inlined_call_operand.hbm [shape: f32[2,8], index: 5, kind: output, shape index: {}]
  %s6 = sld [smem:[#allocation0]]
  $region38: #{soft_pi_forward.3} parent=0
    _
  %s8 = ssub.s32 1, %s6
  %s9 = scalar_select 0, %s8, %s6
  $region1: #{soft_pi_forward.3} parent=0
    #allocation3 [shape = 'u8[1024]{0}', space=vmem, size = 0x400, scoped, tag = 'output window, operand 0, single buffered']
    #allocation4 [shape = 's32[1]{0}', space=sflag, size = 0x4, scoped, tag = 'scoped memory for soft_pi_forward.3']
    %10 = vsyncpa [#allocation4], 0
    // Predicated region
    $region2: #{soft_pi_forward.3} parent=1 // pred_check
      _
    $region3: #{soft_pi_forward.3} parent=1 // pred_check_branch
      %12 = sbr.rel (0) target = $region5
    $region4: #{soft_pi_forward.3} parent=1 // pred_region
      _
    $region5: #{soft_pi_forward.3} parent=1 // pred_fallthru
      _
    // Predicated region
    $region6: #{soft_pi_forward.3} parent=1 // pred_check
      _
    $region7: #{soft_pi_forward.3} parent=1 // pred_check_branch
      %14 = sbr.rel (0) target = $region9
    $region8: #{soft_pi_forward.3} parent=1 // pred_region
      _
    $region9: #{soft_pi_forward.3} parent=1 // pred_fallthru
      _
    // Predicated region
    $region10: #{soft_pi_forward.3} parent=1 // pred_check
      _
    $region11: #{soft_pi_forward.3} parent=1 // pred_check_branch
      %16 = sbr.rel (0) target = $region13
    $region12: #{soft_pi_forward.3} parent=1 // pred_region
      _
    $region13: #{soft_pi_forward.3} parent=1 // pred_fallthru
      _
    // Predicated region
    $region14: #{soft_pi_forward.3} parent=1 // pred_check
      _
    $region15: #{soft_pi_forward.3} parent=1 // pred_check_branch
      %18 = sbr.rel (0) target = $region17
    $region16: #{soft_pi_forward.3} parent=1 // pred_region
      _
    $region17: #{soft_pi_forward.3} parent=1 // pred_fallthru
      _
    // Predicated region
    $region18: #{soft_pi_forward.3} parent=1 // pred_check
      _
    $region19: #{soft_pi_forward.3} parent=1 // pred_check_branch
      %20 = sbr.rel (0) target = $region21
    $region20: #{soft_pi_forward.3} parent=1 // pred_region
      _
    $region21: #{soft_pi_forward.3} parent=1 // pred_fallthru
      _
    %p21 = scmp.eq.s32.totalorder 0, 0
    // Predicated region
    $region22: #{soft_pi_forward.3} parent=1 // pred_check
      %p22 = pneg %p21
    $region23: #{soft_pi_forward.3} parent=1 // pred_check_branch
      %24 = sbr.rel (%p22) target = $region25
    $region24: #{soft_pi_forward.3} parent=1 // pred_region
      %25 = vst [vmem:[#allocation2] sm:$0x3] 0.0
    $region25: #{soft_pi_forward.3} parent=1 // pred_fallthru
      _
    %v26 = vld [vmem:[#allocation2] sm:$0x3]
    %v27 = vld [vmem:[%s0] sm:$0xff]
    %v28 = vld [vmem:[%s0 + $0x8] sm:$0xff]
    %v29 = vld [vmem:[%s0 + $0x10] sm:$0xff]
    %v30 = vld [vmem:[%s0 + $0x18] sm:$0xff]
    %v31 = vld [vmem:[%s0 + $0x20] sm:$0xff]
    %v32 = vld [vmem:[%s0 + $0x28] sm:$0xff]
    %v33 = vld [vmem:[%s0 + $0x30] sm:$0xff]
    %v34 = vld [vmem:[%s0 + $0x38] sm:$0xff]
    %v35 = vld [vmem:[%s0 + $0x40] sm:$0xff]
    %v36 = vld [vmem:[%s0 + $0x48] sm:$0xff]
    %v37 = vld [vmem:[%s0 + $0x50] sm:$0xff]
    %v38 = vld [vmem:[%s0 + $0x58] sm:$0xff]
    %v39 = vld [vmem:[%s0 + $0x60] sm:$0xff]
    %v40 = vld [vmem:[%s0 + $0x68] sm:$0xff]
    %v41 = vld [vmem:[%s0 + $0x70] sm:$0xf]
    %v42 = vld [vmem:[%s1] sm:$0xf]
    %v43 = vld [vmem:[%s1 + $0x4] sm:$0xf]
    %v44 = vld [vmem:[%s1 + $0x8] sm:$0xf]
    %v45 = vld [vmem:[%s1 + $0xc] sm:$0xf]
    %v46 = vld [vmem:[%s1 + $0x10] sm:$0xf]
    %v47 = vld [vmem:[%s1 + $0x14] sm:$0xf]
    %v48 = vld [vmem:[%s1 + $0x18] sm:$0xf]
    %v49 = vld [vmem:[%s1 + $0x1c] sm:$0xf]
    %v50 = vld [vmem:[%s1 + $0x20] sm:$0xf]
    %v51 = vld [vmem:[%s1 + $0x24] sm:$0xf]
    %v52 = vld [vmem:[%s1 + $0x28] sm:$0xf]
    %v53 = vld [vmem:[%s1 + $0x2c] sm:$0xf]
    %v54 = vld [vmem:[%s1 + $0x30] sm:$0xf]
    %v55 = vld [vmem:[%s1 + $0x34] sm:$0xf]
    %v56 = vld [vmem:[%s1 + $0x38] sm:$0xf]
    %v57 = vld [vmem:[%s1 + $0x3c] sm:$0xf]
    %v58 = vld [vmem:[%s1 + $0x40] sm:$0xf]
    %v59 = vld [vmem:[%s1 + $0x44] sm:$0xf]
    %v60 = vld [vmem:[%s1 + $0x48] sm:$0xf]
    %v61 = vld [vmem:[%s1 + $0x4c] sm:$0xf]
    %v62 = vld [vmem:[%s1 + $0x50] sm:$0xf]
    %v63 = vld [vmem:[%s1 + $0x54] sm:$0xf]
    %v64 = vld [vmem:[%s1 + $0x58] sm:$0xf]
    %v65 = vld [vmem:[%s1 + $0x5c] sm:$0xf]
    %v66 = vld [vmem:[%s1 + $0x60] sm:$0xf]
    %v67 = vld [vmem:[%s1 + $0x64] sm:$0xf]
    %v68 = vld [vmem:[%s1 + $0x68] sm:$0xf]
    %v69 = vld [vmem:[%s1 + $0x6c] sm:$0xf]
    %v70 = vld [vmem:[%s1 + $0x70] sm:$0xf]
    %v71 = vld [vmem:[%s1 + $0x74] sm:$0xf]
    %v72 = vld [vmem:[%s1 + $0x78] sm:$0xf]
    %v73 = vld [vmem:[%s1 + $0x7c] sm:$0xf]
    %v74 = vld [vmem:[%s1 + $0x80] sm:$0xf]
    %v75 = vld [vmem:[%s1 + $0x84] sm:$0xf]
    %v76 = vld [vmem:[%s1 + $0x88] sm:$0xf]
    %v77 = vld [vmem:[%s1 + $0x8c] sm:$0xf]
    %v78 = vld [vmem:[%s1 + $0x90] sm:$0xf]
    %v79 = vld [vmem:[%s1 + $0x94] sm:$0xf]
    %v80 = vld [vmem:[%s1 + $0x98] sm:$0xf]
    %v81 = vld [vmem:[%s1 + $0x9c] sm:$0xf]
    %v82 = vld [vmem:[%s1 + $0xa0] sm:$0xf]
    %v83 = vld [vmem:[%s1 + $0xa4] sm:$0xf]
    %v84 = vld [vmem:[%s1 + $0xa8] sm:$0xf]
    %v85 = vld [vmem:[%s1 + $0xac] sm:$0xf]
    %v86 = vld [vmem:[%s1 + $0xb0] sm:$0xf]
    %v87 = vld [vmem:[%s1 + $0xb4] sm:$0xf]
    %v88 = vld [vmem:[%s1 + $0xb8] sm:$0xf]
    %v89 = vld [vmem:[%s1 + $0xbc] sm:$0xf]
    %v90 = vld [vmem:[%s1 + $0xc0] sm:$0xf]
    %v91 = vld [vmem:[%s1 + $0xc4] sm:$0xf]
    %v92 = vld [vmem:[%s1 + $0xc8] sm:$0xf]
    %v93 = vld [vmem:[%s1 + $0xcc] sm:$0xf]
    %v94 = vld [vmem:[%s1 + $0xd0] sm:$0xf]
    %v95 = vld [vmem:[%s1 + $0xd4] sm:$0xf]
    %v96 = vld [vmem:[%s1 + $0xd8] sm:$0xf]
    %v97 = vld [vmem:[%s1 + $0xdc] sm:$0xf]
    %v98 = vld [vmem:[%s1 + $0xe0] sm:$0xf]
    %v99 = vld [vmem:[%s1 + $0xe4] sm:$0xf]
    %v100 = vld [vmem:[%s1 + $0xe8] sm:$0xf]
    %v101 = vld [vmem:[%s1 + $0xec] sm:$0xf]
    %v102 = vld [vmem:[%s1 + $0xf0] sm:$0xf]
    %v103 = vld [vmem:[%s1 + $0xf4] sm:$0xf]
    %v104 = vld [vmem:[%s1 + $0xf8] sm:$0xf]
    %v105 = vld [vmem:[%s1 + $0xfc] sm:$0xf]
    %v106 = vld [vmem:[%s1 + $0x100] sm:$0xf]
    %v107 = vld [vmem:[%s1 + $0x104] sm:$0xf]
    %v108 = vld [vmem:[%s1 + $0x108] sm:$0xf]
    %v109 = vld [vmem:[%s1 + $0x10c] sm:$0xf]
    %v110 = vld [vmem:[%s1 + $0x110] sm:$0xf]
    %v111 = vld [vmem:[%s1 + $0x114] sm:$0xf]
    %v112 = vld [vmem:[%s1 + $0x118] sm:$0xf]
    %v113 = vld [vmem:[%s1 + $0x11c] sm:$0xf]
    %v114 = vld [vmem:[%s1 + $0x120] sm:$0xf]
    %v115 = vld [vmem:[%s1 + $0x124] sm:$0xf]
    %v116 = vld [vmem:[%s1 + $0x128] sm:$0xf]
    %v117 = vld [vmem:[%s1 + $0x12c] sm:$0xf]
    %v118 = vld [vmem:[%s1 + $0x130] sm:$0xf]
    %v119 = vld [vmem:[%s1 + $0x134] sm:$0xf]
    %v120 = vld [vmem:[%s1 + $0x138] sm:$0xf]
    %v121 = vld [vmem:[%s1 + $0x13c] sm:$0xf]
    %v122 = vld [vmem:[%s1 + $0x140] sm:$0xf]
    %v123 = vld [vmem:[%s1 + $0x144] sm:$0xf]
    %v124 = vld [vmem:[%s1 + $0x148] sm:$0xf]
    %v125 = vld [vmem:[%s1 + $0x14c] sm:$0xf]
    %v126 = vld [vmem:[%s1 + $0x150] sm:$0xf]
    %v127 = vld [vmem:[%s1 + $0x154] sm:$0xf]
    %v128 = vld [vmem:[%s1 + $0x158] sm:$0xf]
    %v129 = vld [vmem:[%s1 + $0x15c] sm:$0xf]
    %v130 = vld [vmem:[%s1 + $0x160] sm:$0xf]
    %v131 = vld [vmem:[%s1 + $0x164] sm:$0xf]
    %v132 = vld [vmem:[%s1 + $0x168] sm:$0xf]
    %v133 = vld [vmem:[%s1 + $0x16c] sm:$0xf]
    %v134 = vld [vmem:[%s1 + $0x170] sm:$0xf]
    %v135 = vld [vmem:[%s1 + $0x174] sm:$0xf]
    %v136 = vld [vmem:[%s1 + $0x178] sm:$0xf]
    %v137 = vld [vmem:[%s1 + $0x17c] sm:$0xf]
    %v138 = vld [vmem:[%s1 + $0x180] sm:$0xf]
    %v139 = vld [vmem:[%s1 + $0x184] sm:$0xf]
    %v140 = vld [vmem:[%s1 + $0x188] sm:$0xf]
    %v141 = vld [vmem:[%s1 + $0x18c] sm:$0xf]
    %v142 = vld [vmem:[%s1 + $0x190] sm:$0xf]
    %v143 = vld [vmem:[%s1 + $0x194] sm:$0xf]
    %v144 = vld [vmem:[%s1 + $0x198] sm:$0xf]
    %v145 = vld [vmem:[%s1 + $0x19c] sm:$0xf]
    %v146 = vld [vmem:[%s1 + $0x1a0] sm:$0xf]
    %v147 = vld [vmem:[%s1 + $0x1a4] sm:$0xf]
    %v148 = vld [vmem:[%s1 + $0x1a8] sm:$0xf]
    %v149 = vld [vmem:[%s1 + $0x1ac] sm:$0xf]
    %v150 = vld [vmem:[%s1 + $0x1b0] sm:$0xf]
    %v151 = vld [vmem:[%s1 + $0x1b4] sm:$0xf]
    %v152 = vld [vmem:[%s1 + $0x1b8] sm:$0xf]
    %v153 = vld [vmem:[%s1 + $0x1bc] sm:$0xf]
    %v154 = vld [vmem:[%s1 + $0x1c0] sm:$0xf]
    %v155 = vld [vmem:[%s1 + $0x1c4] sm:$0xf]
    %v156 = vld [vmem:[%s1 + $0x1c8] sm:$0xf]
    %v157 = vld [vmem:[%s1 + $0x1cc] sm:$0xf]
    %v158 = vld [vmem:[%s1 + $0x1d0] sm:$0xf]
    %v159 = vld [vmem:[%s1 + $0x1d4] sm:$0xf]
    %v160 = vld [vmem:[%s1 + $0x1d8] sm:$0xf]
    %v161 = vld [vmem:[%s1 + $0x1dc] sm:$0xf]
    %v162 = vld [vmem:[%s1 + $0x1e0] sm:$0xf]
    %v163 = vld [vmem:[%s1 + $0x1e4] sm:$0xf]
    %v164 = vld [vmem:[%s1 + $0x1e8] sm:$0xf]
    %v165 = vld [vmem:[%s1 + $0x1ec] sm:$0xf]
    %v166 = vld [vmem:[%s1 + $0x1f0] sm:$0xf]
    %v167 = vld [vmem:[%s1 + $0x1f4] sm:$0xf]
    %v168 = vld [vmem:[%s1 + $0x1f8] sm:$0xf]
    %v169 = vld [vmem:[%s1 + $0x1fc] sm:$0xf]
    %v170 = vld [vmem:[%s1 + $0x200] sm:$0xf]
    %v171 = vld [vmem:[%s1 + $0x204] sm:$0xf]
    %v172 = vld [vmem:[%s1 + $0x208] sm:$0xf]
    %v173 = vld [vmem:[%s1 + $0x20c] sm:$0xf]
    %v174 = vld [vmem:[%s1 + $0x210] sm:$0xf]
    %v175 = vld [vmem:[%s1 + $0x214] sm:$0xf]
    %v176 = vld [vmem:[%s1 + $0x218] sm:$0xf]
    %v177 = vld [vmem:[%s1 + $0x21c] sm:$0xf]
    %v178 = vld [vmem:[%s1 + $0x220] sm:$0xf]
    %v179 = vld [vmem:[%s1 + $0x224] sm:$0xf]
    %v180 = vld [vmem:[%s1 + $0x228] sm:$0xf]
    %v181 = vld [vmem:[%s1 + $0x22c] sm:$0xf]
    %v182 = vld [vmem:[%s1 + $0x230] sm:$0xf]
    %v183 = vld [vmem:[%s1 + $0x234] sm:$0xf]
    %v184 = vld [vmem:[%s1 + $0x238] sm:$0xf]
    %v185 = vld [vmem:[%s1 + $0x23c] sm:$0xf]
    %v186 = vld [vmem:[%s1 + $0x240] sm:$0xf]
    %v187 = vld [vmem:[%s1 + $0x244] sm:$0xf]
    %v188 = vld [vmem:[%s1 + $0x248] sm:$0xf]
    %v189 = vld [vmem:[%s1 + $0x24c] sm:$0xf]
    %v190 = vld [vmem:[%s1 + $0x250] sm:$0xf]
    %v191 = vld [vmem:[%s1 + $0x254] sm:$0xf]
    %v192 = vld [vmem:[%s1 + $0x258] sm:$0xf]
    %v193 = vld [vmem:[%s1 + $0x25c] sm:$0xf]
    %v194 = vld [vmem:[%s1 + $0x260] sm:$0xf]
    %v195 = vld [vmem:[%s1 + $0x264] sm:$0xf]
    %v196 = vld [vmem:[%s1 + $0x268] sm:$0xf]
    %v197 = vld [vmem:[%s1 + $0x26c] sm:$0xf]
    %v198 = vld [vmem:[%s1 + $0x270] sm:$0xf]
    %v199 = vld [vmem:[%s1 + $0x274] sm:$0xf]
    %v200 = vld [vmem:[%s1 + $0x278] sm:$0xf]
    %v201 = vld [vmem:[%s1 + $0x27c] sm:$0xf]
    %v202 = vld [vmem:[%s1 + $0x280] sm:$0xf]
    %v203 = vld [vmem:[%s1 + $0x284] sm:$0xf]
    %v204 = vld [vmem:[%s1 + $0x288] sm:$0xf]
    %v205 = vld [vmem:[%s1 + $0x28c] sm:$0xf]
    %v206 = vld [vmem:[%s1 + $0x290] sm:$0xf]
    %v207 = vld [vmem:[%s1 + $0x294] sm:$0xf]
    %v208 = vld [vmem:[%s1 + $0x298] sm:$0xf]
    %v209 = vld [vmem:[%s1 + $0x29c] sm:$0xf]
    %v210 = vld [vmem:[%s1 + $0x2a0] sm:$0xf]
    %v211 = vld [vmem:[%s1 + $0x2a4] sm:$0xf]
    %v212 = vld [vmem:[%s1 + $0x2a8] sm:$0xf]
    %v213 = vld [vmem:[%s1 + $0x2ac] sm:$0xf]
    %v214 = vld [vmem:[%s1 + $0x2b0] sm:$0xf]
    %v215 = vld [vmem:[%s1 + $0x2b4] sm:$0xf]
    %v216 = vld [vmem:[%s1 + $0x2b8] sm:$0xf]
    %v217 = vld [vmem:[%s1 + $0x2bc] sm:$0xf]
    %v218 = vld [vmem:[%s1 + $0x2c0] sm:$0xf]
    %v219 = vld [vmem:[%s1 + $0x2c4] sm:$0xf]
    %v220 = vld [vmem:[%s1 + $0x2c8] sm:$0xf]
    %v221 = vld [vmem:[%s1 + $0x2cc] sm:$0xf]
    %v222 = vld [vmem:[%s1 + $0x2d0] sm:$0xf]
    %v223 = vld [vmem:[%s1 + $0x2d4] sm:$0xf]
    %v224 = vld [vmem:[%s1 + $0x2d8] sm:$0xf]
    %v225 = vld [vmem:[%s1 + $0x2dc] sm:$0xf]
    %v226 = vld [vmem:[%s1 + $0x2e0] sm:$0xf]
    %v227 = vld [vmem:[%s1 + $0x2e4] sm:$0xf]
    %v228 = vld [vmem:[%s1 + $0x2e8] sm:$0xf]
    %v229 = vld [vmem:[%s1 + $0x2ec] sm:$0xf]
    %v230 = vld [vmem:[%s1 + $0x2f0] sm:$0xf]
    %v231 = vld [vmem:[%s1 + $0x2f4] sm:$0xf]
    %v232 = vld [vmem:[%s1 + $0x2f8] sm:$0xf]
    %v233 = vld [vmem:[%s1 + $0x2fc] sm:$0xf]
    %v234 = vld [vmem:[%s1 + $0x300] sm:$0xf]
    %v235 = vld [vmem:[%s1 + $0x304] sm:$0xf]
    %v236 = vld [vmem:[%s1 + $0x308] sm:$0xf]
    %v237 = vld [vmem:[%s1 + $0x30c] sm:$0xf]
    %v238 = vld [vmem:[%s1 + $0x310] sm:$0xf]
    %v239 = vld [vmem:[%s1 + $0x314] sm:$0xf]
    %v240 = vld [vmem:[%s1 + $0x318] sm:$0xf]
    %v241 = vld [vmem:[%s1 + $0x31c] sm:$0xf]
    %v242 = vld [vmem:[%s1 + $0x320] sm:$0xf]
    %v243 = vld [vmem:[%s1 + $0x324] sm:$0xf]
    %v244 = vld [vmem:[%s1 + $0x328] sm:$0xf]
    %v245 = vld [vmem:[%s1 + $0x32c] sm:$0xf]
    %v246 = vld [vmem:[%s1 + $0x330] sm:$0xf]
    %v247 = vld [vmem:[%s1 + $0x334] sm:$0xf]
    %v248 = vld [vmem:[%s1 + $0x338] sm:$0xf]
    %v249 = vld [vmem:[%s1 + $0x33c] sm:$0xf]
    %v250 = vld [vmem:[%s1 + $0x340] sm:$0xf]
    %v251 = vld [vmem:[%s1 + $0x344] sm:$0xf]
    %v252 = vld [vmem:[%s1 + $0x348] sm:$0xf]
    %v253 = vld [vmem:[%s1 + $0x34c] sm:$0xf]
    %v254 = vld [vmem:[%s1 + $0x350] sm:$0xf]
    %v255 = vld [vmem:[%s1 + $0x354] sm:$0xf]
    %v256 = vld [vmem:[%s1 + $0x358] sm:$0xf]
    %v257 = vld [vmem:[%s1 + $0x35c] sm:$0xf]
    %v258 = vld [vmem:[%s1 + $0x360] sm:$0xf]
    %v259 = vld [vmem:[%s1 + $0x364] sm:$0xf]
    %v260 = vld [vmem:[%s1 + $0x368] sm:$0xf]
    %v261 = vld [vmem:[%s1 + $0x36c] sm:$0xf]
    %v262 = vld [vmem:[%s1 + $0x370] sm:$0xf]
    %v263 = vld [vmem:[%s1 + $0x374] sm:$0xf]
    %v264 = vld [vmem:[%s1 + $0x378] sm:$0xf]
    %v265 = vld [vmem:[%s1 + $0x37c] sm:$0xf]
    %v266 = vld [vmem:[%s1 + $0x380] sm:$0xf]
    %v267 = vld [vmem:[%s1 + $0x384] sm:$0xf]
    %v268 = vld [vmem:[%s1 + $0x388] sm:$0xf]
    %v269 = vld [vmem:[%s1 + $0x38c] sm:$0xf]
    %v270 = vld [vmem:[%s1 + $0x390] sm:$0xf]
    %v271 = vld [vmem:[%s1 + $0x394] sm:$0xf]
    %v272 = vld [vmem:[%s1 + $0x398] sm:$0xf]
    %v273 = vld [vmem:[%s1 + $0x39c] sm:$0xf]
    %v274 = vld [vmem:[%s1 + $0x3a0] sm:$0xf]
    %v275 = vld [vmem:[%s1 + $0x3a4] sm:$0xf]
    %v276 = vld [vmem:[%s1 + $0x3a8] sm:$0xf]
    %v277 = vld [vmem:[%s1 + $0x3ac] sm:$0xf]
    %v278 = vld [vmem:[%s1 + $0x3b0] sm:$0xf]
    %v279 = vld [vmem:[%s1 + $0x3b4] sm:$0xf]
    %v280 = vld [vmem:[%s1 + $0x3b8] sm:$0xf]
    %v281 = vld [vmem:[%s1 + $0x3bc] sm:$0xf]
    %v282 = vld [vmem:[%s1 + $0x3c0] sm:$0xf]
    %v283 = vld [vmem:[%s1 + $0x3c4] sm:$0xf]
    %v284 = vld [vmem:[%s1 + $0x3c8] sm:$0xf]
    %v285 = vld [vmem:[%s1 + $0x3cc] sm:$0xf]
    %v286 = vld [vmem:[%s1 + $0x3d0] sm:$0xf]
    %v287 = vld [vmem:[%s1 + $0x3d4] sm:$0xf]
    %v288 = vld [vmem:[%s1 + $0x3d8] sm:$0xf]
    %v289 = vld [vmem:[%s1 + $0x3dc] sm:$0xf]
    %v290 = vld [vmem:[%s1 + $0x3e0] sm:$0xf]
    %v291 = vld [vmem:[%s1 + $0x3e4] sm:$0xf]
    %v292 = vld [vmem:[%s1 + $0x3e8] sm:$0xf]
    %v293 = vld [vmem:[%s1 + $0x3ec] sm:$0xf]
    %v294 = vld [vmem:[%s1 + $0x3f0] sm:$0xf]
    %v295 = vld [vmem:[%s1 + $0x3f4] sm:$0xf]
    %v296 = vld [vmem:[%s1 + $0x3f8] sm:$0xf]
    %v297 = vld [vmem:[%s1 + $0x3fc] sm:$0xf]
    %v298 = vld [vmem:[%s1 + $0x400] sm:$0xf]
    %v299 = vld [vmem:[%s1 + $0x404] sm:$0xf]
    %v300 = vld [vmem:[%s1 + $0x408] sm:$0xf]
    %v301 = vld [vmem:[%s1 + $0x40c] sm:$0xf]
    %v302 = vld [vmem:[%s1 + $0x410] sm:$0xf]
    %v303 = vld [vmem:[%s1 + $0x414] sm:$0xf]
    %v304 = vld [vmem:[%s1 + $0x418] sm:$0xf]
    %v305 = vld [vmem:[%s1 + $0x41c] sm:$0xf]
    %v306 = vld [vmem:[%s1 + $0x420] sm:$0xf]
    %v307 = vld [vmem:[%s1 + $0x424] sm:$0xf]
    %v308 = vld [vmem:[%s1 + $0x428] sm:$0xf]
    %v309 = vld [vmem:[%s1 + $0x42c] sm:$0xf]
    %v310 = vld [vmem:[%s1 + $0x430] sm:$0xf]
    %v311 = vld [vmem:[%s1 + $0x434] sm:$0xf]
    %v312 = vld [vmem:[%s1 + $0x438] sm:$0xf]
    %v313 = vld [vmem:[%s1 + $0x43c] sm:$0xf]
    %v314 = vld [vmem:[%s1 + $0x440] sm:$0xf]
    %v315 = vld [vmem:[%s1 + $0x444] sm:$0xf]
    %v316 = vld [vmem:[%s1 + $0x448] sm:$0xf]
    %v317 = vld [vmem:[%s1 + $0x44c] sm:$0xf]
    %v318 = vld [vmem:[%s1 + $0x450] sm:$0xf]
    %v319 = vld [vmem:[%s1 + $0x454] sm:$0xf]
    %v320 = vld [vmem:[%s1 + $0x458] sm:$0xf]
    %v321 = vld [vmem:[%s1 + $0x45c] sm:$0xf]
    %v322 = vld [vmem:[%s1 + $0x460] sm:$0xf]
    %v323 = vld [vmem:[%s1 + $0x464] sm:$0xf]
    %v324 = vld [vmem:[%s1 + $0x468] sm:$0xf]
    %v325 = vld [vmem:[%s1 + $0x46c] sm:$0xf]
    %v326 = vld [vmem:[%s1 + $0x470] sm:$0xf]
    %v327 = vld [vmem:[%s1 + $0x474] sm:$0xf]
    %v328 = vld [vmem:[%s1 + $0x478] sm:$0xf]
    %v329 = vld [vmem:[%s1 + $0x47c] sm:$0xf]
    %v330 = vld [vmem:[%s1 + $0x480] sm:$0xf]
    %v331 = vld [vmem:[%s1 + $0x484] sm:$0xf]
    %v332 = vld [vmem:[%s1 + $0x488] sm:$0xf]
    %v333 = vld [vmem:[%s1 + $0x48c] sm:$0xf]
    %v334 = vld [vmem:[%s1 + $0x490] sm:$0xf]
    %v335 = vld [vmem:[%s1 + $0x494] sm:$0xf]
    %v336 = vld [vmem:[%s1 + $0x498] sm:$0xf]
    %v337 = vld [vmem:[%s1 + $0x49c] sm:$0xf]
    %v338 = vld [vmem:[%s1 + $0x4a0] sm:$0xf]
    %v339 = vld [vmem:[%s1 + $0x4a4] sm:$0xf]
    %v340 = vld [vmem:[%s1 + $0x4a8] sm:$0xf]
    %v341 = vld [vmem:[%s1 + $0x4ac] sm:$0xf]
    %v342 = vld [vmem:[%s1 + $0x4b0] sm:$0xf]
    %v343 = vld [vmem:[%s1 + $0x4b4] sm:$0xf]
    %v344 = vld [vmem:[%s1 + $0x4b8] sm:$0xf]
    %v345 = vld [vmem:[%s1 + $0x4bc] sm:$0xf]
    %v346 = vld [vmem:[%s1 + $0x4c0] sm:$0xf]
    %v347 = vld [vmem:[%s1 + $0x4c4] sm:$0xf]
    %v348 = vld [vmem:[%s1 + $0x4c8] sm:$0xf]
    %v349 = vld [vmem:[%s1 + $0x4cc] sm:$0xf]
    %v350 = vld [vmem:[%s1 + $0x4d0] sm:$0xf]
    %v351 = vld [vmem:[%s1 + $0x4d4] sm:$0xf]
    %v352 = vld [vmem:[%s1 + $0x4d8] sm:$0xf]
    %v353 = vld [vmem:[%s1 + $0x4dc] sm:$0xf]
    %v354 = vld [vmem:[%s1 + $0x4e0] sm:$0xf]
    %v355 = vld [vmem:[%s1 + $0x4e4] sm:$0xf]
    %v356 = vld [vmem:[%s1 + $0x4e8] sm:$0xf]
    %v357 = vld [vmem:[%s1 + $0x4ec] sm:$0xf]
    %v358 = vld [vmem:[%s1 + $0x4f0] sm:$0xf]
    %v359 = vld [vmem:[%s1 + $0x4f4] sm:$0xf]
    %v360 = vld [vmem:[%s1 + $0x4f8] sm:$0xf]
    %v361 = vld [vmem:[%s1 + $0x4fc] sm:$0xf]
    %v362 = vld [vmem:[%s1 + $0x500] sm:$0xf]
    %v363 = vld [vmem:[%s1 + $0x504] sm:$0xf]
    %v364 = vld [vmem:[%s1 + $0x508] sm:$0xf]
    %v365 = vld [vmem:[%s1 + $0x50c] sm:$0xf]
    %v366 = vld [vmem:[%s1 + $0x510] sm:$0xf]
    %v367 = vld [vmem:[%s1 + $0x514] sm:$0xf]
    %v368 = vld [vmem:[%s1 + $0x518] sm:$0xf]
    %v369 = vld [vmem:[%s1 + $0x51c] sm:$0xf]
    %v370 = vld [vmem:[%s1 + $0x520] sm:$0xf]
    %v371 = vld [vmem:[%s1 + $0x524] sm:$0xf]
    %v372 = vld [vmem:[%s1 + $0x528] sm:$0xf]
    %v373 = vld [vmem:[%s1 + $0x52c] sm:$0xf]
    %v374 = vld [vmem:[%s1 + $0x530] sm:$0xf]
    %v375 = vld [vmem:[%s1 + $0x534] sm:$0xf]
    %v376 = vld [vmem:[%s1 + $0x538] sm:$0xf]
    %v377 = vld [vmem:[%s1 + $0x53c] sm:$0xf]
    %v378 = vld [vmem:[%s1 + $0x540] sm:$0xf]
    %v379 = vld [vmem:[%s1 + $0x544] sm:$0xf]
    %v380 = vld [vmem:[%s1 + $0x548] sm:$0xf]
    %v381 = vld [vmem:[%s1 + $0x54c] sm:$0xf]
    %v382 = vld [vmem:[%s1 + $0x550] sm:$0xf]
    %v383 = vld [vmem:[%s1 + $0x554] sm:$0xf]
    %v384 = vld [vmem:[%s1 + $0x558] sm:$0xf]
    %v385 = vld [vmem:[%s1 + $0x55c] sm:$0xf]
    %v386 = vld [vmem:[%s1 + $0x560] sm:$0xf]
    %v387 = vld [vmem:[%s1 + $0x564] sm:$0xf]
    %v388 = vld [vmem:[%s1 + $0x568] sm:$0xf]
    %v389 = vld [vmem:[%s1 + $0x56c] sm:$0xf]
    %v390 = vld [vmem:[%s1 + $0x570] sm:$0xf]
    %v391 = vld [vmem:[%s1 + $0x574] sm:$0xf]
    %v392 = vld [vmem:[%s1 + $0x578] sm:$0xf]
    %v393 = vld [vmem:[%s1 + $0x57c] sm:$0xf]
    %v394 = vld [vmem:[%s1 + $0x580] sm:$0xf]
    %v395 = vld [vmem:[%s1 + $0x584] sm:$0xf]
    %v396 = vld [vmem:[%s1 + $0x588] sm:$0xf]
    %v397 = vld [vmem:[%s1 + $0x58c] sm:$0xf]
    %v398 = vld [vmem:[%s1 + $0x590] sm:$0xf]
    %v399 = vld [vmem:[%s1 + $0x594] sm:$0xf]
    %v400 = vld [vmem:[%s1 + $0x598] sm:$0xf]
    %v401 = vld [vmem:[%s1 + $0x59c] sm:$0xf]
    %v402 = vld [vmem:[%s1 + $0x5a0] sm:$0xf]
    %v403 = vld [vmem:[%s1 + $0x5a4] sm:$0xf]
    %v404 = vld [vmem:[%s1 + $0x5a8] sm:$0xf]
    %v405 = vld [vmem:[%s1 + $0x5ac] sm:$0xf]
    %v406 = vld [vmem:[%s1 + $0x5b0] sm:$0xf]
    %v407 = vld [vmem:[%s1 + $0x5b4] sm:$0xf]
    %v408 = vld [vmem:[%s1 + $0x5b8] sm:$0xf]
    %v409 = vld [vmem:[%s1 + $0x5bc] sm:$0xf]
    %v410 = vld [vmem:[%s1 + $0x5c0] sm:$0xf]
    %v411 = vld [vmem:[%s1 + $0x5c4] sm:$0xf]
    %v412 = vld [vmem:[%s1 + $0x5c8] sm:$0xf]
    %v413 = vld [vmem:[%s1 + $0x5cc] sm:$0xf]
    %v414 = vld [vmem:[%s1 + $0x5d0] sm:$0xf]
    %v415 = vld [vmem:[%s1 + $0x5d4] sm:$0xf]
    %v416 = vld [vmem:[%s1 + $0x5d8] sm:$0xf]
    %v417 = vld [vmem:[%s1 + $0x5dc] sm:$0xf]
    %v418 = vld [vmem:[%s1 + $0x5e0] sm:$0xf]
    %v419 = vld [vmem:[%s1 + $0x5e4] sm:$0xf]
    %v420 = vld [vmem:[%s1 + $0x5e8] sm:$0xf]
    %v421 = vld [vmem:[%s1 + $0x5ec] sm:$0xf]
    %v422 = vld [vmem:[%s1 + $0x5f0] sm:$0xf]
    %v423 = vld [vmem:[%s1 + $0x5f4] sm:$0xf]
    %v424 = vld [vmem:[%s1 + $0x5f8] sm:$0xf]
    %v425 = vld [vmem:[%s1 + $0x5fc] sm:$0xf]
    %v426 = vld [vmem:[%s1 + $0x600] sm:$0xf]
    %v427 = vld [vmem:[%s1 + $0x604] sm:$0xf]
    %v428 = vld [vmem:[%s1 + $0x608] sm:$0xf]
    %v429 = vld [vmem:[%s1 + $0x60c] sm:$0xf]
    %v430 = vld [vmem:[%s1 + $0x610] sm:$0xf]
    %v431 = vld [vmem:[%s1 + $0x614] sm:$0xf]
    %v432 = vld [vmem:[%s1 + $0x618] sm:$0xf]
    %v433 = vld [vmem:[%s1 + $0x61c] sm:$0xf]
    %v434 = vld [vmem:[%s1 + $0x620] sm:$0xf]
    %v435 = vld [vmem:[%s1 + $0x624] sm:$0xf]
    %v436 = vld [vmem:[%s1 + $0x628] sm:$0xf]
    %v437 = vld [vmem:[%s1 + $0x62c] sm:$0xf]
    %v438 = vld [vmem:[%s1 + $0x630] sm:$0xf]
    %v439 = vld [vmem:[%s1 + $0x634] sm:$0xf]
    %v440 = vld [vmem:[%s1 + $0x638] sm:$0xf]
    %v441 = vld [vmem:[%s1 + $0x63c] sm:$0xf]
    %v442 = vld [vmem:[%s1 + $0x640] sm:$0xf]
    %v443 = vld [vmem:[%s1 + $0x644] sm:$0xf]
    %v444 = vld [vmem:[%s1 + $0x648] sm:$0xf]
    %v445 = vld [vmem:[%s1 + $0x64c] sm:$0xf]
    %v446 = vld [vmem:[%s1 + $0x650] sm:$0xf]
    %v447 = vld [vmem:[%s1 + $0x654] sm:$0xf]
    %v448 = vld [vmem:[%s1 + $0x658] sm:$0xf]
    %v449 = vld [vmem:[%s1 + $0x65c] sm:$0xf]
    %v450 = vld [vmem:[%s1 + $0x660] sm:$0xf]
    %v451 = vld [vmem:[%s1 + $0x664] sm:$0xf]
    %v452 = vld [vmem:[%s1 + $0x668] sm:$0xf]
    %v453 = vld [vmem:[%s1 + $0x66c] sm:$0xf]
    %v454 = vld [vmem:[%s1 + $0x670] sm:$0xf]
    %v455 = vld [vmem:[%s1 + $0x674] sm:$0xf]
    %v456 = vld [vmem:[%s1 + $0x678] sm:$0xf]
    %v457 = vld [vmem:[%s1 + $0x67c] sm:$0xf]
    %v458 = vld [vmem:[%s1 + $0x680] sm:$0xf]
    %v459 = vld [vmem:[%s1 + $0x684] sm:$0xf]
    %v460 = vld [vmem:[%s1 + $0x688] sm:$0xf]
    %v461 = vld [vmem:[%s1 + $0x68c] sm:$0xf]
    %v462 = vld [vmem:[%s1 + $0x690] sm:$0xf]
    %v463 = vld [vmem:[%s1 + $0x694] sm:$0xf]
    %v464 = vld [vmem:[%s1 + $0x698] sm:$0xf]
    %v465 = vld [vmem:[%s1 + $0x69c] sm:$0xf]
    %v466 = vld [vmem:[%s1 + $0x6a0] sm:$0xf]
    %v467 = vld [vmem:[%s1 + $0x6a4] sm:$0xf]
    %v468 = vld [vmem:[%s1 + $0x6a8] sm:$0xf]
    %v469 = vld [vmem:[%s1 + $0x6ac] sm:$0xf]
    %v470 = vld [vmem:[%s1 + $0x6b0] sm:$0xf]
    %v471 = vld [vmem:[%s1 + $0x6b4] sm:$0xf]
    %v472 = vld [vmem:[%s1 + $0x6b8] sm:$0xf]
    %v473 = vld [vmem:[%s1 + $0x6bc] sm:$0xf]
    %v474 = vld [vmem:[%s1 + $0x6c0] sm:$0xf]
    %v475 = vld [vmem:[%s1 + $0x6c4] sm:$0xf]
    %v476 = vld [vmem:[%s1 + $0x6c8] sm:$0xf]
    %v477 = vld [vmem:[%s1 + $0x6cc] sm:$0xf]
    %v478 = vld [vmem:[%s1 + $0x6d0] sm:$0xf]
    %v479 = vld [vmem:[%s1 + $0x6d4] sm:$0xf]
    %v480 = vld [vmem:[%s1 + $0x6d8] sm:$0xf]
    %v481 = vld [vmem:[%s1 + $0x6dc] sm:$0xf]
    %v482 = vld [vmem:[%s1 + $0x6e0] sm:$0xf]
    %v483 = vld [vmem:[%s1 + $0x6e4] sm:$0xf]
    %v484 = vld [vmem:[%s1 + $0x6e8] sm:$0xf]
    %v485 = vld [vmem:[%s1 + $0x6ec] sm:$0xf]
    %v486 = vld [vmem:[%s1 + $0x6f0] sm:$0xf]
    %v487 = vld [vmem:[%s1 + $0x6f4] sm:$0xf]
    %v488 = vld [vmem:[%s1 + $0x6f8] sm:$0xf]
    %v489 = vld [vmem:[%s1 + $0x6fc] sm:$0xf]
    %v490 = vld [vmem:[%s1 + $0x700] sm:$0xf]
    %v491 = vld [vmem:[%s1 + $0x704] sm:$0xf]
    %v492 = vld [vmem:[%s1 + $0x708] sm:$0xf]
    %v493 = vld [vmem:[%s1 + $0x70c] sm:$0xf]
    %v494 = vld [vmem:[%s1 + $0x710] sm:$0xf]
    %v495 = vld [vmem:[%s1 + $0x714] sm:$0xf]
    %v496 = vld [vmem:[%s1 + $0x718] sm:$0xf]
    %v497 = vld [vmem:[%s1 + $0x71c] sm:$0xf]
    %v498 = vld [vmem:[%s1 + $0x720] sm:$0xf]
    %v499 = vld [vmem:[%s1 + $0x724] sm:$0xf]
    %v500 = vld [vmem:[%s1 + $0x728] sm:$0xf]
    %v501 = vld [vmem:[%s1 + $0x72c] sm:$0xf]
    %v502 = vld [vmem:[%s1 + $0x730] sm:$0xf]
    %v503 = vld [vmem:[%s1 + $0x734] sm:$0xf]
    %v504 = vld [vmem:[%s1 + $0x738] sm:$0xf]
    %v505 = vld [vmem:[%s1 + $0x73c] sm:$0xf]
    %v506 = vld [vmem:[%s1 + $0x740] sm:$0xf]
    %v507 = vld [vmem:[%s1 + $0x744] sm:$0xf]
    %v508 = vld [vmem:[%s1 + $0x748] sm:$0xf]
    %v509 = vld [vmem:[%s1 + $0x74c] sm:$0xf]
    %v510 = vld [vmem:[%s1 + $0x750] sm:$0xf]
    %v511 = vld [vmem:[%s1 + $0x754] sm:$0xf]
    %v512 = vld [vmem:[%s1 + $0x758] sm:$0xf]
    %v513 = vld [vmem:[%s1 + $0x75c] sm:$0xf]
    %v514 = vld [vmem:[%s1 + $0x760] sm:$0xf]
    %v515 = vld [vmem:[%s1 + $0x764] sm:$0xf]
    %v516 = vld [vmem:[%s1 + $0x768] sm:$0xf]
    %v517 = vld [vmem:[%s1 + $0x76c] sm:$0xf]
    %v518 = vld [vmem:[%s1 + $0x770] sm:$0xf]
    %v519 = vld [vmem:[%s1 + $0x774] sm:$0xf]
    %v520 = vld [vmem:[%s1 + $0x778] sm:$0xf]
    %v521 = vld [vmem:[%s1 + $0x77c] sm:$0xf]
    %v522 = vld [vmem:[%s1 + $0x780] sm:$0xf]
    %v523 = vld [vmem:[%s1 + $0x784] sm:$0xf]
    %v524 = vld [vmem:[%s1 + $0x788] sm:$0xf]
    %v525 = vld [vmem:[%s1 + $0x78c] sm:$0xf]
    %v526 = vld [vmem:[%s1 + $0x790] sm:$0xf]
    %v527 = vld [vmem:[%s1 + $0x794] sm:$0xf]
    %v528 = vld [vmem:[%s1 + $0x798] sm:$0xf]
    %v529 = vld [vmem:[%s1 + $0x79c] sm:$0xf]
    %v530 = vld [vmem:[%s1 + $0x7a0] sm:$0xf]
    %v531 = vld [vmem:[%s1 + $0x7a4] sm:$0xf]
    %v532 = vld [vmem:[%s1 + $0x7a8] sm:$0xf]
    %v533 = vld [vmem:[%s1 + $0x7ac] sm:$0xf]
    %v534 = vld [vmem:[%s1 + $0x7b0] sm:$0xf]
    %v535 = vld [vmem:[%s1 + $0x7b4] sm:$0xf]
    %v536 = vld [vmem:[%s1 + $0x7b8] sm:$0xf]
    %v537 = vld [vmem:[%s1 + $0x7bc] sm:$0xf]
    %v538 = vld [vmem:[%s1 + $0x7c0] sm:$0xf]
    %v539 = vld [vmem:[%s1 + $0x7c4] sm:$0xf]
    %v540 = vld [vmem:[%s1 + $0x7c8] sm:$0xf]
    %v541 = vld [vmem:[%s1 + $0x7cc] sm:$0xf]
    %v542 = vld [vmem:[%s1 + $0x7d0] sm:$0xf]
    %v543 = vld [vmem:[%s1 + $0x7d4] sm:$0xf]
    %v544 = vld [vmem:[%s1 + $0x7d8] sm:$0xf]
    %v545 = vld [vmem:[%s1 + $0x7dc] sm:$0xf]
    %v546 = vld [vmem:[%s1 + $0x7e0] sm:$0xf]
    %v547 = vld [vmem:[%s1 + $0x7e4] sm:$0xf]
    %v548 = vld [vmem:[%s1 + $0x7e8] sm:$0xf]
    %v549 = vld [vmem:[%s1 + $0x7ec] sm:$0xf]
    %v550 = vld [vmem:[%s1 + $0x7f0] sm:$0xf]
    %v551 = vld [vmem:[%s1 + $0x7f4] sm:$0xf]
    %v552 = vld [vmem:[%s1 + $0x7f8] sm:$0xf]
    %v553 = vld [vmem:[%s1 + $0x7fc] sm:$0xf]
    %v554 = vld [vmem:[%s1 + $0x800] sm:$0xf]
    %v555 = vld [vmem:[%s1 + $0x804] sm:$0xf]
    %v556 = vld [vmem:[%s1 + $0x808] sm:$0xf]
    %v557 = vld [vmem:[%s1 + $0x80c] sm:$0xf]
    %v558 = vld [vmem:[%s1 + $0x810] sm:$0xf]
    %v559 = vld [vmem:[%s1 + $0x814] sm:$0xf]
    %v560 = vld [vmem:[%s1 + $0x818] sm:$0xf]
    %v561 = vld [vmem:[%s1 + $0x81c] sm:$0xf]
    %v562 = vld [vmem:[%s1 + $0x820] sm:$0xf]
    %v563 = vld [vmem:[%s1 + $0x824] sm:$0xf]
    %v564 = vld [vmem:[%s1 + $0x828] sm:$0xf]
    %v565 = vld [vmem:[%s1 + $0x82c] sm:$0xf]
    %v566 = vld [vmem:[%s1 + $0x830] sm:$0xf]
    %v567 = vld [vmem:[%s1 + $0x834] sm:$0xf]
    %v568 = vld [vmem:[%s1 + $0x838] sm:$0xf]
    %v569 = vld [vmem:[%s1 + $0x83c] sm:$0xf]
    %v570 = vld [vmem:[%s1 + $0x840] sm:$0xf]
    %v571 = vld [vmem:[%s1 + $0x844] sm:$0xf]
    %v572 = vld [vmem:[%s1 + $0x848] sm:$0xf]
    %v573 = vld [vmem:[%s1 + $0x84c] sm:$0xf]
    %v574 = vld [vmem:[%s1 + $0x850] sm:$0xf]
    %v575 = vld [vmem:[%s1 + $0x854] sm:$0xf]
    %v576 = vld [vmem:[%s1 + $0x858] sm:$0xf]
    %v577 = vld [vmem:[%s1 + $0x85c] sm:$0xf]
    %v578 = vld [vmem:[%s1 + $0x860] sm:$0xf]
    %v579 = vld [vmem:[%s1 + $0x864] sm:$0xf]
    %v580 = vld [vmem:[%s1 + $0x868] sm:$0xf]
    %v581 = vld [vmem:[%s1 + $0x86c] sm:$0xf]
    %v582 = vld [vmem:[%s1 + $0x870] sm:$0xf]
    %v583 = vld [vmem:[%s1 + $0x874] sm:$0xf]
    %v584 = vld [vmem:[%s1 + $0x878] sm:$0xf]
    %v585 = vld [vmem:[%s1 + $0x87c] sm:$0xf]
    %v586 = vld [vmem:[%s1 + $0x880] sm:$0xf]
    %v587 = vld [vmem:[%s1 + $0x884] sm:$0xf]
    %v588 = vld [vmem:[%s1 + $0x888] sm:$0xf]
    %v589 = vld [vmem:[%s1 + $0x88c] sm:$0xf]
    %v590 = vld [vmem:[%s1 + $0x890] sm:$0xf]
    %v591 = vld [vmem:[%s1 + $0x894] sm:$0xf]
    %v592 = vld [vmem:[%s1 + $0x898] sm:$0xf]
    %v593 = vld [vmem:[%s1 + $0x89c] sm:$0xf]
    %v594 = vld [vmem:[%s1 + $0x8a0] sm:$0xf]
    %v595 = vld [vmem:[%s1 + $0x8a4] sm:$0xf]
    %v596 = vld [vmem:[%s1 + $0x8a8] sm:$0xf]
    %v597 = vld [vmem:[%s1 + $0x8ac] sm:$0xf]
    %v598 = vld [vmem:[%s1 + $0x8b0] sm:$0xf]
    %v599 = vld [vmem:[%s1 + $0x8b4] sm:$0xf]
    %v600 = vld [vmem:[%s1 + $0x8b8] sm:$0xf]
    %v601 = vld [vmem:[%s1 + $0x8bc] sm:$0xf]
    %v602 = vld [vmem:[%s1 + $0x8c0] sm:$0xf]
    %v603 = vld [vmem:[%s1 + $0x8c4] sm:$0xf]
    %v604 = vld [vmem:[%s1 + $0x8c8] sm:$0xf]
    %v605 = vld [vmem:[%s1 + $0x8cc] sm:$0xf]
    %v606 = vld [vmem:[%s1 + $0x8d0] sm:$0xf]
    %v607 = vld [vmem:[%s1 + $0x8d4] sm:$0xf]
    %v608 = vld [vmem:[%s1 + $0x8d8] sm:$0xf]
    %v609 = vld [vmem:[%s1 + $0x8dc] sm:$0xf]
    %v610 = vld [vmem:[%s1 + $0x8e0] sm:$0xf]
    %v611 = vld [vmem:[%s1 + $0x8e4] sm:$0xf]
    %v612 = vld [vmem:[%s1 + $0x8e8] sm:$0xf]
    %v613 = vld [vmem:[%s1 + $0x8ec] sm:$0xf]
    %v614 = vld [vmem:[%s1 + $0x8f0] sm:$0xf]
    %v615 = vld [vmem:[%s1 + $0x8f4] sm:$0xf]
    %v616 = vld [vmem:[%s1 + $0x8f8] sm:$0xf]
    %v617 = vld [vmem:[%s1 + $0x8fc] sm:$0xf]
    %v618 = vld [vmem:[%s1 + $0x900] sm:$0xf]
    %v619 = vld [vmem:[%s1 + $0x904] sm:$0xf]
    %v620 = vld [vmem:[%s1 + $0x908] sm:$0xf]
    %v621 = vld [vmem:[%s1 + $0x90c] sm:$0xf]
    %v622 = vld [vmem:[%s1 + $0x910] sm:$0xf]
    %v623 = vld [vmem:[%s1 + $0x914] sm:$0xf]
    %v624 = vld [vmem:[%s1 + $0x918] sm:$0xf]
    %v625 = vld [vmem:[%s1 + $0x91c] sm:$0xf]
    %v626 = vld [vmem:[%s1 + $0x920] sm:$0xf]
    %v627 = vld [vmem:[%s1 + $0x924] sm:$0xf]
    %v628 = vld [vmem:[%s1 + $0x928] sm:$0xf]
    %v629 = vld [vmem:[%s1 + $0x92c] sm:$0xf]
    %v630 = vld [vmem:[%s1 + $0x930] sm:$0xf]
    %v631 = vld [vmem:[%s1 + $0x934] sm:$0xf]
    %v632 = vld [vmem:[%s1 + $0x938] sm:$0xf]
    %v633 = vld [vmem:[%s1 + $0x93c] sm:$0xf]
    %v634 = vld [vmem:[%s1 + $0x940] sm:$0xf]
    %v635 = vld [vmem:[%s1 + $0x944] sm:$0xf]
    %v636 = vld [vmem:[%s1 + $0x948] sm:$0xf]
    %v637 = vld [vmem:[%s1 + $0x94c] sm:$0xf]
    %v638 = vld [vmem:[%s1 + $0x950] sm:$0xf]
    %v639 = vld [vmem:[%s1 + $0x954] sm:$0xf]
    %v640 = vld [vmem:[%s1 + $0x958] sm:$0xf]
    %v641 = vld [vmem:[%s1 + $0x95c] sm:$0xf]
    %v642 = vld [vmem:[%s1 + $0x960] sm:$0xf]
    %v643 = vld [vmem:[%s1 + $0x964] sm:$0xf]
    %v644 = vld [vmem:[%s1 + $0x968] sm:$0xf]
    %v645 = vld [vmem:[%s1 + $0x96c] sm:$0xf]
    %v646 = vld [vmem:[%s1 + $0x970] sm:$0xf]
    %v647 = vld [vmem:[%s1 + $0x974] sm:$0xf]
    %v648 = vld [vmem:[%s1 + $0x978] sm:$0xf]
    %v649 = vld [vmem:[%s1 + $0x97c] sm:$0xf]
    %v650 = vld [vmem:[%s1 + $0x980] sm:$0xf]
    %v651 = vld [vmem:[%s1 + $0x984] sm:$0xf]
    %v652 = vld [vmem:[%s1 + $0x988] sm:$0xf]
    %v653 = vld [vmem:[%s1 + $0x98c] sm:$0xf]
    %v654 = vld [vmem:[%s1 + $0x990] sm:$0xf]
    %v655 = vld [vmem:[%s1 + $0x994] sm:$0xf]
    %v656 = vld [vmem:[%s1 + $0x998] sm:$0xf]
    %v657 = vld [vmem:[%s1 + $0x99c] sm:$0xf]
    %v658 = vld [vmem:[%s1 + $0x9a0] sm:$0xf]
    %v659 = vld [vmem:[%s1 + $0x9a4] sm:$0xf]
    %v660 = vld [vmem:[%s1 + $0x9a8] sm:$0xf]
    %v661 = vld [vmem:[%s1 + $0x9ac] sm:$0xf]
    %v662 = vld [vmem:[%s1 + $0x9b0] sm:$0xf]
    %v663 = vld [vmem:[%s1 + $0x9b4] sm:$0xf]
    %v664 = vld [vmem:[%s1 + $0x9b8] sm:$0xf]
    %v665 = vld [vmem:[%s1 + $0x9bc] sm:$0xf]
    %v666 = vld [vmem:[%s1 + $0x9c0] sm:$0xf]
    %v667 = vld [vmem:[%s1 + $0x9c4] sm:$0xf]
    %v668 = vld [vmem:[%s1 + $0x9c8] sm:$0xf]
    %v669 = vld [vmem:[%s1 + $0x9cc] sm:$0xf]
    %v670 = vld [vmem:[%s1 + $0x9d0] sm:$0xf]
    %v671 = vld [vmem:[%s1 + $0x9d4] sm:$0xf]
    %v672 = vld [vmem:[%s1 + $0x9d8] sm:$0xf]
    %v673 = vld [vmem:[%s1 + $0x9dc] sm:$0xf]
    %v674 = vld [vmem:[%s1 + $0x9e0] sm:$0xf]
    %v675 = vld [vmem:[%s1 + $0x9e4] sm:$0xf]
    %v676 = vld [vmem:[%s1 + $0x9e8] sm:$0xf]
    %v677 = vld [vmem:[%s1 + $0x9ec] sm:$0xf]
    %v678 = vld [vmem:[%s1 + $0x9f0] sm:$0xf]
    %v679 = vld [vmem:[%s1 + $0x9f4] sm:$0xf]
    %v680 = vld [vmem:[%s1 + $0x9f8] sm:$0xf]
    %v681 = vld [vmem:[%s1 + $0x9fc] sm:$0xf]
    %v682 = vld [vmem:[%s1 + $0xa00] sm:$0xf]
    %v683 = vld [vmem:[%s1 + $0xa04] sm:$0xf]
    %v684 = vld [vmem:[%s1 + $0xa08] sm:$0xf]
    %v685 = vld [vmem:[%s1 + $0xa0c] sm:$0xf]
    %v686 = vld [vmem:[%s1 + $0xa10] sm:$0xf]
    %v687 = vld [vmem:[%s1 + $0xa14] sm:$0xf]
    %v688 = vld [vmem:[%s1 + $0xa18] sm:$0xf]
    %v689 = vld [vmem:[%s1 + $0xa1c] sm:$0xf]
    %v690 = vld [vmem:[%s1 + $0xa20] sm:$0xf]
    %v691 = vld [vmem:[%s1 + $0xa24] sm:$0xf]
    %v692 = vld [vmem:[%s1 + $0xa28] sm:$0xf]
    %v693 = vld [vmem:[%s1 + $0xa2c] sm:$0xf]
    %v694 = vld [vmem:[%s1 + $0xa30] sm:$0xf]
    %v695 = vld [vmem:[%s1 + $0xa34] sm:$0xf]
    %v696 = vld [vmem:[%s1 + $0xa38] sm:$0xf]
    %v697 = vld [vmem:[%s1 + $0xa3c] sm:$0xf]
    %v698 = vld [vmem:[%s1 + $0xa40] sm:$0xf]
    %v699 = vld [vmem:[%s1 + $0xa44] sm:$0xf]
    %v700 = vld [vmem:[%s1 + $0xa48] sm:$0xf]
    %v701 = vld [vmem:[%s1 + $0xa4c] sm:$0xf]
    %v702 = vld [vmem:[%s1 + $0xa50] sm:$0xf]
    %v703 = vld [vmem:[%s1 + $0xa54] sm:$0xf]
    %v704 = vld [vmem:[%s1 + $0xa58] sm:$0xf]
    %v705 = vld [vmem:[%s1 + $0xa5c] sm:$0xf]
    %v706 = vld [vmem:[%s1 + $0xa60] sm:$0xf]
    %v707 = vld [vmem:[%s1 + $0xa64] sm:$0xf]
    %v708 = vld [vmem:[%s1 + $0xa68] sm:$0xf]
    %v709 = vld [vmem:[%s1 + $0xa6c] sm:$0xf]
    %v710 = vld [vmem:[%s1 + $0xa70] sm:$0xf]
    %v711 = vld [vmem:[%s1 + $0xa74] sm:$0xf]
    %v712 = vld [vmem:[%s1 + $0xa78] sm:$0xf]
    %v713 = vld [vmem:[%s1 + $0xa7c] sm:$0xf]
    %v714 = vld [vmem:[%s1 + $0xa80] sm:$0xf]
    %v715 = vld [vmem:[%s1 + $0xa84] sm:$0xf]
    %v716 = vld [vmem:[%s1 + $0xa88] sm:$0xf]
    %v717 = vld [vmem:[%s1 + $0xa8c] sm:$0xf]
    %v718 = vld [vmem:[%s1 + $0xa90] sm:$0xf]
    %v719 = vld [vmem:[%s1 + $0xa94] sm:$0xf]
    %v720 = vld [vmem:[%s1 + $0xa98] sm:$0xf]
    %v721 = vld [vmem:[%s1 + $0xa9c] sm:$0xf]
    %v722 = vld [vmem:[%s1 + $0xaa0] sm:$0xf]
    %v723 = vld [vmem:[%s1 + $0xaa4] sm:$0xf]
    %v724 = vld [vmem:[%s1 + $0xaa8] sm:$0xf]
    %v725 = vld [vmem:[%s1 + $0xaac] sm:$0xf]
    %v726 = vld [vmem:[%s1 + $0xab0] sm:$0xf]
    %v727 = vld [vmem:[%s1 + $0xab4] sm:$0xf]
    %v728 = vld [vmem:[%s1 + $0xab8] sm:$0xf]
    %v729 = vld [vmem:[%s1 + $0xabc] sm:$0xf]
    %v730 = vld [vmem:[%s1 + $0xac0] sm:$0xf]
    %v731 = vld [vmem:[%s1 + $0xac4] sm:$0xf]
    %v732 = vld [vmem:[%s1 + $0xac8] sm:$0xf]
    %v733 = vld [vmem:[%s1 + $0xacc] sm:$0xf]
    %v734 = vld [vmem:[%s1 + $0xad0] sm:$0xf]
    %v735 = vld [vmem:[%s1 + $0xad4] sm:$0xf]
    %v736 = vld [vmem:[%s1 + $0xad8] sm:$0xf]
    %v737 = vld [vmem:[%s1 + $0xadc] sm:$0xf]
    %v738 = vld [vmem:[%s1 + $0xae0] sm:$0xf]
    %v739 = vld [vmem:[%s1 + $0xae4] sm:$0xf]
    %v740 = vld [vmem:[%s1 + $0xae8] sm:$0xf]
    %v741 = vld [vmem:[%s1 + $0xaec] sm:$0xf]
    %v742 = vld [vmem:[%s1 + $0xaf0] sm:$0xf]
    %v743 = vld [vmem:[%s1 + $0xaf4] sm:$0xf]
    %v744 = vld [vmem:[%s1 + $0xaf8] sm:$0xf]
    %v745 = vld [vmem:[%s1 + $0xafc] sm:$0xf]
    %v746 = vld [vmem:[%s1 + $0xb00] sm:$0xf]
    %v747 = vld [vmem:[%s1 + $0xb04] sm:$0xf]
    %v748 = vld [vmem:[%s1 + $0xb08] sm:$0xf]
    %v749 = vld [vmem:[%s1 + $0xb0c] sm:$0xf]
    %v750 = vld [vmem:[%s1 + $0xb10] sm:$0xf]
    %v751 = vld [vmem:[%s1 + $0xb14] sm:$0xf]
    %v752 = vld [vmem:[%s1 + $0xb18] sm:$0xf]
    %v753 = vld [vmem:[%s1 + $0xb1c] sm:$0xf]
    %v754 = vld [vmem:[%s1 + $0xb20] sm:$0xf]
    %v755 = vld [vmem:[%s1 + $0xb24] sm:$0xf]
    %v756 = vld [vmem:[%s1 + $0xb28] sm:$0xf]
    %v757 = vld [vmem:[%s1 + $0xb2c] sm:$0xf]
    %v758 = vld [vmem:[%s1 + $0xb30] sm:$0xf]
    %v759 = vld [vmem:[%s1 + $0xb34] sm:$0xf]
    %v760 = vld [vmem:[%s1 + $0xb38] sm:$0xf]
    %v761 = vld [vmem:[%s1 + $0xb3c] sm:$0xf]
    %v762 = vld [vmem:[%s1 + $0xb40] sm:$0xf]
    %v763 = vld [vmem:[%s1 + $0xb44] sm:$0xf]
    %v764 = vld [vmem:[%s1 + $0xb48] sm:$0xf]
    %v765 = vld [vmem:[%s1 + $0xb4c] sm:$0xf]
    %v766 = vld [vmem:[%s1 + $0xb50] sm:$0xf]
    %v767 = vld [vmem:[%s1 + $0xb54] sm:$0xf]
    %v768 = vld [vmem:[%s1 + $0xb58] sm:$0xf]
    %v769 = vld [vmem:[%s1 + $0xb5c] sm:$0xf]
    %v770 = vld [vmem:[%s1 + $0xb60] sm:$0xf]
    %v771 = vld [vmem:[%s1 + $0xb64] sm:$0xf]
    %v772 = vld [vmem:[%s1 + $0xb68] sm:$0xf]
    %v773 = vld [vmem:[%s1 + $0xb6c] sm:$0xf]
    %v774 = vld [vmem:[%s1 + $0xb70] sm:$0xf]
    %v775 = vld [vmem:[%s1 + $0xb74] sm:$0xf]
    %v776 = vld [vmem:[%s1 + $0xb78] sm:$0xf]
    %v777 = vld [vmem:[%s1 + $0xb7c] sm:$0xf]
    %v778 = vld [vmem:[%s1 + $0xb80] sm:$0xf]
    %v779 = vld [vmem:[%s1 + $0xb84] sm:$0xf]
    %v780 = vld [vmem:[%s1 + $0xb88] sm:$0xf]
    %v781 = vld [vmem:[%s1 + $0xb8c] sm:$0xf]
    %v782 = vld [vmem:[%s1 + $0xb90] sm:$0xf]
    %v783 = vld [vmem:[%s1 + $0xb94] sm:$0xf]
    %v784 = vld [vmem:[%s1 + $0xb98] sm:$0xf]
    %v785 = vld [vmem:[%s1 + $0xb9c] sm:$0xf]
    %v786 = vld [vmem:[%s1 + $0xba0] sm:$0xf]
    %v787 = vld [vmem:[%s1 + $0xba4] sm:$0xf]
    %v788 = vld [vmem:[%s1 + $0xba8] sm:$0xf]
    %v789 = vld [vmem:[%s1 + $0xbac] sm:$0xf]
    %v790 = vld [vmem:[%s1 + $0xbb0] sm:$0xf]
    %v791 = vld [vmem:[%s1 + $0xbb4] sm:$0xf]
    %v792 = vld [vmem:[%s1 + $0xbb8] sm:$0xf]
    %v793 = vld [vmem:[%s1 + $0xbbc] sm:$0xf]
    %v794 = vld [vmem:[%s1 + $0xbc0] sm:$0xf]
    %v795 = vld [vmem:[%s1 + $0xbc4] sm:$0xf]
    %v796 = vld [vmem:[%s1 + $0xbc8] sm:$0xf]
    %v797 = vld [vmem:[%s1 + $0xbcc] sm:$0xf]
    %v798 = vld [vmem:[%s1 + $0xbd0] sm:$0xf]
    %v799 = vld [vmem:[%s1 + $0xbd4] sm:$0xf]
    %v800 = vld [vmem:[%s1 + $0xbd8] sm:$0xf]
    %v801 = vld [vmem:[%s1 + $0xbdc] sm:$0xf]
    %v802 = vld [vmem:[%s1 + $0xbe0] sm:$0xf]
    %v803 = vld [vmem:[%s1 + $0xbe4] sm:$0xf]
    %v804 = vld [vmem:[%s1 + $0xbe8] sm:$0xf]
    %v805 = vld [vmem:[%s1 + $0xbec] sm:$0xf]
    %v806 = vld [vmem:[%s1 + $0xbf0] sm:$0xf]
    %v807 = vld [vmem:[%s1 + $0xbf4] sm:$0xf]
    %v808 = vld [vmem:[%s1 + $0xbf8] sm:$0xf]
    %v809 = vld [vmem:[%s1 + $0xbfc] sm:$0xf]
    %v810 = vld [vmem:[%s1 + $0xc00] sm:$0xf]
    %v811 = vld [vmem:[%s1 + $0xc04] sm:$0xf]
    %v812 = vld [vmem:[%s1 + $0xc08] sm:$0xf]
    %v813 = vld [vmem:[%s1 + $0xc0c] sm:$0xf]
    %v814 = vld [vmem:[%s1 + $0xc10] sm:$0xf]
    %v815 = vld [vmem:[%s1 + $0xc14] sm:$0xf]
    %v816 = vld [vmem:[%s1 + $0xc18] sm:$0xf]
    %v817 = vld [vmem:[%s1 + $0xc1c] sm:$0xf]
    %v818 = vld [vmem:[%s1 + $0xc20] sm:$0xf]
    %v819 = vld [vmem:[%s1 + $0xc24] sm:$0xf]
    %v820 = vld [vmem:[%s1 + $0xc28] sm:$0xf]
    %v821 = vld [vmem:[%s1 + $0xc2c] sm:$0xf]
    %v822 = vld [vmem:[%s1 + $0xc30] sm:$0xf]
    %v823 = vld [vmem:[%s1 + $0xc34] sm:$0xf]
    %v824 = vld [vmem:[%s1 + $0xc38] sm:$0xf]
    %v825 = vld [vmem:[%s1 + $0xc3c] sm:$0xf]
    %v826 = vld [vmem:[%s1 + $0xc40] sm:$0xf]
    %v827 = vld [vmem:[%s1 + $0xc44] sm:$0xf]
    %v828 = vld [vmem:[%s1 + $0xc48] sm:$0xf]
    %v829 = vld [vmem:[%s1 + $0xc4c] sm:$0xf]
    %v830 = vld [vmem:[%s1 + $0xc50] sm:$0xf]
    %v831 = vld [vmem:[%s1 + $0xc54] sm:$0xf]
    %v832 = vld [vmem:[%s1 + $0xc58] sm:$0xf]
    %v833 = vld [vmem:[%s1 + $0xc5c] sm:$0xf]
    %v834 = vld [vmem:[%s1 + $0xc60] sm:$0xf]
    %v835 = vld [vmem:[%s1 + $0xc64] sm:$0xf]
    %v836 = vld [vmem:[%s1 + $0xc68] sm:$0xf]
    %v837 = vld [vmem:[%s1 + $0xc6c] sm:$0xf]
    %v838 = vld [vmem:[%s1 + $0xc70] sm:$0xf]
    %v839 = vld [vmem:[%s1 + $0xc74] sm:$0xf]
    %v840 = vld [vmem:[%s1 + $0xc78] sm:$0xf]
    %v841 = vld [vmem:[%s1 + $0xc7c] sm:$0xf]
    %v842 = vld [vmem:[%s1 + $0xc80] sm:$0xf]
    %v843 = vld [vmem:[%s1 + $0xc84] sm:$0xf]
    %v844 = vld [vmem:[%s1 + $0xc88] sm:$0xf]
    %v845 = vld [vmem:[%s1 + $0xc8c] sm:$0xf]
    %v846 = vld [vmem:[%s1 + $0xc90] sm:$0xf]
    %v847 = vld [vmem:[%s1 + $0xc94] sm:$0xf]
    %v848 = vld [vmem:[%s1 + $0xc98] sm:$0xf]
    %v849 = vld [vmem:[%s1 + $0xc9c] sm:$0xf]
    %v850 = vld [vmem:[%s1 + $0xca0] sm:$0xf]
    %v851 = vld [vmem:[%s1 + $0xca4] sm:$0xf]
    %v852 = vld [vmem:[%s1 + $0xca8] sm:$0xf]
    %v853 = vld [vmem:[%s1 + $0xcac] sm:$0xf]
    %v854 = vld [vmem:[%s1 + $0xcb0] sm:$0xf]
    %v855 = vld [vmem:[%s1 + $0xcb4] sm:$0xf]
    %v856 = vld [vmem:[%s1 + $0xcb8] sm:$0xf]
    %v857 = vld [vmem:[%s1 + $0xcbc] sm:$0xf]
    %v858 = vld [vmem:[%s1 + $0xcc0] sm:$0xf]
    %v859 = vld [vmem:[%s1 + $0xcc4] sm:$0xf]
    %v860 = vld [vmem:[%s1 + $0xcc8] sm:$0xf]
    %v861 = vld [vmem:[%s1 + $0xccc] sm:$0xf]
    %v862 = vld [vmem:[%s1 + $0xcd0] sm:$0xf]
    %v863 = vld [vmem:[%s1 + $0xcd4] sm:$0xf]
    %v864 = vld [vmem:[%s1 + $0xcd8] sm:$0xf]
    %v865 = vld [vmem:[%s1 + $0xcdc] sm:$0xf]
    %v866 = vld [vmem:[%s1 + $0xce0] sm:$0xf]
    %v867 = vld [vmem:[%s1 + $0xce4] sm:$0xf]
    %v868 = vld [vmem:[%s1 + $0xce8] sm:$0xf]
    %v869 = vld [vmem:[%s1 + $0xcec] sm:$0xf]
    %v870 = vld [vmem:[%s1 + $0xcf0] sm:$0xf]
    %v871 = vld [vmem:[%s1 + $0xcf4] sm:$0xf]
    %v872 = vld [vmem:[%s1 + $0xcf8] sm:$0xf]
    %v873 = vld [vmem:[%s1 + $0xcfc] sm:$0xf]
    %v874 = vld [vmem:[%s1 + $0xd00] sm:$0xf]
    %v875 = vld [vmem:[%s1 + $0xd04] sm:$0xf]
    %v876 = vld [vmem:[%s1 + $0xd08] sm:$0xf]
    %v877 = vld [vmem:[%s1 + $0xd0c] sm:$0xf]
    %v878 = vld [vmem:[%s1 + $0xd10] sm:$0xf]
    %v879 = vld [vmem:[%s1 + $0xd14] sm:$0xf]
    %v880 = vld [vmem:[%s1 + $0xd18] sm:$0xf]
    %v881 = vld [vmem:[%s1 + $0xd1c] sm:$0xf]
    %v882 = vld [vmem:[%s1 + $0xd20] sm:$0xf]
    %v883 = vld [vmem:[%s1 + $0xd24] sm:$0xf]
    %v884 = vld [vmem:[%s1 + $0xd28] sm:$0xf]
    %v885 = vld [vmem:[%s1 + $0xd2c] sm:$0xf]
    %v886 = vld [vmem:[%s1 + $0xd30] sm:$0xf]
    %v887 = vld [vmem:[%s1 + $0xd34] sm:$0xf]
    %v888 = vld [vmem:[%s1 + $0xd38] sm:$0xf]
    %v889 = vld [vmem:[%s1 + $0xd3c] sm:$0xf]
    %v890 = vld [vmem:[%s1 + $0xd40] sm:$0xf]
    %v891 = vld [vmem:[%s1 + $0xd44] sm:$0xf]
    %v892 = vld [vmem:[%s1 + $0xd48] sm:$0xf]
    %v893 = vld [vmem:[%s1 + $0xd4c] sm:$0xf]
    %v894 = vld [vmem:[%s1 + $0xd50] sm:$0xf]
    %v895 = vld [vmem:[%s1 + $0xd54] sm:$0xf]
    %v896 = vld [vmem:[%s1 + $0xd58] sm:$0xf]
    %v897 = vld [vmem:[%s1 + $0xd5c] sm:$0xf]
    %v898 = vld [vmem:[%s1 + $0xd60] sm:$0xf]
    %v899 = vld [vmem:[%s1 + $0xd64] sm:$0xf]
    %v900 = vld [vmem:[%s1 + $0xd68] sm:$0xf]
    %v901 = vld [vmem:[%s1 + $0xd6c] sm:$0xf]
    %v902 = vld [vmem:[%s1 + $0xd70] sm:$0xf]
    %v903 = vld [vmem:[%s1 + $0xd74] sm:$0xf]
    %v904 = vld [vmem:[%s1 + $0xd78] sm:$0xf]
    %v905 = vld [vmem:[%s1 + $0xd7c] sm:$0xf]
    %v906 = vld [vmem:[%s1 + $0xd80] sm:$0xf]
    %v907 = vld [vmem:[%s1 + $0xd84] sm:$0xf]
    %v908 = vld [vmem:[%s1 + $0xd88] sm:$0xf]
    %v909 = vld [vmem:[%s1 + $0xd8c] sm:$0xf]
    %v910 = vld [vmem:[%s1 + $0xd90] sm:$0xf]
    %v911 = vld [vmem:[%s1 + $0xd94] sm:$0xf]
    %v912 = vld [vmem:[%s1 + $0xd98] sm:$0xf]
    %v913 = vld [vmem:[%s1 + $0xd9c] sm:$0xf]
    %v914 = vld [vmem:[%s1 + $0xda0] sm:$0xf]
    %v915 = vld [vmem:[%s1 + $0xda4] sm:$0xf]
    %v916 = vld [vmem:[%s1 + $0xda8] sm:$0xf]
    %v917 = vld [vmem:[%s1 + $0xdac] sm:$0xf]
    %v918 = vld [vmem:[%s1 + $0xdb0] sm:$0xf]
    %v919 = vld [vmem:[%s1 + $0xdb4] sm:$0xf]
    %v920 = vld [vmem:[%s1 + $0xdb8] sm:$0xf]
    %v921 = vld [vmem:[%s1 + $0xdbc] sm:$0xf]
    %v922 = vld [vmem:[%s1 + $0xdc0] sm:$0xf]
    %v923 = vld [vmem:[%s1 + $0xdc4] sm:$0xf]
    %v924 = vld [vmem:[%s1 + $0xdc8] sm:$0xf]
    %v925 = vld [vmem:[%s1 + $0xdcc] sm:$0xf]
    %v926 = vld [vmem:[%s1 + $0xdd0] sm:$0xf]
    %v927 = vld [vmem:[%s1 + $0xdd4] sm:$0xf]
    %v928 = vld [vmem:[%s1 + $0xdd8] sm:$0xf]
    %v929 = vld [vmem:[%s1 + $0xddc] sm:$0xf]
    %v930 = vld [vmem:[%s1 + $0xde0] sm:$0xf]
    %v931 = vld [vmem:[%s1 + $0xde4] sm:$0xf]
    %v932 = vld [vmem:[%s1 + $0xde8] sm:$0xf]
    %v933 = vld [vmem:[%s1 + $0xdec] sm:$0xf]
    %v934 = vld [vmem:[%s1 + $0xdf0] sm:$0xf]
    %v935 = vld [vmem:[%s1 + $0xdf4] sm:$0xf]
    %v936 = vld [vmem:[%s1 + $0xdf8] sm:$0xf]
    %v937 = vld [vmem:[%s1 + $0xdfc] sm:$0xf]
    %v938 = vld [vmem:[%s1 + $0xe00] sm:$0xf]
    %v939 = vld [vmem:[%s1 + $0xe04] sm:$0xf]
    %v940 = vld [vmem:[%s1 + $0xe08] sm:$0xf]
    %v941 = vld [vmem:[%s1 + $0xe0c] sm:$0xf]
    %v942 = vld [vmem:[%s1 + $0xe10] sm:$0xf]
    %v943 = vld [vmem:[%s1 + $0xe14] sm:$0xf]
    %v944 = vld [vmem:[%s1 + $0xe18] sm:$0xf]
    %v945 = vld [vmem:[%s1 + $0xe1c] sm:$0xf]
    %v946 = vld [vmem:[%s1 + $0xe20] sm:$0xf]
    %v947 = vld [vmem:[%s1 + $0xe24] sm:$0xf]
    %v948 = vld [vmem:[%s1 + $0xe28] sm:$0xf]
    %v949 = vld [vmem:[%s1 + $0xe2c] sm:$0xf]
    %v950 = vld [vmem:[%s1 + $0xe30] sm:$0xf]
    %v951 = vld [vmem:[%s1 + $0xe34] sm:$0xf]
    %v952 = vld [vmem:[%s1 + $0xe38] sm:$0xf]
    %v953 = vld [vmem:[%s1 + $0xe3c] sm:$0xf]
    %v954 = vld [vmem:[%s1 + $0xe40] sm:$0xf]
    %v955 = vld [vmem:[%s1 + $0xe44] sm:$0xf]
    %v956 = vld [vmem:[%s1 + $0xe48] sm:$0xf]
    %v957 = vld [vmem:[%s1 + $0xe4c] sm:$0xf]
    %v958 = vld [vmem:[%s1 + $0xe50] sm:$0xf]
    %v959 = vld [vmem:[%s1 + $0xe54] sm:$0xf]
    %v960 = vld [vmem:[%s1 + $0xe58] sm:$0xf]
    %v961 = vld [vmem:[%s1 + $0xe5c] sm:$0xf]
    %v962 = vld [vmem:[%s1 + $0xe60] sm:$0xf]
    %v963 = vld [vmem:[%s1 + $0xe64] sm:$0xf]
    %v964 = vld [vmem:[%s1 + $0xe68] sm:$0xf]
    %v965 = vld [vmem:[%s1 + $0xe6c] sm:$0xf]
    %v966 = vld [vmem:[%s1 + $0xe70] sm:$0xf]
    %v967 = vld [vmem:[%s1 + $0xe74] sm:$0xf]
    %v968 = vld [vmem:[%s1 + $0xe78] sm:$0xf]
    %v969 = vld [vmem:[%s1 + $0xe7c] sm:$0xf]
    %v970 = vld [vmem:[%s1 + $0xe80] sm:$0xf]
    %v971 = vld [vmem:[%s1 + $0xe84] sm:$0xf]
    %v972 = vld [vmem:[%s1 + $0xe88] sm:$0xf]
    %v973 = vld [vmem:[%s1 + $0xe8c] sm:$0xf]
    %v974 = vld [vmem:[%s1 + $0xe90] sm:$0xf]
    %v975 = vld [vmem:[%s1 + $0xe94] sm:$0xf]
    %v976 = vld [vmem:[%s1 + $0xe98] sm:$0xf]
    %v977 = vld [vmem:[%s1 + $0xe9c] sm:$0xf]
    %v978 = vld [vmem:[%s1 + $0xea0] sm:$0xf]
    %v979 = vld [vmem:[%s1 + $0xea4] sm:$0xf]
    %v980 = vld [vmem:[%s1 + $0xea8] sm:$0xf]
    %v981 = vld [vmem:[%s1 + $0xeac] sm:$0xf]
    %v982 = vld [vmem:[%s1 + $0xeb0] sm:$0xf]
    %v983 = vld [vmem:[%s1 + $0xeb4] sm:$0xf]
    %v984 = vld [vmem:[%s1 + $0xeb8] sm:$0xf]
    %v985 = vld [vmem:[%s1 + $0xebc] sm:$0xf]
    %v986 = vld [vmem:[%s1 + $0xec0] sm:$0xf]
    %v987 = vld [vmem:[%s1 + $0xec4] sm:$0xf]
    %v988 = vld [vmem:[%s1 + $0xec8] sm:$0xf]
    %v989 = vld [vmem:[%s1 + $0xecc] sm:$0xf]
    %v990 = vld [vmem:[%s1 + $0xed0] sm:$0xf]
    %v991 = vld [vmem:[%s1 + $0xed4] sm:$0xf]
    %v992 = vld [vmem:[%s1 + $0xed8] sm:$0xf]
    %v993 = vld [vmem:[%s1 + $0xedc] sm:$0xf]
    %v994 = vld [vmem:[%s1 + $0xee0] sm:$0xf]
    %v995 = vld [vmem:[%s1 + $0xee4] sm:$0xf]
    %v996 = vld [vmem:[%s1 + $0xee8] sm:$0xf]
    %v997 = vld [vmem:[%s1 + $0xeec] sm:$0xf]
    %v998 = vld [vmem:[%s1 + $0xef0] sm:$0xf]
    %v999 = vld [vmem:[%s1 + $0xef4] sm:$0xf]
    %v1000 = vld [vmem:[%s1 + $0xef8] sm:$0xf]
    %v1001 = vld [vmem:[%s1 + $0xefc] sm:$0xf]
    %v1002 = vld [vmem:[%s1 + $0xf00] sm:$0xf]
    %v1003 = vld [vmem:[%s1 + $0xf04] sm:$0xf]
    %v1004 = vld [vmem:[%s1 + $0xf08] sm:$0xf]
    %v1005 = vld [vmem:[%s1 + $0xf0c] sm:$0xf]
    %v1006 = vld [vmem:[%s1 + $0xf10] sm:$0xf]
    %v1007 = vld [vmem:[%s1 + $0xf14] sm:$0xf]
    %v1008 = vld [vmem:[%s1 + $0xf18] sm:$0xf]
    %v1009 = vld [vmem:[%s1 + $0xf1c] sm:$0xf]
    %v1010 = vld [vmem:[%s1 + $0xf20] sm:$0xf]
    %v1011 = vld [vmem:[%s1 + $0xf24] sm:$0xf]
    %v1012 = vld [vmem:[%s1 + $0xf28] sm:$0xf]
    %v1013 = vld [vmem:[%s1 + $0xf2c] sm:$0xf]
    %v1014 = vld [vmem:[%s1 + $0xf30] sm:$0xf]
    %v1015 = vld [vmem:[%s1 + $0xf34] sm:$0xf]
    %v1016 = vld [vmem:[%s1 + $0xf38] sm:$0xf]
    %v1017 = vld [vmem:[%s1 + $0xf3c] sm:$0xf]
    %v1018 = vld [vmem:[%s1 + $0xf40] sm:$0xf]
    %v1019 = vld [vmem:[%s1 + $0xf44] sm:$0xf]
    %v1020 = vld [vmem:[%s1 + $0xf48] sm:$0xf]
    %v1021 = vld [vmem:[%s1 + $0xf4c] sm:$0xf]
    %v1022 = vld [vmem:[%s1 + $0xf50] sm:$0xf]
    %v1023 = vld [vmem:[%s1 + $0xf54] sm:$0xf]
    %v1024 = vld [vmem:[%s1 + $0xf58] sm:$0xf]
    %v1025 = vld [vmem:[%s1 + $0xf5c] sm:$0xf]
    %v1026 = vld [vmem:[%s1 + $0xf60] sm:$0xf]
    %v1027 = vld [vmem:[%s1 + $0xf64] sm:$0xf]
    %v1028 = vld [vmem:[%s1 + $0xf68] sm:$0xf]
    %v1029 = vld [vmem:[%s1 + $0xf6c] sm:$0xf]
    %v1030 = vld [vmem:[%s1 + $0xf70] sm:$0xf]
    %v1031 = vld [vmem:[%s1 + $0xf74] sm:$0xf]
    %v1032 = vld [vmem:[%s1 + $0xf78] sm:$0xf]
    %v1033 = vld [vmem:[%s1 + $0xf7c] sm:$0xf]
    %v1034 = vld [vmem:[%s1 + $0xf80] sm:$0xf]
    %v1035 = vld [vmem:[%s1 + $0xf84] sm:$0xf]
    %v1036 = vld [vmem:[%s1 + $0xf88] sm:$0xf]
    %v1037 = vld [vmem:[%s1 + $0xf8c] sm:$0xf]
    %v1038 = vld [vmem:[%s1 + $0xf90] sm:$0xf]
    %v1039 = vld [vmem:[%s1 + $0xf94] sm:$0xf]
    %v1040 = vld [vmem:[%s1 + $0xf98] sm:$0xf]
    %v1041 = vld [vmem:[%s1 + $0xf9c] sm:$0xf]
    %v1042 = vld [vmem:[%s1 + $0xfa0] sm:$0xf]
    %v1043 = vld [vmem:[%s1 + $0xfa4] sm:$0xf]
    %v1044 = vld [vmem:[%s1 + $0xfa8] sm:$0xf]
    %v1045 = vld [vmem:[%s1 + $0xfac] sm:$0xf]
    %v1046 = vld [vmem:[%s1 + $0xfb0] sm:$0xf]
    %v1047 = vld [vmem:[%s1 + $0xfb4] sm:$0xf]
    %v1048 = vld [vmem:[%s1 + $0xfb8] sm:$0xf]
    %v1049 = vld [vmem:[%s1 + $0xfbc] sm:$0xf]
    %v1050 = vld [vmem:[%s1 + $0xfc0] sm:$0xf]
    %v1051 = vld [vmem:[%s1 + $0xfc4] sm:$0xf]
    %v1052 = vld [vmem:[%s1 + $0xfc8] sm:$0xf]
    %v1053 = vld [vmem:[%s1 + $0xfcc] sm:$0xf]
    %v1054 = vld [vmem:[%s1 + $0xfd0] sm:$0xf]
    %v1055 = vld [vmem:[%s1 + $0xfd4] sm:$0xf]
    %v1056 = vld [vmem:[%s1 + $0xfd8] sm:$0xf]
    %v1057 = vld [vmem:[%s1 + $0xfdc] sm:$0xf]
    %v1058 = vld [vmem:[%s1 + $0xfe0] sm:$0xf]
    %v1059 = vld [vmem:[%s1 + $0xfe4] sm:$0xf]
    %v1060 = vld [vmem:[%s1 + $0xfe8] sm:$0xf]
    %v1061 = vld [vmem:[%s1 + $0xfec] sm:$0xf]
    %v1062 = vld [vmem:[%s1 + $0xff0] sm:$0xf]
    %v1063 = vld [vmem:[%s1 + $0xff4] sm:$0xf]
    %v1064 = vld [vmem:[%s1 + $0xff8] sm:$0xf]
    %v1065 = vld [vmem:[%s1 + $0xffc] sm:$0xf]
    %v1066 = vld [vmem:[%s1 + $0x1000] sm:$0xf]
    %v1067 = vld [vmem:[%s1 + $0x1004] sm:$0xf]
    %v1068 = vld [vmem:[%s1 + $0x1008] sm:$0xf]
    %v1069 = vld [vmem:[%s1 + $0x100c] sm:$0xf]
    %v1070 = vld [vmem:[%s1 + $0x1010] sm:$0xf]
    %v1071 = vld [vmem:[%s1 + $0x1014] sm:$0xf]
    %v1072 = vld [vmem:[%s1 + $0x1018] sm:$0xf]
    %v1073 = vld [vmem:[%s1 + $0x101c] sm:$0xf]
    %v1074 = vld [vmem:[%s1 + $0x1020] sm:$0xf]
    %v1075 = vld [vmem:[%s1 + $0x1024] sm:$0xf]
    %v1076 = vld [vmem:[%s1 + $0x1028] sm:$0xf]
    %v1077 = vld [vmem:[%s1 + $0x102c] sm:$0xf]
    %v1078 = vld [vmem:[%s1 + $0x1030] sm:$0xf]
    %v1079 = vld [vmem:[%s1 + $0x1034] sm:$0xf]
    %v1080 = vld [vmem:[%s1 + $0x1038] sm:$0xf]
    %v1081 = vld [vmem:[%s1 + $0x103c] sm:$0xf]
    %v1082 = vld [vmem:[%s1 + $0x1040] sm:$0xf]
    %v1083 = vld [vmem:[%s1 + $0x1044] sm:$0xf]
    %v1084 = vld [vmem:[%s1 + $0x1048] sm:$0xf]
    %v1085 = vld [vmem:[%s1 + $0x104c] sm:$0xf]
    %v1086 = vld [vmem:[%s1 + $0x1050] sm:$0xf]
    %v1087 = vld [vmem:[%s1 + $0x1054] sm:$0xf]
    %v1088 = vld [vmem:[%s1 + $0x1058] sm:$0xf]
    %v1089 = vld [vmem:[%s1 + $0x105c] sm:$0xf]
    %v1090 = vld [vmem:[%s1 + $0x1060] sm:$0xf]
    %v1091 = vld [vmem:[%s1 + $0x1064] sm:$0xf]
    %v1092 = vld [vmem:[%s1 + $0x1068] sm:$0xf]
    %v1093 = vld [vmem:[%s1 + $0x106c] sm:$0xf]
    %v1094 = vld [vmem:[%s1 + $0x1070] sm:$0xf]
    %v1095 = vld [vmem:[%s1 + $0x1074] sm:$0xf]
    %v1096 = vld [vmem:[%s1 + $0x1078] sm:$0xf]
    %v1097 = vld [vmem:[%s1 + $0x107c] sm:$0xf]
    %v1098 = vld [vmem:[%s1 + $0x1080] sm:$0xf]
    %v1099 = vld [vmem:[%s1 + $0x1084] sm:$0xf]
    %v1100 = vld [vmem:[%s1 + $0x1088] sm:$0xf]
    %v1101 = vld [vmem:[%s1 + $0x108c] sm:$0xf]
    %v1102 = vld [vmem:[%s1 + $0x1090] sm:$0xf]
    %v1103 = vld [vmem:[%s1 + $0x1094] sm:$0xf]
    %v1104 = vld [vmem:[%s1 + $0x1098] sm:$0xf]
    %v1105 = vld [vmem:[%s1 + $0x109c] sm:$0xf]
    %v1106 = vld [vmem:[%s1 + $0x10a0] sm:$0xf]
    %v1107 = vld [vmem:[%s1 + $0x10a4] sm:$0xf]
    %v1108 = vld [vmem:[%s1 + $0x10a8] sm:$0xf]
    %v1109 = vld [vmem:[%s1 + $0x10ac] sm:$0xf]
    %v1110 = vld [vmem:[%s1 + $0x10b0] sm:$0xf]
    %v1111 = vld [vmem:[%s1 + $0x10b4] sm:$0xf]
    %v1112 = vld [vmem:[%s1 + $0x10b8] sm:$0xf]
    %v1113 = vld [vmem:[%s1 + $0x10bc] sm:$0xf]
    %v1114 = vld [vmem:[%s1 + $0x10c0] sm:$0xf]
    %v1115 = vld [vmem:[%s1 + $0x10c4] sm:$0xf]
    %v1116 = vld [vmem:[%s1 + $0x10c8] sm:$0xf]
    %v1117 = vld [vmem:[%s1 + $0x10cc] sm:$0xf]
    %v1118 = vld [vmem:[%s1 + $0x10d0] sm:$0xf]
    %v1119 = vld [vmem:[%s1 + $0x10d4] sm:$0xf]
    %v1120 = vld [vmem:[%s1 + $0x10d8] sm:$0xf]
    %v1121 = vld [vmem:[%s1 + $0x10dc] sm:$0xf]
    %v1122 = vld [vmem:[%s1 + $0x10e0] sm:$0xf]
    %v1123 = vld [vmem:[%s1 + $0x10e4] sm:$0xf]
    %v1124 = vld [vmem:[%s1 + $0x10e8] sm:$0xf]
    %v1125 = vld [vmem:[%s1 + $0x10ec] sm:$0xf]
    %v1126 = vld [vmem:[%s1 + $0x10f0] sm:$0xf]
    %v1127 = vld [vmem:[%s1 + $0x10f4] sm:$0xf]
    %v1128 = vld [vmem:[%s1 + $0x10f8] sm:$0xf]
    %v1129 = vld [vmem:[%s1 + $0x10fc] sm:$0xf]
    %v1130 = vld [vmem:[%s1 + $0x1100] sm:$0xf]
    %v1131 = vld [vmem:[%s1 + $0x1104] sm:$0xf]
    %v1132 = vld [vmem:[%s1 + $0x1108] sm:$0xf]
    %v1133 = vld [vmem:[%s1 + $0x110c] sm:$0xf]
    %v1134 = vld [vmem:[%s1 + $0x1110] sm:$0xf]
    %v1135 = vld [vmem:[%s1 + $0x1114] sm:$0xf]
    %v1136 = vld [vmem:[%s1 + $0x1118] sm:$0xf]
    %v1137 = vld [vmem:[%s1 + $0x111c] sm:$0xf]
    %v1138 = vld [vmem:[%s1 + $0x1120] sm:$0xf]
    %v1139 = vld [vmem:[%s1 + $0x1124] sm:$0xf]
    %v1140 = vld [vmem:[%s1 + $0x1128] sm:$0xf]
    %v1141 = vld [vmem:[%s1 + $0x112c] sm:$0xf]
    %v1142 = vld [vmem:[%s1 + $0x1130] sm:$0xf]
    %v1143 = vld [vmem:[%s1 + $0x1134] sm:$0xf]
    %v1144 = vld [vmem:[%s1 + $0x1138] sm:$0xf]
    %v1145 = vld [vmem:[%s1 + $0x113c] sm:$0xf]
    %v1146 = vld [vmem:[%s1 + $0x1140] sm:$0xf]
    %v1147 = vld [vmem:[%s1 + $0x1144] sm:$0xf]
    %v1148 = vld [vmem:[%s1 + $0x1148] sm:$0xf]
    %v1149 = vld [vmem:[%s1 + $0x114c] sm:$0xf]
    %v1150 = vld [vmem:[%s1 + $0x1150] sm:$0xf]
    %v1151 = vld [vmem:[%s1 + $0x1154] sm:$0xf]
    %v1152 = vld [vmem:[%s1 + $0x1158] sm:$0xf]
    %v1153 = vld [vmem:[%s1 + $0x115c] sm:$0xf]
    %v1154 = vld [vmem:[%s1 + $0x1160] sm:$0xf]
    %v1155 = vld [vmem:[%s1 + $0x1164] sm:$0xf]
    %v1156 = vld [vmem:[%s1 + $0x1168] sm:$0xf]
    %v1157 = vld [vmem:[%s1 + $0x116c] sm:$0xf]
    %v1158 = vld [vmem:[%s1 + $0x1170] sm:$0xf]
    %v1159 = vld [vmem:[%s1 + $0x1174] sm:$0xf]
    %v1160 = vld [vmem:[%s1 + $0x1178] sm:$0xf]
    %v1161 = vld [vmem:[%s1 + $0x117c] sm:$0xf]
    %v1162 = vld [vmem:[%s1 + $0x1180] sm:$0xf]
    %v1163 = vld [vmem:[%s1 + $0x1184] sm:$0xf]
    %v1164 = vld [vmem:[%s1 + $0x1188] sm:$0xf]
    %v1165 = vld [vmem:[%s1 + $0x118c] sm:$0xf]
    %v1166 = vld [vmem:[%s1 + $0x1190] sm:$0xf]
    %v1167 = vld [vmem:[%s1 + $0x1194] sm:$0xf]
    %v1168 = vld [vmem:[%s1 + $0x1198] sm:$0xf]
    %v1169 = vld [vmem:[%s1 + $0x119c] sm:$0xf]
    %v1170 = vld [vmem:[%s1 + $0x11a0] sm:$0xf]
    %v1171 = vld [vmem:[%s1 + $0x11a4] sm:$0xf]
    %v1172 = vld [vmem:[%s1 + $0x11a8] sm:$0xf]
    %v1173 = vld [vmem:[%s1 + $0x11ac] sm:$0xf]
    %v1174 = vld [vmem:[%s1 + $0x11b0] sm:$0xf]
    %v1175 = vld [vmem:[%s1 + $0x11b4] sm:$0xf]
    %v1176 = vld [vmem:[%s1 + $0x11b8] sm:$0xf]
    %v1177 = vld [vmem:[%s1 + $0x11bc] sm:$0xf]
    %v1178 = vld [vmem:[%s1 + $0x11c0] sm:$0xf]
    %v1179 = vld [vmem:[%s1 + $0x11c4] sm:$0xf]
    %v1180 = vld [vmem:[%s1 + $0x11c8] sm:$0xf]
    %v1181 = vld [vmem:[%s1 + $0x11cc] sm:$0xf]
    %v1182 = vld [vmem:[%s1 + $0x11d0] sm:$0xf]
    %v1183 = vld [vmem:[%s1 + $0x11d4] sm:$0xf]
    %v1184 = vld [vmem:[%s1 + $0x11d8] sm:$0xf]
    %v1185 = vld [vmem:[%s1 + $0x11dc] sm:$0xf]
    %v1186 = vld [vmem:[%s1 + $0x11e0] sm:$0xf]
    %v1187 = vld [vmem:[%s1 + $0x11e4] sm:$0xf]
    %v1188 = vld [vmem:[%s1 + $0x11e8] sm:$0xf]
    %v1189 = vld [vmem:[%s1 + $0x11ec] sm:$0xf]
    %v1190 = vld [vmem:[%s1 + $0x11f0] sm:$0xf]
    %v1191 = vld [vmem:[%s1 + $0x11f4] sm:$0xf]
    %v1192 = vld [vmem:[%s1 + $0x11f8] sm:$0xf]
    %v1193 = vld [vmem:[%s1 + $0x11fc] sm:$0xf]
    %v1194 = vld [vmem:[%s1 + $0x1200] sm:$0xf]
    %v1195 = vld [vmem:[%s1 + $0x1204] sm:$0xf]
    %v1196 = vld [vmem:[%s1 + $0x1208] sm:$0xf]
    %v1197 = vld [vmem:[%s1 + $0x120c] sm:$0xf]
    %v1198 = vld [vmem:[%s1 + $0x1210] sm:$0xf]
    %v1199 = vld [vmem:[%s1 + $0x1214] sm:$0xf]
    %v1200 = vld [vmem:[%s1 + $0x1218] sm:$0xf]
    %v1201 = vld [vmem:[%s1 + $0x121c] sm:$0xf]
    %v1202 = vld [vmem:[%s1 + $0x1220] sm:$0xf]
    %v1203 = vld [vmem:[%s1 + $0x1224] sm:$0xf]
    %v1204 = vld [vmem:[%s1 + $0x1228] sm:$0xf]
    %v1205 = vld [vmem:[%s1 + $0x122c] sm:$0xf]
    %v1206 = vld [vmem:[%s1 + $0x1230] sm:$0xf]
    %v1207 = vld [vmem:[%s1 + $0x1234] sm:$0xf]
    %v1208 = vld [vmem:[%s1 + $0x1238] sm:$0xf]
    %v1209 = vld [vmem:[%s1 + $0x123c] sm:$0xf]
    %v1210 = vld [vmem:[%s1 + $0x1240] sm:$0xf]
    %v1211 = vld [vmem:[%s1 + $0x1244] sm:$0xf]
    %v1212 = vld [vmem:[%s1 + $0x1248] sm:$0xf]
    %v1213 = vld [vmem:[%s1 + $0x124c] sm:$0xf]
    %v1214 = vld [vmem:[%s1 + $0x1250] sm:$0xf]
    %v1215 = vld [vmem:[%s1 + $0x1254] sm:$0xf]
    %v1216 = vld [vmem:[%s1 + $0x1258] sm:$0xf]
    %v1217 = vld [vmem:[%s1 + $0x125c] sm:$0xf]
    %v1218 = vld [vmem:[%s1 + $0x1260] sm:$0xf]
    %v1219 = vld [vmem:[%s1 + $0x1264] sm:$0xf]
    %v1220 = vld [vmem:[%s1 + $0x1268] sm:$0xf]
    %v1221 = vld [vmem:[%s1 + $0x126c] sm:$0xf]
    %v1222 = vld [vmem:[%s1 + $0x1270] sm:$0xf]
    %v1223 = vld [vmem:[%s1 + $0x1274] sm:$0xf]
    %v1224 = vld [vmem:[%s1 + $0x1278] sm:$0xf]
    %v1225 = vld [vmem:[%s1 + $0x127c] sm:$0xf]
    %v1226 = vld [vmem:[%s1 + $0x1280] sm:$0xf]
    %v1227 = vld [vmem:[%s1 + $0x1284] sm:$0xf]
    %v1228 = vld [vmem:[%s1 + $0x1288] sm:$0xf]
    %v1229 = vld [vmem:[%s1 + $0x128c] sm:$0xf]
    %v1230 = vld [vmem:[%s1 + $0x1290] sm:$0xf]
    %v1231 = vld [vmem:[%s1 + $0x1294] sm:$0xf]
    %v1232 = vld [vmem:[%s1 + $0x1298] sm:$0xf]
    %v1233 = vld [vmem:[%s1 + $0x129c] sm:$0xf]
    %v1234 = vld [vmem:[%s1 + $0x12a0] sm:$0xf]
    %v1235 = vld [vmem:[%s1 + $0x12a4] sm:$0xf]
    %v1236 = vld [vmem:[%s1 + $0x12a8] sm:$0xf]
    %v1237 = vld [vmem:[%s1 + $0x12ac] sm:$0xf]
    %v1238 = vld [vmem:[%s1 + $0x12b0] sm:$0xf]
    %v1239 = vld [vmem:[%s1 + $0x12b4] sm:$0xf]
    %v1240 = vld [vmem:[%s1 + $0x12b8] sm:$0xf]
    %v1241 = vld [vmem:[%s1 + $0x12bc] sm:$0xf]
    %v1242 = vld [vmem:[%s1 + $0x12c0] sm:$0xf]
    %v1243 = vld [vmem:[%s1 + $0x12c4] sm:$0xf]
    %v1244 = vld [vmem:[%s1 + $0x12c8] sm:$0xf]
    %v1245 = vld [vmem:[%s1 + $0x12cc] sm:$0xf]
    %v1246 = vld [vmem:[%s1 + $0x12d0] sm:$0xf]
    %v1247 = vld [vmem:[%s1 + $0x12d4] sm:$0xf]
    %v1248 = vld [vmem:[%s1 + $0x12d8] sm:$0xf]
    %v1249 = vld [vmem:[%s1 + $0x12dc] sm:$0xf]
    %v1250 = vld [vmem:[%s1 + $0x12e0] sm:$0xf]
    %v1251 = vld [vmem:[%s1 + $0x12e4] sm:$0xf]
    %v1252 = vld [vmem:[%s1 + $0x12e8] sm:$0xf]
    %v1253 = vld [vmem:[%s1 + $0x12ec] sm:$0xf]
    %v1254 = vld [vmem:[%s1 + $0x12f0] sm:$0xf]
    %v1255 = vld [vmem:[%s1 + $0x12f4] sm:$0xf]
    %v1256 = vld [vmem:[%s1 + $0x12f8] sm:$0xf]
    %v1257 = vld [vmem:[%s1 + $0x12fc] sm:$0xf]
    %v1258 = vld [vmem:[%s1 + $0x1300] sm:$0xf]
    %v1259 = vld [vmem:[%s1 + $0x1304] sm:$0xf]
    %v1260 = vld [vmem:[%s1 + $0x1308] sm:$0xf]
    %v1261 = vld [vmem:[%s1 + $0x130c] sm:$0xf]
    %v1262 = vld [vmem:[%s1 + $0x1310] sm:$0xf]
    %v1263 = vld [vmem:[%s1 + $0x1314] sm:$0xf]
    %v1264 = vld [vmem:[%s1 + $0x1318] sm:$0xf]
    %v1265 = vld [vmem:[%s1 + $0x131c] sm:$0xf]
    %v1266 = vld [vmem:[%s1 + $0x1320] sm:$0xf]
    %v1267 = vld [vmem:[%s1 + $0x1324] sm:$0xf]
    %v1268 = vld [vmem:[%s1 + $0x1328] sm:$0xf]
    %v1269 = vld [vmem:[%s1 + $0x132c] sm:$0xf]
    %v1270 = vld [vmem:[%s1 + $0x1330] sm:$0xf]
    %v1271 = vld [vmem:[%s1 + $0x1334] sm:$0xf]
    %v1272 = vld [vmem:[%s1 + $0x1338] sm:$0xf]
    %v1273 = vld [vmem:[%s1 + $0x133c] sm:$0xf]
    %v1274 = vld [vmem:[%s1 + $0x1340] sm:$0xf]
    %v1275 = vld [vmem:[%s1 + $0x1344] sm:$0xf]
    %v1276 = vld [vmem:[%s1 + $0x1348] sm:$0xf]
    %v1277 = vld [vmem:[%s1 + $0x134c] sm:$0xf]
    %v1278 = vld [vmem:[%s1 + $0x1350] sm:$0xf]
    %v1279 = vld [vmem:[%s1 + $0x1354] sm:$0xf]
    %v1280 = vld [vmem:[%s1 + $0x1358] sm:$0xf]
    %v1281 = vld [vmem:[%s1 + $0x135c] sm:$0xf]
    %v1282 = vld [vmem:[%s1 + $0x1360] sm:$0xf]
    %v1283 = vld [vmem:[%s1 + $0x1364] sm:$0xf]
    %v1284 = vld [vmem:[%s1 + $0x1368] sm:$0xf]
    %v1285 = vld [vmem:[%s1 + $0x136c] sm:$0xf]
    %v1286 = vld [vmem:[%s1 + $0x1370] sm:$0xf]
    %v1287 = vld [vmem:[%s1 + $0x1374] sm:$0xf]
    %v1288 = vld [vmem:[%s1 + $0x1378] sm:$0xf]
    %v1289 = vld [vmem:[%s1 + $0x137c] sm:$0xf]
    %v1290 = vld [vmem:[%s1 + $0x1380] sm:$0xf]
    %v1291 = vld [vmem:[%s1 + $0x1384] sm:$0xf]
    %v1292 = vld [vmem:[%s1 + $0x1388] sm:$0xf]
    %v1293 = vld [vmem:[%s1 + $0x138c] sm:$0xf]
    %v1294 = vld [vmem:[%s1 + $0x1390] sm:$0xf]
    %v1295 = vld [vmem:[%s1 + $0x1394] sm:$0xf]
    %v1296 = vld [vmem:[%s1 + $0x1398] sm:$0xf]
    %v1297 = vld [vmem:[%s1 + $0x139c] sm:$0xf]
    %v1298 = vld [vmem:[%s1 + $0x13a0] sm:$0xf]
    %v1299 = vld [vmem:[%s1 + $0x13a4] sm:$0xf]
    %v1300 = vld [vmem:[%s1 + $0x13a8] sm:$0xf]
    %v1301 = vld [vmem:[%s1 + $0x13ac] sm:$0xf]
    %v1302 = vld [vmem:[%s1 + $0x13b0] sm:$0xf]
    %v1303 = vld [vmem:[%s1 + $0x13b4] sm:$0xf]
    %v1304 = vld [vmem:[%s1 + $0x13b8] sm:$0xf]
    %v1305 = vld [vmem:[%s1 + $0x13bc] sm:$0xf]
    %v1306 = vld [vmem:[%s1 + $0x13c0] sm:$0xf]
    %v1307 = vld [vmem:[%s1 + $0x13c4] sm:$0xf]
    %v1308 = vld [vmem:[%s1 + $0x13c8] sm:$0xf]
    %v1309 = vld [vmem:[%s1 + $0x13cc] sm:$0xf]
    %v1310 = vld [vmem:[%s1 + $0x13d0] sm:$0xf]
    %v1311 = vld [vmem:[%s1 + $0x13d4] sm:$0xf]
    %v1312 = vld [vmem:[%s1 + $0x13d8] sm:$0xf]
    %v1313 = vld [vmem:[%s1 + $0x13dc] sm:$0xf]
    %v1314 = vld [vmem:[%s1 + $0x13e0] sm:$0xf]
    %v1315 = vld [vmem:[%s1 + $0x13e4] sm:$0xf]
    %v1316 = vld [vmem:[%s1 + $0x13e8] sm:$0xf]
    %v1317 = vld [vmem:[%s1 + $0x13ec] sm:$0xf]
    %v1318 = vld [vmem:[%s1 + $0x13f0] sm:$0xf]
    %v1319 = vld [vmem:[%s1 + $0x13f4] sm:$0xf]
    %v1320 = vld [vmem:[%s1 + $0x13f8] sm:$0xf]
    %v1321 = vld [vmem:[%s1 + $0x13fc] sm:$0xf]
    %v1322 = vld [vmem:[%s1 + $0x1400] sm:$0xf]
    %v1323 = vld [vmem:[%s1 + $0x1404] sm:$0xf]
    %v1324 = vld [vmem:[%s1 + $0x1408] sm:$0xf]
    %v1325 = vld [vmem:[%s1 + $0x140c] sm:$0xf]
    %v1326 = vld [vmem:[%s1 + $0x1410] sm:$0xf]
    %v1327 = vld [vmem:[%s1 + $0x1414] sm:$0xf]
    %v1328 = vld [vmem:[%s1 + $0x1418] sm:$0xf]
    %v1329 = vld [vmem:[%s1 + $0x141c] sm:$0xf]
    %v1330 = vld [vmem:[%s1 + $0x1420] sm:$0xf]
    %v1331 = vld [vmem:[%s1 + $0x1424] sm:$0xf]
    %v1332 = vld [vmem:[%s1 + $0x1428] sm:$0xf]
    %v1333 = vld [vmem:[%s1 + $0x142c] sm:$0xf]
    %v1334 = vld [vmem:[%s1 + $0x1430] sm:$0xf]
    %v1335 = vld [vmem:[%s1 + $0x1434] sm:$0xf]
    %v1336 = vld [vmem:[%s1 + $0x1438] sm:$0xf]
    %v1337 = vld [vmem:[%s1 + $0x143c] sm:$0xf]
    %v1338 = vld [vmem:[%s1 + $0x1440] sm:$0xf]
    %v1339 = vld [vmem:[%s1 + $0x1444] sm:$0xf]
    %v1340 = vld [vmem:[%s1 + $0x1448] sm:$0xf]
    %v1341 = vld [vmem:[%s1 + $0x144c] sm:$0xf]
    %v1342 = vld [vmem:[%s1 + $0x1450] sm:$0xf]
    %v1343 = vld [vmem:[%s1 + $0x1454] sm:$0xf]
    %v1344 = vld [vmem:[%s1 + $0x1458] sm:$0xf]
    %v1345 = vld [vmem:[%s1 + $0x145c] sm:$0xf]
    %v1346 = vld [vmem:[%s1 + $0x1460] sm:$0xf]
    %v1347 = vld [vmem:[%s1 + $0x1464] sm:$0xf]
    %v1348 = vld [vmem:[%s1 + $0x1468] sm:$0xf]
    %v1349 = vld [vmem:[%s1 + $0x146c] sm:$0xf]
    %v1350 = vld [vmem:[%s1 + $0x1470] sm:$0xf]
    %v1351 = vld [vmem:[%s1 + $0x1474] sm:$0xf]
    %v1352 = vld [vmem:[%s1 + $0x1478] sm:$0xf]
    %v1353 = vld [vmem:[%s1 + $0x147c] sm:$0xf]
    %v1354 = vld [vmem:[%s1 + $0x1480] sm:$0xf]
    %v1355 = vld [vmem:[%s1 + $0x1484] sm:$0xf]
    %v1356 = vld [vmem:[%s1 + $0x1488] sm:$0xf]
    %v1357 = vld [vmem:[%s1 + $0x148c] sm:$0xf]
    %v1358 = vld [vmem:[%s1 + $0x1490] sm:$0xf]
    %v1359 = vld [vmem:[%s1 + $0x1494] sm:$0xf]
    %v1360 = vld [vmem:[%s1 + $0x1498] sm:$0xf]
    %v1361 = vld [vmem:[%s1 + $0x149c] sm:$0xf]
    %v1362 = vld [vmem:[%s1 + $0x14a0] sm:$0xf]
    %v1363 = vld [vmem:[%s1 + $0x14a4] sm:$0xf]
    %v1364 = vld [vmem:[%s1 + $0x14a8] sm:$0xf]
    %v1365 = vld [vmem:[%s1 + $0x14ac] sm:$0xf]
    %v1366 = vld [vmem:[%s1 + $0x14b0] sm:$0xf]
    %v1367 = vld [vmem:[%s1 + $0x14b4] sm:$0xf]
    %v1368 = vld [vmem:[%s1 + $0x14b8] sm:$0xf]
    %v1369 = vld [vmem:[%s1 + $0x14bc] sm:$0xf]
    %v1370 = vld [vmem:[%s1 + $0x14c0] sm:$0xf]
    %v1371 = vld [vmem:[%s1 + $0x14c4] sm:$0xf]
    %v1372 = vld [vmem:[%s1 + $0x14c8] sm:$0xf]
    %v1373 = vld [vmem:[%s1 + $0x14cc] sm:$0xf]
    %v1374 = vld [vmem:[%s1 + $0x14d0] sm:$0xf]
    %v1375 = vld [vmem:[%s1 + $0x14d4] sm:$0xf]
    %v1376 = vld [vmem:[%s1 + $0x14d8] sm:$0xf]
    %v1377 = vld [vmem:[%s1 + $0x14dc] sm:$0xf]
    %v1378 = vld [vmem:[%s1 + $0x14e0] sm:$0xf]
    %v1379 = vld [vmem:[%s1 + $0x14e4] sm:$0xf]
    %v1380 = vld [vmem:[%s1 + $0x14e8] sm:$0xf]
    %v1381 = vld [vmem:[%s1 + $0x14ec] sm:$0xf]
    %v1382 = vld [vmem:[%s1 + $0x14f0] sm:$0xf]
    %v1383 = vld [vmem:[%s1 + $0x14f4] sm:$0xf]
    %v1384 = vld [vmem:[%s1 + $0x14f8] sm:$0xf]
    %v1385 = vld [vmem:[%s1 + $0x14fc] sm:$0xf]
    %v1386 = vld [vmem:[%s1 + $0x1500] sm:$0xf]
    %v1387 = vld [vmem:[%s1 + $0x1504] sm:$0xf]
    %v1388 = vld [vmem:[%s1 + $0x1508] sm:$0xf]
    %v1389 = vld [vmem:[%s1 + $0x150c] sm:$0xf]
    %v1390 = vld [vmem:[%s1 + $0x1510] sm:$0xf]
    %v1391 = vld [vmem:[%s1 + $0x1514] sm:$0xf]
    %v1392 = vld [vmem:[%s1 + $0x1518] sm:$0xf]
    %v1393 = vld [vmem:[%s1 + $0x151c] sm:$0xf]
    %v1394 = vld [vmem:[%s1 + $0x1520] sm:$0xf]
    %v1395 = vld [vmem:[%s1 + $0x1524] sm:$0xf]
    %v1396 = vld [vmem:[%s1 + $0x1528] sm:$0xf]
    %v1397 = vld [vmem:[%s1 + $0x152c] sm:$0xf]
    %v1398 = vld [vmem:[%s1 + $0x1530] sm:$0xf]
    %v1399 = vld [vmem:[%s1 + $0x1534] sm:$0xf]
    %v1400 = vld [vmem:[%s1 + $0x1538] sm:$0xf]
    %v1401 = vld [vmem:[%s1 + $0x153c] sm:$0xf]
    %v1402 = vld [vmem:[%s1 + $0x1540] sm:$0xf]
    %v1403 = vld [vmem:[%s1 + $0x1544] sm:$0xf]
    %v1404 = vld [vmem:[%s1 + $0x1548] sm:$0xf]
    %v1405 = vld [vmem:[%s1 + $0x154c] sm:$0xf]
    %v1406 = vld [vmem:[%s1 + $0x1550] sm:$0xf]
    %v1407 = vld [vmem:[%s1 + $0x1554] sm:$0xf]
    %v1408 = vld [vmem:[%s1 + $0x1558] sm:$0xf]
    %v1409 = vld [vmem:[%s1 + $0x155c] sm:$0xf]
    %v1410 = vld [vmem:[%s1 + $0x1560] sm:$0xf]
    %v1411 = vld [vmem:[%s1 + $0x1564] sm:$0xf]
    %v1412 = vld [vmem:[%s1 + $0x1568] sm:$0xf]
    %v1413 = vld [vmem:[%s1 + $0x156c] sm:$0xf]
    %v1414 = vld [vmem:[%s1 + $0x1570] sm:$0xf]
    %v1415 = vld [vmem:[%s1 + $0x1574] sm:$0xf]
    %v1416 = vld [vmem:[%s1 + $0x1578] sm:$0xf]
    %v1417 = vld [vmem:[%s1 + $0x157c] sm:$0xf]
    %v1418 = vld [vmem:[%s1 + $0x1580] sm:$0xf]
    %v1419 = vld [vmem:[%s1 + $0x1584] sm:$0xf]
    %v1420 = vld [vmem:[%s1 + $0x1588] sm:$0xf]
    %v1421 = vld [vmem:[%s1 + $0x158c] sm:$0xf]
    %v1422 = vld [vmem:[%s1 + $0x1590] sm:$0xf]
    %v1423 = vld [vmem:[%s1 + $0x1594] sm:$0xf]
    %v1424 = vld [vmem:[%s1 + $0x1598] sm:$0xf]
    %v1425 = vld [vmem:[%s1 + $0x159c] sm:$0xf]
    %v1426 = vld [vmem:[%s1 + $0x15a0] sm:$0xf]
    %v1427 = vld [vmem:[%s1 + $0x15a4] sm:$0xf]
    %v1428 = vld [vmem:[%s1 + $0x15a8] sm:$0xf]
    %v1429 = vld [vmem:[%s1 + $0x15ac] sm:$0xf]
    %v1430 = vld [vmem:[%s1 + $0x15b0] sm:$0xf]
    %v1431 = vld [vmem:[%s1 + $0x15b4] sm:$0xf]
    %v1432 = vld [vmem:[%s1 + $0x15b8] sm:$0xf]
    %v1433 = vld [vmem:[%s1 + $0x15bc] sm:$0xf]
    %v1434 = vld [vmem:[%s1 + $0x15c0] sm:$0xf]
    %v1435 = vld [vmem:[%s1 + $0x15c4] sm:$0xf]
    %v1436 = vld [vmem:[%s1 + $0x15c8] sm:$0xf]
    %v1437 = vld [vmem:[%s1 + $0x15cc] sm:$0xf]
    %v1438 = vld [vmem:[%s1 + $0x15d0] sm:$0xf]
    %v1439 = vld [vmem:[%s1 + $0x15d4] sm:$0xf]
    %v1440 = vld [vmem:[%s1 + $0x15d8] sm:$0xf]
    %v1441 = vld [vmem:[%s1 + $0x15dc] sm:$0xf]
    %v1442 = vld [vmem:[%s1 + $0x15e0] sm:$0xf]
    %v1443 = vld [vmem:[%s1 + $0x15e4] sm:$0xf]
    %v1444 = vld [vmem:[%s1 + $0x15e8] sm:$0xf]
    %v1445 = vld [vmem:[%s1 + $0x15ec] sm:$0xf]
    %v1446 = vld [vmem:[%s1 + $0x15f0] sm:$0xf]
    %v1447 = vld [vmem:[%s1 + $0x15f4] sm:$0xf]
    %v1448 = vld [vmem:[%s1 + $0x15f8] sm:$0xf]
    %v1449 = vld [vmem:[%s1 + $0x15fc] sm:$0xf]
    %v1450 = vld [vmem:[%s1 + $0x1600] sm:$0xf]
    %v1451 = vld [vmem:[%s1 + $0x1604] sm:$0xf]
    %v1452 = vld [vmem:[%s1 + $0x1608] sm:$0xf]
    %v1453 = vld [vmem:[%s1 + $0x160c] sm:$0xf]
    %v1454 = vld [vmem:[%s1 + $0x1610] sm:$0xf]
    %v1455 = vld [vmem:[%s1 + $0x1614] sm:$0xf]
    %v1456 = vld [vmem:[%s1 + $0x1618] sm:$0xf]
    %v1457 = vld [vmem:[%s1 + $0x161c] sm:$0xf]
    %v1458 = vld [vmem:[%s1 + $0x1620] sm:$0xf]
    %v1459 = vld [vmem:[%s1 + $0x1624] sm:$0xf]
    %v1460 = vld [vmem:[%s1 + $0x1628] sm:$0xf]
    %v1461 = vld [vmem:[%s1 + $0x162c] sm:$0xf]
    %v1462 = vld [vmem:[%s1 + $0x1630] sm:$0xf]
    %v1463 = vld [vmem:[%s1 + $0x1634] sm:$0xf]
    %v1464 = vld [vmem:[%s1 + $0x1638] sm:$0xf]
    %v1465 = vld [vmem:[%s1 + $0x163c] sm:$0xf]
    %v1466 = vld [vmem:[%s1 + $0x1640] sm:$0xf]
    %v1467 = vld [vmem:[%s1 + $0x1644] sm:$0xf]
    %v1468 = vld [vmem:[%s1 + $0x1648] sm:$0xf]
    %v1469 = vld [vmem:[%s1 + $0x164c] sm:$0xf]
    %v1470 = vld [vmem:[%s1 + $0x1650] sm:$0xf]
    %v1471 = vld [vmem:[%s1 + $0x1654] sm:$0xf]
    %v1472 = vld [vmem:[%s1 + $0x1658] sm:$0xf]
    %v1473 = vld [vmem:[%s1 + $0x165c] sm:$0xf]
    %v1474 = vld [vmem:[%s1 + $0x1660] sm:$0xf]
    %v1475 = vld [vmem:[%s1 + $0x1664] sm:$0xf]
    %v1476 = vld [vmem:[%s1 + $0x1668] sm:$0xf]
    %v1477 = vld [vmem:[%s1 + $0x166c] sm:$0xf]
    %v1478 = vld [vmem:[%s1 + $0x1670] sm:$0xf]
    %v1479 = vld [vmem:[%s1 + $0x1674] sm:$0xf]
    %v1480 = vld [vmem:[%s1 + $0x1678] sm:$0xf]
    %v1481 = vld [vmem:[%s1 + $0x167c] sm:$0xf]
    %v1482 = vld [vmem:[%s1 + $0x1680] sm:$0xf]
    %v1483 = vld [vmem:[%s1 + $0x1684] sm:$0xf]
    %v1484 = vld [vmem:[%s1 + $0x1688] sm:$0xf]
    %v1485 = vld [vmem:[%s1 + $0x168c] sm:$0xf]
    %v1486 = vld [vmem:[%s1 + $0x1690] sm:$0xf]
    %v1487 = vld [vmem:[%s1 + $0x1694] sm:$0xf]
    %v1488 = vld [vmem:[%s1 + $0x1698] sm:$0xf]
    %v1489 = vld [vmem:[%s1 + $0x169c] sm:$0xf]
    %v1490 = vld [vmem:[%s1 + $0x16a0] sm:$0xf]
    %v1491 = vld [vmem:[%s1 + $0x16a4] sm:$0xf]
    %v1492 = vld [vmem:[%s1 + $0x16a8] sm:$0xf]
    %v1493 = vld [vmem:[%s1 + $0x16ac] sm:$0xf]
    %v1494 = vld [vmem:[%s1 + $0x16b0] sm:$0xf]
    %v1495 = vld [vmem:[%s1 + $0x16b4] sm:$0xf]
    %v1496 = vld [vmem:[%s1 + $0x16b8] sm:$0xf]
    %v1497 = vld [vmem:[%s1 + $0x16bc] sm:$0xf]
    %v1498 = vld [vmem:[%s1 + $0x16c0] sm:$0xf]
    %v1499 = vld [vmem:[%s1 + $0x16c4] sm:$0xf]
    %v1500 = vld [vmem:[%s1 + $0x16c8] sm:$0xf]
    %v1501 = vld [vmem:[%s1 + $0x16cc] sm:$0xf]
    %v1502 = vld [vmem:[%s1 + $0x16d0] sm:$0xf]
    %v1503 = vld [vmem:[%s1 + $0x16d4] sm:$0xf]
    %v1504 = vld [vmem:[%s1 + $0x16d8] sm:$0xf]
    %v1505 = vld [vmem:[%s1 + $0x16dc] sm:$0xf]
    %v1506 = vld [vmem:[%s1 + $0x16e0] sm:$0xf]
    %v1507 = vld [vmem:[%s1 + $0x16e4] sm:$0xf]
    %v1508 = vld [vmem:[%s1 + $0x16e8] sm:$0xf]
    %v1509 = vld [vmem:[%s1 + $0x16ec] sm:$0xf]
    %v1510 = vld [vmem:[%s1 + $0x16f0] sm:$0xf]
    %v1511 = vld [vmem:[%s1 + $0x16f4] sm:$0xf]
    %v1512 = vld [vmem:[%s1 + $0x16f8] sm:$0xf]
    %v1513 = vld [vmem:[%s1 + $0x16fc] sm:$0xf]
    %v1514 = vld [vmem:[%s1 + $0x1700] sm:$0xf]
    %v1515 = vld [vmem:[%s1 + $0x1704] sm:$0xf]
    %v1516 = vld [vmem:[%s1 + $0x1708] sm:$0xf]
    %v1517 = vld [vmem:[%s1 + $0x170c] sm:$0xf]
    %v1518 = vld [vmem:[%s1 + $0x1710] sm:$0xf]
    %v1519 = vld [vmem:[%s1 + $0x1714] sm:$0xf]
    %v1520 = vld [vmem:[%s1 + $0x1718] sm:$0xf]
    %v1521 = vld [vmem:[%s1 + $0x171c] sm:$0xf]
    %v1522 = vld [vmem:[%s1 + $0x1720] sm:$0xf]
    %v1523 = vld [vmem:[%s1 + $0x1724] sm:$0xf]
    %v1524 = vld [vmem:[%s1 + $0x1728] sm:$0xf]
    %v1525 = vld [vmem:[%s1 + $0x172c] sm:$0xf]
    %v1526 = vld [vmem:[%s1 + $0x1730] sm:$0xf]
    %v1527 = vld [vmem:[%s1 + $0x1734] sm:$0xf]
    %v1528 = vld [vmem:[%s1 + $0x1738] sm:$0xf]
    %v1529 = vld [vmem:[%s1 + $0x173c] sm:$0xf]
    %v1530 = vld [vmem:[%s1 + $0x1740] sm:$0xf]
    %v1531 = vld [vmem:[%s1 + $0x1744] sm:$0xf]
    %v1532 = vld [vmem:[%s1 + $0x1748] sm:$0xf]
    %v1533 = vld [vmem:[%s1 + $0x174c] sm:$0xf]
    %v1534 = vld [vmem:[%s1 + $0x1750] sm:$0xf]
    %v1535 = vld [vmem:[%s1 + $0x1754] sm:$0xf]
    %v1536 = vld [vmem:[%s1 + $0x1758] sm:$0xf]
    %v1537 = vld [vmem:[%s1 + $0x175c] sm:$0xf]
    %v1538 = vld [vmem:[%s1 + $0x1760] sm:$0xf]
    %v1539 = vld [vmem:[%s1 + $0x1764] sm:$0xf]
    %v1540 = vld [vmem:[%s1 + $0x1768] sm:$0xf]
    %v1541 = vld [vmem:[%s1 + $0x176c] sm:$0xf]
    %v1542 = vld [vmem:[%s1 + $0x1770] sm:$0xf]
    %v1543 = vld [vmem:[%s1 + $0x1774] sm:$0xf]
    %v1544 = vld [vmem:[%s1 + $0x1778] sm:$0xf]
    %v1545 = vld [vmem:[%s1 + $0x177c] sm:$0xf]
    %v1546 = vld [vmem:[%s1 + $0x1780] sm:$0xf]
    %v1547 = vld [vmem:[%s1 + $0x1784] sm:$0xf]
    %v1548 = vld [vmem:[%s1 + $0x1788] sm:$0xf]
    %v1549 = vld [vmem:[%s1 + $0x178c] sm:$0xf]
    %v1550 = vld [vmem:[%s1 + $0x1790] sm:$0xf]
    %v1551 = vld [vmem:[%s1 + $0x1794] sm:$0xf]
    %v1552 = vld [vmem:[%s1 + $0x1798] sm:$0xf]
    %v1553 = vld [vmem:[%s1 + $0x179c] sm:$0xf]
    %v1554 = vld [vmem:[%s1 + $0x17a0] sm:$0xf]
    %v1555 = vld [vmem:[%s1 + $0x17a4] sm:$0xf]
    %v1556 = vld [vmem:[%s1 + $0x17a8] sm:$0xf]
    %v1557 = vld [vmem:[%s1 + $0x17ac] sm:$0xf]
    %v1558 = vld [vmem:[%s1 + $0x17b0] sm:$0xf]
    %v1559 = vld [vmem:[%s1 + $0x17b4] sm:$0xf]
    %v1560 = vld [vmem:[%s1 + $0x17b8] sm:$0xf]
    %v1561 = vld [vmem:[%s1 + $0x17bc] sm:$0xf]
    %v1562 = vld [vmem:[%s1 + $0x17c0] sm:$0xf]
    %v1563 = vld [vmem:[%s1 + $0x17c4] sm:$0xf]
    %v1564 = vld [vmem:[%s1 + $0x17c8] sm:$0xf]
    %v1565 = vld [vmem:[%s1 + $0x17cc] sm:$0xf]
    %v1566 = vld [vmem:[%s1 + $0x17d0] sm:$0xf]
    %v1567 = vld [vmem:[%s1 + $0x17d4] sm:$0xf]
    %v1568 = vld [vmem:[%s1 + $0x17d8] sm:$0xf]
    %v1569 = vld [vmem:[%s1 + $0x17dc] sm:$0xf]
    %v1570 = vld [vmem:[%s1 + $0x17e0] sm:$0xf]
    %v1571 = vld [vmem:[%s1 + $0x17e4] sm:$0xf]
    %v1572 = vld [vmem:[%s1 + $0x17e8] sm:$0xf]
    %v1573 = vld [vmem:[%s1 + $0x17ec] sm:$0xf]
    %v1574 = vld [vmem:[%s1 + $0x17f0] sm:$0xf]
    %v1575 = vld [vmem:[%s1 + $0x17f4] sm:$0xf]
    %v1576 = vld [vmem:[%s1 + $0x17f8] sm:$0xf]
    %v1577 = vld [vmem:[%s1 + $0x17fc] sm:$0xf]
    %v1578 = vld [vmem:[%s1 + $0x1800] sm:$0xf]
    %v1579 = vld [vmem:[%s1 + $0x1804] sm:$0xf]
    %v1580 = vld [vmem:[%s1 + $0x1808] sm:$0xf]
    %v1581 = vld [vmem:[%s1 + $0x180c] sm:$0xf]
    %v1582 = vld [vmem:[%s1 + $0x1810] sm:$0xf]
    %v1583 = vld [vmem:[%s1 + $0x1814] sm:$0xf]
    %v1584 = vld [vmem:[%s1 + $0x1818] sm:$0xf]
    %v1585 = vld [vmem:[%s1 + $0x181c] sm:$0xf]
    %v1586 = vld [vmem:[%s1 + $0x1820] sm:$0xf]
    %v1587 = vld [vmem:[%s1 + $0x1824] sm:$0xf]
    %v1588 = vld [vmem:[%s1 + $0x1828] sm:$0xf]
    %v1589 = vld [vmem:[%s1 + $0x182c] sm:$0xf]
    %v1590 = vld [vmem:[%s1 + $0x1830] sm:$0xf]
    %v1591 = vld [vmem:[%s1 + $0x1834] sm:$0xf]
    %v1592 = vld [vmem:[%s1 + $0x1838] sm:$0xf]
    %v1593 = vld [vmem:[%s1 + $0x183c] sm:$0xf]
    %v1594 = vld [vmem:[%s1 + $0x1840] sm:$0xf]
    %v1595 = vld [vmem:[%s1 + $0x1844] sm:$0xf]
    %v1596 = vld [vmem:[%s1 + $0x1848] sm:$0xf]
    %v1597 = vld [vmem:[%s1 + $0x184c] sm:$0xf]
    %v1598 = vld [vmem:[%s1 + $0x1850] sm:$0xf]
    %v1599 = vld [vmem:[%s1 + $0x1854] sm:$0xf]
    %v1600 = vld [vmem:[%s1 + $0x1858] sm:$0xf]
    %v1601 = vld [vmem:[%s1 + $0x185c] sm:$0xf]
    %v1602 = vld [vmem:[%s1 + $0x1860] sm:$0xf]
    %v1603 = vld [vmem:[%s1 + $0x1864] sm:$0xf]
    %v1604 = vld [vmem:[%s1 + $0x1868] sm:$0xf]
    %v1605 = vld [vmem:[%s1 + $0x186c] sm:$0xf]
    %v1606 = vld [vmem:[%s1 + $0x1870] sm:$0xf]
    %v1607 = vld [vmem:[%s1 + $0x1874] sm:$0xf]
    %v1608 = vld [vmem:[%s1 + $0x1878] sm:$0xf]
    %v1609 = vld [vmem:[%s1 + $0x187c] sm:$0xf]
    %v1610 = vld [vmem:[%s1 + $0x1880] sm:$0xf]
    %v1611 = vld [vmem:[%s1 + $0x1884] sm:$0xf]
    %v1612 = vld [vmem:[%s1 + $0x1888] sm:$0xf]
    %v1613 = vld [vmem:[%s1 + $0x188c] sm:$0xf]
    %v1614 = vld [vmem:[%s1 + $0x1890] sm:$0xf]
    %v1615 = vld [vmem:[%s1 + $0x1894] sm:$0xf]
    %v1616 = vld [vmem:[%s1 + $0x1898] sm:$0xf]
    %v1617 = vld [vmem:[%s1 + $0x189c] sm:$0xf]
    %v1618 = vld [vmem:[%s1 + $0x18a0] sm:$0xf]
    %v1619 = vld [vmem:[%s1 + $0x18a4] sm:$0xf]
    %v1620 = vld [vmem:[%s1 + $0x18a8] sm:$0xf]
    %v1621 = vld [vmem:[%s1 + $0x18ac] sm:$0xf]
    %v1622 = vld [vmem:[%s1 + $0x18b0] sm:$0xf]
    %v1623 = vld [vmem:[%s1 + $0x18b4] sm:$0xf]
    %v1624 = vld [vmem:[%s1 + $0x18b8] sm:$0xf]
    %v1625 = vld [vmem:[%s1 + $0x18bc] sm:$0xf]
    %v1626 = vld [vmem:[%s1 + $0x18c0] sm:$0xf]
    %v1627 = vld [vmem:[%s1 + $0x18c4] sm:$0xf]
    %v1628 = vld [vmem:[%s1 + $0x18c8] sm:$0xf]
    %v1629 = vld [vmem:[%s1 + $0x18cc] sm:$0xf]
    %v1630 = vld [vmem:[%s1 + $0x18d0] sm:$0xf]
    %v1631 = vld [vmem:[%s1 + $0x18d4] sm:$0xf]
    %v1632 = vld [vmem:[%s1 + $0x18d8] sm:$0xf]
    %v1633 = vld [vmem:[%s1 + $0x18dc] sm:$0xf]
    %v1634 = vld [vmem:[%s1 + $0x18e0] sm:$0xf]
    %v1635 = vld [vmem:[%s1 + $0x18e4] sm:$0xf]
    %v1636 = vld [vmem:[%s1 + $0x18e8] sm:$0xf]
    %v1637 = vld [vmem:[%s1 + $0x18ec] sm:$0xf]
    %v1638 = vld [vmem:[%s1 + $0x18f0] sm:$0xf]
    %v1639 = vld [vmem:[%s1 + $0x18f4] sm:$0xf]
    %v1640 = vld [vmem:[%s1 + $0x18f8] sm:$0xf]
    %v1641 = vld [vmem:[%s1 + $0x18fc] sm:$0xf]
    %v1642 = vld [vmem:[%s1 + $0x1900] sm:$0xf]
    %v1643 = vld [vmem:[%s1 + $0x1904] sm:$0xf]
    %v1644 = vld [vmem:[%s1 + $0x1908] sm:$0xf]
    %v1645 = vld [vmem:[%s1 + $0x190c] sm:$0xf]
    %v1646 = vld [vmem:[%s1 + $0x1910] sm:$0xf]
    %v1647 = vld [vmem:[%s1 + $0x1914] sm:$0xf]
    %v1648 = vld [vmem:[%s1 + $0x1918] sm:$0xf]
    %v1649 = vld [vmem:[%s1 + $0x191c] sm:$0xf]
    %v1650 = vld [vmem:[%s1 + $0x1920] sm:$0xf]
    %v1651 = vld [vmem:[%s1 + $0x1924] sm:$0xf]
    %v1652 = vld [vmem:[%s1 + $0x1928] sm:$0xf]
    %v1653 = vld [vmem:[%s1 + $0x192c] sm:$0xf]
    %v1654 = vld [vmem:[%s1 + $0x1930] sm:$0xf]
    %v1655 = vld [vmem:[%s1 + $0x1934] sm:$0xf]
    %v1656 = vld [vmem:[%s1 + $0x1938] sm:$0xf]
    %v1657 = vld [vmem:[%s1 + $0x193c] sm:$0xf]
    %v1658 = vld [vmem:[%s1 + $0x1940] sm:$0xf]
    %v1659 = vld [vmem:[%s1 + $0x1944] sm:$0xf]
    %v1660 = vld [vmem:[%s1 + $0x1948] sm:$0xf]
    %v1661 = vld [vmem:[%s1 + $0x194c] sm:$0xf]
    %v1662 = vld [vmem:[%s1 + $0x1950] sm:$0xf]
    %v1663 = vld [vmem:[%s1 + $0x1954] sm:$0xf]
    %v1664 = vld [vmem:[%s1 + $0x1958] sm:$0xf]
    %v1665 = vld [vmem:[%s1 + $0x195c] sm:$0xf]
    %v1666 = vld [vmem:[%s1 + $0x1960] sm:$0xf]
    %v1667 = vld [vmem:[%s1 + $0x1964] sm:$0xf]
    %v1668 = vld [vmem:[%s1 + $0x1968] sm:$0xf]
    %v1669 = vld [vmem:[%s1 + $0x196c] sm:$0xf]
    %v1670 = vld [vmem:[%s1 + $0x1970] sm:$0xf]
    %v1671 = vld [vmem:[%s1 + $0x1974] sm:$0xf]
    %v1672 = vld [vmem:[%s1 + $0x1978] sm:$0xf]
    %v1673 = vld [vmem:[%s1 + $0x197c] sm:$0xf]
    %v1674 = vld [vmem:[%s1 + $0x1980] sm:$0xf]
    %v1675 = vld [vmem:[%s1 + $0x1984] sm:$0xf]
    %v1676 = vld [vmem:[%s1 + $0x1988] sm:$0xf]
    %v1677 = vld [vmem:[%s1 + $0x198c] sm:$0xf]
    %v1678 = vld [vmem:[%s1 + $0x1990] sm:$0xf]
    %v1679 = vld [vmem:[%s1 + $0x1994] sm:$0xf]
    %v1680 = vld [vmem:[%s1 + $0x1998] sm:$0xf]
    %v1681 = vld [vmem:[%s1 + $0x199c] sm:$0xf]
    %v1682 = vld [vmem:[%s1 + $0x19a0] sm:$0xf]
    %v1683 = vld [vmem:[%s1 + $0x19a4] sm:$0xf]
    %v1684 = vld [vmem:[%s1 + $0x19a8] sm:$0xf]
    %v1685 = vld [vmem:[%s1 + $0x19ac] sm:$0xf]
    %v1686 = vld [vmem:[%s1 + $0x19b0] sm:$0xf]
    %v1687 = vld [vmem:[%s1 + $0x19b4] sm:$0xf]
    %v1688 = vld [vmem:[%s1 + $0x19b8] sm:$0xf]
    %v1689 = vld [vmem:[%s1 + $0x19bc] sm:$0xf]
    %v1690 = vld [vmem:[%s1 + $0x19c0] sm:$0xf]
    %v1691 = vld [vmem:[%s1 + $0x19c4] sm:$0xf]
    %v1692 = vld [vmem:[%s1 + $0x19c8] sm:$0xf]
    %v1693 = vld [vmem:[%s1 + $0x19cc] sm:$0xf]
    %v1694 = vld [vmem:[%s1 + $0x19d0] sm:$0xf]
    %v1695 = vld [vmem:[%s1 + $0x19d4] sm:$0xf]
    %v1696 = vld [vmem:[%s1 + $0x19d8] sm:$0xf]
    %v1697 = vld [vmem:[%s1 + $0x19dc] sm:$0xf]
    %v1698 = vld [vmem:[%s1 + $0x19e0] sm:$0xf]
    %v1699 = vld [vmem:[%s1 + $0x19e4] sm:$0xf]
    %v1700 = vld [vmem:[%s1 + $0x19e8] sm:$0xf]
    %v1701 = vld [vmem:[%s1 + $0x19ec] sm:$0xf]
    %v1702 = vld [vmem:[%s1 + $0x19f0] sm:$0xf]
    %v1703 = vld [vmem:[%s1 + $0x19f4] sm:$0xf]
    %v1704 = vld [vmem:[%s1 + $0x19f8] sm:$0xf]
    %v1705 = vld [vmem:[%s1 + $0x19fc] sm:$0xf]
    %v1706 = vld [vmem:[%s1 + $0x1a00] sm:$0xf]
    %v1707 = vld [vmem:[%s1 + $0x1a04] sm:$0xf]
    %v1708 = vld [vmem:[%s1 + $0x1a08] sm:$0xf]
    %v1709 = vld [vmem:[%s1 + $0x1a0c] sm:$0xf]
    %v1710 = vld [vmem:[%s1 + $0x1a10] sm:$0xf]
    %v1711 = vld [vmem:[%s1 + $0x1a14] sm:$0xf]
    %v1712 = vld [vmem:[%s1 + $0x1a18] sm:$0xf]
    %v1713 = vld [vmem:[%s1 + $0x1a1c] sm:$0xf]
    %v1714 = vld [vmem:[%s1 + $0x1a20] sm:$0xf]
    %v1715 = vld [vmem:[%s1 + $0x1a24] sm:$0xf]
    %v1716 = vld [vmem:[%s1 + $0x1a28] sm:$0xf]
    %v1717 = vld [vmem:[%s1 + $0x1a2c] sm:$0xf]
    %v1718 = vld [vmem:[%s1 + $0x1a30] sm:$0xf]
    %v1719 = vld [vmem:[%s1 + $0x1a34] sm:$0xf]
    %v1720 = vld [vmem:[%s1 + $0x1a38] sm:$0xf]
    %v1721 = vld [vmem:[%s1 + $0x1a3c] sm:$0xf]
    %v1722 = vld [vmem:[%s1 + $0x1a40] sm:$0xf]
    %v1723 = vld [vmem:[%s1 + $0x1a44] sm:$0xf]
    %v1724 = vld [vmem:[%s1 + $0x1a48] sm:$0xf]
    %v1725 = vld [vmem:[%s1 + $0x1a4c] sm:$0xf]
    %v1726 = vld [vmem:[%s1 + $0x1a50] sm:$0xf]
    %v1727 = vld [vmem:[%s1 + $0x1a54] sm:$0xf]
    %v1728 = vld [vmem:[%s1 + $0x1a58] sm:$0xf]
    %v1729 = vld [vmem:[%s1 + $0x1a5c] sm:$0xf]
    %v1730 = vld [vmem:[%s1 + $0x1a60] sm:$0xf]
    %v1731 = vld [vmem:[%s1 + $0x1a64] sm:$0xf]
    %v1732 = vld [vmem:[%s1 + $0x1a68] sm:$0xf]
    %v1733 = vld [vmem:[%s1 + $0x1a6c] sm:$0xf]
    %v1734 = vld [vmem:[%s1 + $0x1a70] sm:$0xf]
    %v1735 = vld [vmem:[%s1 + $0x1a74] sm:$0xf]
    %v1736 = vld [vmem:[%s1 + $0x1a78] sm:$0xf]
    %v1737 = vld [vmem:[%s1 + $0x1a7c] sm:$0xf]
    %v1738 = vld [vmem:[%s1 + $0x1a80] sm:$0xf]
    %v1739 = vld [vmem:[%s1 + $0x1a84] sm:$0xf]
    %v1740 = vld [vmem:[%s1 + $0x1a88] sm:$0xf]
    %v1741 = vld [vmem:[%s1 + $0x1a8c] sm:$0xf]
    %v1742 = vld [vmem:[%s1 + $0x1a90] sm:$0xf]
    %v1743 = vld [vmem:[%s1 + $0x1a94] sm:$0xf]
    %v1744 = vld [vmem:[%s1 + $0x1a98] sm:$0xf]
    %v1745 = vld [vmem:[%s1 + $0x1a9c] sm:$0xf]
    %v1746 = vld [vmem:[%s1 + $0x1aa0] sm:$0xf]
    %v1747 = vld [vmem:[%s1 + $0x1aa4] sm:$0xf]
    %v1748 = vld [vmem:[%s1 + $0x1aa8] sm:$0xf]
    %v1749 = vld [vmem:[%s1 + $0x1aac] sm:$0xf]
    %v1750 = vld [vmem:[%s1 + $0x1ab0] sm:$0xf]
    %v1751 = vld [vmem:[%s1 + $0x1ab4] sm:$0xf]
    %v1752 = vld [vmem:[%s1 + $0x1ab8] sm:$0xf]
    %v1753 = vld [vmem:[%s1 + $0x1abc] sm:$0xf]
    %v1754 = vld [vmem:[%s1 + $0x1ac0] sm:$0xf]
    %v1755 = vld [vmem:[%s1 + $0x1ac4] sm:$0xf]
    %v1756 = vld [vmem:[%s1 + $0x1ac8] sm:$0xf]
    %v1757 = vld [vmem:[%s1 + $0x1acc] sm:$0xf]
    %v1758 = vld [vmem:[%s1 + $0x1ad0] sm:$0xf]
    %v1759 = vld [vmem:[%s1 + $0x1ad4] sm:$0xf]
    %v1760 = vld [vmem:[%s1 + $0x1ad8] sm:$0xf]
    %v1761 = vld [vmem:[%s1 + $0x1adc] sm:$0xf]
    %v1762 = vld [vmem:[%s1 + $0x1ae0] sm:$0xf]
    %v1763 = vld [vmem:[%s1 + $0x1ae4] sm:$0xf]
    %v1764 = vld [vmem:[%s1 + $0x1ae8] sm:$0xf]
    %v1765 = vld [vmem:[%s1 + $0x1aec] sm:$0xf]
    %v1766 = vld [vmem:[%s1 + $0x1af0] sm:$0xf]
    %v1767 = vld [vmem:[%s1 + $0x1af4] sm:$0xf]
    %v1768 = vld [vmem:[%s1 + $0x1af8] sm:$0xf]
    %v1769 = vld [vmem:[%s1 + $0x1afc] sm:$0xf]
    %v1770 = vld [vmem:[%s1 + $0x1b00] sm:$0xf]
    %v1771 = vld [vmem:[%s1 + $0x1b04] sm:$0xf]
    %v1772 = vld [vmem:[%s1 + $0x1b08] sm:$0xf]
    %v1773 = vld [vmem:[%s1 + $0x1b0c] sm:$0xf]
    %v1774 = vld [vmem:[%s1 + $0x1b10] sm:$0xf]
    %v1775 = vld [vmem:[%s1 + $0x1b14] sm:$0xf]
    %v1776 = vld [vmem:[%s1 + $0x1b18] sm:$0xf]
    %v1777 = vld [vmem:[%s1 + $0x1b1c] sm:$0xf]
    %v1778 = vld [vmem:[%s1 + $0x1b20] sm:$0xf]
    %v1779 = vld [vmem:[%s1 + $0x1b24] sm:$0xf]
    %v1780 = vld [vmem:[%s1 + $0x1b28] sm:$0xf]
    %v1781 = vld [vmem:[%s1 + $0x1b2c] sm:$0xf]
    %v1782 = vld [vmem:[%s1 + $0x1b30] sm:$0xf]
    %v1783 = vld [vmem:[%s1 + $0x1b34] sm:$0xf]
    %v1784 = vld [vmem:[%s1 + $0x1b38] sm:$0xf]
    %v1785 = vld [vmem:[%s1 + $0x1b3c] sm:$0xf]
    %v1786 = vld [vmem:[%s1 + $0x1b40] sm:$0xf]
    %v1787 = vld [vmem:[%s1 + $0x1b44] sm:$0xf]
    %v1788 = vld [vmem:[%s1 + $0x1b48] sm:$0xf]
    %v1789 = vld [vmem:[%s1 + $0x1b4c] sm:$0xf]
    %v1790 = vld [vmem:[%s1 + $0x1b50] sm:$0xf]
    %v1791 = vld [vmem:[%s1 + $0x1b54] sm:$0xf]
    %v1792 = vld [vmem:[%s1 + $0x1b58] sm:$0xf]
    %v1793 = vld [vmem:[%s1 + $0x1b5c] sm:$0xf]
    %v1794 = vld [vmem:[%s1 + $0x1b60] sm:$0xf]
    %v1795 = vld [vmem:[%s1 + $0x1b64] sm:$0xf]
    %v1796 = vld [vmem:[%s1 + $0x1b68] sm:$0xf]
    %v1797 = vld [vmem:[%s1 + $0x1b6c] sm:$0xf]
    %v1798 = vld [vmem:[%s1 + $0x1b70] sm:$0xf]
    %v1799 = vld [vmem:[%s1 + $0x1b74] sm:$0xf]
    %v1800 = vld [vmem:[%s1 + $0x1b78] sm:$0xf]
    %v1801 = vld [vmem:[%s1 + $0x1b7c] sm:$0xf]
    %v1802 = vld [vmem:[%s1 + $0x1b80] sm:$0xf]
    %v1803 = vld [vmem:[%s1 + $0x1b84] sm:$0xf]
    %v1804 = vld [vmem:[%s1 + $0x1b88] sm:$0xf]
    %v1805 = vld [vmem:[%s1 + $0x1b8c] sm:$0xf]
    %v1806 = vld [vmem:[%s1 + $0x1b90] sm:$0xf]
    %v1807 = vld [vmem:[%s1 + $0x1b94] sm:$0xf]
    %v1808 = vld [vmem:[%s1 + $0x1b98] sm:$0xf]
    %v1809 = vld [vmem:[%s1 + $0x1b9c] sm:$0xf]
    %v1810 = vld [vmem:[%s1 + $0x1ba0] sm:$0xf]
    %v1811 = vld [vmem:[%s1 + $0x1ba4] sm:$0xf]
    %v1812 = vld [vmem:[%s1 + $0x1ba8] sm:$0xf]
    %v1813 = vld [vmem:[%s1 + $0x1bac] sm:$0xf]
    %v1814 = vld [vmem:[%s1 + $0x1bb0] sm:$0xf]
    %v1815 = vld [vmem:[%s1 + $0x1bb4] sm:$0xf]
    %v1816 = vld [vmem:[%s1 + $0x1bb8] sm:$0xf]
    %v1817 = vld [vmem:[%s1 + $0x1bbc] sm:$0xf]
    %v1818 = vld [vmem:[%s1 + $0x1bc0] sm:$0xf]
    %v1819 = vld [vmem:[%s1 + $0x1bc4] sm:$0xf]
    %v1820 = vld [vmem:[%s1 + $0x1bc8] sm:$0xf]
    %v1821 = vld [vmem:[%s1 + $0x1bcc] sm:$0xf]
    %v1822 = vld [vmem:[%s1 + $0x1bd0] sm:$0xf]
    %v1823 = vld [vmem:[%s1 + $0x1bd4] sm:$0xf]
    %v1824 = vld [vmem:[%s1 + $0x1bd8] sm:$0xf]
    %v1825 = vld [vmem:[%s1 + $0x1bdc] sm:$0xf]
    %v1826 = vld [vmem:[%s1 + $0x1be0] sm:$0xf]
    %v1827 = vld [vmem:[%s1 + $0x1be4] sm:$0xf]
    %v1828 = vld [vmem:[%s1 + $0x1be8] sm:$0xf]
    %v1829 = vld [vmem:[%s1 + $0x1bec] sm:$0xf]
    %v1830 = vld [vmem:[%s1 + $0x1bf0] sm:$0xf]
    %v1831 = vld [vmem:[%s1 + $0x1bf4] sm:$0xf]
    %v1832 = vld [vmem:[%s1 + $0x1bf8] sm:$0xf]
    %v1833 = vld [vmem:[%s1 + $0x1bfc] sm:$0xf]
    %v1834 = vld [vmem:[%s1 + $0x1c00] sm:$0xf]
    %v1835 = vld [vmem:[%s1 + $0x1c04] sm:$0xf]
    %v1836 = vld [vmem:[%s1 + $0x1c08] sm:$0xf]
    %v1837 = vld [vmem:[%s1 + $0x1c0c] sm:$0xf]
    %v1838 = vld [vmem:[%s1 + $0x1c10] sm:$0xf]
    %v1839 = vld [vmem:[%s1 + $0x1c14] sm:$0xf]
    %v1840 = vld [vmem:[%s1 + $0x1c18] sm:$0xf]
    %v1841 = vld [vmem:[%s1 + $0x1c1c] sm:$0xf]
    %v1842 = vld [vmem:[%s1 + $0x1c20] sm:$0xf]
    %v1843 = vld [vmem:[%s1 + $0x1c24] sm:$0xf]
    %v1844 = vld [vmem:[%s1 + $0x1c28] sm:$0xf]
    %v1845 = vld [vmem:[%s1 + $0x1c2c] sm:$0xf]
    %v1846 = vld [vmem:[%s1 + $0x1c30] sm:$0xf]
    %v1847 = vld [vmem:[%s1 + $0x1c34] sm:$0xf]
    %v1848 = vld [vmem:[%s1 + $0x1c38] sm:$0xf]
    %v1849 = vld [vmem:[%s1 + $0x1c3c] sm:$0xf]
    %v1850 = vld [vmem:[%s1 + $0x1c40] sm:$0xf]
    %v1851 = vld [vmem:[%s1 + $0x1c44] sm:$0xf]
    %v1852 = vld [vmem:[%s1 + $0x1c48] sm:$0xf]
    %v1853 = vld [vmem:[%s1 + $0x1c4c] sm:$0xf]
    %v1854 = vld [vmem:[%s1 + $0x1c50] sm:$0xf]
    %v1855 = vld [vmem:[%s1 + $0x1c54] sm:$0xf]
    %v1856 = vld [vmem:[%s1 + $0x1c58] sm:$0xf]
    %v1857 = vld [vmem:[%s1 + $0x1c5c] sm:$0xf]
    %v1858 = vld [vmem:[%s1 + $0x1c60] sm:$0xf]
    %v1859 = vld [vmem:[%s1 + $0x1c64] sm:$0xf]
    %v1860 = vld [vmem:[%s1 + $0x1c68] sm:$0xf]
    %v1861 = vld [vmem:[%s1 + $0x1c6c] sm:$0xf]
    %v1862 = vld [vmem:[%s1 + $0x1c70] sm:$0xf]
    %v1863 = vld [vmem:[%s1 + $0x1c74] sm:$0xf]
    %v1864 = vld [vmem:[%s1 + $0x1c78] sm:$0xf]
    %v1865 = vld [vmem:[%s1 + $0x1c7c] sm:$0xf]
    %v1866 = vld [vmem:[%s1 + $0x1c80] sm:$0xf]
    %v1867 = vld [vmem:[%s1 + $0x1c84] sm:$0xf]
    %v1868 = vld [vmem:[%s1 + $0x1c88] sm:$0xf]
    %v1869 = vld [vmem:[%s1 + $0x1c8c] sm:$0xf]
    %v1870 = vld [vmem:[%s1 + $0x1c90] sm:$0xf]
    %v1871 = vld [vmem:[%s1 + $0x1c94] sm:$0xf]
    %v1872 = vld [vmem:[%s1 + $0x1c98] sm:$0xf]
    %v1873 = vld [vmem:[%s1 + $0x1c9c] sm:$0xf]
    %v1874 = vld [vmem:[%s1 + $0x1ca0] sm:$0xf]
    %v1875 = vld [vmem:[%s1 + $0x1ca4] sm:$0xf]
    %v1876 = vld [vmem:[%s1 + $0x1ca8] sm:$0xf]
    %v1877 = vld [vmem:[%s1 + $0x1cac] sm:$0xf]
    %v1878 = vld [vmem:[%s1 + $0x1cb0] sm:$0xf]
    %v1879 = vld [vmem:[%s1 + $0x1cb4] sm:$0xf]
    %v1880 = vld [vmem:[%s1 + $0x1cb8] sm:$0xf]
    %v1881 = vld [vmem:[%s1 + $0x1cbc] sm:$0xf]
    %v1882 = vld [vmem:[%s1 + $0x1cc0] sm:$0xf]
    %v1883 = vld [vmem:[%s1 + $0x1cc4] sm:$0xf]
    %v1884 = vld [vmem:[%s1 + $0x1cc8] sm:$0xf]
    %v1885 = vld [vmem:[%s1 + $0x1ccc] sm:$0xf]
    %v1886 = vld [vmem:[%s1 + $0x1cd0] sm:$0xf]
    %v1887 = vld [vmem:[%s1 + $0x1cd4] sm:$0xf]
    %v1888 = vld [vmem:[%s1 + $0x1cd8] sm:$0xf]
    %v1889 = vld [vmem:[%s1 + $0x1cdc] sm:$0xf]
    %v1890 = vld [vmem:[%s1 + $0x1ce0] sm:$0xf]
    %v1891 = vld [vmem:[%s1 + $0x1ce4] sm:$0xf]
    %v1892 = vld [vmem:[%s1 + $0x1ce8] sm:$0xf]
    %v1893 = vld [vmem:[%s1 + $0x1cec] sm:$0xf]
    %v1894 = vld [vmem:[%s1 + $0x1cf0] sm:$0xf]
    %v1895 = vld [vmem:[%s1 + $0x1cf4] sm:$0xf]
    %v1896 = vld [vmem:[%s1 + $0x1cf8] sm:$0xf]
    %v1897 = vld [vmem:[%s1 + $0x1cfc] sm:$0xf]
    %1899 = vst [vmem:[#allocation1] ss:$9 sm:$0xff] %v27
    %v1900 = vld [vmem:[#allocation1] sm:$0xff]
    %v1901 = vld [vmem:[#allocation1 + $0x9] sm:$0xff]
    %v1902 = vld [vmem:[#allocation1 + $0x12] sm:$0xff]
    %v1903 = vld [vmem:[#allocation1 + $0x1b] sm:$0xff]
    %v1904 = vld [vmem:[#allocation1 + $0x24] sm:$0xff]
    %v1905 = vld [vmem:[#allocation1 + $0x2d] sm:$0xff]
    %v1906 = vld [vmem:[#allocation1 + $0x36] sm:$0xff]
    %v1907 = vld [vmem:[#allocation1 + $0x3f] sm:$0xff]
    %1909 = vst [vmem:[#allocation1] ss:$9 sm:$0xff] %v28
    %v1910 = vld [vmem:[#allocation1] sm:$0xff]
    %v1911 = vld [vmem:[#allocation1 + $0x9] sm:$0xff]
    %v1912 = vld [vmem:[#allocation1 + $0x12] sm:$0xff]
    %v1913 = vld [vmem:[#allocation1 + $0x1b] sm:$0xff]
    %v1914 = vld [vmem:[#allocation1 + $0x24] sm:$0xff]
    %v1915 = vld [vmem:[#allocation1 + $0x2d] sm:$0xff]
    %v1916 = vld [vmem:[#allocation1 + $0x36] sm:$0xff]
    %v1917 = vld [vmem:[#allocation1 + $0x3f] sm:$0xff]
    %1919 = vst [vmem:[#allocation1] ss:$9 sm:$0xff] %v29
    %v1920 = vld [vmem:[#allocation1] sm:$0xff]
    %v1921 = vld [vmem:[#allocation1 + $0x9] sm:$0xff]
    %v1922 = vld [vmem:[#allocation1 + $0x12] sm:$0xff]
    %v1923 = vld [vmem:[#allocation1 + $0x1b] sm:$0xff]
    %v1924 = vld [vmem:[#allocation1 + $0x24] sm:$0xff]
    %v1925 = vld [vmem:[#allocation1 + $0x2d] sm:$0xff]
    %v1926 = vld [vmem:[#allocation1 + $0x36] sm:$0xff]
    %v1927 = vld [vmem:[#allocation1 + $0x3f] sm:$0xff]
    %1929 = vst [vmem:[#allocation1] ss:$9 sm:$0xff] %v30
    %v1930 = vld [vmem:[#allocation1] sm:$0xff]
    %v1931 = vld [vmem:[#allocation1 + $0x9] sm:$0xff]
    %v1932 = vld [vmem:[#allocation1 + $0x12] sm:$0xff]
    %v1933 = vld [vmem:[#allocation1 + $0x1b] sm:$0xff]
    %v1934 = vld [vmem:[#allocation1 + $0x24] sm:$0xff]
    %v1935 = vld [vmem:[#allocation1 + $0x2d] sm:$0xff]
    %v1936 = vld [vmem:[#allocation1 + $0x36] sm:$0xff]
    %v1937 = vld [vmem:[#allocation1 + $0x3f] sm:$0xff]
    %1939 = vst [vmem:[#allocation1] ss:$9 sm:$0xff] %v31
    %v1940 = vld [vmem:[#allocation1] sm:$0xff]
    %v1941 = vld [vmem:[#allocation1 + $0x9] sm:$0xff]
    %v1942 = vld [vmem:[#allocation1 + $0x12] sm:$0xff]
    %v1943 = vld [vmem:[#allocation1 + $0x1b] sm:$0xff]
    %v1944 = vld [vmem:[#allocation1 + $0x24] sm:$0xff]
    %v1945 = vld [vmem:[#allocation1 + $0x2d] sm:$0xff]
    %v1946 = vld [vmem:[#allocation1 + $0x36] sm:$0xff]
    %v1947 = vld [vmem:[#allocation1 + $0x3f] sm:$0xff]
    %1949 = vst [vmem:[#allocation1] ss:$9 sm:$0xff] %v32
    %v1950 = vld [vmem:[#allocation1] sm:$0xff]
    %v1951 = vld [vmem:[#allocation1 + $0x9] sm:$0xff]
    %v1952 = vld [vmem:[#allocation1 + $0x12] sm:$0xff]
    %v1953 = vld [vmem:[#allocation1 + $0x1b] sm:$0xff]
    %v1954 = vld [vmem:[#allocation1 + $0x24] sm:$0xff]
    %v1955 = vld [vmem:[#allocation1 + $0x2d] sm:$0xff]
    %v1956 = vld [vmem:[#allocation1 + $0x36] sm:$0xff]
    %v1957 = vld [vmem:[#allocation1 + $0x3f] sm:$0xff]
    %1959 = vst [vmem:[#allocation1] ss:$9 sm:$0xff] %v33
    %v1960 = vld [vmem:[#allocation1] sm:$0xff]
    %v1961 = vld [vmem:[#allocation1 + $0x9] sm:$0xff]
    %v1962 = vld [vmem:[#allocation1 + $0x12] sm:$0xff]
    %v1963 = vld [vmem:[#allocation1 + $0x1b] sm:$0xff]
    %v1964 = vld [vmem:[#allocation1 + $0x24] sm:$0xff]
    %v1965 = vld [vmem:[#allocation1 + $0x2d] sm:$0xff]
    %v1966 = vld [vmem:[#allocation1 + $0x36] sm:$0xff]
    %v1967 = vld [vmem:[#allocation1 + $0x3f] sm:$0xff]
    %1969 = vst [vmem:[#allocation1] ss:$9 sm:$0xff] %v34
    %v1970 = vld [vmem:[#allocation1] sm:$0xff]
    %v1971 = vld [vmem:[#allocation1 + $0x9] sm:$0xff]
    %v1972 = vld [vmem:[#allocation1 + $0x12] sm:$0xff]
    %v1973 = vld [vmem:[#allocation1 + $0x1b] sm:$0xff]
    %v1974 = vld [vmem:[#allocation1 + $0x24] sm:$0xff]
    %v1975 = vld [vmem:[#allocation1 + $0x2d] sm:$0xff]
    %v1976 = vld [vmem:[#allocation1 + $0x36] sm:$0xff]
    %v1977 = vld [vmem:[#allocation1 + $0x3f] sm:$0xff]
    %1979 = vst [vmem:[#allocation1] ss:$9 sm:$0xff] %v35
    %v1980 = vld [vmem:[#allocation1] sm:$0xff]
    %v1981 = vld [vmem:[#allocation1 + $0x9] sm:$0xff]
    %v1982 = vld [vmem:[#allocation1 + $0x12] sm:$0xff]
    %v1983 = vld [vmem:[#allocation1 + $0x1b] sm:$0xff]
    %v1984 = vld [vmem:[#allocation1 + $0x24] sm:$0xff]
    %v1985 = vld [vmem:[#allocation1 + $0x2d] sm:$0xff]
    %v1986 = vld [vmem:[#allocation1 + $0x36] sm:$0xff]
    %v1987 = vld [vmem:[#allocation1 + $0x3f] sm:$0xff]
    %1989 = vst [vmem:[#allocation1] ss:$9 sm:$0xff] %v36
    %v1990 = vld [vmem:[#allocation1] sm:$0xff]
    %v1991 = vld [vmem:[#allocation1 + $0x9] sm:$0xff]
    %v1992 = vld [vmem:[#allocation1 + $0x12] sm:$0xff]
    %v1993 = vld [vmem:[#allocation1 + $0x1b] sm:$0xff]
    %v1994 = vld [vmem:[#allocation1 + $0x24] sm:$0xff]
    %v1995 = vld [vmem:[#allocation1 + $0x2d] sm:$0xff]
    %v1996 = vld [vmem:[#allocation1 + $0x36] sm:$0xff]
    %v1997 = vld [vmem:[#allocation1 + $0x3f] sm:$0xff]
    %1999 = vst [vmem:[#allocation1] ss:$9 sm:$0xff] %v37
    %v2000 = vld [vmem:[#allocation1] sm:$0xff]
    %v2001 = vld [vmem:[#allocation1 + $0x9] sm:$0xff]
    %v2002 = vld [vmem:[#allocation1 + $0x12] sm:$0xff]
    %v2003 = vld [vmem:[#allocation1 + $0x1b] sm:$0xff]
    %v2004 = vld [vmem:[#allocation1 + $0x24] sm:$0xff]
    %v2005 = vld [vmem:[#allocation1 + $0x2d] sm:$0xff]
    %v2006 = vld [vmem:[#allocation1 + $0x36] sm:$0xff]
    %v2007 = vld [vmem:[#allocation1 + $0x3f] sm:$0xff]
    %2009 = vst [vmem:[#allocation1] ss:$9 sm:$0xff] %v38
    %v2010 = vld [vmem:[#allocation1] sm:$0xff]
    %v2011 = vld [vmem:[#allocation1 + $0x9] sm:$0xff]
    %v2012 = vld [vmem:[#allocation1 + $0x12] sm:$0xff]
    %v2013 = vld [vmem:[#allocation1 + $0x1b] sm:$0xff]
    %v2014 = vld [vmem:[#allocation1 + $0x24] sm:$0xff]
    %v2015 = vld [vmem:[#allocation1 + $0x2d] sm:$0xff]
    %v2016 = vld [vmem:[#allocation1 + $0x36] sm:$0xff]
    %v2017 = vld [vmem:[#allocation1 + $0x3f] sm:$0xff]
    %2019 = vst [vmem:[#allocation1] ss:$9 sm:$0xff] %v39
    %v2020 = vld [vmem:[#allocation1] sm:$0xff]
    %v2021 = vld [vmem:[#allocation1 + $0x9] sm:$0xff]
    %v2022 = vld [vmem:[#allocation1 + $0x12] sm:$0xff]
    %v2023 = vld [vmem:[#allocation1 + $0x1b] sm:$0xff]
    %v2024 = vld [vmem:[#allocation1 + $0x24] sm:$0xff]
    %v2025 = vld [vmem:[#allocation1 + $0x2d] sm:$0xff]
    %v2026 = vld [vmem:[#allocation1 + $0x36] sm:$0xff]
    %v2027 = vld [vmem:[#allocation1 + $0x3f] sm:$0xff]
    %2029 = vst [vmem:[#allocation1] ss:$9 sm:$0xff] %v40
    %v2030 = vld [vmem:[#allocation1] sm:$0xff]
    %v2031 = vld [vmem:[#allocation1 + $0x9] sm:$0xff]
    %v2032 = vld [vmem:[#allocation1 + $0x12] sm:$0xff]
    %v2033 = vld [vmem:[#allocation1 + $0x1b] sm:$0xff]
    %v2034 = vld [vmem:[#allocation1 + $0x24] sm:$0xff]
    %v2035 = vld [vmem:[#allocation1 + $0x2d] sm:$0xff]
    %v2036 = vld [vmem:[#allocation1 + $0x36] sm:$0xff]
    %v2037 = vld [vmem:[#allocation1 + $0x3f] sm:$0xff]
    %2039 = vst [vmem:[#allocation1] ss:$9 sm:$0xff] %v41
    %v2040 = vld [vmem:[#allocation1] sm:$0xff]
    %v2041 = vld [vmem:[#allocation1 + $0x9] sm:$0xff]
    %v2042 = vld [vmem:[#allocation1 + $0x12] sm:$0xff]
    %v2043 = vld [vmem:[#allocation1 + $0x1b] sm:$0xff]
    %v4016 = vunpack.c.l.b16 %v42
    %v4017 = vunpack.c.l.b16 %v43
    %v4018 = vunpack.c.l.b16 %v44
    %v4019 = vunpack.c.l.b16 %v45
    %v4020 = vunpack.c.l.b16 %v46
    %v4021 = vunpack.c.l.b16 %v47
    %v4022 = vunpack.c.l.b16 %v48
    %v4023 = vunpack.c.l.b16 %v49
    %v4024 = vunpack.c.l.b16 %v50
    %v4025 = vunpack.c.l.b16 %v51
    %v4026 = vunpack.c.l.b16 %v52
    %v4027 = vunpack.c.l.b16 %v53
    %v4028 = vunpack.c.l.b16 %v54
    %v4029 = vunpack.c.l.b16 %v55
    %v4030 = vunpack.c.l.b16 %v56
    %v4031 = vunpack.c.l.b16 %v57
    %v4032 = vunpack.c.l.b16 %v58
    %v4033 = vunpack.c.l.b16 %v59
    %v4034 = vunpack.c.l.b16 %v60
    %v4035 = vunpack.c.l.b16 %v61
    %v4036 = vunpack.c.l.b16 %v62
    %v4037 = vunpack.c.l.b16 %v63
    %v4038 = vunpack.c.l.b16 %v64
    %v4039 = vunpack.c.l.b16 %v65
    %v4040 = vunpack.c.l.b16 %v66
    %v4041 = vunpack.c.l.b16 %v67
    %v4042 = vunpack.c.l.b16 %v68
    %v4043 = vunpack.c.l.b16 %v69
    %v4044 = vunpack.c.l.b16 %v70
    %v4045 = vunpack.c.l.b16 %v71
    %v4046 = vunpack.c.l.b16 %v72
    %v4047 = vunpack.c.l.b16 %v73
    %v4048 = vunpack.c.l.b16 %v74
    %v4049 = vunpack.c.l.b16 %v75
    %v4050 = vunpack.c.l.b16 %v76
    %v4051 = vunpack.c.l.b16 %v77
    %v4052 = vunpack.c.l.b16 %v78
    %v4053 = vunpack.c.l.b16 %v79
    %v4054 = vunpack.c.l.b16 %v80
    %v4055 = vunpack.c.l.b16 %v81
    %v4056 = vunpack.c.l.b16 %v82
    %v4057 = vunpack.c.l.b16 %v83
    %v4058 = vunpack.c.l.b16 %v84
    %v4059 = vunpack.c.l.b16 %v85
    %v4060 = vunpack.c.l.b16 %v86
    %v4061 = vunpack.c.l.b16 %v87
    %v4062 = vunpack.c.l.b16 %v88
    %v4063 = vunpack.c.l.b16 %v89
    %v4064 = vunpack.c.l.b16 %v90
    %v4065 = vunpack.c.l.b16 %v91
    %v4066 = vunpack.c.l.b16 %v92
    %v4067 = vunpack.c.l.b16 %v93
    %v4068 = vunpack.c.l.b16 %v94
    %v4069 = vunpack.c.l.b16 %v95
    %v4070 = vunpack.c.l.b16 %v96
    %v4071 = vunpack.c.l.b16 %v97
    %v4072 = vunpack.c.l.b16 %v98
    %v4073 = vunpack.c.l.b16 %v99
    %v4074 = vunpack.c.l.b16 %v100
    %v4075 = vunpack.c.l.b16 %v101
    %v4076 = vunpack.c.l.b16 %v102
    %v4077 = vunpack.c.l.b16 %v103
    %v4078 = vunpack.c.l.b16 %v104
    %v4079 = vunpack.c.l.b16 %v105
    %v4080 = vunpack.c.l.b16 %v106
    %v4081 = vunpack.c.l.b16 %v107
    %v4082 = vunpack.c.l.b16 %v108
    %v4083 = vunpack.c.l.b16 %v109
    %v4084 = vunpack.c.l.b16 %v110
    %v4085 = vunpack.c.l.b16 %v111
    %v4086 = vunpack.c.l.b16 %v112
    %v4087 = vunpack.c.l.b16 %v113
    %v4088 = vunpack.c.l.b16 %v114
    %v4089 = vunpack.c.l.b16 %v115
    %v4090 = vunpack.c.l.b16 %v116
    %v4091 = vunpack.c.l.b16 %v117
    %v4092 = vunpack.c.l.b16 %v118
    %v4093 = vunpack.c.l.b16 %v119
    %v4094 = vunpack.c.l.b16 %v120
    %v4095 = vunpack.c.l.b16 %v121
    %v4096 = vunpack.c.l.b16 %v122
    %v4097 = vunpack.c.l.b16 %v123
    %v4098 = vunpack.c.l.b16 %v124
    %v4099 = vunpack.c.l.b16 %v125
    %v4100 = vunpack.c.l.b16 %v126
    %v4101 = vunpack.c.l.b16 %v127
    %v4102 = vunpack.c.l.b16 %v128
    %v4103 = vunpack.c.l.b16 %v129
    %v4104 = vunpack.c.l.b16 %v130
    %v4105 = vunpack.c.l.b16 %v131
    %v4106 = vunpack.c.l.b16 %v132
    %v4107 = vunpack.c.l.b16 %v133
    %v4108 = vunpack.c.l.b16 %v134
    %v4109 = vunpack.c.l.b16 %v135
    %v4110 = vunpack.c.l.b16 %v136
    %v4111 = vunpack.c.l.b16 %v137
    %v4112 = vunpack.c.l.b16 %v138
    %v4113 = vunpack.c.l.b16 %v139
    %v4114 = vunpack.c.l.b16 %v140
    %v4115 = vunpack.c.l.b16 %v141
    %v4116 = vunpack.c.l.b16 %v142
    %v4117 = vunpack.c.l.b16 %v143
    %v4118 = vunpack.c.l.b16 %v144
    %v4119 = vunpack.c.l.b16 %v145
    %v4120 = vunpack.c.l.b16 %v146
    %v4121 = vunpack.c.l.b16 %v147
    %v4122 = vunpack.c.l.b16 %v148
    %v4123 = vunpack.c.l.b16 %v149
    %v4124 = vunpack.c.l.b16 %v150
    %v4125 = vunpack.c.l.b16 %v151
    %v4126 = vunpack.c.l.b16 %v152
    %v4127 = vunpack.c.l.b16 %v153
    %v4128 = vunpack.c.l.b16 %v154
    %v4129 = vunpack.c.l.b16 %v155
    %v4130 = vunpack.c.l.b16 %v156
    %v4131 = vunpack.c.l.b16 %v157
    %v4132 = vunpack.c.l.b16 %v158
    %v4133 = vunpack.c.l.b16 %v159
    %v4134 = vunpack.c.l.b16 %v160
    %v4135 = vunpack.c.l.b16 %v161
    %v4136 = vunpack.c.l.b16 %v162
    %v4137 = vunpack.c.l.b16 %v163
    %v4138 = vunpack.c.l.b16 %v164
    %v4139 = vunpack.c.l.b16 %v165
    %v4140 = vunpack.c.l.b16 %v166
    %v4141 = vunpack.c.l.b16 %v167
    %v4142 = vunpack.c.l.b16 %v168
    %v4143 = vunpack.c.l.b16 %v169
    %v4144 = vunpack.c.l.b16 %v170
    %v4145 = vunpack.c.l.b16 %v171
    %v4146 = vunpack.c.l.b16 %v172
    %v4147 = vunpack.c.l.b16 %v173
    %v4148 = vunpack.c.l.b16 %v174
    %v4149 = vunpack.c.l.b16 %v175
    %v4150 = vunpack.c.l.b16 %v176
    %v4151 = vunpack.c.l.b16 %v177
    %v4152 = vunpack.c.l.b16 %v178
    %v4153 = vunpack.c.l.b16 %v179
    %v4154 = vunpack.c.l.b16 %v180
    %v4155 = vunpack.c.l.b16 %v181
    %v4156 = vunpack.c.l.b16 %v182
    %v4157 = vunpack.c.l.b16 %v183
    %v4158 = vunpack.c.l.b16 %v184
    %v4159 = vunpack.c.l.b16 %v185
    %v4160 = vunpack.c.l.b16 %v186
    %v4161 = vunpack.c.l.b16 %v187
    %v4162 = vunpack.c.l.b16 %v188
    %v4163 = vunpack.c.l.b16 %v189
    %v4164 = vunpack.c.l.b16 %v190
    %v4165 = vunpack.c.l.b16 %v191
    %v4166 = vunpack.c.l.b16 %v192
    %v4167 = vunpack.c.l.b16 %v193
    %v4168 = vunpack.c.l.b16 %v194
    %v4169 = vunpack.c.l.b16 %v195
    %v4170 = vunpack.c.l.b16 %v196
    %v4171 = vunpack.c.l.b16 %v197
    %v4172 = vunpack.c.l.b16 %v198
    %v4173 = vunpack.c.l.b16 %v199
    %v4174 = vunpack.c.l.b16 %v200
    %v4175 = vunpack.c.l.b16 %v201
    %v4176 = vunpack.c.l.b16 %v202
    %v4177 = vunpack.c.l.b16 %v203
    %v4178 = vunpack.c.l.b16 %v204
    %v4179 = vunpack.c.l.b16 %v205
    %v4180 = vunpack.c.l.b16 %v206
    %v4181 = vunpack.c.l.b16 %v207
    %v4182 = vunpack.c.l.b16 %v208
    %v4183 = vunpack.c.l.b16 %v209
    %v4184 = vunpack.c.l.b16 %v210
    %v4185 = vunpack.c.l.b16 %v211
    %v4186 = vunpack.c.l.b16 %v212
    %v4187 = vunpack.c.l.b16 %v213
    %v4188 = vunpack.c.l.b16 %v214
    %v4189 = vunpack.c.l.b16 %v215
    %v4190 = vunpack.c.l.b16 %v216
    %v4191 = vunpack.c.l.b16 %v217
    %v4192 = vunpack.c.l.b16 %v218
    %v4193 = vunpack.c.l.b16 %v219
    %v4194 = vunpack.c.l.b16 %v220
    %v4195 = vunpack.c.l.b16 %v221
    %v4196 = vunpack.c.l.b16 %v222
    %v4197 = vunpack.c.l.b16 %v223
    %v4198 = vunpack.c.l.b16 %v224
    %v4199 = vunpack.c.l.b16 %v225
    %v4200 = vunpack.c.l.b16 %v226
    %v4201 = vunpack.c.l.b16 %v227
    %v4202 = vunpack.c.l.b16 %v228
    %v4203 = vunpack.c.l.b16 %v229
    %v4204 = vunpack.c.l.b16 %v230
    %v4205 = vunpack.c.l.b16 %v231
    %v4206 = vunpack.c.l.b16 %v232
    %v4207 = vunpack.c.l.b16 %v233
    %v4208 = vunpack.c.l.b16 %v234
    %v4209 = vunpack.c.l.b16 %v235
    %v4210 = vunpack.c.l.b16 %v236
    %v4211 = vunpack.c.l.b16 %v237
    %v4212 = vunpack.c.l.b16 %v238
    %v4213 = vunpack.c.l.b16 %v239
    %v4214 = vunpack.c.l.b16 %v240
    %v4215 = vunpack.c.l.b16 %v241
    %v4216 = vunpack.c.l.b16 %v242
    %v4217 = vunpack.c.l.b16 %v243
    %v4218 = vunpack.c.l.b16 %v244
    %v4219 = vunpack.c.l.b16 %v245
    %v4220 = vunpack.c.l.b16 %v246
    %v4221 = vunpack.c.l.b16 %v247
    %v4222 = vunpack.c.l.b16 %v248
    %v4223 = vunpack.c.l.b16 %v249
    %v4224 = vunpack.c.l.b16 %v250
    %v4225 = vunpack.c.l.b16 %v251
    %v4226 = vunpack.c.l.b16 %v252
    %v4227 = vunpack.c.l.b16 %v253
    %v4228 = vunpack.c.l.b16 %v254
    %v4229 = vunpack.c.l.b16 %v255
    %v4230 = vunpack.c.l.b16 %v256
    %v4231 = vunpack.c.l.b16 %v257
    %v4232 = vunpack.c.l.b16 %v258
    %v4233 = vunpack.c.l.b16 %v259
    %v4234 = vunpack.c.l.b16 %v260
    %v4235 = vunpack.c.l.b16 %v261
    %v4236 = vunpack.c.l.b16 %v262
    %v4237 = vunpack.c.l.b16 %v263
    %v4238 = vunpack.c.l.b16 %v264
    %v4239 = vunpack.c.l.b16 %v265
    %v4240 = vunpack.c.l.b16 %v266
    %v4241 = vunpack.c.l.b16 %v267
    %v4242 = vunpack.c.l.b16 %v268
    %v4243 = vunpack.c.l.b16 %v269
    %v4244 = vunpack.c.l.b16 %v270
    %v4245 = vunpack.c.l.b16 %v271
    %v4246 = vunpack.c.l.b16 %v272
    %v4247 = vunpack.c.l.b16 %v273
    %v4248 = vunpack.c.l.b16 %v274
    %v4249 = vunpack.c.l.b16 %v275
    %v4250 = vunpack.c.l.b16 %v276
    %v4251 = vunpack.c.l.b16 %v277
    %v4252 = vunpack.c.l.b16 %v278
    %v4253 = vunpack.c.l.b16 %v279
    %v4254 = vunpack.c.l.b16 %v280
    %v4255 = vunpack.c.l.b16 %v281
    %v4256 = vunpack.c.l.b16 %v282
    %v4257 = vunpack.c.l.b16 %v283
    %v4258 = vunpack.c.l.b16 %v284
    %v4259 = vunpack.c.l.b16 %v285
    %v4260 = vunpack.c.l.b16 %v286
    %v4261 = vunpack.c.l.b16 %v287
    %v4262 = vunpack.c.l.b16 %v288
    %v4263 = vunpack.c.l.b16 %v289
    %v4264 = vunpack.c.l.b16 %v290
    %v4265 = vunpack.c.l.b16 %v291
    %v4266 = vunpack.c.l.b16 %v292
    %v4267 = vunpack.c.l.b16 %v293
    %v4268 = vunpack.c.l.b16 %v294
    %v4269 = vunpack.c.l.b16 %v295
    %v4270 = vunpack.c.l.b16 %v296
    %v4271 = vunpack.c.l.b16 %v297
    %v4272 = vunpack.c.l.b16 %v298
    %v4273 = vunpack.c.l.b16 %v299
    %v4274 = vunpack.c.l.b16 %v300
    %v4275 = vunpack.c.l.b16 %v301
    %v4276 = vunpack.c.l.b16 %v302
    %v4277 = vunpack.c.l.b16 %v303
    %v4278 = vunpack.c.l.b16 %v304
    %v4279 = vunpack.c.l.b16 %v305
    %v4280 = vunpack.c.l.b16 %v306
    %v4281 = vunpack.c.l.b16 %v307
    %v4282 = vunpack.c.l.b16 %v308
    %v4283 = vunpack.c.l.b16 %v309
    %v4284 = vunpack.c.l.b16 %v310
    %v4285 = vunpack.c.l.b16 %v311
    %v4286 = vunpack.c.l.b16 %v312
    %v4287 = vunpack.c.l.b16 %v313
    %v4288 = vunpack.c.l.b16 %v314
    %v4289 = vunpack.c.l.b16 %v315
    %v4290 = vunpack.c.l.b16 %v316
    %v4291 = vunpack.c.l.b16 %v317
    %v4292 = vunpack.c.l.b16 %v318
    %v4293 = vunpack.c.l.b16 %v319
    %v4294 = vunpack.c.l.b16 %v320
    %v4295 = vunpack.c.l.b16 %v321
    %v4296 = vunpack.c.l.b16 %v322
    %v4297 = vunpack.c.l.b16 %v323
    %v4298 = vunpack.c.l.b16 %v324
    %v4299 = vunpack.c.l.b16 %v325
    %v4300 = vunpack.c.l.b16 %v326
    %v4301 = vunpack.c.l.b16 %v327
    %v4302 = vunpack.c.l.b16 %v328
    %v4303 = vunpack.c.l.b16 %v329
    %v4304 = vunpack.c.l.b16 %v330
    %v4305 = vunpack.c.l.b16 %v331
    %v4306 = vunpack.c.l.b16 %v332
    %v4307 = vunpack.c.l.b16 %v333
    %v4308 = vunpack.c.l.b16 %v334
    %v4309 = vunpack.c.l.b16 %v335
    %v4310 = vunpack.c.l.b16 %v336
    %v4311 = vunpack.c.l.b16 %v337
    %v4312 = vunpack.c.l.b16 %v338
    %v4313 = vunpack.c.l.b16 %v339
    %v4314 = vunpack.c.l.b16 %v340
    %v4315 = vunpack.c.l.b16 %v341
    %v4316 = vunpack.c.l.b16 %v342
    %v4317 = vunpack.c.l.b16 %v343
    %v4318 = vunpack.c.l.b16 %v344
    %v4319 = vunpack.c.l.b16 %v345
    %v4320 = vunpack.c.l.b16 %v346
    %v4321 = vunpack.c.l.b16 %v347
    %v4322 = vunpack.c.l.b16 %v348
    %v4323 = vunpack.c.l.b16 %v349
    %v4324 = vunpack.c.l.b16 %v350
    %v4325 = vunpack.c.l.b16 %v351
    %v4326 = vunpack.c.l.b16 %v352
    %v4327 = vunpack.c.l.b16 %v353
    %v4328 = vunpack.c.l.b16 %v354
    %v4329 = vunpack.c.l.b16 %v355
    %v4330 = vunpack.c.l.b16 %v356
    %v4331 = vunpack.c.l.b16 %v357
    %v4332 = vunpack.c.l.b16 %v358
    %v4333 = vunpack.c.l.b16 %v359
    %v4334 = vunpack.c.l.b16 %v360
    %v4335 = vunpack.c.l.b16 %v361
    %v4336 = vunpack.c.l.b16 %v362
    %v4337 = vunpack.c.l.b16 %v363
    %v4338 = vunpack.c.l.b16 %v364
    %v4339 = vunpack.c.l.b16 %v365
    %v4340 = vunpack.c.l.b16 %v366
    %v4341 = vunpack.c.l.b16 %v367
    %v4342 = vunpack.c.l.b16 %v368
    %v4343 = vunpack.c.l.b16 %v369
    %v4344 = vunpack.c.l.b16 %v370
    %v4345 = vunpack.c.l.b16 %v371
    %v4346 = vunpack.c.l.b16 %v372
    %v4347 = vunpack.c.l.b16 %v373
    %v4348 = vunpack.c.l.b16 %v374
    %v4349 = vunpack.c.l.b16 %v375
    %v4350 = vunpack.c.l.b16 %v376
    %v4351 = vunpack.c.l.b16 %v377
    %v4352 = vunpack.c.l.b16 %v378
    %v4353 = vunpack.c.l.b16 %v379
    %v4354 = vunpack.c.l.b16 %v380
    %v4355 = vunpack.c.l.b16 %v381
    %v4356 = vunpack.c.l.b16 %v382
    %v4357 = vunpack.c.l.b16 %v383
    %v4358 = vunpack.c.l.b16 %v384
    %v4359 = vunpack.c.l.b16 %v385
    %v4360 = vunpack.c.l.b16 %v386
    %v4361 = vunpack.c.l.b16 %v387
    %v4362 = vunpack.c.l.b16 %v388
    %v4363 = vunpack.c.l.b16 %v389
    %v4364 = vunpack.c.l.b16 %v390
    %v4365 = vunpack.c.l.b16 %v391
    %v4366 = vunpack.c.l.b16 %v392
    %v4367 = vunpack.c.l.b16 %v393
    %v4368 = vunpack.c.l.b16 %v394
    %v4369 = vunpack.c.l.b16 %v395
    %v4370 = vunpack.c.l.b16 %v396
    %v4371 = vunpack.c.l.b16 %v397
    %v4372 = vunpack.c.l.b16 %v398
    %v4373 = vunpack.c.l.b16 %v399
    %v4374 = vunpack.c.l.b16 %v400
    %v4375 = vunpack.c.l.b16 %v401
    %v4376 = vunpack.c.l.b16 %v402
    %v4377 = vunpack.c.l.b16 %v403
    %v4378 = vunpack.c.l.b16 %v404
    %v4379 = vunpack.c.l.b16 %v405
    %v4380 = vunpack.c.l.b16 %v406
    %v4381 = vunpack.c.l.b16 %v407
    %v4382 = vunpack.c.l.b16 %v408
    %v4383 = vunpack.c.l.b16 %v409
    %v4384 = vunpack.c.l.b16 %v410
    %v4385 = vunpack.c.l.b16 %v411
    %v4386 = vunpack.c.l.b16 %v412
    %v4387 = vunpack.c.l.b16 %v413
    %v4388 = vunpack.c.l.b16 %v414
    %v4389 = vunpack.c.l.b16 %v415
    %v4390 = vunpack.c.l.b16 %v416
    %v4391 = vunpack.c.l.b16 %v417
    %v4392 = vunpack.c.l.b16 %v418
    %v4393 = vunpack.c.l.b16 %v419
    %v4394 = vunpack.c.l.b16 %v420
    %v4395 = vunpack.c.l.b16 %v421
    %v4396 = vunpack.c.l.b16 %v422
    %v4397 = vunpack.c.l.b16 %v423
    %v4398 = vunpack.c.l.b16 %v424
    %v4399 = vunpack.c.l.b16 %v425
    %v4400 = vunpack.c.l.b16 %v426
    %v4401 = vunpack.c.l.b16 %v427
    %v4402 = vunpack.c.l.b16 %v428
    %v4403 = vunpack.c.l.b16 %v429
    %v4404 = vunpack.c.l.b16 %v430
    %v4405 = vunpack.c.l.b16 %v431
    %v4406 = vunpack.c.l.b16 %v432
    %v4407 = vunpack.c.l.b16 %v433
    %v4408 = vunpack.c.l.b16 %v434
    %v4409 = vunpack.c.l.b16 %v435
    %v4410 = vunpack.c.l.b16 %v436
    %v4411 = vunpack.c.l.b16 %v437
    %v4412 = vunpack.c.l.b16 %v438
    %v4413 = vunpack.c.l.b16 %v439
    %v4414 = vunpack.c.l.b16 %v440
    %v4415 = vunpack.c.l.b16 %v441
    %v4416 = vunpack.c.l.b16 %v442
    %v4417 = vunpack.c.l.b16 %v443
    %v4418 = vunpack.c.l.b16 %v444
    %v4419 = vunpack.c.l.b16 %v445
    %v4420 = vunpack.c.l.b16 %v446
    %v4421 = vunpack.c.l.b16 %v447
    %v4422 = vunpack.c.l.b16 %v448
    %v4423 = vunpack.c.l.b16 %v449
    %v4424 = vunpack.c.l.b16 %v450
    %v4425 = vunpack.c.l.b16 %v451
    %v4426 = vunpack.c.l.b16 %v452
    %v4427 = vunpack.c.l.b16 %v453
    %v4428 = vunpack.c.l.b16 %v454
    %v4429 = vunpack.c.l.b16 %v455
    %v4430 = vunpack.c.l.b16 %v456
    %v4431 = vunpack.c.l.b16 %v457
    %v4432 = vunpack.c.l.b16 %v458
    %v4433 = vunpack.c.l.b16 %v459
    %v4434 = vunpack.c.l.b16 %v460
    %v4435 = vunpack.c.l.b16 %v461
    %v4436 = vunpack.c.l.b16 %v462
    %v4437 = vunpack.c.l.b16 %v463
    %v4438 = vunpack.c.l.b16 %v464
    %v4439 = vunpack.c.l.b16 %v465
    %v4440 = vunpack.c.l.b16 %v466
    %v4441 = vunpack.c.l.b16 %v467
    %v4442 = vunpack.c.l.b16 %v468
    %v4443 = vunpack.c.l.b16 %v469
    %v4444 = vunpack.c.l.b16 %v470
    %v4445 = vunpack.c.l.b16 %v471
    %v4446 = vunpack.c.l.b16 %v472
    %v4447 = vunpack.c.l.b16 %v473
    %v4448 = vunpack.c.l.b16 %v474
    %v4449 = vunpack.c.l.b16 %v475
    %v4450 = vunpack.c.l.b16 %v476
    %v4451 = vunpack.c.l.b16 %v477
    %v4452 = vunpack.c.l.b16 %v478
    %v4453 = vunpack.c.l.b16 %v479
    %v4454 = vunpack.c.l.b16 %v480
    %v4455 = vunpack.c.l.b16 %v481
    %v4456 = vunpack.c.l.b16 %v482
    %v4457 = vunpack.c.l.b16 %v483
    %v4458 = vunpack.c.l.b16 %v484
    %v4459 = vunpack.c.l.b16 %v485
    %v4460 = vunpack.c.l.b16 %v486
    %v4461 = vunpack.c.l.b16 %v487
    %v4462 = vunpack.c.l.b16 %v488
    %v4463 = vunpack.c.l.b16 %v489
    %v4464 = vunpack.c.l.b16 %v490
    %v4465 = vunpack.c.l.b16 %v491
    %v4466 = vunpack.c.l.b16 %v492
    %v4467 = vunpack.c.l.b16 %v493
    %v4468 = vunpack.c.l.b16 %v494
    %v4469 = vunpack.c.l.b16 %v495
    %v4470 = vunpack.c.l.b16 %v496
    %v4471 = vunpack.c.l.b16 %v497
    %v4472 = vunpack.c.l.b16 %v498
    %v4473 = vunpack.c.l.b16 %v499
    %v4474 = vunpack.c.l.b16 %v500
    %v4475 = vunpack.c.l.b16 %v501
    %v4476 = vunpack.c.l.b16 %v502
    %v4477 = vunpack.c.l.b16 %v503
    %v4478 = vunpack.c.l.b16 %v504
    %v4479 = vunpack.c.l.b16 %v505
    %v4480 = vunpack.c.l.b16 %v506
    %v4481 = vunpack.c.l.b16 %v507
    %v4482 = vunpack.c.l.b16 %v508
    %v4483 = vunpack.c.l.b16 %v509
    %v4484 = vunpack.c.l.b16 %v510
    %v4485 = vunpack.c.l.b16 %v511
    %v4486 = vunpack.c.l.b16 %v512
    %v4487 = vunpack.c.l.b16 %v513
    %v4488 = vunpack.c.l.b16 %v514
    %v4489 = vunpack.c.l.b16 %v515
    %v4490 = vunpack.c.l.b16 %v516
    %v4491 = vunpack.c.l.b16 %v517
    %v4492 = vunpack.c.l.b16 %v518
    %v4493 = vunpack.c.l.b16 %v519
    %v4494 = vunpack.c.l.b16 %v520
    %v4495 = vunpack.c.l.b16 %v521
    %v4496 = vunpack.c.l.b16 %v522
    %v4497 = vunpack.c.l.b16 %v523
    %v4498 = vunpack.c.l.b16 %v524
    %v4499 = vunpack.c.l.b16 %v525
    %v4500 = vunpack.c.l.b16 %v526
    %v4501 = vunpack.c.l.b16 %v527
    %v4502 = vunpack.c.l.b16 %v528
    %v4503 = vunpack.c.l.b16 %v529
    %v4504 = vunpack.c.l.b16 %v530
    %v4505 = vunpack.c.l.b16 %v531
    %v4506 = vunpack.c.l.b16 %v532
    %v4507 = vunpack.c.l.b16 %v533
    %v4508 = vunpack.c.l.b16 %v534
    %v4509 = vunpack.c.l.b16 %v535
    %v4510 = vunpack.c.l.b16 %v536
    %v4511 = vunpack.c.l.b16 %v537
    %v4512 = vunpack.c.l.b16 %v538
    %v4513 = vunpack.c.l.b16 %v539
    %v4514 = vunpack.c.l.b16 %v540
    %v4515 = vunpack.c.l.b16 %v541
    %v4516 = vunpack.c.l.b16 %v542
    %v4517 = vunpack.c.l.b16 %v543
    %v4518 = vunpack.c.l.b16 %v544
    %v4519 = vunpack.c.l.b16 %v545
    %v4520 = vunpack.c.l.b16 %v546
    %v4521 = vunpack.c.l.b16 %v547
    %v4522 = vunpack.c.l.b16 %v548
    %v4523 = vunpack.c.l.b16 %v549
    %v4524 = vunpack.c.l.b16 %v550
    %v4525 = vunpack.c.l.b16 %v551
    %v4526 = vunpack.c.l.b16 %v552
    %v4527 = vunpack.c.l.b16 %v553
    %v4528 = vunpack.c.l.b16 %v554
    %v4529 = vunpack.c.l.b16 %v555
    %v4530 = vunpack.c.l.b16 %v556
    %v4531 = vunpack.c.l.b16 %v557
    %v4532 = vunpack.c.l.b16 %v558
    %v4533 = vunpack.c.l.b16 %v559
    %v4534 = vunpack.c.l.b16 %v560
    %v4535 = vunpack.c.l.b16 %v561
    %v4536 = vunpack.c.l.b16 %v562
    %v4537 = vunpack.c.l.b16 %v563
    %v4538 = vunpack.c.l.b16 %v564
    %v4539 = vunpack.c.l.b16 %v565
    %v4540 = vunpack.c.l.b16 %v566
    %v4541 = vunpack.c.l.b16 %v567
    %v4542 = vunpack.c.l.b16 %v568
    %v4543 = vunpack.c.l.b16 %v569
    %v4544 = vunpack.c.l.b16 %v570
    %v4545 = vunpack.c.l.b16 %v571
    %v4546 = vunpack.c.l.b16 %v572
    %v4547 = vunpack.c.l.b16 %v573
    %v4548 = vunpack.c.l.b16 %v574
    %v4549 = vunpack.c.l.b16 %v575
    %v4550 = vunpack.c.l.b16 %v576
    %v4551 = vunpack.c.l.b16 %v577
    %v4552 = vunpack.c.l.b16 %v578
    %v4553 = vunpack.c.l.b16 %v579
    %v4554 = vunpack.c.l.b16 %v580
    %v4555 = vunpack.c.l.b16 %v581
    %v4556 = vunpack.c.l.b16 %v582
    %v4557 = vunpack.c.l.b16 %v583
    %v4558 = vunpack.c.l.b16 %v584
    %v4559 = vunpack.c.l.b16 %v585
    %v4560 = vunpack.c.l.b16 %v586
    %v4561 = vunpack.c.l.b16 %v587
    %v4562 = vunpack.c.l.b16 %v588
    %v4563 = vunpack.c.l.b16 %v589
    %v4564 = vunpack.c.l.b16 %v590
    %v4565 = vunpack.c.l.b16 %v591
    %v4566 = vunpack.c.l.b16 %v592
    %v4567 = vunpack.c.l.b16 %v593
    %v4568 = vunpack.c.l.b16 %v594
    %v4569 = vunpack.c.l.b16 %v595
    %v4570 = vunpack.c.l.b16 %v596
    %v4571 = vunpack.c.l.b16 %v597
    %v4572 = vunpack.c.l.b16 %v598
    %v4573 = vunpack.c.l.b16 %v599
    %v4574 = vunpack.c.l.b16 %v600
    %v4575 = vunpack.c.l.b16 %v601
    %v4576 = vunpack.c.l.b16 %v602
    %v4577 = vunpack.c.l.b16 %v603
    %v4578 = vunpack.c.l.b16 %v604
    %v4579 = vunpack.c.l.b16 %v605
    %v4580 = vunpack.c.l.b16 %v606
    %v4581 = vunpack.c.l.b16 %v607
    %v4582 = vunpack.c.l.b16 %v608
    %v4583 = vunpack.c.l.b16 %v609
    %v4584 = vunpack.c.l.b16 %v610
    %v4585 = vunpack.c.l.b16 %v611
    %v4586 = vunpack.c.l.b16 %v612
    %v4587 = vunpack.c.l.b16 %v613
    %v4588 = vunpack.c.l.b16 %v614
    %v4589 = vunpack.c.l.b16 %v615
    %v4590 = vunpack.c.l.b16 %v616
    %v4591 = vunpack.c.l.b16 %v617
    %v4592 = vunpack.c.l.b16 %v618
    %v4593 = vunpack.c.l.b16 %v619
    %v4594 = vunpack.c.l.b16 %v620
    %v4595 = vunpack.c.l.b16 %v621
    %v4596 = vunpack.c.l.b16 %v622
    %v4597 = vunpack.c.l.b16 %v623
    %v4598 = vunpack.c.l.b16 %v624
    %v4599 = vunpack.c.l.b16 %v625
    %v4600 = vunpack.c.l.b16 %v626
    %v4601 = vunpack.c.l.b16 %v627
    %v4602 = vunpack.c.l.b16 %v628
    %v4603 = vunpack.c.l.b16 %v629
    %v4604 = vunpack.c.l.b16 %v630
    %v4605 = vunpack.c.l.b16 %v631
    %v4606 = vunpack.c.l.b16 %v632
    %v4607 = vunpack.c.l.b16 %v633
    %v4608 = vunpack.c.l.b16 %v634
    %v4609 = vunpack.c.l.b16 %v635
    %v4610 = vunpack.c.l.b16 %v636
    %v4611 = vunpack.c.l.b16 %v637
    %v4612 = vunpack.c.l.b16 %v638
    %v4613 = vunpack.c.l.b16 %v639
    %v4614 = vunpack.c.l.b16 %v640
    %v4615 = vunpack.c.l.b16 %v641
    %v4616 = vunpack.c.l.b16 %v642
    %v4617 = vunpack.c.l.b16 %v643
    %v4618 = vunpack.c.l.b16 %v644
    %v4619 = vunpack.c.l.b16 %v645
    %v4620 = vunpack.c.l.b16 %v646
    %v4621 = vunpack.c.l.b16 %v647
    %v4622 = vunpack.c.l.b16 %v648
    %v4623 = vunpack.c.l.b16 %v649
    %v4624 = vunpack.c.l.b16 %v650
    %v4625 = vunpack.c.l.b16 %v651
    %v4626 = vunpack.c.l.b16 %v652
    %v4627 = vunpack.c.l.b16 %v653
    %v4628 = vunpack.c.l.b16 %v654
    %v4629 = vunpack.c.l.b16 %v655
    %v4630 = vunpack.c.l.b16 %v656
    %v4631 = vunpack.c.l.b16 %v657
    %v4632 = vunpack.c.l.b16 %v658
    %v4633 = vunpack.c.l.b16 %v659
    %v4634 = vunpack.c.l.b16 %v660
    %v4635 = vunpack.c.l.b16 %v661
    %v4636 = vunpack.c.l.b16 %v662
    %v4637 = vunpack.c.l.b16 %v663
    %v4638 = vunpack.c.l.b16 %v664
    %v4639 = vunpack.c.l.b16 %v665
    %v4640 = vunpack.c.l.b16 %v666
    %v4641 = vunpack.c.l.b16 %v667
    %v4642 = vunpack.c.l.b16 %v668
    %v4643 = vunpack.c.l.b16 %v669
    %v4644 = vunpack.c.l.b16 %v670
    %v4645 = vunpack.c.l.b16 %v671
    %v4646 = vunpack.c.l.b16 %v672
    %v4647 = vunpack.c.l.b16 %v673
    %v4648 = vunpack.c.l.b16 %v674
    %v4649 = vunpack.c.l.b16 %v675
    %v4650 = vunpack.c.l.b16 %v676
    %v4651 = vunpack.c.l.b16 %v677
    %v4652 = vunpack.c.l.b16 %v678
    %v4653 = vunpack.c.l.b16 %v679
    %v4654 = vunpack.c.l.b16 %v680
    %v4655 = vunpack.c.l.b16 %v681
    %v4656 = vunpack.c.l.b16 %v682
    %v4657 = vunpack.c.l.b16 %v683
    %v4658 = vunpack.c.l.b16 %v684
    %v4659 = vunpack.c.l.b16 %v685
    %v4660 = vunpack.c.l.b16 %v686
    %v4661 = vunpack.c.l.b16 %v687
    %v4662 = vunpack.c.l.b16 %v688
    %v4663 = vunpack.c.l.b16 %v689
    %v4664 = vunpack.c.l.b16 %v690
    %v4665 = vunpack.c.l.b16 %v691
    %v4666 = vunpack.c.l.b16 %v692
    %v4667 = vunpack.c.l.b16 %v693
    %v4668 = vunpack.c.l.b16 %v694
    %v4669 = vunpack.c.l.b16 %v695
    %v4670 = vunpack.c.l.b16 %v696
    %v4671 = vunpack.c.l.b16 %v697
    %v4672 = vunpack.c.l.b16 %v698
    %v4673 = vunpack.c.l.b16 %v699
    %v4674 = vunpack.c.l.b16 %v700
    %v4675 = vunpack.c.l.b16 %v701
    %v4676 = vunpack.c.l.b16 %v702
    %v4677 = vunpack.c.l.b16 %v703
    %v4678 = vunpack.c.l.b16 %v704
    %v4679 = vunpack.c.l.b16 %v705
    %v4680 = vunpack.c.l.b16 %v706
    %v4681 = vunpack.c.l.b16 %v707
    %v4682 = vunpack.c.l.b16 %v708
    %v4683 = vunpack.c.l.b16 %v709
    %v4684 = vunpack.c.l.b16 %v710
    %v4685 = vunpack.c.l.b16 %v711
    %v4686 = vunpack.c.l.b16 %v712
    %v4687 = vunpack.c.l.b16 %v713
    %v4688 = vunpack.c.l.b16 %v714
    %v4689 = vunpack.c.l.b16 %v715
    %v4690 = vunpack.c.l.b16 %v716
    %v4691 = vunpack.c.l.b16 %v717
    %v4692 = vunpack.c.l.b16 %v718
    %v4693 = vunpack.c.l.b16 %v719
    %v4694 = vunpack.c.l.b16 %v720
    %v4695 = vunpack.c.l.b16 %v721
    %v4696 = vunpack.c.l.b16 %v722
    %v4697 = vunpack.c.l.b16 %v723
    %v4698 = vunpack.c.l.b16 %v724
    %v4699 = vunpack.c.l.b16 %v725
    %v4700 = vunpack.c.l.b16 %v726
    %v4701 = vunpack.c.l.b16 %v727
    %v4702 = vunpack.c.l.b16 %v728
    %v4703 = vunpack.c.l.b16 %v729
    %v4704 = vunpack.c.l.b16 %v730
    %v4705 = vunpack.c.l.b16 %v731
    %v4706 = vunpack.c.l.b16 %v732
    %v4707 = vunpack.c.l.b16 %v733
    %v4708 = vunpack.c.l.b16 %v734
    %v4709 = vunpack.c.l.b16 %v735
    %v4710 = vunpack.c.l.b16 %v736
    %v4711 = vunpack.c.l.b16 %v737
    %v4712 = vunpack.c.l.b16 %v738
    %v4713 = vunpack.c.l.b16 %v739
    %v4714 = vunpack.c.l.b16 %v740
    %v4715 = vunpack.c.l.b16 %v741
    %v4716 = vunpack.c.l.b16 %v742
    %v4717 = vunpack.c.l.b16 %v743
    %v4718 = vunpack.c.l.b16 %v744
    %v4719 = vunpack.c.l.b16 %v745
    %v4720 = vunpack.c.l.b16 %v746
    %v4721 = vunpack.c.l.b16 %v747
    %v4722 = vunpack.c.l.b16 %v748
    %v4723 = vunpack.c.l.b16 %v749
    %v4724 = vunpack.c.l.b16 %v750
    %v4725 = vunpack.c.l.b16 %v751
    %v4726 = vunpack.c.l.b16 %v752
    %v4727 = vunpack.c.l.b16 %v753
    %v4728 = vunpack.c.l.b16 %v754
    %v4729 = vunpack.c.l.b16 %v755
    %v4730 = vunpack.c.l.b16 %v756
    %v4731 = vunpack.c.l.b16 %v757
    %v4732 = vunpack.c.l.b16 %v758
    %v4733 = vunpack.c.l.b16 %v759
    %v4734 = vunpack.c.l.b16 %v760
    %v4735 = vunpack.c.l.b16 %v761
    %v4736 = vunpack.c.l.b16 %v762
    %v4737 = vunpack.c.l.b16 %v763
    %v4738 = vunpack.c.l.b16 %v764
    %v4739 = vunpack.c.l.b16 %v765
    %v4740 = vunpack.c.l.b16 %v766
    %v4741 = vunpack.c.l.b16 %v767
    %v4742 = vunpack.c.l.b16 %v768
    %v4743 = vunpack.c.l.b16 %v769
    %v4744 = vunpack.c.l.b16 %v770
    %v4745 = vunpack.c.l.b16 %v771
    %v4746 = vunpack.c.l.b16 %v772
    %v4747 = vunpack.c.l.b16 %v773
    %v4748 = vunpack.c.l.b16 %v774
    %v4749 = vunpack.c.l.b16 %v775
    %v4750 = vunpack.c.l.b16 %v776
    %v4751 = vunpack.c.l.b16 %v777
    %v4752 = vunpack.c.l.b16 %v778
    %v4753 = vunpack.c.l.b16 %v779
    %v4754 = vunpack.c.l.b16 %v780
    %v4755 = vunpack.c.l.b16 %v781
    %v4756 = vunpack.c.l.b16 %v782
    %v4757 = vunpack.c.l.b16 %v783
    %v4758 = vunpack.c.l.b16 %v784
    %v4759 = vunpack.c.l.b16 %v785
    %v4760 = vunpack.c.l.b16 %v786
    %v4761 = vunpack.c.l.b16 %v787
    %v4762 = vunpack.c.l.b16 %v788
    %v4763 = vunpack.c.l.b16 %v789
    %v4764 = vunpack.c.l.b16 %v790
    %v4765 = vunpack.c.l.b16 %v791
    %v4766 = vunpack.c.l.b16 %v792
    %v4767 = vunpack.c.l.b16 %v793
    %v4768 = vunpack.c.l.b16 %v794
    %v4769 = vunpack.c.l.b16 %v795
    %v4770 = vunpack.c.l.b16 %v796
    %v4771 = vunpack.c.l.b16 %v797
    %v4772 = vunpack.c.l.b16 %v798
    %v4773 = vunpack.c.l.b16 %v799
    %v4774 = vunpack.c.l.b16 %v800
    %v4775 = vunpack.c.l.b16 %v801
    %v4776 = vunpack.c.l.b16 %v802
    %v4777 = vunpack.c.l.b16 %v803
    %v4778 = vunpack.c.l.b16 %v804
    %v4779 = vunpack.c.l.b16 %v805
    %v4780 = vunpack.c.l.b16 %v806
    %v4781 = vunpack.c.l.b16 %v807
    %v4782 = vunpack.c.l.b16 %v808
    %v4783 = vunpack.c.l.b16 %v809
    %v4784 = vunpack.c.l.b16 %v810
    %v4785 = vunpack.c.l.b16 %v811
    %v4786 = vunpack.c.l.b16 %v812
    %v4787 = vunpack.c.l.b16 %v813
    %v4788 = vunpack.c.l.b16 %v814
    %v4789 = vunpack.c.l.b16 %v815
    %v4790 = vunpack.c.l.b16 %v816
    %v4791 = vunpack.c.l.b16 %v817
    %v4792 = vunpack.c.l.b16 %v818
    %v4793 = vunpack.c.l.b16 %v819
    %v4794 = vunpack.c.l.b16 %v820
    %v4795 = vunpack.c.l.b16 %v821
    %v4796 = vunpack.c.l.b16 %v822
    %v4797 = vunpack.c.l.b16 %v823
    %v4798 = vunpack.c.l.b16 %v824
    %v4799 = vunpack.c.l.b16 %v825
    %v4800 = vunpack.c.l.b16 %v826
    %v4801 = vunpack.c.l.b16 %v827
    %v4802 = vunpack.c.l.b16 %v828
    %v4803 = vunpack.c.l.b16 %v829
    %v4804 = vunpack.c.l.b16 %v830
    %v4805 = vunpack.c.l.b16 %v831
    %v4806 = vunpack.c.l.b16 %v832
    %v4807 = vunpack.c.l.b16 %v833
    %v4808 = vunpack.c.l.b16 %v834
    %v4809 = vunpack.c.l.b16 %v835
    %v4810 = vunpack.c.l.b16 %v836
    %v4811 = vunpack.c.l.b16 %v837
    %v4812 = vunpack.c.l.b16 %v838
    %v4813 = vunpack.c.l.b16 %v839
    %v4814 = vunpack.c.l.b16 %v840
    %v4815 = vunpack.c.l.b16 %v841
    %v4816 = vunpack.c.l.b16 %v842
    %v4817 = vunpack.c.l.b16 %v843
    %v4818 = vunpack.c.l.b16 %v844
    %v4819 = vunpack.c.l.b16 %v845
    %v4820 = vunpack.c.l.b16 %v846
    %v4821 = vunpack.c.l.b16 %v847
    %v4822 = vunpack.c.l.b16 %v848
    %v4823 = vunpack.c.l.b16 %v849
    %v4824 = vunpack.c.l.b16 %v850
    %v4825 = vunpack.c.l.b16 %v851
    %v4826 = vunpack.c.l.b16 %v852
    %v4827 = vunpack.c.l.b16 %v853
    %v4828 = vunpack.c.l.b16 %v854
    %v4829 = vunpack.c.l.b16 %v855
    %v4830 = vunpack.c.l.b16 %v856
    %v4831 = vunpack.c.l.b16 %v857
    %v4832 = vunpack.c.l.b16 %v858
    %v4833 = vunpack.c.l.b16 %v859
    %v4834 = vunpack.c.l.b16 %v860
    %v4835 = vunpack.c.l.b16 %v861
    %v4836 = vunpack.c.l.b16 %v862
    %v4837 = vunpack.c.l.b16 %v863
    %v4838 = vunpack.c.l.b16 %v864
    %v4839 = vunpack.c.l.b16 %v865
    %v4840 = vunpack.c.l.b16 %v866
    %v4841 = vunpack.c.l.b16 %v867
    %v4842 = vunpack.c.l.b16 %v868
    %v4843 = vunpack.c.l.b16 %v869
    %v4844 = vunpack.c.l.b16 %v870
    %v4845 = vunpack.c.l.b16 %v871
    %v4846 = vunpack.c.l.b16 %v872
    %v4847 = vunpack.c.l.b16 %v873
    %v4848 = vunpack.c.l.b16 %v874
    %v4849 = vunpack.c.l.b16 %v875
    %v4850 = vunpack.c.l.b16 %v876
    %v4851 = vunpack.c.l.b16 %v877
    %v4852 = vunpack.c.l.b16 %v878
    %v4853 = vunpack.c.l.b16 %v879
    %v4854 = vunpack.c.l.b16 %v880
    %v4855 = vunpack.c.l.b16 %v881
    %v4856 = vunpack.c.l.b16 %v882
    %v4857 = vunpack.c.l.b16 %v883
    %v4858 = vunpack.c.l.b16 %v884
    %v4859 = vunpack.c.l.b16 %v885
    %v4860 = vunpack.c.l.b16 %v886
    %v4861 = vunpack.c.l.b16 %v887
    %v4862 = vunpack.c.l.b16 %v888
    %v4863 = vunpack.c.l.b16 %v889
    %v4864 = vunpack.c.l.b16 %v890
    %v4865 = vunpack.c.l.b16 %v891
    %v4866 = vunpack.c.l.b16 %v892
    %v4867 = vunpack.c.l.b16 %v893
    %v4868 = vunpack.c.l.b16 %v894
    %v4869 = vunpack.c.l.b16 %v895
    %v4870 = vunpack.c.l.b16 %v896
    %v4871 = vunpack.c.l.b16 %v897
    %v4872 = vunpack.c.l.b16 %v898
    %v4873 = vunpack.c.l.b16 %v899
    %v4874 = vunpack.c.l.b16 %v900
    %v4875 = vunpack.c.l.b16 %v901
    %v4876 = vunpack.c.l.b16 %v902
    %v4877 = vunpack.c.l.b16 %v903
    %v4878 = vunpack.c.l.b16 %v904
    %v4879 = vunpack.c.l.b16 %v905
    %v4880 = vunpack.c.l.b16 %v906
    %v4881 = vunpack.c.l.b16 %v907
    %v4882 = vunpack.c.l.b16 %v908
    %v4883 = vunpack.c.l.b16 %v909
    %v4884 = vunpack.c.l.b16 %v910
    %v4885 = vunpack.c.l.b16 %v911
    %v4886 = vunpack.c.l.b16 %v912
    %v4887 = vunpack.c.l.b16 %v913
    %v4888 = vunpack.c.l.b16 %v914
    %v4889 = vunpack.c.l.b16 %v915
    %v4890 = vunpack.c.l.b16 %v916
    %v4891 = vunpack.c.l.b16 %v917
    %v4892 = vunpack.c.l.b16 %v918
    %v4893 = vunpack.c.l.b16 %v919
    %v4894 = vunpack.c.l.b16 %v920
    %v4895 = vunpack.c.l.b16 %v921
    %v4896 = vunpack.c.l.b16 %v922
    %v4897 = vunpack.c.l.b16 %v923
    %v4898 = vunpack.c.l.b16 %v924
    %v4899 = vunpack.c.l.b16 %v925
    %v4900 = vunpack.c.l.b16 %v926
    %v4901 = vunpack.c.l.b16 %v927
    %v4902 = vunpack.c.l.b16 %v928
    %v4903 = vunpack.c.l.b16 %v929
    %v4904 = vunpack.c.l.b16 %v930
    %v4905 = vunpack.c.l.b16 %v931
    %v4906 = vunpack.c.l.b16 %v932
    %v4907 = vunpack.c.l.b16 %v933
    %v4908 = vunpack.c.l.b16 %v934
    %v4909 = vunpack.c.l.b16 %v935
    %v4910 = vunpack.c.l.b16 %v936
    %v4911 = vunpack.c.l.b16 %v937
    %v4912 = vunpack.c.l.b16 %v938
    %v4913 = vunpack.c.l.b16 %v939
    %v4914 = vunpack.c.l.b16 %v940
    %v4915 = vunpack.c.l.b16 %v941
    %v4916 = vunpack.c.l.b16 %v942
    %v4917 = vunpack.c.l.b16 %v943
    %v4918 = vunpack.c.l.b16 %v944
    %v4919 = vunpack.c.l.b16 %v945
    %v4920 = vunpack.c.l.b16 %v946
    %v4921 = vunpack.c.l.b16 %v947
    %v4922 = vunpack.c.l.b16 %v948
    %v4923 = vunpack.c.l.b16 %v949
    %v4924 = vunpack.c.l.b16 %v950
    %v4925 = vunpack.c.l.b16 %v951
    %v4926 = vunpack.c.l.b16 %v952
    %v4927 = vunpack.c.l.b16 %v953
    %v4928 = vunpack.c.l.b16 %v954
    %v4929 = vunpack.c.l.b16 %v955
    %v4930 = vunpack.c.l.b16 %v956
    %v4931 = vunpack.c.l.b16 %v957
    %v4932 = vunpack.c.l.b16 %v958
    %v4933 = vunpack.c.l.b16 %v959
    %v4934 = vunpack.c.l.b16 %v960
    %v4935 = vunpack.c.l.b16 %v961
    %v4936 = vunpack.c.l.b16 %v962
    %v4937 = vunpack.c.l.b16 %v963
    %v4938 = vunpack.c.l.b16 %v964
    %v4939 = vunpack.c.l.b16 %v965
    %v4940 = vunpack.c.l.b16 %v966
    %v4941 = vunpack.c.l.b16 %v967
    %v4942 = vunpack.c.l.b16 %v968
    %v4943 = vunpack.c.l.b16 %v969
    %v4944 = vunpack.c.l.b16 %v970
    %v4945 = vunpack.c.l.b16 %v971
    %v4946 = vunpack.c.l.b16 %v972
    %v4947 = vunpack.c.l.b16 %v973
    %v4948 = vunpack.c.l.b16 %v974
    %v4949 = vunpack.c.l.b16 %v975
    %v4950 = vunpack.c.l.b16 %v976
    %v4951 = vunpack.c.l.b16 %v977
    %v4952 = vunpack.c.l.b16 %v978
    %v4953 = vunpack.c.l.b16 %v979
    %v4954 = vunpack.c.l.b16 %v980
    %v4955 = vunpack.c.l.b16 %v981
    %v4956 = vunpack.c.l.b16 %v982
    %v4957 = vunpack.c.l.b16 %v983
    %v4958 = vunpack.c.l.b16 %v984
    %v4959 = vunpack.c.l.b16 %v985
    %v4960 = vunpack.c.l.b16 %v986
    %v4961 = vunpack.c.l.b16 %v987
    %v4962 = vunpack.c.l.b16 %v988
    %v4963 = vunpack.c.l.b16 %v989
    %v4964 = vunpack.c.l.b16 %v990
    %v4965 = vunpack.c.l.b16 %v991
    %v4966 = vunpack.c.l.b16 %v992
    %v4967 = vunpack.c.l.b16 %v993
    %v4968 = vunpack.c.l.b16 %v994
    %v4969 = vunpack.c.l.b16 %v995
    %v4970 = vunpack.c.l.b16 %v996
    %v4971 = vunpack.c.l.b16 %v997
    %v4972 = vunpack.c.l.b16 %v998
    %v4973 = vunpack.c.l.b16 %v999
    %v4974 = vunpack.c.l.b16 %v1000
    %v4975 = vunpack.c.l.b16 %v1001
    %v4976 = vunpack.c.l.b16 %v1002
    %v4977 = vunpack.c.l.b16 %v1003
    %v4978 = vunpack.c.l.b16 %v1004
    %v4979 = vunpack.c.l.b16 %v1005
    %v4980 = vunpack.c.l.b16 %v1006
    %v4981 = vunpack.c.l.b16 %v1007
    %v4982 = vunpack.c.l.b16 %v1008
    %v4983 = vunpack.c.l.b16 %v1009
    %v4984 = vunpack.c.l.b16 %v1010
    %v4985 = vunpack.c.l.b16 %v1011
    %v4986 = vunpack.c.l.b16 %v1012
    %v4987 = vunpack.c.l.b16 %v1013
    %v4988 = vunpack.c.l.b16 %v1014
    %v4989 = vunpack.c.l.b16 %v1015
    %v4990 = vunpack.c.l.b16 %v1016
    %v4991 = vunpack.c.l.b16 %v1017
    %v4992 = vunpack.c.l.b16 %v1018
    %v4993 = vunpack.c.l.b16 %v1019
    %v4994 = vunpack.c.l.b16 %v1020
    %v4995 = vunpack.c.l.b16 %v1021
    %v4996 = vunpack.c.l.b16 %v1022
    %v4997 = vunpack.c.l.b16 %v1023
    %v4998 = vunpack.c.l.b16 %v1024
    %v4999 = vunpack.c.l.b16 %v1025
    %v5000 = vunpack.c.l.b16 %v1026
    %v5001 = vunpack.c.l.b16 %v1027
    %v5002 = vunpack.c.l.b16 %v1028
    %v5003 = vunpack.c.l.b16 %v1029
    %v5004 = vunpack.c.l.b16 %v1030
    %v5005 = vunpack.c.l.b16 %v1031
    %v5006 = vunpack.c.l.b16 %v1032
    %v5007 = vunpack.c.l.b16 %v1033
    %v5008 = vunpack.c.l.b16 %v1034
    %v5009 = vunpack.c.l.b16 %v1035
    %v5010 = vunpack.c.l.b16 %v1036
    %v5011 = vunpack.c.l.b16 %v1037
    %v5012 = vunpack.c.l.b16 %v1038
    %v5013 = vunpack.c.l.b16 %v1039
    %v5014 = vunpack.c.l.b16 %v1040
    %v5015 = vunpack.c.l.b16 %v1041
    %v5016 = vunpack.c.l.b16 %v1042
    %v5017 = vunpack.c.l.b16 %v1043
    %v5018 = vunpack.c.l.b16 %v1044
    %v5019 = vunpack.c.l.b16 %v1045
    %v5020 = vunpack.c.l.b16 %v1046
    %v5021 = vunpack.c.l.b16 %v1047
    %v5022 = vunpack.c.l.b16 %v1048
    %v5023 = vunpack.c.l.b16 %v1049
    %v5024 = vunpack.c.l.b16 %v1050
    %v5025 = vunpack.c.l.b16 %v1051
    %v5026 = vunpack.c.l.b16 %v1052
    %v5027 = vunpack.c.l.b16 %v1053
    %v5028 = vunpack.c.l.b16 %v1054
    %v5029 = vunpack.c.l.b16 %v1055
    %v5030 = vunpack.c.l.b16 %v1056
    %v5031 = vunpack.c.l.b16 %v1057
    %v5032 = vunpack.c.l.b16 %v1058
    %v5033 = vunpack.c.l.b16 %v1059
    %v5034 = vunpack.c.l.b16 %v1060
    %v5035 = vunpack.c.l.b16 %v1061
    %v5036 = vunpack.c.l.b16 %v1062
    %v5037 = vunpack.c.l.b16 %v1063
    %v5038 = vunpack.c.l.b16 %v1064
    %v5039 = vunpack.c.l.b16 %v1065
    %v5040 = vunpack.c.l.b16 %v1066
    %v5041 = vunpack.c.l.b16 %v1067
    %v5042 = vunpack.c.l.b16 %v1068
    %v5043 = vunpack.c.l.b16 %v1069
    %v5044 = vunpack.c.l.b16 %v1070
    %v5045 = vunpack.c.l.b16 %v1071
    %v5046 = vunpack.c.l.b16 %v1072
    %v5047 = vunpack.c.l.b16 %v1073
    %v5048 = vunpack.c.l.b16 %v1074
    %v5049 = vunpack.c.l.b16 %v1075
    %v5050 = vunpack.c.l.b16 %v1076
    %v5051 = vunpack.c.l.b16 %v1077
    %v5052 = vunpack.c.l.b16 %v1078
    %v5053 = vunpack.c.l.b16 %v1079
    %v5054 = vunpack.c.l.b16 %v1080
    %v5055 = vunpack.c.l.b16 %v1081
    %v5056 = vunpack.c.l.b16 %v1082
    %v5057 = vunpack.c.l.b16 %v1083
    %v5058 = vunpack.c.l.b16 %v1084
    %v5059 = vunpack.c.l.b16 %v1085
    %v5060 = vunpack.c.l.b16 %v1086
    %v5061 = vunpack.c.l.b16 %v1087
    %v5062 = vunpack.c.l.b16 %v1088
    %v5063 = vunpack.c.l.b16 %v1089
    %v5064 = vunpack.c.l.b16 %v1090
    %v5065 = vunpack.c.l.b16 %v1091
    %v5066 = vunpack.c.l.b16 %v1092
    %v5067 = vunpack.c.l.b16 %v1093
    %v5068 = vunpack.c.l.b16 %v1094
    %v5069 = vunpack.c.l.b16 %v1095
    %v5070 = vunpack.c.l.b16 %v1096
    %v5071 = vunpack.c.l.b16 %v1097
    %v5072 = vunpack.c.l.b16 %v1098
    %v5073 = vunpack.c.l.b16 %v1099
    %v5074 = vunpack.c.l.b16 %v1100
    %v5075 = vunpack.c.l.b16 %v1101
    %v5076 = vunpack.c.l.b16 %v1102
    %v5077 = vunpack.c.l.b16 %v1103
    %v5078 = vunpack.c.l.b16 %v1104
    %v5079 = vunpack.c.l.b16 %v1105
    %v5080 = vunpack.c.l.b16 %v1106
    %v5081 = vunpack.c.l.b16 %v1107
    %v5082 = vunpack.c.l.b16 %v1108
    %v5083 = vunpack.c.l.b16 %v1109
    %v5084 = vunpack.c.l.b16 %v1110
    %v5085 = vunpack.c.l.b16 %v1111
    %v5086 = vunpack.c.l.b16 %v1112
    %v5087 = vunpack.c.l.b16 %v1113
    %v5088 = vunpack.c.l.b16 %v1114
    %v5089 = vunpack.c.l.b16 %v1115
    %v5090 = vunpack.c.l.b16 %v1116
    %v5091 = vunpack.c.l.b16 %v1117
    %v5092 = vunpack.c.l.b16 %v1118
    %v5093 = vunpack.c.l.b16 %v1119
    %v5094 = vunpack.c.l.b16 %v1120
    %v5095 = vunpack.c.l.b16 %v1121
    %v5096 = vunpack.c.l.b16 %v1122
    %v5097 = vunpack.c.l.b16 %v1123
    %v5098 = vunpack.c.l.b16 %v1124
    %v5099 = vunpack.c.l.b16 %v1125
    %v5100 = vunpack.c.l.b16 %v1126
    %v5101 = vunpack.c.l.b16 %v1127
    %v5102 = vunpack.c.l.b16 %v1128
    %v5103 = vunpack.c.l.b16 %v1129
    %v5104 = vunpack.c.l.b16 %v1130
    %v5105 = vunpack.c.l.b16 %v1131
    %v5106 = vunpack.c.l.b16 %v1132
    %v5107 = vunpack.c.l.b16 %v1133
    %v5108 = vunpack.c.l.b16 %v1134
    %v5109 = vunpack.c.l.b16 %v1135
    %v5110 = vunpack.c.l.b16 %v1136
    %v5111 = vunpack.c.l.b16 %v1137
    %v5112 = vunpack.c.l.b16 %v1138
    %v5113 = vunpack.c.l.b16 %v1139
    %v5114 = vunpack.c.l.b16 %v1140
    %v5115 = vunpack.c.l.b16 %v1141
    %v5116 = vunpack.c.l.b16 %v1142
    %v5117 = vunpack.c.l.b16 %v1143
    %v5118 = vunpack.c.l.b16 %v1144
    %v5119 = vunpack.c.l.b16 %v1145
    %v5120 = vunpack.c.l.b16 %v1146
    %v5121 = vunpack.c.l.b16 %v1147
    %v5122 = vunpack.c.l.b16 %v1148
    %v5123 = vunpack.c.l.b16 %v1149
    %v5124 = vunpack.c.l.b16 %v1150
    %v5125 = vunpack.c.l.b16 %v1151
    %v5126 = vunpack.c.l.b16 %v1152
    %v5127 = vunpack.c.l.b16 %v1153
    %v5128 = vunpack.c.l.b16 %v1154
    %v5129 = vunpack.c.l.b16 %v1155
    %v5130 = vunpack.c.l.b16 %v1156
    %v5131 = vunpack.c.l.b16 %v1157
    %v5132 = vunpack.c.l.b16 %v1158
    %v5133 = vunpack.c.l.b16 %v1159
    %v5134 = vunpack.c.l.b16 %v1160
    %v5135 = vunpack.c.l.b16 %v1161
    %v5136 = vunpack.c.l.b16 %v1162
    %v5137 = vunpack.c.l.b16 %v1163
    %v5138 = vunpack.c.l.b16 %v1164
    %v5139 = vunpack.c.l.b16 %v1165
    %v5140 = vunpack.c.l.b16 %v1166
    %v5141 = vunpack.c.l.b16 %v1167
    %v5142 = vunpack.c.l.b16 %v1168
    %v5143 = vunpack.c.l.b16 %v1169
    %v5144 = vunpack.c.l.b16 %v1170
    %v5145 = vunpack.c.l.b16 %v1171
    %v5146 = vunpack.c.l.b16 %v1172
    %v5147 = vunpack.c.l.b16 %v1173
    %v5148 = vunpack.c.l.b16 %v1174
    %v5149 = vunpack.c.l.b16 %v1175
    %v5150 = vunpack.c.l.b16 %v1176
    %v5151 = vunpack.c.l.b16 %v1177
    %v5152 = vunpack.c.l.b16 %v1178
    %v5153 = vunpack.c.l.b16 %v1179
    %v5154 = vunpack.c.l.b16 %v1180
    %v5155 = vunpack.c.l.b16 %v1181
    %v5156 = vunpack.c.l.b16 %v1182
    %v5157 = vunpack.c.l.b16 %v1183
    %v5158 = vunpack.c.l.b16 %v1184
    %v5159 = vunpack.c.l.b16 %v1185
    %v5160 = vunpack.c.l.b16 %v1186
    %v5161 = vunpack.c.l.b16 %v1187
    %v5162 = vunpack.c.l.b16 %v1188
    %v5163 = vunpack.c.l.b16 %v1189
    %v5164 = vunpack.c.l.b16 %v1190
    %v5165 = vunpack.c.l.b16 %v1191
    %v5166 = vunpack.c.l.b16 %v1192
    %v5167 = vunpack.c.l.b16 %v1193
    %v5168 = vunpack.c.l.b16 %v1194
    %v5169 = vunpack.c.l.b16 %v1195
    %v5170 = vunpack.c.l.b16 %v1196
    %v5171 = vunpack.c.l.b16 %v1197
    %v5172 = vunpack.c.l.b16 %v1198
    %v5173 = vunpack.c.l.b16 %v1199
    %v5174 = vunpack.c.l.b16 %v1200
    %v5175 = vunpack.c.l.b16 %v1201
    %v5176 = vunpack.c.l.b16 %v1202
    %v5177 = vunpack.c.l.b16 %v1203
    %v5178 = vunpack.c.l.b16 %v1204
    %v5179 = vunpack.c.l.b16 %v1205
    %v5180 = vunpack.c.l.b16 %v1206
    %v5181 = vunpack.c.l.b16 %v1207
    %v5182 = vunpack.c.l.b16 %v1208
    %v5183 = vunpack.c.l.b16 %v1209
    %v5184 = vunpack.c.l.b16 %v1210
    %v5185 = vunpack.c.l.b16 %v1211
    %v5186 = vunpack.c.l.b16 %v1212
    %v5187 = vunpack.c.l.b16 %v1213
    %v5188 = vunpack.c.l.b16 %v1214
    %v5189 = vunpack.c.l.b16 %v1215
    %v5190 = vunpack.c.l.b16 %v1216
    %v5191 = vunpack.c.l.b16 %v1217
    %v5192 = vunpack.c.l.b16 %v1218
    %v5193 = vunpack.c.l.b16 %v1219
    %v5194 = vunpack.c.l.b16 %v1220
    %v5195 = vunpack.c.l.b16 %v1221
    %v5196 = vunpack.c.l.b16 %v1222
    %v5197 = vunpack.c.l.b16 %v1223
    %v5198 = vunpack.c.l.b16 %v1224
    %v5199 = vunpack.c.l.b16 %v1225
    %v5200 = vunpack.c.l.b16 %v1226
    %v5201 = vunpack.c.l.b16 %v1227
    %v5202 = vunpack.c.l.b16 %v1228
    %v5203 = vunpack.c.l.b16 %v1229
    %v5204 = vunpack.c.l.b16 %v1230
    %v5205 = vunpack.c.l.b16 %v1231
    %v5206 = vunpack.c.l.b16 %v1232
    %v5207 = vunpack.c.l.b16 %v1233
    %v5208 = vunpack.c.l.b16 %v1234
    %v5209 = vunpack.c.l.b16 %v1235
    %v5210 = vunpack.c.l.b16 %v1236
    %v5211 = vunpack.c.l.b16 %v1237
    %v5212 = vunpack.c.l.b16 %v1238
    %v5213 = vunpack.c.l.b16 %v1239
    %v5214 = vunpack.c.l.b16 %v1240
    %v5215 = vunpack.c.l.b16 %v1241
    %v5216 = vunpack.c.l.b16 %v1242
    %v5217 = vunpack.c.l.b16 %v1243
    %v5218 = vunpack.c.l.b16 %v1244
    %v5219 = vunpack.c.l.b16 %v1245
    %v5220 = vunpack.c.l.b16 %v1246
    %v5221 = vunpack.c.l.b16 %v1247
    %v5222 = vunpack.c.l.b16 %v1248
    %v5223 = vunpack.c.l.b16 %v1249
    %v5224 = vunpack.c.l.b16 %v1250
    %v5225 = vunpack.c.l.b16 %v1251
    %v5226 = vunpack.c.l.b16 %v1252
    %v5227 = vunpack.c.l.b16 %v1253
    %v5228 = vunpack.c.l.b16 %v1254
    %v5229 = vunpack.c.l.b16 %v1255
    %v5230 = vunpack.c.l.b16 %v1256
    %v5231 = vunpack.c.l.b16 %v1257
    %v5232 = vunpack.c.l.b16 %v1258
    %v5233 = vunpack.c.l.b16 %v1259
    %v5234 = vunpack.c.l.b16 %v1260
    %v5235 = vunpack.c.l.b16 %v1261
    %v5236 = vunpack.c.l.b16 %v1262
    %v5237 = vunpack.c.l.b16 %v1263
    %v5238 = vunpack.c.l.b16 %v1264
    %v5239 = vunpack.c.l.b16 %v1265
    %v5240 = vunpack.c.l.b16 %v1266
    %v5241 = vunpack.c.l.b16 %v1267
    %v5242 = vunpack.c.l.b16 %v1268
    %v5243 = vunpack.c.l.b16 %v1269
    %v5244 = vunpack.c.l.b16 %v1270
    %v5245 = vunpack.c.l.b16 %v1271
    %v5246 = vunpack.c.l.b16 %v1272
    %v5247 = vunpack.c.l.b16 %v1273
    %v5248 = vunpack.c.l.b16 %v1274
    %v5249 = vunpack.c.l.b16 %v1275
    %v5250 = vunpack.c.l.b16 %v1276
    %v5251 = vunpack.c.l.b16 %v1277
    %v5252 = vunpack.c.l.b16 %v1278
    %v5253 = vunpack.c.l.b16 %v1279
    %v5254 = vunpack.c.l.b16 %v1280
    %v5255 = vunpack.c.l.b16 %v1281
    %v5256 = vunpack.c.l.b16 %v1282
    %v5257 = vunpack.c.l.b16 %v1283
    %v5258 = vunpack.c.l.b16 %v1284
    %v5259 = vunpack.c.l.b16 %v1285
    %v5260 = vunpack.c.l.b16 %v1286
    %v5261 = vunpack.c.l.b16 %v1287
    %v5262 = vunpack.c.l.b16 %v1288
    %v5263 = vunpack.c.l.b16 %v1289
    %v5264 = vunpack.c.l.b16 %v1290
    %v5265 = vunpack.c.l.b16 %v1291
    %v5266 = vunpack.c.l.b16 %v1292
    %v5267 = vunpack.c.l.b16 %v1293
    %v5268 = vunpack.c.l.b16 %v1294
    %v5269 = vunpack.c.l.b16 %v1295
    %v5270 = vunpack.c.l.b16 %v1296
    %v5271 = vunpack.c.l.b16 %v1297
    %v5272 = vunpack.c.l.b16 %v1298
    %v5273 = vunpack.c.l.b16 %v1299
    %v5274 = vunpack.c.l.b16 %v1300
    %v5275 = vunpack.c.l.b16 %v1301
    %v5276 = vunpack.c.l.b16 %v1302
    %v5277 = vunpack.c.l.b16 %v1303
    %v5278 = vunpack.c.l.b16 %v1304
    %v5279 = vunpack.c.l.b16 %v1305
    %v5280 = vunpack.c.l.b16 %v1306
    %v5281 = vunpack.c.l.b16 %v1307
    %v5282 = vunpack.c.l.b16 %v1308
    %v5283 = vunpack.c.l.b16 %v1309
    %v5284 = vunpack.c.l.b16 %v1310
    %v5285 = vunpack.c.l.b16 %v1311
    %v5286 = vunpack.c.l.b16 %v1312
    %v5287 = vunpack.c.l.b16 %v1313
    %v5288 = vunpack.c.l.b16 %v1314
    %v5289 = vunpack.c.l.b16 %v1315
    %v5290 = vunpack.c.l.b16 %v1316
    %v5291 = vunpack.c.l.b16 %v1317
    %v5292 = vunpack.c.l.b16 %v1318
    %v5293 = vunpack.c.l.b16 %v1319
    %v5294 = vunpack.c.l.b16 %v1320
    %v5295 = vunpack.c.l.b16 %v1321
    %v5296 = vunpack.c.l.b16 %v1322
    %v5297 = vunpack.c.l.b16 %v1323
    %v5298 = vunpack.c.l.b16 %v1324
    %v5299 = vunpack.c.l.b16 %v1325
    %v5300 = vunpack.c.l.b16 %v1326
    %v5301 = vunpack.c.l.b16 %v1327
    %v5302 = vunpack.c.l.b16 %v1328
    %v5303 = vunpack.c.l.b16 %v1329
    %v5304 = vunpack.c.l.b16 %v1330
    %v5305 = vunpack.c.l.b16 %v1331
    %v5306 = vunpack.c.l.b16 %v1332
    %v5307 = vunpack.c.l.b16 %v1333
    %v5308 = vunpack.c.l.b16 %v1334
    %v5309 = vunpack.c.l.b16 %v1335
    %v5310 = vunpack.c.l.b16 %v1336
    %v5311 = vunpack.c.l.b16 %v1337
    %v5312 = vunpack.c.l.b16 %v1338
    %v5313 = vunpack.c.l.b16 %v1339
    %v5314 = vunpack.c.l.b16 %v1340
    %v5315 = vunpack.c.l.b16 %v1341
    %v5316 = vunpack.c.l.b16 %v1342
    %v5317 = vunpack.c.l.b16 %v1343
    %v5318 = vunpack.c.l.b16 %v1344
    %v5319 = vunpack.c.l.b16 %v1345
    %v5320 = vunpack.c.l.b16 %v1346
    %v5321 = vunpack.c.l.b16 %v1347
    %v5322 = vunpack.c.l.b16 %v1348
    %v5323 = vunpack.c.l.b16 %v1349
    %v5324 = vunpack.c.l.b16 %v1350
    %v5325 = vunpack.c.l.b16 %v1351
    %v5326 = vunpack.c.l.b16 %v1352
    %v5327 = vunpack.c.l.b16 %v1353
    %v5328 = vunpack.c.l.b16 %v1354
    %v5329 = vunpack.c.l.b16 %v1355
    %v5330 = vunpack.c.l.b16 %v1356
    %v5331 = vunpack.c.l.b16 %v1357
    %v5332 = vunpack.c.l.b16 %v1358
    %v5333 = vunpack.c.l.b16 %v1359
    %v5334 = vunpack.c.l.b16 %v1360
    %v5335 = vunpack.c.l.b16 %v1361
    %v5336 = vunpack.c.l.b16 %v1362
    %v5337 = vunpack.c.l.b16 %v1363
    %v5338 = vunpack.c.l.b16 %v1364
    %v5339 = vunpack.c.l.b16 %v1365
    %v5340 = vunpack.c.l.b16 %v1366
    %v5341 = vunpack.c.l.b16 %v1367
    %v5342 = vunpack.c.l.b16 %v1368
    %v5343 = vunpack.c.l.b16 %v1369
    %v5344 = vunpack.c.l.b16 %v1370
    %v5345 = vunpack.c.l.b16 %v1371
    %v5346 = vunpack.c.l.b16 %v1372
    %v5347 = vunpack.c.l.b16 %v1373
    %v5348 = vunpack.c.l.b16 %v1374
    %v5349 = vunpack.c.l.b16 %v1375
    %v5350 = vunpack.c.l.b16 %v1376
    %v5351 = vunpack.c.l.b16 %v1377
    %v5352 = vunpack.c.l.b16 %v1378
    %v5353 = vunpack.c.l.b16 %v1379
    %v5354 = vunpack.c.l.b16 %v1380
    %v5355 = vunpack.c.l.b16 %v1381
    %v5356 = vunpack.c.l.b16 %v1382
    %v5357 = vunpack.c.l.b16 %v1383
    %v5358 = vunpack.c.l.b16 %v1384
    %v5359 = vunpack.c.l.b16 %v1385
    %v5360 = vunpack.c.l.b16 %v1386
    %v5361 = vunpack.c.l.b16 %v1387
    %v5362 = vunpack.c.l.b16 %v1388
    %v5363 = vunpack.c.l.b16 %v1389
    %v5364 = vunpack.c.l.b16 %v1390
    %v5365 = vunpack.c.l.b16 %v1391
    %v5366 = vunpack.c.l.b16 %v1392
    %v5367 = vunpack.c.l.b16 %v1393
    %v5368 = vunpack.c.l.b16 %v1394
    %v5369 = vunpack.c.l.b16 %v1395
    %v5370 = vunpack.c.l.b16 %v1396
    %v5371 = vunpack.c.l.b16 %v1397
    %v5372 = vunpack.c.l.b16 %v1398
    %v5373 = vunpack.c.l.b16 %v1399
    %v5374 = vunpack.c.l.b16 %v1400
    %v5375 = vunpack.c.l.b16 %v1401
    %v5376 = vunpack.c.l.b16 %v1402
    %v5377 = vunpack.c.l.b16 %v1403
    %v5378 = vunpack.c.l.b16 %v1404
    %v5379 = vunpack.c.l.b16 %v1405
    %v5380 = vunpack.c.l.b16 %v1406
    %v5381 = vunpack.c.l.b16 %v1407
    %v5382 = vunpack.c.l.b16 %v1408
    %v5383 = vunpack.c.l.b16 %v1409
    %v5384 = vunpack.c.l.b16 %v1410
    %v5385 = vunpack.c.l.b16 %v1411
    %v5386 = vunpack.c.l.b16 %v1412
    %v5387 = vunpack.c.l.b16 %v1413
    %v5388 = vunpack.c.l.b16 %v1414
    %v5389 = vunpack.c.l.b16 %v1415
    %v5390 = vunpack.c.l.b16 %v1416
    %v5391 = vunpack.c.l.b16 %v1417
    %v5392 = vunpack.c.l.b16 %v1418
    %v5393 = vunpack.c.l.b16 %v1419
    %v5394 = vunpack.c.l.b16 %v1420
    %v5395 = vunpack.c.l.b16 %v1421
    %v5396 = vunpack.c.l.b16 %v1422
    %v5397 = vunpack.c.l.b16 %v1423
    %v5398 = vunpack.c.l.b16 %v1424
    %v5399 = vunpack.c.l.b16 %v1425
    %v5400 = vunpack.c.l.b16 %v1426
    %v5401 = vunpack.c.l.b16 %v1427
    %v5402 = vunpack.c.l.b16 %v1428
    %v5403 = vunpack.c.l.b16 %v1429
    %v5404 = vunpack.c.l.b16 %v1430
    %v5405 = vunpack.c.l.b16 %v1431
    %v5406 = vunpack.c.l.b16 %v1432
    %v5407 = vunpack.c.l.b16 %v1433
    %v5408 = vunpack.c.l.b16 %v1434
    %v5409 = vunpack.c.l.b16 %v1435
    %v5410 = vunpack.c.l.b16 %v1436
    %v5411 = vunpack.c.l.b16 %v1437
    %v5412 = vunpack.c.l.b16 %v1438
    %v5413 = vunpack.c.l.b16 %v1439
    %v5414 = vunpack.c.l.b16 %v1440
    %v5415 = vunpack.c.l.b16 %v1441
    %v5416 = vunpack.c.l.b16 %v1442
    %v5417 = vunpack.c.l.b16 %v1443
    %v5418 = vunpack.c.l.b16 %v1444
    %v5419 = vunpack.c.l.b16 %v1445
    %v5420 = vunpack.c.l.b16 %v1446
    %v5421 = vunpack.c.l.b16 %v1447
    %v5422 = vunpack.c.l.b16 %v1448
    %v5423 = vunpack.c.l.b16 %v1449
    %v5424 = vunpack.c.l.b16 %v1450
    %v5425 = vunpack.c.l.b16 %v1451
    %v5426 = vunpack.c.l.b16 %v1452
    %v5427 = vunpack.c.l.b16 %v1453
    %v5428 = vunpack.c.l.b16 %v1454
    %v5429 = vunpack.c.l.b16 %v1455
    %v5430 = vunpack.c.l.b16 %v1456
    %v5431 = vunpack.c.l.b16 %v1457
    %v5432 = vunpack.c.l.b16 %v1458
    %v5433 = vunpack.c.l.b16 %v1459
    %v5434 = vunpack.c.l.b16 %v1460
    %v5435 = vunpack.c.l.b16 %v1461
    %v5436 = vunpack.c.l.b16 %v1462
    %v5437 = vunpack.c.l.b16 %v1463
    %v5438 = vunpack.c.l.b16 %v1464
    %v5439 = vunpack.c.l.b16 %v1465
    %v5440 = vunpack.c.l.b16 %v1466
    %v5441 = vunpack.c.l.b16 %v1467
    %v5442 = vunpack.c.l.b16 %v1468
    %v5443 = vunpack.c.l.b16 %v1469
    %v5444 = vunpack.c.l.b16 %v1470
    %v5445 = vunpack.c.l.b16 %v1471
    %v5446 = vunpack.c.l.b16 %v1472
    %v5447 = vunpack.c.l.b16 %v1473
    %v5448 = vunpack.c.l.b16 %v1474
    %v5449 = vunpack.c.l.b16 %v1475
    %v5450 = vunpack.c.l.b16 %v1476
    %v5451 = vunpack.c.l.b16 %v1477
    %v5452 = vunpack.c.l.b16 %v1478
    %v5453 = vunpack.c.l.b16 %v1479
    %v5454 = vunpack.c.l.b16 %v1480
    %v5455 = vunpack.c.l.b16 %v1481
    %v5456 = vunpack.c.l.b16 %v1482
    %v5457 = vunpack.c.l.b16 %v1483
    %v5458 = vunpack.c.l.b16 %v1484
    %v5459 = vunpack.c.l.b16 %v1485
    %v5460 = vunpack.c.l.b16 %v1486
    %v5461 = vunpack.c.l.b16 %v1487
    %v5462 = vunpack.c.l.b16 %v1488
    %v5463 = vunpack.c.l.b16 %v1489
    %v5464 = vunpack.c.l.b16 %v1490
    %v5465 = vunpack.c.l.b16 %v1491
    %v5466 = vunpack.c.l.b16 %v1492
    %v5467 = vunpack.c.l.b16 %v1493
    %v5468 = vunpack.c.l.b16 %v1494
    %v5469 = vunpack.c.l.b16 %v1495
    %v5470 = vunpack.c.l.b16 %v1496
    %v5471 = vunpack.c.l.b16 %v1497
    %v5472 = vunpack.c.l.b16 %v1498
    %v5473 = vunpack.c.l.b16 %v1499
    %v5474 = vunpack.c.l.b16 %v1500
    %v5475 = vunpack.c.l.b16 %v1501
    %v5476 = vunpack.c.l.b16 %v1502
    %v5477 = vunpack.c.l.b16 %v1503
    %v5478 = vunpack.c.l.b16 %v1504
    %v5479 = vunpack.c.l.b16 %v1505
    %v5480 = vunpack.c.l.b16 %v1506
    %v5481 = vunpack.c.l.b16 %v1507
    %v5482 = vunpack.c.l.b16 %v1508
    %v5483 = vunpack.c.l.b16 %v1509
    %v5484 = vunpack.c.l.b16 %v1510
    %v5485 = vunpack.c.l.b16 %v1511
    %v5486 = vunpack.c.l.b16 %v1512
    %v5487 = vunpack.c.l.b16 %v1513
    %v5488 = vunpack.c.l.b16 %v1514
    %v5489 = vunpack.c.l.b16 %v1515
    %v5490 = vunpack.c.l.b16 %v1516
    %v5491 = vunpack.c.l.b16 %v1517
    %v5492 = vunpack.c.l.b16 %v1518
    %v5493 = vunpack.c.l.b16 %v1519
    %v5494 = vunpack.c.l.b16 %v1520
    %v5495 = vunpack.c.l.b16 %v1521
    %v5496 = vunpack.c.l.b16 %v1522
    %v5497 = vunpack.c.l.b16 %v1523
    %v5498 = vunpack.c.l.b16 %v1524
    %v5499 = vunpack.c.l.b16 %v1525
    %v5500 = vunpack.c.l.b16 %v1526
    %v5501 = vunpack.c.l.b16 %v1527
    %v5502 = vunpack.c.l.b16 %v1528
    %v5503 = vunpack.c.l.b16 %v1529
    %v5504 = vunpack.c.l.b16 %v1530
    %v5505 = vunpack.c.l.b16 %v1531
    %v5506 = vunpack.c.l.b16 %v1532
    %v5507 = vunpack.c.l.b16 %v1533
    %v5508 = vunpack.c.l.b16 %v1534
    %v5509 = vunpack.c.l.b16 %v1535
    %v5510 = vunpack.c.l.b16 %v1536
    %v5511 = vunpack.c.l.b16 %v1537
    %v5512 = vunpack.c.l.b16 %v1538
    %v5513 = vunpack.c.l.b16 %v1539
    %v5514 = vunpack.c.l.b16 %v1540
    %v5515 = vunpack.c.l.b16 %v1541
    %v5516 = vunpack.c.l.b16 %v1542
    %v5517 = vunpack.c.l.b16 %v1543
    %v5518 = vunpack.c.l.b16 %v1544
    %v5519 = vunpack.c.l.b16 %v1545
    %v5520 = vunpack.c.l.b16 %v1546
    %v5521 = vunpack.c.l.b16 %v1547
    %v5522 = vunpack.c.l.b16 %v1548
    %v5523 = vunpack.c.l.b16 %v1549
    %v5524 = vunpack.c.l.b16 %v1550
    %v5525 = vunpack.c.l.b16 %v1551
    %v5526 = vunpack.c.l.b16 %v1552
    %v5527 = vunpack.c.l.b16 %v1553
    %v5528 = vunpack.c.l.b16 %v1554
    %v5529 = vunpack.c.l.b16 %v1555
    %v5530 = vunpack.c.l.b16 %v1556
    %v5531 = vunpack.c.l.b16 %v1557
    %v5532 = vunpack.c.l.b16 %v1558
    %v5533 = vunpack.c.l.b16 %v1559
    %v5534 = vunpack.c.l.b16 %v1560
    %v5535 = vunpack.c.l.b16 %v1561
    %v5536 = vunpack.c.l.b16 %v1562
    %v5537 = vunpack.c.l.b16 %v1563
    %v5538 = vunpack.c.l.b16 %v1564
    %v5539 = vunpack.c.l.b16 %v1565
    %v5540 = vunpack.c.l.b16 %v1566
    %v5541 = vunpack.c.l.b16 %v1567
    %v5542 = vunpack.c.l.b16 %v1568
    %v5543 = vunpack.c.l.b16 %v1569
    %v5544 = vunpack.c.l.b16 %v1570
    %v5545 = vunpack.c.l.b16 %v1571
    %v5546 = vunpack.c.l.b16 %v1572
    %v5547 = vunpack.c.l.b16 %v1573
    %v5548 = vunpack.c.l.b16 %v1574
    %v5549 = vunpack.c.l.b16 %v1575
    %v5550 = vunpack.c.l.b16 %v1576
    %v5551 = vunpack.c.l.b16 %v1577
    %v5552 = vunpack.c.l.b16 %v1578
    %v5553 = vunpack.c.l.b16 %v1579
    %v5554 = vunpack.c.l.b16 %v1580
    %v5555 = vunpack.c.l.b16 %v1581
    %v5556 = vunpack.c.l.b16 %v1582
    %v5557 = vunpack.c.l.b16 %v1583
    %v5558 = vunpack.c.l.b16 %v1584
    %v5559 = vunpack.c.l.b16 %v1585
    %v5560 = vunpack.c.l.b16 %v1586
    %v5561 = vunpack.c.l.b16 %v1587
    %v5562 = vunpack.c.l.b16 %v1588
    %v5563 = vunpack.c.l.b16 %v1589
    %v5564 = vunpack.c.l.b16 %v1590
    %v5565 = vunpack.c.l.b16 %v1591
    %v5566 = vunpack.c.l.b16 %v1592
    %v5567 = vunpack.c.l.b16 %v1593
    %v5568 = vunpack.c.l.b16 %v1594
    %v5569 = vunpack.c.l.b16 %v1595
    %v5570 = vunpack.c.l.b16 %v1596
    %v5571 = vunpack.c.l.b16 %v1597
    %v5572 = vunpack.c.l.b16 %v1598
    %v5573 = vunpack.c.l.b16 %v1599
    %v5574 = vunpack.c.l.b16 %v1600
    %v5575 = vunpack.c.l.b16 %v1601
    %v5576 = vunpack.c.l.b16 %v1602
    %v5577 = vunpack.c.l.b16 %v1603
    %v5578 = vunpack.c.l.b16 %v1604
    %v5579 = vunpack.c.l.b16 %v1605
    %v5580 = vunpack.c.l.b16 %v1606
    %v5581 = vunpack.c.l.b16 %v1607
    %v5582 = vunpack.c.l.b16 %v1608
    %v5583 = vunpack.c.l.b16 %v1609
    %v5584 = vunpack.c.l.b16 %v1610
    %v5585 = vunpack.c.l.b16 %v1611
    %v5586 = vunpack.c.l.b16 %v1612
    %v5587 = vunpack.c.l.b16 %v1613
    %v5588 = vunpack.c.l.b16 %v1614
    %v5589 = vunpack.c.l.b16 %v1615
    %v5590 = vunpack.c.l.b16 %v1616
    %v5591 = vunpack.c.l.b16 %v1617
    %v5592 = vunpack.c.l.b16 %v1618
    %v5593 = vunpack.c.l.b16 %v1619
    %v5594 = vunpack.c.l.b16 %v1620
    %v5595 = vunpack.c.l.b16 %v1621
    %v5596 = vunpack.c.l.b16 %v1622
    %v5597 = vunpack.c.l.b16 %v1623
    %v5598 = vunpack.c.l.b16 %v1624
    %v5599 = vunpack.c.l.b16 %v1625
    %v5600 = vunpack.c.l.b16 %v1626
    %v5601 = vunpack.c.l.b16 %v1627
    %v5602 = vunpack.c.l.b16 %v1628
    %v5603 = vunpack.c.l.b16 %v1629
    %v5604 = vunpack.c.l.b16 %v1630
    %v5605 = vunpack.c.l.b16 %v1631
    %v5606 = vunpack.c.l.b16 %v1632
    %v5607 = vunpack.c.l.b16 %v1633
    %v5608 = vunpack.c.l.b16 %v1634
    %v5609 = vunpack.c.l.b16 %v1635
    %v5610 = vunpack.c.l.b16 %v1636
    %v5611 = vunpack.c.l.b16 %v1637
    %v5612 = vunpack.c.l.b16 %v1638
    %v5613 = vunpack.c.l.b16 %v1639
    %v5614 = vunpack.c.l.b16 %v1640
    %v5615 = vunpack.c.l.b16 %v1641
    %v5616 = vunpack.c.l.b16 %v1642
    %v5617 = vunpack.c.l.b16 %v1643
    %v5618 = vunpack.c.l.b16 %v1644
    %v5619 = vunpack.c.l.b16 %v1645
    %v5620 = vunpack.c.l.b16 %v1646
    %v5621 = vunpack.c.l.b16 %v1647
    %v5622 = vunpack.c.l.b16 %v1648
    %v5623 = vunpack.c.l.b16 %v1649
    %v5624 = vunpack.c.l.b16 %v1650
    %v5625 = vunpack.c.l.b16 %v1651
    %v5626 = vunpack.c.l.b16 %v1652
    %v5627 = vunpack.c.l.b16 %v1653
    %v5628 = vunpack.c.l.b16 %v1654
    %v5629 = vunpack.c.l.b16 %v1655
    %v5630 = vunpack.c.l.b16 %v1656
    %v5631 = vunpack.c.l.b16 %v1657
    %v5632 = vunpack.c.l.b16 %v1658
    %v5633 = vunpack.c.l.b16 %v1659
    %v5634 = vunpack.c.l.b16 %v1660
    %v5635 = vunpack.c.l.b16 %v1661
    %v5636 = vunpack.c.l.b16 %v1662
    %v5637 = vunpack.c.l.b16 %v1663
    %v5638 = vunpack.c.l.b16 %v1664
    %v5639 = vunpack.c.l.b16 %v1665
    %v5640 = vunpack.c.l.b16 %v1666
    %v5641 = vunpack.c.l.b16 %v1667
    %v5642 = vunpack.c.l.b16 %v1668
    %v5643 = vunpack.c.l.b16 %v1669
    %v5644 = vunpack.c.l.b16 %v1670
    %v5645 = vunpack.c.l.b16 %v1671
    %v5646 = vunpack.c.l.b16 %v1672
    %v5647 = vunpack.c.l.b16 %v1673
    %v5648 = vunpack.c.l.b16 %v1674
    %v5649 = vunpack.c.l.b16 %v1675
    %v5650 = vunpack.c.l.b16 %v1676
    %v5651 = vunpack.c.l.b16 %v1677
    %v5652 = vunpack.c.l.b16 %v1678
    %v5653 = vunpack.c.l.b16 %v1679
    %v5654 = vunpack.c.l.b16 %v1680
    %v5655 = vunpack.c.l.b16 %v1681
    %v5656 = vunpack.c.l.b16 %v1682
    %v5657 = vunpack.c.l.b16 %v1683
    %v5658 = vunpack.c.l.b16 %v1684
    %v5659 = vunpack.c.l.b16 %v1685
    %v5660 = vunpack.c.l.b16 %v1686
    %v5661 = vunpack.c.l.b16 %v1687
    %v5662 = vunpack.c.l.b16 %v1688
    %v5663 = vunpack.c.l.b16 %v1689
    %v5664 = vunpack.c.l.b16 %v1690
    %v5665 = vunpack.c.l.b16 %v1691
    %v5666 = vunpack.c.l.b16 %v1692
    %v5667 = vunpack.c.l.b16 %v1693
    %v5668 = vunpack.c.l.b16 %v1694
    %v5669 = vunpack.c.l.b16 %v1695
    %v5670 = vunpack.c.l.b16 %v1696
    %v5671 = vunpack.c.l.b16 %v1697
    %v5672 = vunpack.c.l.b16 %v1698
    %v5673 = vunpack.c.l.b16 %v1699
    %v5674 = vunpack.c.l.b16 %v1700
    %v5675 = vunpack.c.l.b16 %v1701
    %v5676 = vunpack.c.l.b16 %v1702
    %v5677 = vunpack.c.l.b16 %v1703
    %v5678 = vunpack.c.l.b16 %v1704
    %v5679 = vunpack.c.l.b16 %v1705
    %v5680 = vunpack.c.l.b16 %v1706
    %v5681 = vunpack.c.l.b16 %v1707
    %v5682 = vunpack.c.l.b16 %v1708
    %v5683 = vunpack.c.l.b16 %v1709
    %v5684 = vunpack.c.l.b16 %v1710
    %v5685 = vunpack.c.l.b16 %v1711
    %v5686 = vunpack.c.l.b16 %v1712
    %v5687 = vunpack.c.l.b16 %v1713
    %v5688 = vunpack.c.l.b16 %v1714
    %v5689 = vunpack.c.l.b16 %v1715
    %v5690 = vunpack.c.l.b16 %v1716
    %v5691 = vunpack.c.l.b16 %v1717
    %v5692 = vunpack.c.l.b16 %v1718
    %v5693 = vunpack.c.l.b16 %v1719
    %v5694 = vunpack.c.l.b16 %v1720
    %v5695 = vunpack.c.l.b16 %v1721
    %v5696 = vunpack.c.l.b16 %v1722
    %v5697 = vunpack.c.l.b16 %v1723
    %v5698 = vunpack.c.l.b16 %v1724
    %v5699 = vunpack.c.l.b16 %v1725
    %v5700 = vunpack.c.l.b16 %v1726
    %v5701 = vunpack.c.l.b16 %v1727
    %v5702 = vunpack.c.l.b16 %v1728
    %v5703 = vunpack.c.l.b16 %v1729
    %v5704 = vunpack.c.l.b16 %v1730
    %v5705 = vunpack.c.l.b16 %v1731
    %v5706 = vunpack.c.l.b16 %v1732
    %v5707 = vunpack.c.l.b16 %v1733
    %v5708 = vunpack.c.l.b16 %v1734
    %v5709 = vunpack.c.l.b16 %v1735
    %v5710 = vunpack.c.l.b16 %v1736
    %v5711 = vunpack.c.l.b16 %v1737
    %v5712 = vunpack.c.l.b16 %v1738
    %v5713 = vunpack.c.l.b16 %v1739
    %v5714 = vunpack.c.l.b16 %v1740
    %v5715 = vunpack.c.l.b16 %v1741
    %v5716 = vunpack.c.l.b16 %v1742
    %v5717 = vunpack.c.l.b16 %v1743
    %v5718 = vunpack.c.l.b16 %v1744
    %v5719 = vunpack.c.l.b16 %v1745
    %v5720 = vunpack.c.l.b16 %v1746
    %v5721 = vunpack.c.l.b16 %v1747
    %v5722 = vunpack.c.l.b16 %v1748
    %v5723 = vunpack.c.l.b16 %v1749
    %v5724 = vunpack.c.l.b16 %v1750
    %v5725 = vunpack.c.l.b16 %v1751
    %v5726 = vunpack.c.l.b16 %v1752
    %v5727 = vunpack.c.l.b16 %v1753
    %v5728 = vunpack.c.l.b16 %v1754
    %v5729 = vunpack.c.l.b16 %v1755
    %v5730 = vunpack.c.l.b16 %v1756
    %v5731 = vunpack.c.l.b16 %v1757
    %v5732 = vunpack.c.l.b16 %v1758
    %v5733 = vunpack.c.l.b16 %v1759
    %v5734 = vunpack.c.l.b16 %v1760
    %v5735 = vunpack.c.l.b16 %v1761
    %v5736 = vunpack.c.l.b16 %v1762
    %v5737 = vunpack.c.l.b16 %v1763
    %v5738 = vunpack.c.l.b16 %v1764
    %v5739 = vunpack.c.l.b16 %v1765
    %v5740 = vunpack.c.l.b16 %v1766
    %v5741 = vunpack.c.l.b16 %v1767
    %v5742 = vunpack.c.l.b16 %v1768
    %v5743 = vunpack.c.l.b16 %v1769
    %v5744 = vunpack.c.l.b16 %v1770
    %v5745 = vunpack.c.l.b16 %v1771
    %v5746 = vunpack.c.l.b16 %v1772
    %v5747 = vunpack.c.l.b16 %v1773
    %v5748 = vunpack.c.l.b16 %v1774
    %v5749 = vunpack.c.l.b16 %v1775
    %v5750 = vunpack.c.l.b16 %v1776
    %v5751 = vunpack.c.l.b16 %v1777
    %v5752 = vunpack.c.l.b16 %v1778
    %v5753 = vunpack.c.l.b16 %v1779
    %v5754 = vunpack.c.l.b16 %v1780
    %v5755 = vunpack.c.l.b16 %v1781
    %v5756 = vunpack.c.l.b16 %v1782
    %v5757 = vunpack.c.l.b16 %v1783
    %v5758 = vunpack.c.l.b16 %v1784
    %v5759 = vunpack.c.l.b16 %v1785
    %v5760 = vunpack.c.l.b16 %v1786
    %v5761 = vunpack.c.l.b16 %v1787
    %v5762 = vunpack.c.l.b16 %v1788
    %v5763 = vunpack.c.l.b16 %v1789
    %v5764 = vunpack.c.l.b16 %v1790
    %v5765 = vunpack.c.l.b16 %v1791
    %v5766 = vunpack.c.l.b16 %v1792
    %v5767 = vunpack.c.l.b16 %v1793
    %v5768 = vunpack.c.l.b16 %v1794
    %v5769 = vunpack.c.l.b16 %v1795
    %v5770 = vunpack.c.l.b16 %v1796
    %v5771 = vunpack.c.l.b16 %v1797
    %v5772 = vunpack.c.l.b16 %v1798
    %v5773 = vunpack.c.l.b16 %v1799
    %v5774 = vunpack.c.l.b16 %v1800
    %v5775 = vunpack.c.l.b16 %v1801
    %v5776 = vunpack.c.l.b16 %v1802
    %v5777 = vunpack.c.l.b16 %v1803
    %v5778 = vunpack.c.l.b16 %v1804
    %v5779 = vunpack.c.l.b16 %v1805
    %v5780 = vunpack.c.l.b16 %v1806
    %v5781 = vunpack.c.l.b16 %v1807
    %v5782 = vunpack.c.l.b16 %v1808
    %v5783 = vunpack.c.l.b16 %v1809
    %v5784 = vunpack.c.l.b16 %v1810
    %v5785 = vunpack.c.l.b16 %v1811
    %v5786 = vunpack.c.l.b16 %v1812
    %v5787 = vunpack.c.l.b16 %v1813
    %v5788 = vunpack.c.l.b16 %v1814
    %v5789 = vunpack.c.l.b16 %v1815
    %v5790 = vunpack.c.l.b16 %v1816
    %v5791 = vunpack.c.l.b16 %v1817
    %v5792 = vunpack.c.l.b16 %v1818
    %v5793 = vunpack.c.l.b16 %v1819
    %v5794 = vunpack.c.l.b16 %v1820
    %v5795 = vunpack.c.l.b16 %v1821
    %v5796 = vunpack.c.l.b16 %v1822
    %v5797 = vunpack.c.l.b16 %v1823
    %v5798 = vunpack.c.l.b16 %v1824
    %v5799 = vunpack.c.l.b16 %v1825
    %v5800 = vunpack.c.l.b16 %v1826
    %v5801 = vunpack.c.l.b16 %v1827
    %v5802 = vunpack.c.l.b16 %v1828
    %v5803 = vunpack.c.l.b16 %v1829
    %v5804 = vunpack.c.l.b16 %v1830
    %v5805 = vunpack.c.l.b16 %v1831
    %v5806 = vunpack.c.l.b16 %v1832
    %v5807 = vunpack.c.l.b16 %v1833
    %v5808 = vunpack.c.l.b16 %v1834
    %v5809 = vunpack.c.l.b16 %v1835
    %v5810 = vunpack.c.l.b16 %v1836
    %v5811 = vunpack.c.l.b16 %v1837
    %v5812 = vunpack.c.l.b16 %v1838
    %v5813 = vunpack.c.l.b16 %v1839
    %v5814 = vunpack.c.l.b16 %v1840
    %v5815 = vunpack.c.l.b16 %v1841
    %v5816 = vunpack.c.l.b16 %v1842
    %v5817 = vunpack.c.l.b16 %v1843
    %v5818 = vunpack.c.l.b16 %v1844
    %v5819 = vunpack.c.l.b16 %v1845
    %v5820 = vunpack.c.l.b16 %v1846
    %v5821 = vunpack.c.l.b16 %v1847
    %v5822 = vunpack.c.l.b16 %v1848
    %v5823 = vunpack.c.l.b16 %v1849
    %v5824 = vunpack.c.l.b16 %v1850
    %v5825 = vunpack.c.l.b16 %v1851
    %v5826 = vunpack.c.l.b16 %v1852
    %v5827 = vunpack.c.l.b16 %v1853
    %v5828 = vunpack.c.l.b16 %v1854
    %v5829 = vunpack.c.l.b16 %v1855
    %v5830 = vunpack.c.l.b16 %v1856
    %v5831 = vunpack.c.l.b16 %v1857
    %v5832 = vunpack.c.l.b16 %v1858
    %v5833 = vunpack.c.l.b16 %v1859
    %v5834 = vunpack.c.l.b16 %v1860
    %v5835 = vunpack.c.l.b16 %v1861
    %v5836 = vunpack.c.l.b16 %v1862
    %v5837 = vunpack.c.l.b16 %v1863
    %v5838 = vunpack.c.l.b16 %v1864
    %v5839 = vunpack.c.l.b16 %v1865
    %v5840 = vunpack.c.l.b16 %v1866
    %v5841 = vunpack.c.l.b16 %v1867
    %v5842 = vunpack.c.l.b16 %v1868
    %v5843 = vunpack.c.l.b16 %v1869
    %v5844 = vunpack.c.l.b16 %v1870
    %v5845 = vunpack.c.l.b16 %v1871
    %v5846 = vunpack.c.l.b16 %v1872
    %v5847 = vunpack.c.l.b16 %v1873
    %v5848 = vunpack.c.l.b16 %v1874
    %v5849 = vunpack.c.l.b16 %v1875
    %v5850 = vunpack.c.l.b16 %v1876
    %v5851 = vunpack.c.l.b16 %v1877
    %v5852 = vunpack.c.l.b16 %v1878
    %v5853 = vunpack.c.l.b16 %v1879
    %v5854 = vunpack.c.l.b16 %v1880
    %v5855 = vunpack.c.l.b16 %v1881
    %v5856 = vunpack.c.l.b16 %v1882
    %v5857 = vunpack.c.l.b16 %v1883
    %v5858 = vunpack.c.l.b16 %v1884
    %v5859 = vunpack.c.l.b16 %v1885
    %v5860 = vunpack.c.l.b16 %v1886
    %v5861 = vunpack.c.l.b16 %v1887
    %v5862 = vunpack.c.l.b16 %v1888
    %v5863 = vunpack.c.l.b16 %v1889
    %v5864 = vunpack.c.l.b16 %v1890
    %v5865 = vunpack.c.l.b16 %v1891
    %v5866 = vunpack.c.l.b16 %v1892
    %v5867 = vunpack.c.l.b16 %v1893
    %v5868 = vunpack.c.l.b16 %v1894
    %v5869 = vunpack.c.l.b16 %v1895
    %v5870 = vunpack.c.l.b16 %v1896
    %v5871 = vunpack.c.l.b16 %v1897
    %v5872 = vpack.c.b16 %v4017, %v4016
    %v5873 = vpack.c.b16 %v4019, %v4018
    %v5874 = vpack.c.b16 %v4021, %v4020
    %v5875 = vpack.c.b16 %v4023, %v4022
    %v5876 = vpack.c.b16 %v4025, %v4024
    %v5877 = vpack.c.b16 %v4027, %v4026
    %v5878 = vpack.c.b16 %v4029, %v4028
    %v5879 = vpack.c.b16 %v4031, %v4030
    %v5880 = vpack.c.b16 %v4033, %v4032
    %v5881 = vpack.c.b16 %v4035, %v4034
    %v5882 = vpack.c.b16 %v4037, %v4036
    %v5883 = vpack.c.b16 %v4039, %v4038
    %v5884 = vpack.c.b16 %v4041, %v4040
    %v5885 = vpack.c.b16 %v4043, %v4042
    %v5886 = vpack.c.b16 %v4045, %v4044
    %v5887 = vpack.c.b16 %v4047, %v4046
    %v5888 = vpack.c.b16 %v4049, %v4048
    %v5889 = vpack.c.b16 %v4051, %v4050
    %v5890 = vpack.c.b16 %v4053, %v4052
    %v5891 = vpack.c.b16 %v4055, %v4054
    %v5892 = vpack.c.b16 %v4057, %v4056
    %v5893 = vpack.c.b16 %v4059, %v4058
    %v5894 = vpack.c.b16 %v4061, %v4060
    %v5895 = vpack.c.b16 %v4063, %v4062
    %v5896 = vpack.c.b16 %v4065, %v4064
    %v5897 = vpack.c.b16 %v4067, %v4066
    %v5898 = vpack.c.b16 %v4069, %v4068
    %v5899 = vpack.c.b16 %v4071, %v4070
    %v5900 = vpack.c.b16 %v4073, %v4072
    %v5901 = vpack.c.b16 %v4075, %v4074
    %v5902 = vpack.c.b16 %v4077, %v4076
    %v5903 = vpack.c.b16 %v4079, %v4078
    %v5904 = vpack.c.b16 %v4081, %v4080
    %v5905 = vpack.c.b16 %v4083, %v4082
    %v5906 = vpack.c.b16 %v4085, %v4084
    %v5907 = vpack.c.b16 %v4087, %v4086
    %v5908 = vpack.c.b16 %v4089, %v4088
    %v5909 = vpack.c.b16 %v4091, %v4090
    %v5910 = vpack.c.b16 %v4093, %v4092
    %v5911 = vpack.c.b16 %v4095, %v4094
    %v5912 = vpack.c.b16 %v4097, %v4096
    %v5913 = vpack.c.b16 %v4099, %v4098
    %v5914 = vpack.c.b16 %v4101, %v4100
    %v5915 = vpack.c.b16 %v4103, %v4102
    %v5916 = vpack.c.b16 %v4105, %v4104
    %v5917 = vpack.c.b16 %v4107, %v4106
    %v5918 = vpack.c.b16 %v4109, %v4108
    %v5919 = vpack.c.b16 %v4111, %v4110
    %v5920 = vpack.c.b16 %v4113, %v4112
    %v5921 = vpack.c.b16 %v4115, %v4114
    %v5922 = vpack.c.b16 %v4117, %v4116
    %v5923 = vpack.c.b16 %v4119, %v4118
    %v5924 = vpack.c.b16 %v4121, %v4120
    %v5925 = vpack.c.b16 %v4123, %v4122
    %v5926 = vpack.c.b16 %v4125, %v4124
    %v5927 = vpack.c.b16 %v4127, %v4126
    %v5928 = vpack.c.b16 %v4129, %v4128
    %v5929 = vpack.c.b16 %v4131, %v4130
    %v5930 = vpack.c.b16 %v4133, %v4132
    %v5931 = vpack.c.b16 %v4135, %v4134
    %v5932 = vpack.c.b16 %v4137, %v4136
    %v5933 = vpack.c.b16 %v4139, %v4138
    %v5934 = vpack.c.b16 %v4141, %v4140
    %v5935 = vpack.c.b16 %v4143, %v4142
    %v5936 = vpack.c.b16 %v4145, %v4144
    %v5937 = vpack.c.b16 %v4147, %v4146
    %v5938 = vpack.c.b16 %v4149, %v4148
    %v5939 = vpack.c.b16 %v4151, %v4150
    %v5940 = vpack.c.b16 %v4153, %v4152
    %v5941 = vpack.c.b16 %v4155, %v4154
    %v5942 = vpack.c.b16 %v4157, %v4156
    %v5943 = vpack.c.b16 %v4159, %v4158
    %v5944 = vpack.c.b16 %v4161, %v4160
    %v5945 = vpack.c.b16 %v4163, %v4162
    %v5946 = vpack.c.b16 %v4165, %v4164
    %v5947 = vpack.c.b16 %v4167, %v4166
    %v5948 = vpack.c.b16 %v4169, %v4168
    %v5949 = vpack.c.b16 %v4171, %v4170
    %v5950 = vpack.c.b16 %v4173, %v4172
    %v5951 = vpack.c.b16 %v4175, %v4174
    %v5952 = vpack.c.b16 %v4177, %v4176
    %v5953 = vpack.c.b16 %v4179, %v4178
    %v5954 = vpack.c.b16 %v4181, %v4180
    %v5955 = vpack.c.b16 %v4183, %v4182
    %v5956 = vpack.c.b16 %v4185, %v4184
    %v5957 = vpack.c.b16 %v4187, %v4186
    %v5958 = vpack.c.b16 %v4189, %v4188
    %v5959 = vpack.c.b16 %v4191, %v4190
    %v5960 = vpack.c.b16 %v4193, %v4192
    %v5961 = vpack.c.b16 %v4195, %v4194
    %v5962 = vpack.c.b16 %v4197, %v4196
    %v5963 = vpack.c.b16 %v4199, %v4198
    %v5964 = vpack.c.b16 %v4201, %v4200
    %v5965 = vpack.c.b16 %v4203, %v4202
    %v5966 = vpack.c.b16 %v4205, %v4204
    %v5967 = vpack.c.b16 %v4207, %v4206
    %v5968 = vpack.c.b16 %v4209, %v4208
    %v5969 = vpack.c.b16 %v4211, %v4210
    %v5970 = vpack.c.b16 %v4213, %v4212
    %v5971 = vpack.c.b16 %v4215, %v4214
    %v5972 = vpack.c.b16 %v4217, %v4216
    %v5973 = vpack.c.b16 %v4219, %v4218
    %v5974 = vpack.c.b16 %v4221, %v4220
    %v5975 = vpack.c.b16 %v4223, %v4222
    %v5976 = vpack.c.b16 %v4225, %v4224
    %v5977 = vpack.c.b16 %v4227, %v4226
    %v5978 = vpack.c.b16 %v4229, %v4228
    %v5979 = vpack.c.b16 %v4231, %v4230
    %v5980 = vpack.c.b16 %v4233, %v4232
    %v5981 = vpack.c.b16 %v4235, %v4234
    %v5982 = vpack.c.b16 %v4237, %v4236
    %v5983 = vpack.c.b16 %v4239, %v4238
    %v5984 = vpack.c.b16 %v4241, %v4240
    %v5985 = vpack.c.b16 %v4243, %v4242
    %v5986 = vpack.c.b16 %v4245, %v4244
    %v5987 = vpack.c.b16 %v4247, %v4246
    %v5988 = vpack.c.b16 %v4249, %v4248
    %v5989 = vpack.c.b16 %v4251, %v4250
    %v5990 = vpack.c.b16 %v4253, %v4252
    %v5991 = vpack.c.b16 %v4255, %v4254
    %v5992 = vpack.c.b16 %v4257, %v4256
    %v5993 = vpack.c.b16 %v4259, %v4258
    %v5994 = vpack.c.b16 %v4261, %v4260
    %v5995 = vpack.c.b16 %v4263, %v4262
    %v5996 = vpack.c.b16 %v4265, %v4264
    %v5997 = vpack.c.b16 %v4267, %v4266
    %v5998 = vpack.c.b16 %v4269, %v4268
    %v5999 = vpack.c.b16 %v4271, %v4270
    %v6000 = vpack.c.b16 %v4273, %v4272
    %v6001 = vpack.c.b16 %v4275, %v4274
    %v6002 = vpack.c.b16 %v4277, %v4276
    %v6003 = vpack.c.b16 %v4279, %v4278
    %v6004 = vpack.c.b16 %v4281, %v4280
    %v6005 = vpack.c.b16 %v4283, %v4282
    %v6006 = vpack.c.b16 %v4285, %v4284
    %v6007 = vpack.c.b16 %v4287, %v4286
    %v6008 = vpack.c.b16 %v4289, %v4288
    %v6009 = vpack.c.b16 %v4291, %v4290
    %v6010 = vpack.c.b16 %v4293, %v4292
    %v6011 = vpack.c.b16 %v4295, %v4294
    %v6012 = vpack.c.b16 %v4297, %v4296
    %v6013 = vpack.c.b16 %v4299, %v4298
    %v6014 = vpack.c.b16 %v4301, %v4300
    %v6015 = vpack.c.b16 %v4303, %v4302
    %v6016 = vpack.c.b16 %v4305, %v4304
    %v6017 = vpack.c.b16 %v4307, %v4306
    %v6018 = vpack.c.b16 %v4309, %v4308
    %v6019 = vpack.c.b16 %v4311, %v4310
    %v6020 = vpack.c.b16 %v4313, %v4312
    %v6021 = vpack.c.b16 %v4315, %v4314
    %v6022 = vpack.c.b16 %v4317, %v4316
    %v6023 = vpack.c.b16 %v4319, %v4318
    %v6024 = vpack.c.b16 %v4321, %v4320
    %v6025 = vpack.c.b16 %v4323, %v4322
    %v6026 = vpack.c.b16 %v4325, %v4324
    %v6027 = vpack.c.b16 %v4327, %v4326
    %v6028 = vpack.c.b16 %v4329, %v4328
    %v6029 = vpack.c.b16 %v4331, %v4330
    %v6030 = vpack.c.b16 %v4333, %v4332
    %v6031 = vpack.c.b16 %v4335, %v4334
    %v6032 = vpack.c.b16 %v4337, %v4336
    %v6033 = vpack.c.b16 %v4339, %v4338
    %v6034 = vpack.c.b16 %v4341, %v4340
    %v6035 = vpack.c.b16 %v4343, %v4342
    %v6036 = vpack.c.b16 %v4345, %v4344
    %v6037 = vpack.c.b16 %v4347, %v4346
    %v6038 = vpack.c.b16 %v4349, %v4348
    %v6039 = vpack.c.b16 %v4351, %v4350
    %v6040 = vpack.c.b16 %v4353, %v4352
    %v6041 = vpack.c.b16 %v4355, %v4354
    %v6042 = vpack.c.b16 %v4357, %v4356
    %v6043 = vpack.c.b16 %v4359, %v4358
    %v6044 = vpack.c.b16 %v4361, %v4360
    %v6045 = vpack.c.b16 %v4363, %v4362
    %v6046 = vpack.c.b16 %v4365, %v4364
    %v6047 = vpack.c.b16 %v4367, %v4366
    %v6048 = vpack.c.b16 %v4369, %v4368
    %v6049 = vpack.c.b16 %v4371, %v4370
    %v6050 = vpack.c.b16 %v4373, %v4372
    %v6051 = vpack.c.b16 %v4375, %v4374
    %v6052 = vpack.c.b16 %v4377, %v4376
    %v6053 = vpack.c.b16 %v4379, %v4378
    %v6054 = vpack.c.b16 %v4381, %v4380
    %v6055 = vpack.c.b16 %v4383, %v4382
    %v6056 = vpack.c.b16 %v4385, %v4384
    %v6057 = vpack.c.b16 %v4387, %v4386
    %v6058 = vpack.c.b16 %v4389, %v4388
    %v6059 = vpack.c.b16 %v4391, %v4390
    %v6060 = vpack.c.b16 %v4393, %v4392
    %v6061 = vpack.c.b16 %v4395, %v4394
    %v6062 = vpack.c.b16 %v4397, %v4396
    %v6063 = vpack.c.b16 %v4399, %v4398
    %v6064 = vpack.c.b16 %v4401, %v4400
    %v6065 = vpack.c.b16 %v4403, %v4402
    %v6066 = vpack.c.b16 %v4405, %v4404
    %v6067 = vpack.c.b16 %v4407, %v4406
    %v6068 = vpack.c.b16 %v4409, %v4408
    %v6069 = vpack.c.b16 %v4411, %v4410
    %v6070 = vpack.c.b16 %v4413, %v4412
    %v6071 = vpack.c.b16 %v4415, %v4414
    %v6072 = vpack.c.b16 %v4417, %v4416
    %v6073 = vpack.c.b16 %v4419, %v4418
    %v6074 = vpack.c.b16 %v4421, %v4420
    %v6075 = vpack.c.b16 %v4423, %v4422
    %v6076 = vpack.c.b16 %v4425, %v4424
    %v6077 = vpack.c.b16 %v4427, %v4426
    %v6078 = vpack.c.b16 %v4429, %v4428
    %v6079 = vpack.c.b16 %v4431, %v4430
    %v6080 = vpack.c.b16 %v4433, %v4432
    %v6081 = vpack.c.b16 %v4435, %v4434
    %v6082 = vpack.c.b16 %v4437, %v4436
    %v6083 = vpack.c.b16 %v4439, %v4438
    %v6084 = vpack.c.b16 %v4441, %v4440
    %v6085 = vpack.c.b16 %v4443, %v4442
    %v6086 = vpack.c.b16 %v4445, %v4444
    %v6087 = vpack.c.b16 %v4447, %v4446
    %v6088 = vpack.c.b16 %v4449, %v4448
    %v6089 = vpack.c.b16 %v4451, %v4450
    %v6090 = vpack.c.b16 %v4453, %v4452
    %v6091 = vpack.c.b16 %v4455, %v4454
    %v6092 = vpack.c.b16 %v4457, %v4456
    %v6093 = vpack.c.b16 %v4459, %v4458
    %v6094 = vpack.c.b16 %v4461, %v4460
    %v6095 = vpack.c.b16 %v4463, %v4462
    %v6096 = vpack.c.b16 %v4465, %v4464
    %v6097 = vpack.c.b16 %v4467, %v4466
    %v6098 = vpack.c.b16 %v4469, %v4468
    %v6099 = vpack.c.b16 %v4471, %v4470
    %v6100 = vpack.c.b16 %v4473, %v4472
    %v6101 = vpack.c.b16 %v4475, %v4474
    %v6102 = vpack.c.b16 %v4477, %v4476
    %v6103 = vpack.c.b16 %v4479, %v4478
    %v6104 = vpack.c.b16 %v4481, %v4480
    %v6105 = vpack.c.b16 %v4483, %v4482
    %v6106 = vpack.c.b16 %v4485, %v4484
    %v6107 = vpack.c.b16 %v4487, %v4486
    %v6108 = vpack.c.b16 %v4489, %v4488
    %v6109 = vpack.c.b16 %v4491, %v4490
    %v6110 = vpack.c.b16 %v4493, %v4492
    %v6111 = vpack.c.b16 %v4495, %v4494
    %v6112 = vpack.c.b16 %v4497, %v4496
    %v6113 = vpack.c.b16 %v4499, %v4498
    %v6114 = vpack.c.b16 %v4501, %v4500
    %v6115 = vpack.c.b16 %v4503, %v4502
    %v6116 = vpack.c.b16 %v4505, %v4504
    %v6117 = vpack.c.b16 %v4507, %v4506
    %v6118 = vpack.c.b16 %v4509, %v4508
    %v6119 = vpack.c.b16 %v4511, %v4510
    %v6120 = vpack.c.b16 %v4513, %v4512
    %v6121 = vpack.c.b16 %v4515, %v4514
    %v6122 = vpack.c.b16 %v4517, %v4516
    %v6123 = vpack.c.b16 %v4519, %v4518
    %v6124 = vpack.c.b16 %v4521, %v4520
    %v6125 = vpack.c.b16 %v4523, %v4522
    %v6126 = vpack.c.b16 %v4525, %v4524
    %v6127 = vpack.c.b16 %v4527, %v4526
    %v6128 = vpack.c.b16 %v4529, %v4528
    %v6129 = vpack.c.b16 %v4531, %v4530
    %v6130 = vpack.c.b16 %v4533, %v4532
    %v6131 = vpack.c.b16 %v4535, %v4534
    %v6132 = vpack.c.b16 %v4537, %v4536
    %v6133 = vpack.c.b16 %v4539, %v4538
    %v6134 = vpack.c.b16 %v4541, %v4540
    %v6135 = vpack.c.b16 %v4543, %v4542
    %v6136 = vpack.c.b16 %v4545, %v4544
    %v6137 = vpack.c.b16 %v4547, %v4546
    %v6138 = vpack.c.b16 %v4549, %v4548
    %v6139 = vpack.c.b16 %v4551, %v4550
    %v6140 = vpack.c.b16 %v4553, %v4552
    %v6141 = vpack.c.b16 %v4555, %v4554
    %v6142 = vpack.c.b16 %v4557, %v4556
    %v6143 = vpack.c.b16 %v4559, %v4558
    %v6144 = vpack.c.b16 %v4561, %v4560
    %v6145 = vpack.c.b16 %v4563, %v4562
    %v6146 = vpack.c.b16 %v4565, %v4564
    %v6147 = vpack.c.b16 %v4567, %v4566
    %v6148 = vpack.c.b16 %v4569, %v4568
    %v6149 = vpack.c.b16 %v4571, %v4570
    %v6150 = vpack.c.b16 %v4573, %v4572
    %v6151 = vpack.c.b16 %v4575, %v4574
    %v6152 = vpack.c.b16 %v4577, %v4576
    %v6153 = vpack.c.b16 %v4579, %v4578
    %v6154 = vpack.c.b16 %v4581, %v4580
    %v6155 = vpack.c.b16 %v4583, %v4582
    %v6156 = vpack.c.b16 %v4585, %v4584
    %v6157 = vpack.c.b16 %v4587, %v4586
    %v6158 = vpack.c.b16 %v4589, %v4588
    %v6159 = vpack.c.b16 %v4591, %v4590
    %v6160 = vpack.c.b16 %v4593, %v4592
    %v6161 = vpack.c.b16 %v4595, %v4594
    %v6162 = vpack.c.b16 %v4597, %v4596
    %v6163 = vpack.c.b16 %v4599, %v4598
    %v6164 = vpack.c.b16 %v4601, %v4600
    %v6165 = vpack.c.b16 %v4603, %v4602
    %v6166 = vpack.c.b16 %v4605, %v4604
    %v6167 = vpack.c.b16 %v4607, %v4606
    %v6168 = vpack.c.b16 %v4609, %v4608
    %v6169 = vpack.c.b16 %v4611, %v4610
    %v6170 = vpack.c.b16 %v4613, %v4612
    %v6171 = vpack.c.b16 %v4615, %v4614
    %v6172 = vpack.c.b16 %v4617, %v4616
    %v6173 = vpack.c.b16 %v4619, %v4618
    %v6174 = vpack.c.b16 %v4621, %v4620
    %v6175 = vpack.c.b16 %v4623, %v4622
    %v6176 = vpack.c.b16 %v4625, %v4624
    %v6177 = vpack.c.b16 %v4627, %v4626
    %v6178 = vpack.c.b16 %v4629, %v4628
    %v6179 = vpack.c.b16 %v4631, %v4630
    %v6180 = vpack.c.b16 %v4633, %v4632
    %v6181 = vpack.c.b16 %v4635, %v4634
    %v6182 = vpack.c.b16 %v4637, %v4636
    %v6183 = vpack.c.b16 %v4639, %v4638
    %v6184 = vpack.c.b16 %v4641, %v4640
    %v6185 = vpack.c.b16 %v4643, %v4642
    %v6186 = vpack.c.b16 %v4645, %v4644
    %v6187 = vpack.c.b16 %v4647, %v4646
    %v6188 = vpack.c.b16 %v4649, %v4648
    %v6189 = vpack.c.b16 %v4651, %v4650
    %v6190 = vpack.c.b16 %v4653, %v4652
    %v6191 = vpack.c.b16 %v4655, %v4654
    %v6192 = vpack.c.b16 %v4657, %v4656
    %v6193 = vpack.c.b16 %v4659, %v4658
    %v6194 = vpack.c.b16 %v4661, %v4660
    %v6195 = vpack.c.b16 %v4663, %v4662
    %v6196 = vpack.c.b16 %v4665, %v4664
    %v6197 = vpack.c.b16 %v4667, %v4666
    %v6198 = vpack.c.b16 %v4669, %v4668
    %v6199 = vpack.c.b16 %v4671, %v4670
    %v6200 = vpack.c.b16 %v4673, %v4672
    %v6201 = vpack.c.b16 %v4675, %v4674
    %v6202 = vpack.c.b16 %v4677, %v4676
    %v6203 = vpack.c.b16 %v4679, %v4678
    %v6204 = vpack.c.b16 %v4681, %v4680
    %v6205 = vpack.c.b16 %v4683, %v4682
    %v6206 = vpack.c.b16 %v4685, %v4684
    %v6207 = vpack.c.b16 %v4687, %v4686
    %v6208 = vpack.c.b16 %v4689, %v4688
    %v6209 = vpack.c.b16 %v4691, %v4690
    %v6210 = vpack.c.b16 %v4693, %v4692
    %v6211 = vpack.c.b16 %v4695, %v4694
    %v6212 = vpack.c.b16 %v4697, %v4696
    %v6213 = vpack.c.b16 %v4699, %v4698
    %v6214 = vpack.c.b16 %v4701, %v4700
    %v6215 = vpack.c.b16 %v4703, %v4702
    %v6216 = vpack.c.b16 %v4705, %v4704
    %v6217 = vpack.c.b16 %v4707, %v4706
    %v6218 = vpack.c.b16 %v4709, %v4708
    %v6219 = vpack.c.b16 %v4711, %v4710
    %v6220 = vpack.c.b16 %v4713, %v4712
    %v6221 = vpack.c.b16 %v4715, %v4714
    %v6222 = vpack.c.b16 %v4717, %v4716
    %v6223 = vpack.c.b16 %v4719, %v4718
    %v6224 = vpack.c.b16 %v4721, %v4720
    %v6225 = vpack.c.b16 %v4723, %v4722
    %v6226 = vpack.c.b16 %v4725, %v4724
    %v6227 = vpack.c.b16 %v4727, %v4726
    %v6228 = vpack.c.b16 %v4729, %v4728
    %v6229 = vpack.c.b16 %v4731, %v4730
    %v6230 = vpack.c.b16 %v4733, %v4732
    %v6231 = vpack.c.b16 %v4735, %v4734
    %v6232 = vpack.c.b16 %v4737, %v4736
    %v6233 = vpack.c.b16 %v4739, %v4738
    %v6234 = vpack.c.b16 %v4741, %v4740
    %v6235 = vpack.c.b16 %v4743, %v4742
    %v6236 = vpack.c.b16 %v4745, %v4744
    %v6237 = vpack.c.b16 %v4747, %v4746
    %v6238 = vpack.c.b16 %v4749, %v4748
    %v6239 = vpack.c.b16 %v4751, %v4750
    %v6240 = vpack.c.b16 %v4753, %v4752
    %v6241 = vpack.c.b16 %v4755, %v4754
    %v6242 = vpack.c.b16 %v4757, %v4756
    %v6243 = vpack.c.b16 %v4759, %v4758
    %v6244 = vpack.c.b16 %v4761, %v4760
    %v6245 = vpack.c.b16 %v4763, %v4762
    %v6246 = vpack.c.b16 %v4765, %v4764
    %v6247 = vpack.c.b16 %v4767, %v4766
    %v6248 = vpack.c.b16 %v4769, %v4768
    %v6249 = vpack.c.b16 %v4771, %v4770
    %v6250 = vpack.c.b16 %v4773, %v4772
    %v6251 = vpack.c.b16 %v4775, %v4774
    %v6252 = vpack.c.b16 %v4777, %v4776
    %v6253 = vpack.c.b16 %v4779, %v4778
    %v6254 = vpack.c.b16 %v4781, %v4780
    %v6255 = vpack.c.b16 %v4783, %v4782
    %v6256 = vpack.c.b16 %v4785, %v4784
    %v6257 = vpack.c.b16 %v4787, %v4786
    %v6258 = vpack.c.b16 %v4789, %v4788
    %v6259 = vpack.c.b16 %v4791, %v4790
    %v6260 = vpack.c.b16 %v4793, %v4792
    %v6261 = vpack.c.b16 %v4795, %v4794
    %v6262 = vpack.c.b16 %v4797, %v4796
    %v6263 = vpack.c.b16 %v4799, %v4798
    %v6264 = vpack.c.b16 %v4801, %v4800
    %v6265 = vpack.c.b16 %v4803, %v4802
    %v6266 = vpack.c.b16 %v4805, %v4804
    %v6267 = vpack.c.b16 %v4807, %v4806
    %v6268 = vpack.c.b16 %v4809, %v4808
    %v6269 = vpack.c.b16 %v4811, %v4810
    %v6270 = vpack.c.b16 %v4813, %v4812
    %v6271 = vpack.c.b16 %v4815, %v4814
    %v6272 = vpack.c.b16 %v4817, %v4816
    %v6273 = vpack.c.b16 %v4819, %v4818
    %v6274 = vpack.c.b16 %v4821, %v4820
    %v6275 = vpack.c.b16 %v4823, %v4822
    %v6276 = vpack.c.b16 %v4825, %v4824
    %v6277 = vpack.c.b16 %v4827, %v4826
    %v6278 = vpack.c.b16 %v4829, %v4828
    %v6279 = vpack.c.b16 %v4831, %v4830
    %v6280 = vpack.c.b16 %v4833, %v4832
    %v6281 = vpack.c.b16 %v4835, %v4834
    %v6282 = vpack.c.b16 %v4837, %v4836
    %v6283 = vpack.c.b16 %v4839, %v4838
    %v6284 = vpack.c.b16 %v4841, %v4840
    %v6285 = vpack.c.b16 %v4843, %v4842
    %v6286 = vpack.c.b16 %v4845, %v4844
    %v6287 = vpack.c.b16 %v4847, %v4846
    %v6288 = vpack.c.b16 %v4849, %v4848
    %v6289 = vpack.c.b16 %v4851, %v4850
    %v6290 = vpack.c.b16 %v4853, %v4852
    %v6291 = vpack.c.b16 %v4855, %v4854
    %v6292 = vpack.c.b16 %v4857, %v4856
    %v6293 = vpack.c.b16 %v4859, %v4858
    %v6294 = vpack.c.b16 %v4861, %v4860
    %v6295 = vpack.c.b16 %v4863, %v4862
    %v6296 = vpack.c.b16 %v4865, %v4864
    %v6297 = vpack.c.b16 %v4867, %v4866
    %v6298 = vpack.c.b16 %v4869, %v4868
    %v6299 = vpack.c.b16 %v4871, %v4870
    %v6300 = vpack.c.b16 %v4873, %v4872
    %v6301 = vpack.c.b16 %v4875, %v4874
    %v6302 = vpack.c.b16 %v4877, %v4876
    %v6303 = vpack.c.b16 %v4879, %v4878
    %v6304 = vpack.c.b16 %v4881, %v4880
    %v6305 = vpack.c.b16 %v4883, %v4882
    %v6306 = vpack.c.b16 %v4885, %v4884
    %v6307 = vpack.c.b16 %v4887, %v4886
    %v6308 = vpack.c.b16 %v4889, %v4888
    %v6309 = vpack.c.b16 %v4891, %v4890
    %v6310 = vpack.c.b16 %v4893, %v4892
    %v6311 = vpack.c.b16 %v4895, %v4894
    %v6312 = vpack.c.b16 %v4897, %v4896
    %v6313 = vpack.c.b16 %v4899, %v4898
    %v6314 = vpack.c.b16 %v4901, %v4900
    %v6315 = vpack.c.b16 %v4903, %v4902
    %v6316 = vpack.c.b16 %v4905, %v4904
    %v6317 = vpack.c.b16 %v4907, %v4906
    %v6318 = vpack.c.b16 %v4909, %v4908
    %v6319 = vpack.c.b16 %v4911, %v4910
    %v6320 = vpack.c.b16 %v4913, %v4912
    %v6321 = vpack.c.b16 %v4915, %v4914
    %v6322 = vpack.c.b16 %v4917, %v4916
    %v6323 = vpack.c.b16 %v4919, %v4918
    %v6324 = vpack.c.b16 %v4921, %v4920
    %v6325 = vpack.c.b16 %v4923, %v4922
    %v6326 = vpack.c.b16 %v4925, %v4924
    %v6327 = vpack.c.b16 %v4927, %v4926
    %v6328 = vpack.c.b16 %v4929, %v4928
    %v6329 = vpack.c.b16 %v4931, %v4930
    %v6330 = vpack.c.b16 %v4933, %v4932
    %v6331 = vpack.c.b16 %v4935, %v4934
    %v6332 = vpack.c.b16 %v4937, %v4936
    %v6333 = vpack.c.b16 %v4939, %v4938
    %v6334 = vpack.c.b16 %v4941, %v4940
    %v6335 = vpack.c.b16 %v4943, %v4942
    %v6336 = vpack.c.b16 %v4945, %v4944
    %v6337 = vpack.c.b16 %v4947, %v4946
    %v6338 = vpack.c.b16 %v4949, %v4948
    %v6339 = vpack.c.b16 %v4951, %v4950
    %v6340 = vpack.c.b16 %v4953, %v4952
    %v6341 = vpack.c.b16 %v4955, %v4954
    %v6342 = vpack.c.b16 %v4957, %v4956
    %v6343 = vpack.c.b16 %v4959, %v4958
    %v6344 = vpack.c.b16 %v4961, %v4960
    %v6345 = vpack.c.b16 %v4963, %v4962
    %v6346 = vpack.c.b16 %v4965, %v4964
    %v6347 = vpack.c.b16 %v4967, %v4966
    %v6348 = vpack.c.b16 %v4969, %v4968
    %v6349 = vpack.c.b16 %v4971, %v4970
    %v6350 = vpack.c.b16 %v4973, %v4972
    %v6351 = vpack.c.b16 %v4975, %v4974
    %v6352 = vpack.c.b16 %v4977, %v4976
    %v6353 = vpack.c.b16 %v4979, %v4978
    %v6354 = vpack.c.b16 %v4981, %v4980
    %v6355 = vpack.c.b16 %v4983, %v4982
    %v6356 = vpack.c.b16 %v4985, %v4984
    %v6357 = vpack.c.b16 %v4987, %v4986
    %v6358 = vpack.c.b16 %v4989, %v4988
    %v6359 = vpack.c.b16 %v4991, %v4990
    %v6360 = vpack.c.b16 %v4993, %v4992
    %v6361 = vpack.c.b16 %v4995, %v4994
    %v6362 = vpack.c.b16 %v4997, %v4996
    %v6363 = vpack.c.b16 %v4999, %v4998
    %v6364 = vpack.c.b16 %v5001, %v5000
    %v6365 = vpack.c.b16 %v5003, %v5002
    %v6366 = vpack.c.b16 %v5005, %v5004
    %v6367 = vpack.c.b16 %v5007, %v5006
    %v6368 = vpack.c.b16 %v5009, %v5008
    %v6369 = vpack.c.b16 %v5011, %v5010
    %v6370 = vpack.c.b16 %v5013, %v5012
    %v6371 = vpack.c.b16 %v5015, %v5014
    %v6372 = vpack.c.b16 %v5017, %v5016
    %v6373 = vpack.c.b16 %v5019, %v5018
    %v6374 = vpack.c.b16 %v5021, %v5020
    %v6375 = vpack.c.b16 %v5023, %v5022
    %v6376 = vpack.c.b16 %v5025, %v5024
    %v6377 = vpack.c.b16 %v5027, %v5026
    %v6378 = vpack.c.b16 %v5029, %v5028
    %v6379 = vpack.c.b16 %v5031, %v5030
    %v6380 = vpack.c.b16 %v5033, %v5032
    %v6381 = vpack.c.b16 %v5035, %v5034
    %v6382 = vpack.c.b16 %v5037, %v5036
    %v6383 = vpack.c.b16 %v5039, %v5038
    %v6384 = vpack.c.b16 %v5041, %v5040
    %v6385 = vpack.c.b16 %v5043, %v5042
    %v6386 = vpack.c.b16 %v5045, %v5044
    %v6387 = vpack.c.b16 %v5047, %v5046
    %v6388 = vpack.c.b16 %v5049, %v5048
    %v6389 = vpack.c.b16 %v5051, %v5050
    %v6390 = vpack.c.b16 %v5053, %v5052
    %v6391 = vpack.c.b16 %v5055, %v5054
    %v6392 = vpack.c.b16 %v5057, %v5056
    %v6393 = vpack.c.b16 %v5059, %v5058
    %v6394 = vpack.c.b16 %v5061, %v5060
    %v6395 = vpack.c.b16 %v5063, %v5062
    %v6396 = vpack.c.b16 %v5065, %v5064
    %v6397 = vpack.c.b16 %v5067, %v5066
    %v6398 = vpack.c.b16 %v5069, %v5068
    %v6399 = vpack.c.b16 %v5071, %v5070
    %v6400 = vpack.c.b16 %v5073, %v5072
    %v6401 = vpack.c.b16 %v5075, %v5074
    %v6402 = vpack.c.b16 %v5077, %v5076
    %v6403 = vpack.c.b16 %v5079, %v5078
    %v6404 = vpack.c.b16 %v5081, %v5080
    %v6405 = vpack.c.b16 %v5083, %v5082
    %v6406 = vpack.c.b16 %v5085, %v5084
    %v6407 = vpack.c.b16 %v5087, %v5086
    %v6408 = vpack.c.b16 %v5089, %v5088
    %v6409 = vpack.c.b16 %v5091, %v5090
    %v6410 = vpack.c.b16 %v5093, %v5092
    %v6411 = vpack.c.b16 %v5095, %v5094
    %v6412 = vpack.c.b16 %v5097, %v5096
    %v6413 = vpack.c.b16 %v5099, %v5098
    %v6414 = vpack.c.b16 %v5101, %v5100
    %v6415 = vpack.c.b16 %v5103, %v5102
    %v6416 = vpack.c.b16 %v5105, %v5104
    %v6417 = vpack.c.b16 %v5107, %v5106
    %v6418 = vpack.c.b16 %v5109, %v5108
    %v6419 = vpack.c.b16 %v5111, %v5110
    %v6420 = vpack.c.b16 %v5113, %v5112
    %v6421 = vpack.c.b16 %v5115, %v5114
    %v6422 = vpack.c.b16 %v5117, %v5116
    %v6423 = vpack.c.b16 %v5119, %v5118
    %v6424 = vpack.c.b16 %v5121, %v5120
    %v6425 = vpack.c.b16 %v5123, %v5122
    %v6426 = vpack.c.b16 %v5125, %v5124
    %v6427 = vpack.c.b16 %v5127, %v5126
    %v6428 = vpack.c.b16 %v5129, %v5128
    %v6429 = vpack.c.b16 %v5131, %v5130
    %v6430 = vpack.c.b16 %v5133, %v5132
    %v6431 = vpack.c.b16 %v5135, %v5134
    %v6432 = vpack.c.b16 %v5137, %v5136
    %v6433 = vpack.c.b16 %v5139, %v5138
    %v6434 = vpack.c.b16 %v5141, %v5140
    %v6435 = vpack.c.b16 %v5143, %v5142
    %v6436 = vpack.c.b16 %v5145, %v5144
    %v6437 = vpack.c.b16 %v5147, %v5146
    %v6438 = vpack.c.b16 %v5149, %v5148
    %v6439 = vpack.c.b16 %v5151, %v5150
    %v6440 = vpack.c.b16 %v5153, %v5152
    %v6441 = vpack.c.b16 %v5155, %v5154
    %v6442 = vpack.c.b16 %v5157, %v5156
    %v6443 = vpack.c.b16 %v5159, %v5158
    %v6444 = vpack.c.b16 %v5161, %v5160
    %v6445 = vpack.c.b16 %v5163, %v5162
    %v6446 = vpack.c.b16 %v5165, %v5164
    %v6447 = vpack.c.b16 %v5167, %v5166
    %v6448 = vpack.c.b16 %v5169, %v5168
    %v6449 = vpack.c.b16 %v5171, %v5170
    %v6450 = vpack.c.b16 %v5173, %v5172
    %v6451 = vpack.c.b16 %v5175, %v5174
    %v6452 = vpack.c.b16 %v5177, %v5176
    %v6453 = vpack.c.b16 %v5179, %v5178
    %v6454 = vpack.c.b16 %v5181, %v5180
    %v6455 = vpack.c.b16 %v5183, %v5182
    %v6456 = vpack.c.b16 %v5185, %v5184
    %v6457 = vpack.c.b16 %v5187, %v5186
    %v6458 = vpack.c.b16 %v5189, %v5188
    %v6459 = vpack.c.b16 %v5191, %v5190
    %v6460 = vpack.c.b16 %v5193, %v5192
    %v6461 = vpack.c.b16 %v5195, %v5194
    %v6462 = vpack.c.b16 %v5197, %v5196
    %v6463 = vpack.c.b16 %v5199, %v5198
    %v6464 = vpack.c.b16 %v5201, %v5200
    %v6465 = vpack.c.b16 %v5203, %v5202
    %v6466 = vpack.c.b16 %v5205, %v5204
    %v6467 = vpack.c.b16 %v5207, %v5206
    %v6468 = vpack.c.b16 %v5209, %v5208
    %v6469 = vpack.c.b16 %v5211, %v5210
    %v6470 = vpack.c.b16 %v5213, %v5212
    %v6471 = vpack.c.b16 %v5215, %v5214
    %v6472 = vpack.c.b16 %v5217, %v5216
    %v6473 = vpack.c.b16 %v5219, %v5218
    %v6474 = vpack.c.b16 %v5221, %v5220
    %v6475 = vpack.c.b16 %v5223, %v5222
    %v6476 = vpack.c.b16 %v5225, %v5224
    %v6477 = vpack.c.b16 %v5227, %v5226
    %v6478 = vpack.c.b16 %v5229, %v5228
    %v6479 = vpack.c.b16 %v5231, %v5230
    %v6480 = vpack.c.b16 %v5233, %v5232
    %v6481 = vpack.c.b16 %v5235, %v5234
    %v6482 = vpack.c.b16 %v5237, %v5236
    %v6483 = vpack.c.b16 %v5239, %v5238
    %v6484 = vpack.c.b16 %v5241, %v5240
    %v6485 = vpack.c.b16 %v5243, %v5242
    %v6486 = vpack.c.b16 %v5245, %v5244
    %v6487 = vpack.c.b16 %v5247, %v5246
    %v6488 = vpack.c.b16 %v5249, %v5248
    %v6489 = vpack.c.b16 %v5251, %v5250
    %v6490 = vpack.c.b16 %v5253, %v5252
    %v6491 = vpack.c.b16 %v5255, %v5254
    %v6492 = vpack.c.b16 %v5257, %v5256
    %v6493 = vpack.c.b16 %v5259, %v5258
    %v6494 = vpack.c.b16 %v5261, %v5260
    %v6495 = vpack.c.b16 %v5263, %v5262
    %v6496 = vpack.c.b16 %v5265, %v5264
    %v6497 = vpack.c.b16 %v5267, %v5266
    %v6498 = vpack.c.b16 %v5269, %v5268
    %v6499 = vpack.c.b16 %v5271, %v5270
    %v6500 = vpack.c.b16 %v5273, %v5272
    %v6501 = vpack.c.b16 %v5275, %v5274
    %v6502 = vpack.c.b16 %v5277, %v5276
    %v6503 = vpack.c.b16 %v5279, %v5278
    %v6504 = vpack.c.b16 %v5281, %v5280
    %v6505 = vpack.c.b16 %v5283, %v5282
    %v6506 = vpack.c.b16 %v5285, %v5284
    %v6507 = vpack.c.b16 %v5287, %v5286
    %v6508 = vpack.c.b16 %v5289, %v5288
    %v6509 = vpack.c.b16 %v5291, %v5290
    %v6510 = vpack.c.b16 %v5293, %v5292
    %v6511 = vpack.c.b16 %v5295, %v5294
    %v6512 = vpack.c.b16 %v5297, %v5296
    %v6513 = vpack.c.b16 %v5299, %v5298
    %v6514 = vpack.c.b16 %v5301, %v5300
    %v6515 = vpack.c.b16 %v5303, %v5302
    %v6516 = vpack.c.b16 %v5305, %v5304
    %v6517 = vpack.c.b16 %v5307, %v5306
    %v6518 = vpack.c.b16 %v5309, %v5308
    %v6519 = vpack.c.b16 %v5311, %v5310
    %v6520 = vpack.c.b16 %v5313, %v5312
    %v6521 = vpack.c.b16 %v5315, %v5314
    %v6522 = vpack.c.b16 %v5317, %v5316
    %v6523 = vpack.c.b16 %v5319, %v5318
    %v6524 = vpack.c.b16 %v5321, %v5320
    %v6525 = vpack.c.b16 %v5323, %v5322
    %v6526 = vpack.c.b16 %v5325, %v5324
    %v6527 = vpack.c.b16 %v5327, %v5326
    %v6528 = vpack.c.b16 %v5329, %v5328
    %v6529 = vpack.c.b16 %v5331, %v5330
    %v6530 = vpack.c.b16 %v5333, %v5332
    %v6531 = vpack.c.b16 %v5335, %v5334
    %v6532 = vpack.c.b16 %v5337, %v5336
    %v6533 = vpack.c.b16 %v5339, %v5338
    %v6534 = vpack.c.b16 %v5341, %v5340
    %v6535 = vpack.c.b16 %v5343, %v5342
    %v6536 = vpack.c.b16 %v5345, %v5344
    %v6537 = vpack.c.b16 %v5347, %v5346
    %v6538 = vpack.c.b16 %v5349, %v5348
    %v6539 = vpack.c.b16 %v5351, %v5350
    %v6540 = vpack.c.b16 %v5353, %v5352
    %v6541 = vpack.c.b16 %v5355, %v5354
    %v6542 = vpack.c.b16 %v5357, %v5356
    %v6543 = vpack.c.b16 %v5359, %v5358
    %v6544 = vpack.c.b16 %v5361, %v5360
    %v6545 = vpack.c.b16 %v5363, %v5362
    %v6546 = vpack.c.b16 %v5365, %v5364
    %v6547 = vpack.c.b16 %v5367, %v5366
    %v6548 = vpack.c.b16 %v5369, %v5368
    %v6549 = vpack.c.b16 %v5371, %v5370
    %v6550 = vpack.c.b16 %v5373, %v5372
    %v6551 = vpack.c.b16 %v5375, %v5374
    %v6552 = vpack.c.b16 %v5377, %v5376
    %v6553 = vpack.c.b16 %v5379, %v5378
    %v6554 = vpack.c.b16 %v5381, %v5380
    %v6555 = vpack.c.b16 %v5383, %v5382
    %v6556 = vpack.c.b16 %v5385, %v5384
    %v6557 = vpack.c.b16 %v5387, %v5386
    %v6558 = vpack.c.b16 %v5389, %v5388
    %v6559 = vpack.c.b16 %v5391, %v5390
    %v6560 = vpack.c.b16 %v5393, %v5392
    %v6561 = vpack.c.b16 %v5395, %v5394
    %v6562 = vpack.c.b16 %v5397, %v5396
    %v6563 = vpack.c.b16 %v5399, %v5398
    %v6564 = vpack.c.b16 %v5401, %v5400
    %v6565 = vpack.c.b16 %v5403, %v5402
    %v6566 = vpack.c.b16 %v5405, %v5404
    %v6567 = vpack.c.b16 %v5407, %v5406
    %v6568 = vpack.c.b16 %v5409, %v5408
    %v6569 = vpack.c.b16 %v5411, %v5410
    %v6570 = vpack.c.b16 %v5413, %v5412
    %v6571 = vpack.c.b16 %v5415, %v5414
    %v6572 = vpack.c.b16 %v5417, %v5416
    %v6573 = vpack.c.b16 %v5419, %v5418
    %v6574 = vpack.c.b16 %v5421, %v5420
    %v6575 = vpack.c.b16 %v5423, %v5422
    %v6576 = vpack.c.b16 %v5425, %v5424
    %v6577 = vpack.c.b16 %v5427, %v5426
    %v6578 = vpack.c.b16 %v5429, %v5428
    %v6579 = vpack.c.b16 %v5431, %v5430
    %v6580 = vpack.c.b16 %v5433, %v5432
    %v6581 = vpack.c.b16 %v5435, %v5434
    %v6582 = vpack.c.b16 %v5437, %v5436
    %v6583 = vpack.c.b16 %v5439, %v5438
    %v6584 = vpack.c.b16 %v5441, %v5440
    %v6585 = vpack.c.b16 %v5443, %v5442
    %v6586 = vpack.c.b16 %v5445, %v5444
    %v6587 = vpack.c.b16 %v5447, %v5446
    %v6588 = vpack.c.b16 %v5449, %v5448
    %v6589 = vpack.c.b16 %v5451, %v5450
    %v6590 = vpack.c.b16 %v5453, %v5452
    %v6591 = vpack.c.b16 %v5455, %v5454
    %v6592 = vpack.c.b16 %v5457, %v5456
    %v6593 = vpack.c.b16 %v5459, %v5458
    %v6594 = vpack.c.b16 %v5461, %v5460
    %v6595 = vpack.c.b16 %v5463, %v5462
    %v6596 = vpack.c.b16 %v5465, %v5464
    %v6597 = vpack.c.b16 %v5467, %v5466
    %v6598 = vpack.c.b16 %v5469, %v5468
    %v6599 = vpack.c.b16 %v5471, %v5470
    %v6600 = vpack.c.b16 %v5473, %v5472
    %v6601 = vpack.c.b16 %v5475, %v5474
    %v6602 = vpack.c.b16 %v5477, %v5476
    %v6603 = vpack.c.b16 %v5479, %v5478
    %v6604 = vpack.c.b16 %v5481, %v5480
    %v6605 = vpack.c.b16 %v5483, %v5482
    %v6606 = vpack.c.b16 %v5485, %v5484
    %v6607 = vpack.c.b16 %v5487, %v5486
    %v6608 = vpack.c.b16 %v5489, %v5488
    %v6609 = vpack.c.b16 %v5491, %v5490
    %v6610 = vpack.c.b16 %v5493, %v5492
    %v6611 = vpack.c.b16 %v5495, %v5494
    %v6612 = vpack.c.b16 %v5497, %v5496
    %v6613 = vpack.c.b16 %v5499, %v5498
    %v6614 = vpack.c.b16 %v5501, %v5500
    %v6615 = vpack.c.b16 %v5503, %v5502
    %v6616 = vpack.c.b16 %v5505, %v5504
    %v6617 = vpack.c.b16 %v5507, %v5506
    %v6618 = vpack.c.b16 %v5509, %v5508
    %v6619 = vpack.c.b16 %v5511, %v5510
    %v6620 = vpack.c.b16 %v5513, %v5512
    %v6621 = vpack.c.b16 %v5515, %v5514
    %v6622 = vpack.c.b16 %v5517, %v5516
    %v6623 = vpack.c.b16 %v5519, %v5518
    %v6624 = vpack.c.b16 %v5521, %v5520
    %v6625 = vpack.c.b16 %v5523, %v5522
    %v6626 = vpack.c.b16 %v5525, %v5524
    %v6627 = vpack.c.b16 %v5527, %v5526
    %v6628 = vpack.c.b16 %v5529, %v5528
    %v6629 = vpack.c.b16 %v5531, %v5530
    %v6630 = vpack.c.b16 %v5533, %v5532
    %v6631 = vpack.c.b16 %v5535, %v5534
    %v6632 = vpack.c.b16 %v5537, %v5536
    %v6633 = vpack.c.b16 %v5539, %v5538
    %v6634 = vpack.c.b16 %v5541, %v5540
    %v6635 = vpack.c.b16 %v5543, %v5542
    %v6636 = vpack.c.b16 %v5545, %v5544
    %v6637 = vpack.c.b16 %v5547, %v5546
    %v6638 = vpack.c.b16 %v5549, %v5548
    %v6639 = vpack.c.b16 %v5551, %v5550
    %v6640 = vpack.c.b16 %v5553, %v5552
    %v6641 = vpack.c.b16 %v5555, %v5554
    %v6642 = vpack.c.b16 %v5557, %v5556
    %v6643 = vpack.c.b16 %v5559, %v5558
    %v6644 = vpack.c.b16 %v5561, %v5560
    %v6645 = vpack.c.b16 %v5563, %v5562
    %v6646 = vpack.c.b16 %v5565, %v5564
    %v6647 = vpack.c.b16 %v5567, %v5566
    %v6648 = vpack.c.b16 %v5569, %v5568
    %v6649 = vpack.c.b16 %v5571, %v5570
    %v6650 = vpack.c.b16 %v5573, %v5572
    %v6651 = vpack.c.b16 %v5575, %v5574
    %v6652 = vpack.c.b16 %v5577, %v5576
    %v6653 = vpack.c.b16 %v5579, %v5578
    %v6654 = vpack.c.b16 %v5581, %v5580
    %v6655 = vpack.c.b16 %v5583, %v5582
    %v6656 = vpack.c.b16 %v5585, %v5584
    %v6657 = vpack.c.b16 %v5587, %v5586
    %v6658 = vpack.c.b16 %v5589, %v5588
    %v6659 = vpack.c.b16 %v5591, %v5590
    %v6660 = vpack.c.b16 %v5593, %v5592
    %v6661 = vpack.c.b16 %v5595, %v5594
    %v6662 = vpack.c.b16 %v5597, %v5596
    %v6663 = vpack.c.b16 %v5599, %v5598
    %v6664 = vpack.c.b16 %v5601, %v5600
    %v6665 = vpack.c.b16 %v5603, %v5602
    %v6666 = vpack.c.b16 %v5605, %v5604
    %v6667 = vpack.c.b16 %v5607, %v5606
    %v6668 = vpack.c.b16 %v5609, %v5608
    %v6669 = vpack.c.b16 %v5611, %v5610
    %v6670 = vpack.c.b16 %v5613, %v5612
    %v6671 = vpack.c.b16 %v5615, %v5614
    %v6672 = vpack.c.b16 %v5617, %v5616
    %v6673 = vpack.c.b16 %v5619, %v5618
    %v6674 = vpack.c.b16 %v5621, %v5620
    %v6675 = vpack.c.b16 %v5623, %v5622
    %v6676 = vpack.c.b16 %v5625, %v5624
    %v6677 = vpack.c.b16 %v5627, %v5626
    %v6678 = vpack.c.b16 %v5629, %v5628
    %v6679 = vpack.c.b16 %v5631, %v5630
    %v6680 = vpack.c.b16 %v5633, %v5632
    %v6681 = vpack.c.b16 %v5635, %v5634
    %v6682 = vpack.c.b16 %v5637, %v5636
    %v6683 = vpack.c.b16 %v5639, %v5638
    %v6684 = vpack.c.b16 %v5641, %v5640
    %v6685 = vpack.c.b16 %v5643, %v5642
    %v6686 = vpack.c.b16 %v5645, %v5644
    %v6687 = vpack.c.b16 %v5647, %v5646
    %v6688 = vpack.c.b16 %v5649, %v5648
    %v6689 = vpack.c.b16 %v5651, %v5650
    %v6690 = vpack.c.b16 %v5653, %v5652
    %v6691 = vpack.c.b16 %v5655, %v5654
    %v6692 = vpack.c.b16 %v5657, %v5656
    %v6693 = vpack.c.b16 %v5659, %v5658
    %v6694 = vpack.c.b16 %v5661, %v5660
    %v6695 = vpack.c.b16 %v5663, %v5662
    %v6696 = vpack.c.b16 %v5665, %v5664
    %v6697 = vpack.c.b16 %v5667, %v5666
    %v6698 = vpack.c.b16 %v5669, %v5668
    %v6699 = vpack.c.b16 %v5671, %v5670
    %v6700 = vpack.c.b16 %v5673, %v5672
    %v6701 = vpack.c.b16 %v5675, %v5674
    %v6702 = vpack.c.b16 %v5677, %v5676
    %v6703 = vpack.c.b16 %v5679, %v5678
    %v6704 = vpack.c.b16 %v5681, %v5680
    %v6705 = vpack.c.b16 %v5683, %v5682
    %v6706 = vpack.c.b16 %v5685, %v5684
    %v6707 = vpack.c.b16 %v5687, %v5686
    %v6708 = vpack.c.b16 %v5689, %v5688
    %v6709 = vpack.c.b16 %v5691, %v5690
    %v6710 = vpack.c.b16 %v5693, %v5692
    %v6711 = vpack.c.b16 %v5695, %v5694
    %v6712 = vpack.c.b16 %v5697, %v5696
    %v6713 = vpack.c.b16 %v5699, %v5698
    %v6714 = vpack.c.b16 %v5701, %v5700
    %v6715 = vpack.c.b16 %v5703, %v5702
    %v6716 = vpack.c.b16 %v5705, %v5704
    %v6717 = vpack.c.b16 %v5707, %v5706
    %v6718 = vpack.c.b16 %v5709, %v5708
    %v6719 = vpack.c.b16 %v5711, %v5710
    %v6720 = vpack.c.b16 %v5713, %v5712
    %v6721 = vpack.c.b16 %v5715, %v5714
    %v6722 = vpack.c.b16 %v5717, %v5716
    %v6723 = vpack.c.b16 %v5719, %v5718
    %v6724 = vpack.c.b16 %v5721, %v5720
    %v6725 = vpack.c.b16 %v5723, %v5722
    %v6726 = vpack.c.b16 %v5725, %v5724
    %v6727 = vpack.c.b16 %v5727, %v5726
    %v6728 = vpack.c.b16 %v5729, %v5728
    %v6729 = vpack.c.b16 %v5731, %v5730
    %v6730 = vpack.c.b16 %v5733, %v5732
    %v6731 = vpack.c.b16 %v5735, %v5734
    %v6732 = vpack.c.b16 %v5737, %v5736
    %v6733 = vpack.c.b16 %v5739, %v5738
    %v6734 = vpack.c.b16 %v5741, %v5740
    %v6735 = vpack.c.b16 %v5743, %v5742
    %v6736 = vpack.c.b16 %v5745, %v5744
    %v6737 = vpack.c.b16 %v5747, %v5746
    %v6738 = vpack.c.b16 %v5749, %v5748
    %v6739 = vpack.c.b16 %v5751, %v5750
    %v6740 = vpack.c.b16 %v5753, %v5752
    %v6741 = vpack.c.b16 %v5755, %v5754
    %v6742 = vpack.c.b16 %v5757, %v5756
    %v6743 = vpack.c.b16 %v5759, %v5758
    %v6744 = vpack.c.b16 %v5761, %v5760
    %v6745 = vpack.c.b16 %v5763, %v5762
    %v6746 = vpack.c.b16 %v5765, %v5764
    %v6747 = vpack.c.b16 %v5767, %v5766
    %v6748 = vpack.c.b16 %v5769, %v5768
    %v6749 = vpack.c.b16 %v5771, %v5770
    %v6750 = vpack.c.b16 %v5773, %v5772
    %v6751 = vpack.c.b16 %v5775, %v5774
    %v6752 = vpack.c.b16 %v5777, %v5776
    %v6753 = vpack.c.b16 %v5779, %v5778
    %v6754 = vpack.c.b16 %v5781, %v5780
    %v6755 = vpack.c.b16 %v5783, %v5782
    %v6756 = vpack.c.b16 %v5785, %v5784
    %v6757 = vpack.c.b16 %v5787, %v5786
    %v6758 = vpack.c.b16 %v5789, %v5788
    %v6759 = vpack.c.b16 %v5791, %v5790
    %v6760 = vpack.c.b16 %v5793, %v5792
    %v6761 = vpack.c.b16 %v5795, %v5794
    %v6762 = vpack.c.b16 %v5797, %v5796
    %v6763 = vpack.c.b16 %v5799, %v5798
    %v6764 = vpack.c.b16 %v5801, %v5800
    %v6765 = vpack.c.b16 %v5803, %v5802
    %v6766 = vpack.c.b16 %v5805, %v5804
    %v6767 = vpack.c.b16 %v5807, %v5806
    %v6768 = vpack.c.b16 %v5809, %v5808
    %v6769 = vpack.c.b16 %v5811, %v5810
    %v6770 = vpack.c.b16 %v5813, %v5812
    %v6771 = vpack.c.b16 %v5815, %v5814
    %v6772 = vpack.c.b16 %v5817, %v5816
    %v6773 = vpack.c.b16 %v5819, %v5818
    %v6774 = vpack.c.b16 %v5821, %v5820
    %v6775 = vpack.c.b16 %v5823, %v5822
    %v6776 = vpack.c.b16 %v5825, %v5824
    %v6777 = vpack.c.b16 %v5827, %v5826
    %v6778 = vpack.c.b16 %v5829, %v5828
    %v6779 = vpack.c.b16 %v5831, %v5830
    %v6780 = vpack.c.b16 %v5833, %v5832
    %v6781 = vpack.c.b16 %v5835, %v5834
    %v6782 = vpack.c.b16 %v5837, %v5836
    %v6783 = vpack.c.b16 %v5839, %v5838
    %v6784 = vpack.c.b16 %v5841, %v5840
    %v6785 = vpack.c.b16 %v5843, %v5842
    %v6786 = vpack.c.b16 %v5845, %v5844
    %v6787 = vpack.c.b16 %v5847, %v5846
    %v6788 = vpack.c.b16 %v5849, %v5848
    %v6789 = vpack.c.b16 %v5851, %v5850
    %v6790 = vpack.c.b16 %v5853, %v5852
    %v6791 = vpack.c.b16 %v5855, %v5854
    %v6792 = vpack.c.b16 %v5857, %v5856
    %v6793 = vpack.c.b16 %v5859, %v5858
    %v6794 = vpack.c.b16 %v5861, %v5860
    %v6795 = vpack.c.b16 %v5863, %v5862
    %v6796 = vpack.c.b16 %v5865, %v5864
    %v6797 = vpack.c.b16 %v5867, %v5866
    %v6798 = vpack.c.b16 %v5869, %v5868
    %v6799 = vpack.c.b16 %v5871, %v5870
    %7728 = vmatpush.bf16.msra.mxu0 %v5879
    %7729 = vmatpush.bf16.msra.mxu0 %v5878
    %7730 = vmatpush.bf16.msra.mxu0 %v5877
    %7731 = vmatpush.bf16.msra.mxu0 %v5876
    %7732 = vmatpush.bf16.msra.mxu0 %v5875
    %7733 = vmatpush.bf16.msra.mxu0 %v5874
    %7734 = vmatpush.bf16.msra.mxu0 %v5873
    %7735 = vmatpush.bf16.msra.mxu0 %v5872
    %7736 = vmatmul.bf16.gmra.mxu0 %v1900
    %v7737 = vpop.f32.mrf.mxu0
    %v7738 = vadd.f32 0.0, %v7737
    %v7739 = vpop.f32.mrf.mxu0
    %7740 = vdwg.mxu0
    %7741 = vmatpush.bf16.msra.mxu0 %v5887
    %7742 = vmatpush.bf16.msra.mxu0 %v5886
    %7743 = vmatpush.bf16.msra.mxu0 %v5885
    %7744 = vmatpush.bf16.msra.mxu0 %v5884
    %7745 = vmatpush.bf16.msra.mxu0 %v5883
    %7746 = vmatpush.bf16.msra.mxu0 %v5882
    %7747 = vmatpush.bf16.msra.mxu0 %v5881
    %7748 = vmatpush.bf16.msra.mxu0 %v5880
    %7749 = vmatmul.bf16.gmra.mxu0 %v1901
    %v7750 = vpop.f32.mrf.mxu0
    %v7751 = vadd.f32 %v7738, %v7750
    %v7752 = vpop.f32.mrf.mxu0
    %7753 = vdwg.mxu0
    %7754 = vmatpush.bf16.msra.mxu0 %v5895
    %7755 = vmatpush.bf16.msra.mxu0 %v5894
    %7756 = vmatpush.bf16.msra.mxu0 %v5893
    %7757 = vmatpush.bf16.msra.mxu0 %v5892
    %7758 = vmatpush.bf16.msra.mxu0 %v5891
    %7759 = vmatpush.bf16.msra.mxu0 %v5890
    %7760 = vmatpush.bf16.msra.mxu0 %v5889
    %7761 = vmatpush.bf16.msra.mxu0 %v5888
    %7762 = vmatmul.bf16.gmra.mxu0 %v1902
    %v7763 = vpop.f32.mrf.mxu0
    %v7764 = vadd.f32 %v7751, %v7763
    %v7765 = vpop.f32.mrf.mxu0
    %7766 = vdwg.mxu0
    %7767 = vmatpush.bf16.msra.mxu0 %v5903
    %7768 = vmatpush.bf16.msra.mxu0 %v5902
    %7769 = vmatpush.bf16.msra.mxu0 %v5901
    %7770 = vmatpush.bf16.msra.mxu0 %v5900
    %7771 = vmatpush.bf16.msra.mxu0 %v5899
    %7772 = vmatpush.bf16.msra.mxu0 %v5898
    %7773 = vmatpush.bf16.msra.mxu0 %v5897
    %7774 = vmatpush.bf16.msra.mxu0 %v5896
    %7775 = vmatmul.bf16.gmra.mxu0 %v1903
    %v7776 = vpop.f32.mrf.mxu0
    %v7777 = vadd.f32 %v7764, %v7776
    %v7778 = vpop.f32.mrf.mxu0
    %7779 = vdwg.mxu0
    %7780 = vmatpush.bf16.msra.mxu0 %v5911
    %7781 = vmatpush.bf16.msra.mxu0 %v5910
    %7782 = vmatpush.bf16.msra.mxu0 %v5909
    %7783 = vmatpush.bf16.msra.mxu0 %v5908
    %7784 = vmatpush.bf16.msra.mxu0 %v5907
    %7785 = vmatpush.bf16.msra.mxu0 %v5906
    %7786 = vmatpush.bf16.msra.mxu0 %v5905
    %7787 = vmatpush.bf16.msra.mxu0 %v5904
    %7788 = vmatmul.bf16.gmra.mxu0 %v1904
    %v7789 = vpop.f32.mrf.mxu0
    %v7790 = vadd.f32 %v7777, %v7789
    %v7791 = vpop.f32.mrf.mxu0
    %7792 = vdwg.mxu0
    %7793 = vmatpush.bf16.msra.mxu0 %v5919
    %7794 = vmatpush.bf16.msra.mxu0 %v5918
    %7795 = vmatpush.bf16.msra.mxu0 %v5917
    %7796 = vmatpush.bf16.msra.mxu0 %v5916
    %7797 = vmatpush.bf16.msra.mxu0 %v5915
    %7798 = vmatpush.bf16.msra.mxu0 %v5914
    %7799 = vmatpush.bf16.msra.mxu0 %v5913
    %7800 = vmatpush.bf16.msra.mxu0 %v5912
    %7801 = vmatmul.bf16.gmra.mxu0 %v1905
    %v7802 = vpop.f32.mrf.mxu0
    %v7803 = vadd.f32 %v7790, %v7802
    %v7804 = vpop.f32.mrf.mxu0
    %7805 = vdwg.mxu0
    %7806 = vmatpush.bf16.msra.mxu0 %v5927
    %7807 = vmatpush.bf16.msra.mxu0 %v5926
    %7808 = vmatpush.bf16.msra.mxu0 %v5925
    %7809 = vmatpush.bf16.msra.mxu0 %v5924
    %7810 = vmatpush.bf16.msra.mxu0 %v5923
    %7811 = vmatpush.bf16.msra.mxu0 %v5922
    %7812 = vmatpush.bf16.msra.mxu0 %v5921
    %7813 = vmatpush.bf16.msra.mxu0 %v5920
    %7814 = vmatmul.bf16.gmra.mxu0 %v1906
    %v7815 = vpop.f32.mrf.mxu0
    %v7816 = vadd.f32 %v7803, %v7815
    %v7817 = vpop.f32.mrf.mxu0
    %7818 = vdwg.mxu0
    %7819 = vmatpush.bf16.msra.mxu0 %v5935
    %7820 = vmatpush.bf16.msra.mxu0 %v5934
    %7821 = vmatpush.bf16.msra.mxu0 %v5933
    %7822 = vmatpush.bf16.msra.mxu0 %v5932
    %7823 = vmatpush.bf16.msra.mxu0 %v5931
    %7824 = vmatpush.bf16.msra.mxu0 %v5930
    %7825 = vmatpush.bf16.msra.mxu0 %v5929
    %7826 = vmatpush.bf16.msra.mxu0 %v5928
    %7827 = vmatmul.bf16.gmra.mxu0 %v1907
    %v7828 = vpop.f32.mrf.mxu0
    %v7829 = vadd.f32 %v7816, %v7828
    %v7830 = vpop.f32.mrf.mxu0
    %7831 = vdwg.mxu0
    %7832 = vmatpush.bf16.msra.mxu0 %v5943
    %7833 = vmatpush.bf16.msra.mxu0 %v5942
    %7834 = vmatpush.bf16.msra.mxu0 %v5941
    %7835 = vmatpush.bf16.msra.mxu0 %v5940
    %7836 = vmatpush.bf16.msra.mxu0 %v5939
    %7837 = vmatpush.bf16.msra.mxu0 %v5938
    %7838 = vmatpush.bf16.msra.mxu0 %v5937
    %7839 = vmatpush.bf16.msra.mxu0 %v5936
    %7840 = vmatmul.bf16.gmra.mxu0 %v1910
    %v7841 = vpop.f32.mrf.mxu0
    %v7842 = vadd.f32 %v7829, %v7841
    %v7843 = vpop.f32.mrf.mxu0
    %7844 = vdwg.mxu0
    %7845 = vmatpush.bf16.msra.mxu0 %v5951
    %7846 = vmatpush.bf16.msra.mxu0 %v5950
    %7847 = vmatpush.bf16.msra.mxu0 %v5949
    %7848 = vmatpush.bf16.msra.mxu0 %v5948
    %7849 = vmatpush.bf16.msra.mxu0 %v5947
    %7850 = vmatpush.bf16.msra.mxu0 %v5946
    %7851 = vmatpush.bf16.msra.mxu0 %v5945
    %7852 = vmatpush.bf16.msra.mxu0 %v5944
    %7853 = vmatmul.bf16.gmra.mxu0 %v1911
    %v7854 = vpop.f32.mrf.mxu0
    %v7855 = vadd.f32 %v7842, %v7854
    %v7856 = vpop.f32.mrf.mxu0
    %7857 = vdwg.mxu0
    %7858 = vmatpush.bf16.msra.mxu0 %v5959
    %7859 = vmatpush.bf16.msra.mxu0 %v5958
    %7860 = vmatpush.bf16.msra.mxu0 %v5957
    %7861 = vmatpush.bf16.msra.mxu0 %v5956
    %7862 = vmatpush.bf16.msra.mxu0 %v5955
    %7863 = vmatpush.bf16.msra.mxu0 %v5954
    %7864 = vmatpush.bf16.msra.mxu0 %v5953
    %7865 = vmatpush.bf16.msra.mxu0 %v5952
    %7866 = vmatmul.bf16.gmra.mxu0 %v1912
    %v7867 = vpop.f32.mrf.mxu0
    %v7868 = vadd.f32 %v7855, %v7867
    %v7869 = vpop.f32.mrf.mxu0
    %7870 = vdwg.mxu0
    %7871 = vmatpush.bf16.msra.mxu0 %v5967
    %7872 = vmatpush.bf16.msra.mxu0 %v5966
    %7873 = vmatpush.bf16.msra.mxu0 %v5965
    %7874 = vmatpush.bf16.msra.mxu0 %v5964
    %7875 = vmatpush.bf16.msra.mxu0 %v5963
    %7876 = vmatpush.bf16.msra.mxu0 %v5962
    %7877 = vmatpush.bf16.msra.mxu0 %v5961
    %7878 = vmatpush.bf16.msra.mxu0 %v5960
    %7879 = vmatmul.bf16.gmra.mxu0 %v1913
    %v7880 = vpop.f32.mrf.mxu0
    %v7881 = vadd.f32 %v7868, %v7880
    %v7882 = vpop.f32.mrf.mxu0
    %7883 = vdwg.mxu0
    %7884 = vmatpush.bf16.msra.mxu0 %v5975
    %7885 = vmatpush.bf16.msra.mxu0 %v5974
    %7886 = vmatpush.bf16.msra.mxu0 %v5973
    %7887 = vmatpush.bf16.msra.mxu0 %v5972
    %7888 = vmatpush.bf16.msra.mxu0 %v5971
    %7889 = vmatpush.bf16.msra.mxu0 %v5970
    %7890 = vmatpush.bf16.msra.mxu0 %v5969
    %7891 = vmatpush.bf16.msra.mxu0 %v5968
    %7892 = vmatmul.bf16.gmra.mxu0 %v1914
    %v7893 = vpop.f32.mrf.mxu0
    %v7894 = vadd.f32 %v7881, %v7893
    %v7895 = vpop.f32.mrf.mxu0
    %7896 = vdwg.mxu0
    %7897 = vmatpush.bf16.msra.mxu0 %v5983
    %7898 = vmatpush.bf16.msra.mxu0 %v5982
    %7899 = vmatpush.bf16.msra.mxu0 %v5981
    %7900 = vmatpush.bf16.msra.mxu0 %v5980
    %7901 = vmatpush.bf16.msra.mxu0 %v5979
    %7902 = vmatpush.bf16.msra.mxu0 %v5978
    %7903 = vmatpush.bf16.msra.mxu0 %v5977
    %7904 = vmatpush.bf16.msra.mxu0 %v5976
    %7905 = vmatmul.bf16.gmra.mxu0 %v1915
    %v7906 = vpop.f32.mrf.mxu0
    %v7907 = vadd.f32 %v7894, %v7906
    %v7908 = vpop.f32.mrf.mxu0
    %7909 = vdwg.mxu0
    %7910 = vmatpush.bf16.msra.mxu0 %v5991
    %7911 = vmatpush.bf16.msra.mxu0 %v5990
    %7912 = vmatpush.bf16.msra.mxu0 %v5989
    %7913 = vmatpush.bf16.msra.mxu0 %v5988
    %7914 = vmatpush.bf16.msra.mxu0 %v5987
    %7915 = vmatpush.bf16.msra.mxu0 %v5986
    %7916 = vmatpush.bf16.msra.mxu0 %v5985
    %7917 = vmatpush.bf16.msra.mxu0 %v5984
    %7918 = vmatmul.bf16.gmra.mxu0 %v1916
    %v7919 = vpop.f32.mrf.mxu0
    %v7920 = vadd.f32 %v7907, %v7919
    %v7921 = vpop.f32.mrf.mxu0
    %7922 = vdwg.mxu0
    %7923 = vmatpush.bf16.msra.mxu0 %v5999
    %7924 = vmatpush.bf16.msra.mxu0 %v5998
    %7925 = vmatpush.bf16.msra.mxu0 %v5997
    %7926 = vmatpush.bf16.msra.mxu0 %v5996
    %7927 = vmatpush.bf16.msra.mxu0 %v5995
    %7928 = vmatpush.bf16.msra.mxu0 %v5994
    %7929 = vmatpush.bf16.msra.mxu0 %v5993
    %7930 = vmatpush.bf16.msra.mxu0 %v5992
    %7931 = vmatmul.bf16.gmra.mxu0 %v1917
    %v7932 = vpop.f32.mrf.mxu0
    %v7933 = vadd.f32 %v7920, %v7932
    %v7934 = vpop.f32.mrf.mxu0
    %7935 = vdwg.mxu0
    %7936 = vmatpush.bf16.msra.mxu0 %v6007
    %7937 = vmatpush.bf16.msra.mxu0 %v6006
    %7938 = vmatpush.bf16.msra.mxu0 %v6005
    %7939 = vmatpush.bf16.msra.mxu0 %v6004
    %7940 = vmatpush.bf16.msra.mxu0 %v6003
    %7941 = vmatpush.bf16.msra.mxu0 %v6002
    %7942 = vmatpush.bf16.msra.mxu0 %v6001
    %7943 = vmatpush.bf16.msra.mxu0 %v6000
    %7944 = vmatmul.bf16.gmra.mxu0 %v1920
    %v7945 = vpop.f32.mrf.mxu0
    %v7946 = vadd.f32 %v7933, %v7945
    %v7947 = vpop.f32.mrf.mxu0
    %7948 = vdwg.mxu0
    %7949 = vmatpush.bf16.msra.mxu0 %v6015
    %7950 = vmatpush.bf16.msra.mxu0 %v6014
    %7951 = vmatpush.bf16.msra.mxu0 %v6013
    %7952 = vmatpush.bf16.msra.mxu0 %v6012
    %7953 = vmatpush.bf16.msra.mxu0 %v6011
    %7954 = vmatpush.bf16.msra.mxu0 %v6010
    %7955 = vmatpush.bf16.msra.mxu0 %v6009
    %7956 = vmatpush.bf16.msra.mxu0 %v6008
    %7957 = vmatmul.bf16.gmra.mxu0 %v1921
    %v7958 = vpop.f32.mrf.mxu0
    %v7959 = vadd.f32 %v7946, %v7958
    %v7960 = vpop.f32.mrf.mxu0
    %7961 = vdwg.mxu0
    %7962 = vmatpush.bf16.msra.mxu0 %v6023
    %7963 = vmatpush.bf16.msra.mxu0 %v6022
    %7964 = vmatpush.bf16.msra.mxu0 %v6021
    %7965 = vmatpush.bf16.msra.mxu0 %v6020
    %7966 = vmatpush.bf16.msra.mxu0 %v6019
    %7967 = vmatpush.bf16.msra.mxu0 %v6018
    %7968 = vmatpush.bf16.msra.mxu0 %v6017
    %7969 = vmatpush.bf16.msra.mxu0 %v6016
    %7970 = vmatmul.bf16.gmra.mxu0 %v1922
    %v7971 = vpop.f32.mrf.mxu0
    %v7972 = vadd.f32 %v7959, %v7971
    %v7973 = vpop.f32.mrf.mxu0
    %7974 = vdwg.mxu0
    %7975 = vmatpush.bf16.msra.mxu0 %v6031
    %7976 = vmatpush.bf16.msra.mxu0 %v6030
    %7977 = vmatpush.bf16.msra.mxu0 %v6029
    %7978 = vmatpush.bf16.msra.mxu0 %v6028
    %7979 = vmatpush.bf16.msra.mxu0 %v6027
    %7980 = vmatpush.bf16.msra.mxu0 %v6026
    %7981 = vmatpush.bf16.msra.mxu0 %v6025
    %7982 = vmatpush.bf16.msra.mxu0 %v6024
    %7983 = vmatmul.bf16.gmra.mxu0 %v1923
    %v7984 = vpop.f32.mrf.mxu0
    %v7985 = vadd.f32 %v7972, %v7984
    %v7986 = vpop.f32.mrf.mxu0
    %7987 = vdwg.mxu0
    %7988 = vmatpush.bf16.msra.mxu0 %v6039
    %7989 = vmatpush.bf16.msra.mxu0 %v6038
    %7990 = vmatpush.bf16.msra.mxu0 %v6037
    %7991 = vmatpush.bf16.msra.mxu0 %v6036
    %7992 = vmatpush.bf16.msra.mxu0 %v6035
    %7993 = vmatpush.bf16.msra.mxu0 %v6034
    %7994 = vmatpush.bf16.msra.mxu0 %v6033
    %7995 = vmatpush.bf16.msra.mxu0 %v6032
    %7996 = vmatmul.bf16.gmra.mxu0 %v1924
    %v7997 = vpop.f32.mrf.mxu0
    %v7998 = vadd.f32 %v7985, %v7997
    %v7999 = vpop.f32.mrf.mxu0
    %8000 = vdwg.mxu0
    %8001 = vmatpush.bf16.msra.mxu0 %v6047
    %8002 = vmatpush.bf16.msra.mxu0 %v6046
    %8003 = vmatpush.bf16.msra.mxu0 %v6045
    %8004 = vmatpush.bf16.msra.mxu0 %v6044
    %8005 = vmatpush.bf16.msra.mxu0 %v6043
    %8006 = vmatpush.bf16.msra.mxu0 %v6042
    %8007 = vmatpush.bf16.msra.mxu0 %v6041
    %8008 = vmatpush.bf16.msra.mxu0 %v6040
    %8009 = vmatmul.bf16.gmra.mxu0 %v1925
    %v8010 = vpop.f32.mrf.mxu0
    %v8011 = vadd.f32 %v7998, %v8010
    %v8012 = vpop.f32.mrf.mxu0
    %8013 = vdwg.mxu0
    %8014 = vmatpush.bf16.msra.mxu0 %v6055
    %8015 = vmatpush.bf16.msra.mxu0 %v6054
    %8016 = vmatpush.bf16.msra.mxu0 %v6053
    %8017 = vmatpush.bf16.msra.mxu0 %v6052
    %8018 = vmatpush.bf16.msra.mxu0 %v6051
    %8019 = vmatpush.bf16.msra.mxu0 %v6050
    %8020 = vmatpush.bf16.msra.mxu0 %v6049
    %8021 = vmatpush.bf16.msra.mxu0 %v6048
    %8022 = vmatmul.bf16.gmra.mxu0 %v1926
    %v8023 = vpop.f32.mrf.mxu0
    %v8024 = vadd.f32 %v8011, %v8023
    %v8025 = vpop.f32.mrf.mxu0
    %8026 = vdwg.mxu0
    %8027 = vmatpush.bf16.msra.mxu0 %v6063
    %8028 = vmatpush.bf16.msra.mxu0 %v6062
    %8029 = vmatpush.bf16.msra.mxu0 %v6061
    %8030 = vmatpush.bf16.msra.mxu0 %v6060
    %8031 = vmatpush.bf16.msra.mxu0 %v6059
    %8032 = vmatpush.bf16.msra.mxu0 %v6058
    %8033 = vmatpush.bf16.msra.mxu0 %v6057
    %8034 = vmatpush.bf16.msra.mxu0 %v6056
    %8035 = vmatmul.bf16.gmra.mxu0 %v1927
    %v8036 = vpop.f32.mrf.mxu0
    %v8037 = vadd.f32 %v8024, %v8036
    %v8038 = vpop.f32.mrf.mxu0
    %8039 = vdwg.mxu0
    %8040 = vmatpush.bf16.msra.mxu0 %v6071
    %8041 = vmatpush.bf16.msra.mxu0 %v6070
    %8042 = vmatpush.bf16.msra.mxu0 %v6069
    %8043 = vmatpush.bf16.msra.mxu0 %v6068
    %8044 = vmatpush.bf16.msra.mxu0 %v6067
    %8045 = vmatpush.bf16.msra.mxu0 %v6066
    %8046 = vmatpush.bf16.msra.mxu0 %v6065
    %8047 = vmatpush.bf16.msra.mxu0 %v6064
    %8048 = vmatmul.bf16.gmra.mxu0 %v1930
    %v8049 = vpop.f32.mrf.mxu0
    %v8050 = vadd.f32 %v8037, %v8049
    %v8051 = vpop.f32.mrf.mxu0
    %8052 = vdwg.mxu0
    %8053 = vmatpush.bf16.msra.mxu0 %v6079
    %8054 = vmatpush.bf16.msra.mxu0 %v6078
    %8055 = vmatpush.bf16.msra.mxu0 %v6077
    %8056 = vmatpush.bf16.msra.mxu0 %v6076
    %8057 = vmatpush.bf16.msra.mxu0 %v6075
    %8058 = vmatpush.bf16.msra.mxu0 %v6074
    %8059 = vmatpush.bf16.msra.mxu0 %v6073
    %8060 = vmatpush.bf16.msra.mxu0 %v6072
    %8061 = vmatmul.bf16.gmra.mxu0 %v1931
    %v8062 = vpop.f32.mrf.mxu0
    %v8063 = vadd.f32 %v8050, %v8062
    %v8064 = vpop.f32.mrf.mxu0
    %8065 = vdwg.mxu0
    %8066 = vmatpush.bf16.msra.mxu0 %v6087
    %8067 = vmatpush.bf16.msra.mxu0 %v6086
    %8068 = vmatpush.bf16.msra.mxu0 %v6085
    %8069 = vmatpush.bf16.msra.mxu0 %v6084
    %8070 = vmatpush.bf16.msra.mxu0 %v6083
    %8071 = vmatpush.bf16.msra.mxu0 %v6082
    %8072 = vmatpush.bf16.msra.mxu0 %v6081
    %8073 = vmatpush.bf16.msra.mxu0 %v6080
    %8074 = vmatmul.bf16.gmra.mxu0 %v1932
    %v8075 = vpop.f32.mrf.mxu0
    %v8076 = vadd.f32 %v8063, %v8075
    %v8077 = vpop.f32.mrf.mxu0
    %8078 = vdwg.mxu0
    %8079 = vmatpush.bf16.msra.mxu0 %v6095
    %8080 = vmatpush.bf16.msra.mxu0 %v6094
    %8081 = vmatpush.bf16.msra.mxu0 %v6093
    %8082 = vmatpush.bf16.msra.mxu0 %v6092
    %8083 = vmatpush.bf16.msra.mxu0 %v6091
    %8084 = vmatpush.bf16.msra.mxu0 %v6090
    %8085 = vmatpush.bf16.msra.mxu0 %v6089
    %8086 = vmatpush.bf16.msra.mxu0 %v6088
    %8087 = vmatmul.bf16.gmra.mxu0 %v1933
    %v8088 = vpop.f32.mrf.mxu0
    %v8089 = vadd.f32 %v8076, %v8088
    %v8090 = vpop.f32.mrf.mxu0
    %8091 = vdwg.mxu0
    %8092 = vmatpush.bf16.msra.mxu0 %v6103
    %8093 = vmatpush.bf16.msra.mxu0 %v6102
    %8094 = vmatpush.bf16.msra.mxu0 %v6101
    %8095 = vmatpush.bf16.msra.mxu0 %v6100
    %8096 = vmatpush.bf16.msra.mxu0 %v6099
    %8097 = vmatpush.bf16.msra.mxu0 %v6098
    %8098 = vmatpush.bf16.msra.mxu0 %v6097
    %8099 = vmatpush.bf16.msra.mxu0 %v6096
    %8100 = vmatmul.bf16.gmra.mxu0 %v1934
    %v8101 = vpop.f32.mrf.mxu0
    %v8102 = vadd.f32 %v8089, %v8101
    %v8103 = vpop.f32.mrf.mxu0
    %8104 = vdwg.mxu0
    %8105 = vmatpush.bf16.msra.mxu0 %v6111
    %8106 = vmatpush.bf16.msra.mxu0 %v6110
    %8107 = vmatpush.bf16.msra.mxu0 %v6109
    %8108 = vmatpush.bf16.msra.mxu0 %v6108
    %8109 = vmatpush.bf16.msra.mxu0 %v6107
    %8110 = vmatpush.bf16.msra.mxu0 %v6106
    %8111 = vmatpush.bf16.msra.mxu0 %v6105
    %8112 = vmatpush.bf16.msra.mxu0 %v6104
    %8113 = vmatmul.bf16.gmra.mxu0 %v1935
    %v8114 = vpop.f32.mrf.mxu0
    %v8115 = vadd.f32 %v8102, %v8114
    %v8116 = vpop.f32.mrf.mxu0
    %8117 = vdwg.mxu0
    %8118 = vmatpush.bf16.msra.mxu0 %v6119
    %8119 = vmatpush.bf16.msra.mxu0 %v6118
    %8120 = vmatpush.bf16.msra.mxu0 %v6117
    %8121 = vmatpush.bf16.msra.mxu0 %v6116
    %8122 = vmatpush.bf16.msra.mxu0 %v6115
    %8123 = vmatpush.bf16.msra.mxu0 %v6114
    %8124 = vmatpush.bf16.msra.mxu0 %v6113
    %8125 = vmatpush.bf16.msra.mxu0 %v6112
    %8126 = vmatmul.bf16.gmra.mxu0 %v1936
    %v8127 = vpop.f32.mrf.mxu0
    %v8128 = vadd.f32 %v8115, %v8127
    %v8129 = vpop.f32.mrf.mxu0
    %8130 = vdwg.mxu0
    %8131 = vmatpush.bf16.msra.mxu0 %v6127
    %8132 = vmatpush.bf16.msra.mxu0 %v6126
    %8133 = vmatpush.bf16.msra.mxu0 %v6125
    %8134 = vmatpush.bf16.msra.mxu0 %v6124
    %8135 = vmatpush.bf16.msra.mxu0 %v6123
    %8136 = vmatpush.bf16.msra.mxu0 %v6122
    %8137 = vmatpush.bf16.msra.mxu0 %v6121
    %8138 = vmatpush.bf16.msra.mxu0 %v6120
    %8139 = vmatmul.bf16.gmra.mxu0 %v1937
    %v8140 = vpop.f32.mrf.mxu0
    %v8141 = vadd.f32 %v8128, %v8140
    %v8142 = vpop.f32.mrf.mxu0
    %8143 = vdwg.mxu0
    %8144 = vmatpush.bf16.msra.mxu0 %v6135
    %8145 = vmatpush.bf16.msra.mxu0 %v6134
    %8146 = vmatpush.bf16.msra.mxu0 %v6133
    %8147 = vmatpush.bf16.msra.mxu0 %v6132
    %8148 = vmatpush.bf16.msra.mxu0 %v6131
    %8149 = vmatpush.bf16.msra.mxu0 %v6130
    %8150 = vmatpush.bf16.msra.mxu0 %v6129
    %8151 = vmatpush.bf16.msra.mxu0 %v6128
    %8152 = vmatmul.bf16.gmra.mxu0 %v1940
    %v8153 = vpop.f32.mrf.mxu0
    %v8154 = vadd.f32 %v8141, %v8153
    %v8155 = vpop.f32.mrf.mxu0
    %8156 = vdwg.mxu0
    %8157 = vmatpush.bf16.msra.mxu0 %v6143
    %8158 = vmatpush.bf16.msra.mxu0 %v6142
    %8159 = vmatpush.bf16.msra.mxu0 %v6141
    %8160 = vmatpush.bf16.msra.mxu0 %v6140
    %8161 = vmatpush.bf16.msra.mxu0 %v6139
    %8162 = vmatpush.bf16.msra.mxu0 %v6138
    %8163 = vmatpush.bf16.msra.mxu0 %v6137
    %8164 = vmatpush.bf16.msra.mxu0 %v6136
    %8165 = vmatmul.bf16.gmra.mxu0 %v1941
    %v8166 = vpop.f32.mrf.mxu0
    %v8167 = vadd.f32 %v8154, %v8166
    %v8168 = vpop.f32.mrf.mxu0
    %8169 = vdwg.mxu0
    %8170 = vmatpush.bf16.msra.mxu0 %v6151
    %8171 = vmatpush.bf16.msra.mxu0 %v6150
    %8172 = vmatpush.bf16.msra.mxu0 %v6149
    %8173 = vmatpush.bf16.msra.mxu0 %v6148
    %8174 = vmatpush.bf16.msra.mxu0 %v6147
    %8175 = vmatpush.bf16.msra.mxu0 %v6146
    %8176 = vmatpush.bf16.msra.mxu0 %v6145
    %8177 = vmatpush.bf16.msra.mxu0 %v6144
    %8178 = vmatmul.bf16.gmra.mxu0 %v1942
    %v8179 = vpop.f32.mrf.mxu0
    %v8180 = vadd.f32 %v8167, %v8179
    %v8181 = vpop.f32.mrf.mxu0
    %8182 = vdwg.mxu0
    %8183 = vmatpush.bf16.msra.mxu0 %v6159
    %8184 = vmatpush.bf16.msra.mxu0 %v6158
    %8185 = vmatpush.bf16.msra.mxu0 %v6157
    %8186 = vmatpush.bf16.msra.mxu0 %v6156
    %8187 = vmatpush.bf16.msra.mxu0 %v6155
    %8188 = vmatpush.bf16.msra.mxu0 %v6154
    %8189 = vmatpush.bf16.msra.mxu0 %v6153
    %8190 = vmatpush.bf16.msra.mxu0 %v6152
    %8191 = vmatmul.bf16.gmra.mxu0 %v1943
    %v8192 = vpop.f32.mrf.mxu0
    %v8193 = vadd.f32 %v8180, %v8192
    %v8194 = vpop.f32.mrf.mxu0
    %8195 = vdwg.mxu0
    %8196 = vmatpush.bf16.msra.mxu0 %v6167
    %8197 = vmatpush.bf16.msra.mxu0 %v6166
    %8198 = vmatpush.bf16.msra.mxu0 %v6165
    %8199 = vmatpush.bf16.msra.mxu0 %v6164
    %8200 = vmatpush.bf16.msra.mxu0 %v6163
    %8201 = vmatpush.bf16.msra.mxu0 %v6162
    %8202 = vmatpush.bf16.msra.mxu0 %v6161
    %8203 = vmatpush.bf16.msra.mxu0 %v6160
    %8204 = vmatmul.bf16.gmra.mxu0 %v1944
    %v8205 = vpop.f32.mrf.mxu0
    %v8206 = vadd.f32 %v8193, %v8205
    %v8207 = vpop.f32.mrf.mxu0
    %8208 = vdwg.mxu0
    %8209 = vmatpush.bf16.msra.mxu0 %v6175
    %8210 = vmatpush.bf16.msra.mxu0 %v6174
    %8211 = vmatpush.bf16.msra.mxu0 %v6173
    %8212 = vmatpush.bf16.msra.mxu0 %v6172
    %8213 = vmatpush.bf16.msra.mxu0 %v6171
    %8214 = vmatpush.bf16.msra.mxu0 %v6170
    %8215 = vmatpush.bf16.msra.mxu0 %v6169
    %8216 = vmatpush.bf16.msra.mxu0 %v6168
    %8217 = vmatmul.bf16.gmra.mxu0 %v1945
    %v8218 = vpop.f32.mrf.mxu0
    %v8219 = vadd.f32 %v8206, %v8218
    %v8220 = vpop.f32.mrf.mxu0
    %8221 = vdwg.mxu0
    %8222 = vmatpush.bf16.msra.mxu0 %v6183
    %8223 = vmatpush.bf16.msra.mxu0 %v6182
    %8224 = vmatpush.bf16.msra.mxu0 %v6181
    %8225 = vmatpush.bf16.msra.mxu0 %v6180
    %8226 = vmatpush.bf16.msra.mxu0 %v6179
    %8227 = vmatpush.bf16.msra.mxu0 %v6178
    %8228 = vmatpush.bf16.msra.mxu0 %v6177
    %8229 = vmatpush.bf16.msra.mxu0 %v6176
    %8230 = vmatmul.bf16.gmra.mxu0 %v1946
    %v8231 = vpop.f32.mrf.mxu0
    %v8232 = vadd.f32 %v8219, %v8231
    %v8233 = vpop.f32.mrf.mxu0
    %8234 = vdwg.mxu0
    %8235 = vmatpush.bf16.msra.mxu0 %v6191
    %8236 = vmatpush.bf16.msra.mxu0 %v6190
    %8237 = vmatpush.bf16.msra.mxu0 %v6189
    %8238 = vmatpush.bf16.msra.mxu0 %v6188
    %8239 = vmatpush.bf16.msra.mxu0 %v6187
    %8240 = vmatpush.bf16.msra.mxu0 %v6186
    %8241 = vmatpush.bf16.msra.mxu0 %v6185
    %8242 = vmatpush.bf16.msra.mxu0 %v6184
    %8243 = vmatmul.bf16.gmra.mxu0 %v1947
    %v8244 = vpop.f32.mrf.mxu0
    %v8245 = vadd.f32 %v8232, %v8244
    %v8246 = vpop.f32.mrf.mxu0
    %8247 = vdwg.mxu0
    %8248 = vmatpush.bf16.msra.mxu0 %v6199
    %8249 = vmatpush.bf16.msra.mxu0 %v6198
    %8250 = vmatpush.bf16.msra.mxu0 %v6197
    %8251 = vmatpush.bf16.msra.mxu0 %v6196
    %8252 = vmatpush.bf16.msra.mxu0 %v6195
    %8253 = vmatpush.bf16.msra.mxu0 %v6194
    %8254 = vmatpush.bf16.msra.mxu0 %v6193
    %8255 = vmatpush.bf16.msra.mxu0 %v6192
    %8256 = vmatmul.bf16.gmra.mxu0 %v1950
    %v8257 = vpop.f32.mrf.mxu0
    %v8258 = vadd.f32 %v8245, %v8257
    %v8259 = vpop.f32.mrf.mxu0
    %8260 = vdwg.mxu0
    %8261 = vmatpush.bf16.msra.mxu0 %v6207
    %8262 = vmatpush.bf16.msra.mxu0 %v6206
    %8263 = vmatpush.bf16.msra.mxu0 %v6205
    %8264 = vmatpush.bf16.msra.mxu0 %v6204
    %8265 = vmatpush.bf16.msra.mxu0 %v6203
    %8266 = vmatpush.bf16.msra.mxu0 %v6202
    %8267 = vmatpush.bf16.msra.mxu0 %v6201
    %8268 = vmatpush.bf16.msra.mxu0 %v6200
    %8269 = vmatmul.bf16.gmra.mxu0 %v1951
    %v8270 = vpop.f32.mrf.mxu0
    %v8271 = vadd.f32 %v8258, %v8270
    %v8272 = vpop.f32.mrf.mxu0
    %8273 = vdwg.mxu0
    %8274 = vmatpush.bf16.msra.mxu0 %v6215
    %8275 = vmatpush.bf16.msra.mxu0 %v6214
    %8276 = vmatpush.bf16.msra.mxu0 %v6213
    %8277 = vmatpush.bf16.msra.mxu0 %v6212
    %8278 = vmatpush.bf16.msra.mxu0 %v6211
    %8279 = vmatpush.bf16.msra.mxu0 %v6210
    %8280 = vmatpush.bf16.msra.mxu0 %v6209
    %8281 = vmatpush.bf16.msra.mxu0 %v6208
    %8282 = vmatmul.bf16.gmra.mxu0 %v1952
    %v8283 = vpop.f32.mrf.mxu0
    %v8284 = vadd.f32 %v8271, %v8283
    %v8285 = vpop.f32.mrf.mxu0
    %8286 = vdwg.mxu0
    %8287 = vmatpush.bf16.msra.mxu0 %v6223
    %8288 = vmatpush.bf16.msra.mxu0 %v6222
    %8289 = vmatpush.bf16.msra.mxu0 %v6221
    %8290 = vmatpush.bf16.msra.mxu0 %v6220
    %8291 = vmatpush.bf16.msra.mxu0 %v6219
    %8292 = vmatpush.bf16.msra.mxu0 %v6218
    %8293 = vmatpush.bf16.msra.mxu0 %v6217
    %8294 = vmatpush.bf16.msra.mxu0 %v6216
    %8295 = vmatmul.bf16.gmra.mxu0 %v1953
    %v8296 = vpop.f32.mrf.mxu0
    %v8297 = vadd.f32 %v8284, %v8296
    %v8298 = vpop.f32.mrf.mxu0
    %8299 = vdwg.mxu0
    %8300 = vmatpush.bf16.msra.mxu0 %v6231
    %8301 = vmatpush.bf16.msra.mxu0 %v6230
    %8302 = vmatpush.bf16.msra.mxu0 %v6229
    %8303 = vmatpush.bf16.msra.mxu0 %v6228
    %8304 = vmatpush.bf16.msra.mxu0 %v6227
    %8305 = vmatpush.bf16.msra.mxu0 %v6226
    %8306 = vmatpush.bf16.msra.mxu0 %v6225
    %8307 = vmatpush.bf16.msra.mxu0 %v6224
    %8308 = vmatmul.bf16.gmra.mxu0 %v1954
    %v8309 = vpop.f32.mrf.mxu0
    %v8310 = vadd.f32 %v8297, %v8309
    %v8311 = vpop.f32.mrf.mxu0
    %8312 = vdwg.mxu0
    %8313 = vmatpush.bf16.msra.mxu0 %v6239
    %8314 = vmatpush.bf16.msra.mxu0 %v6238
    %8315 = vmatpush.bf16.msra.mxu0 %v6237
    %8316 = vmatpush.bf16.msra.mxu0 %v6236
    %8317 = vmatpush.bf16.msra.mxu0 %v6235
    %8318 = vmatpush.bf16.msra.mxu0 %v6234
    %8319 = vmatpush.bf16.msra.mxu0 %v6233
    %8320 = vmatpush.bf16.msra.mxu0 %v6232
    %8321 = vmatmul.bf16.gmra.mxu0 %v1955
    %v8322 = vpop.f32.mrf.mxu0
    %v8323 = vadd.f32 %v8310, %v8322
    %v8324 = vpop.f32.mrf.mxu0
    %8325 = vdwg.mxu0
    %8326 = vmatpush.bf16.msra.mxu0 %v6247
    %8327 = vmatpush.bf16.msra.mxu0 %v6246
    %8328 = vmatpush.bf16.msra.mxu0 %v6245
    %8329 = vmatpush.bf16.msra.mxu0 %v6244
    %8330 = vmatpush.bf16.msra.mxu0 %v6243
    %8331 = vmatpush.bf16.msra.mxu0 %v6242
    %8332 = vmatpush.bf16.msra.mxu0 %v6241
    %8333 = vmatpush.bf16.msra.mxu0 %v6240
    %8334 = vmatmul.bf16.gmra.mxu0 %v1956
    %v8335 = vpop.f32.mrf.mxu0
    %v8336 = vadd.f32 %v8323, %v8335
    %v8337 = vpop.f32.mrf.mxu0
    %8338 = vdwg.mxu0
    %8339 = vmatpush.bf16.msra.mxu0 %v6255
    %8340 = vmatpush.bf16.msra.mxu0 %v6254
    %8341 = vmatpush.bf16.msra.mxu0 %v6253
    %8342 = vmatpush.bf16.msra.mxu0 %v6252
    %8343 = vmatpush.bf16.msra.mxu0 %v6251
    %8344 = vmatpush.bf16.msra.mxu0 %v6250
    %8345 = vmatpush.bf16.msra.mxu0 %v6249
    %8346 = vmatpush.bf16.msra.mxu0 %v6248
    %8347 = vmatmul.bf16.gmra.mxu0 %v1957
    %v8348 = vpop.f32.mrf.mxu0
    %v8349 = vadd.f32 %v8336, %v8348
    %v8350 = vpop.f32.mrf.mxu0
    %8351 = vdwg.mxu0
    %8352 = vmatpush.bf16.msra.mxu0 %v6263
    %8353 = vmatpush.bf16.msra.mxu0 %v6262
    %8354 = vmatpush.bf16.msra.mxu0 %v6261
    %8355 = vmatpush.bf16.msra.mxu0 %v6260
    %8356 = vmatpush.bf16.msra.mxu0 %v6259
    %8357 = vmatpush.bf16.msra.mxu0 %v6258
    %8358 = vmatpush.bf16.msra.mxu0 %v6257
    %8359 = vmatpush.bf16.msra.mxu0 %v6256
    %8360 = vmatmul.bf16.gmra.mxu0 %v1960
    %v8361 = vpop.f32.mrf.mxu0
    %v8362 = vadd.f32 %v8349, %v8361
    %v8363 = vpop.f32.mrf.mxu0
    %8364 = vdwg.mxu0
    %8365 = vmatpush.bf16.msra.mxu0 %v6271
    %8366 = vmatpush.bf16.msra.mxu0 %v6270
    %8367 = vmatpush.bf16.msra.mxu0 %v6269
    %8368 = vmatpush.bf16.msra.mxu0 %v6268
    %8369 = vmatpush.bf16.msra.mxu0 %v6267
    %8370 = vmatpush.bf16.msra.mxu0 %v6266
    %8371 = vmatpush.bf16.msra.mxu0 %v6265
    %8372 = vmatpush.bf16.msra.mxu0 %v6264
    %8373 = vmatmul.bf16.gmra.mxu0 %v1961
    %v8374 = vpop.f32.mrf.mxu0
    %v8375 = vadd.f32 %v8362, %v8374
    %v8376 = vpop.f32.mrf.mxu0
    %8377 = vdwg.mxu0
    %8378 = vmatpush.bf16.msra.mxu0 %v6279
    %8379 = vmatpush.bf16.msra.mxu0 %v6278
    %8380 = vmatpush.bf16.msra.mxu0 %v6277
    %8381 = vmatpush.bf16.msra.mxu0 %v6276
    %8382 = vmatpush.bf16.msra.mxu0 %v6275
    %8383 = vmatpush.bf16.msra.mxu0 %v6274
    %8384 = vmatpush.bf16.msra.mxu0 %v6273
    %8385 = vmatpush.bf16.msra.mxu0 %v6272
    %8386 = vmatmul.bf16.gmra.mxu0 %v1962
    %v8387 = vpop.f32.mrf.mxu0
    %v8388 = vadd.f32 %v8375, %v8387
    %v8389 = vpop.f32.mrf.mxu0
    %8390 = vdwg.mxu0
    %8391 = vmatpush.bf16.msra.mxu0 %v6287
    %8392 = vmatpush.bf16.msra.mxu0 %v6286
    %8393 = vmatpush.bf16.msra.mxu0 %v6285
    %8394 = vmatpush.bf16.msra.mxu0 %v6284
    %8395 = vmatpush.bf16.msra.mxu0 %v6283
    %8396 = vmatpush.bf16.msra.mxu0 %v6282
    %8397 = vmatpush.bf16.msra.mxu0 %v6281
    %8398 = vmatpush.bf16.msra.mxu0 %v6280
    %8399 = vmatmul.bf16.gmra.mxu0 %v1963
    %v8400 = vpop.f32.mrf.mxu0
    %v8401 = vadd.f32 %v8388, %v8400
    %v8402 = vpop.f32.mrf.mxu0
    %8403 = vdwg.mxu0
    %8404 = vmatpush.bf16.msra.mxu0 %v6295
    %8405 = vmatpush.bf16.msra.mxu0 %v6294
    %8406 = vmatpush.bf16.msra.mxu0 %v6293
    %8407 = vmatpush.bf16.msra.mxu0 %v6292
    %8408 = vmatpush.bf16.msra.mxu0 %v6291
    %8409 = vmatpush.bf16.msra.mxu0 %v6290
    %8410 = vmatpush.bf16.msra.mxu0 %v6289
    %8411 = vmatpush.bf16.msra.mxu0 %v6288
    %8412 = vmatmul.bf16.gmra.mxu0 %v1964
    %v8413 = vpop.f32.mrf.mxu0
    %v8414 = vadd.f32 %v8401, %v8413
    %v8415 = vpop.f32.mrf.mxu0
    %8416 = vdwg.mxu0
    %8417 = vmatpush.bf16.msra.mxu0 %v6303
    %8418 = vmatpush.bf16.msra.mxu0 %v6302
    %8419 = vmatpush.bf16.msra.mxu0 %v6301
    %8420 = vmatpush.bf16.msra.mxu0 %v6300
    %8421 = vmatpush.bf16.msra.mxu0 %v6299
    %8422 = vmatpush.bf16.msra.mxu0 %v6298
    %8423 = vmatpush.bf16.msra.mxu0 %v6297
    %8424 = vmatpush.bf16.msra.mxu0 %v6296
    %8425 = vmatmul.bf16.gmra.mxu0 %v1965
    %v8426 = vpop.f32.mrf.mxu0
    %v8427 = vadd.f32 %v8414, %v8426
    %v8428 = vpop.f32.mrf.mxu0
    %8429 = vdwg.mxu0
    %8430 = vmatpush.bf16.msra.mxu0 %v6311
    %8431 = vmatpush.bf16.msra.mxu0 %v6310
    %8432 = vmatpush.bf16.msra.mxu0 %v6309
    %8433 = vmatpush.bf16.msra.mxu0 %v6308
    %8434 = vmatpush.bf16.msra.mxu0 %v6307
    %8435 = vmatpush.bf16.msra.mxu0 %v6306
    %8436 = vmatpush.bf16.msra.mxu0 %v6305
    %8437 = vmatpush.bf16.msra.mxu0 %v6304
    %8438 = vmatmul.bf16.gmra.mxu0 %v1966
    %v8439 = vpop.f32.mrf.mxu0
    %v8440 = vadd.f32 %v8427, %v8439
    %v8441 = vpop.f32.mrf.mxu0
    %8442 = vdwg.mxu0
    %8443 = vmatpush.bf16.msra.mxu0 %v6319
    %8444 = vmatpush.bf16.msra.mxu0 %v6318
    %8445 = vmatpush.bf16.msra.mxu0 %v6317
    %8446 = vmatpush.bf16.msra.mxu0 %v6316
    %8447 = vmatpush.bf16.msra.mxu0 %v6315
    %8448 = vmatpush.bf16.msra.mxu0 %v6314
    %8449 = vmatpush.bf16.msra.mxu0 %v6313
    %8450 = vmatpush.bf16.msra.mxu0 %v6312
    %8451 = vmatmul.bf16.gmra.mxu0 %v1967
    %v8452 = vpop.f32.mrf.mxu0
    %v8453 = vadd.f32 %v8440, %v8452
    %v8454 = vpop.f32.mrf.mxu0
    %8455 = vdwg.mxu0
    %8456 = vmatpush.bf16.msra.mxu0 %v6327
    %8457 = vmatpush.bf16.msra.mxu0 %v6326
    %8458 = vmatpush.bf16.msra.mxu0 %v6325
    %8459 = vmatpush.bf16.msra.mxu0 %v6324
    %8460 = vmatpush.bf16.msra.mxu0 %v6323
    %8461 = vmatpush.bf16.msra.mxu0 %v6322
    %8462 = vmatpush.bf16.msra.mxu0 %v6321
    %8463 = vmatpush.bf16.msra.mxu0 %v6320
    %8464 = vmatmul.bf16.gmra.mxu0 %v1970
    %v8465 = vpop.f32.mrf.mxu0
    %v8466 = vadd.f32 %v8453, %v8465
    %v8467 = vpop.f32.mrf.mxu0
    %8468 = vdwg.mxu0
    %8469 = vmatpush.bf16.msra.mxu0 %v6335
    %8470 = vmatpush.bf16.msra.mxu0 %v6334
    %8471 = vmatpush.bf16.msra.mxu0 %v6333
    %8472 = vmatpush.bf16.msra.mxu0 %v6332
    %8473 = vmatpush.bf16.msra.mxu0 %v6331
    %8474 = vmatpush.bf16.msra.mxu0 %v6330
    %8475 = vmatpush.bf16.msra.mxu0 %v6329
    %8476 = vmatpush.bf16.msra.mxu0 %v6328
    %8477 = vmatmul.bf16.gmra.mxu0 %v1971
    %v8478 = vpop.f32.mrf.mxu0
    %v8479 = vadd.f32 %v8466, %v8478
    %v8480 = vpop.f32.mrf.mxu0
    %8481 = vdwg.mxu0
    %8482 = vmatpush.bf16.msra.mxu0 %v6343
    %8483 = vmatpush.bf16.msra.mxu0 %v6342
    %8484 = vmatpush.bf16.msra.mxu0 %v6341
    %8485 = vmatpush.bf16.msra.mxu0 %v6340
    %8486 = vmatpush.bf16.msra.mxu0 %v6339
    %8487 = vmatpush.bf16.msra.mxu0 %v6338
    %8488 = vmatpush.bf16.msra.mxu0 %v6337
    %8489 = vmatpush.bf16.msra.mxu0 %v6336
    %8490 = vmatmul.bf16.gmra.mxu0 %v1972
    %v8491 = vpop.f32.mrf.mxu0
    %v8492 = vadd.f32 %v8479, %v8491
    %v8493 = vpop.f32.mrf.mxu0
    %8494 = vdwg.mxu0
    %8495 = vmatpush.bf16.msra.mxu0 %v6351
    %8496 = vmatpush.bf16.msra.mxu0 %v6350
    %8497 = vmatpush.bf16.msra.mxu0 %v6349
    %8498 = vmatpush.bf16.msra.mxu0 %v6348
    %8499 = vmatpush.bf16.msra.mxu0 %v6347
    %8500 = vmatpush.bf16.msra.mxu0 %v6346
    %8501 = vmatpush.bf16.msra.mxu0 %v6345
    %8502 = vmatpush.bf16.msra.mxu0 %v6344
    %8503 = vmatmul.bf16.gmra.mxu0 %v1973
    %v8504 = vpop.f32.mrf.mxu0
    %v8505 = vadd.f32 %v8492, %v8504
    %v8506 = vpop.f32.mrf.mxu0
    %8507 = vdwg.mxu0
    %8508 = vmatpush.bf16.msra.mxu0 %v6359
    %8509 = vmatpush.bf16.msra.mxu0 %v6358
    %8510 = vmatpush.bf16.msra.mxu0 %v6357
    %8511 = vmatpush.bf16.msra.mxu0 %v6356
    %8512 = vmatpush.bf16.msra.mxu0 %v6355
    %8513 = vmatpush.bf16.msra.mxu0 %v6354
    %8514 = vmatpush.bf16.msra.mxu0 %v6353
    %8515 = vmatpush.bf16.msra.mxu0 %v6352
    %8516 = vmatmul.bf16.gmra.mxu0 %v1974
    %v8517 = vpop.f32.mrf.mxu0
    %v8518 = vadd.f32 %v8505, %v8517
    %v8519 = vpop.f32.mrf.mxu0
    %8520 = vdwg.mxu0
    %8521 = vmatpush.bf16.msra.mxu0 %v6367
    %8522 = vmatpush.bf16.msra.mxu0 %v6366
    %8523 = vmatpush.bf16.msra.mxu0 %v6365
    %8524 = vmatpush.bf16.msra.mxu0 %v6364
    %8525 = vmatpush.bf16.msra.mxu0 %v6363
    %8526 = vmatpush.bf16.msra.mxu0 %v6362
    %8527 = vmatpush.bf16.msra.mxu0 %v6361
    %8528 = vmatpush.bf16.msra.mxu0 %v6360
    %8529 = vmatmul.bf16.gmra.mxu0 %v1975
    %v8530 = vpop.f32.mrf.mxu0
    %v8531 = vadd.f32 %v8518, %v8530
    %v8532 = vpop.f32.mrf.mxu0
    %8533 = vdwg.mxu0
    %8534 = vmatpush.bf16.msra.mxu0 %v6375
    %8535 = vmatpush.bf16.msra.mxu0 %v6374
    %8536 = vmatpush.bf16.msra.mxu0 %v6373
    %8537 = vmatpush.bf16.msra.mxu0 %v6372
    %8538 = vmatpush.bf16.msra.mxu0 %v6371
    %8539 = vmatpush.bf16.msra.mxu0 %v6370
    %8540 = vmatpush.bf16.msra.mxu0 %v6369
    %8541 = vmatpush.bf16.msra.mxu0 %v6368
    %8542 = vmatmul.bf16.gmra.mxu0 %v1976
    %v8543 = vpop.f32.mrf.mxu0
    %v8544 = vadd.f32 %v8531, %v8543
    %v8545 = vpop.f32.mrf.mxu0
    %8546 = vdwg.mxu0
    %8547 = vmatpush.bf16.msra.mxu0 %v6383
    %8548 = vmatpush.bf16.msra.mxu0 %v6382
    %8549 = vmatpush.bf16.msra.mxu0 %v6381
    %8550 = vmatpush.bf16.msra.mxu0 %v6380
    %8551 = vmatpush.bf16.msra.mxu0 %v6379
    %8552 = vmatpush.bf16.msra.mxu0 %v6378
    %8553 = vmatpush.bf16.msra.mxu0 %v6377
    %8554 = vmatpush.bf16.msra.mxu0 %v6376
    %8555 = vmatmul.bf16.gmra.mxu0 %v1977
    %v8556 = vpop.f32.mrf.mxu0
    %v8557 = vadd.f32 %v8544, %v8556
    %v8558 = vpop.f32.mrf.mxu0
    %8559 = vdwg.mxu0
    %8560 = vmatpush.bf16.msra.mxu0 %v6391
    %8561 = vmatpush.bf16.msra.mxu0 %v6390
    %8562 = vmatpush.bf16.msra.mxu0 %v6389
    %8563 = vmatpush.bf16.msra.mxu0 %v6388
    %8564 = vmatpush.bf16.msra.mxu0 %v6387
    %8565 = vmatpush.bf16.msra.mxu0 %v6386
    %8566 = vmatpush.bf16.msra.mxu0 %v6385
    %8567 = vmatpush.bf16.msra.mxu0 %v6384
    %8568 = vmatmul.bf16.gmra.mxu0 %v1980
    %v8569 = vpop.f32.mrf.mxu0
    %v8570 = vadd.f32 %v8557, %v8569
    %v8571 = vpop.f32.mrf.mxu0
    %8572 = vdwg.mxu0
    %8573 = vmatpush.bf16.msra.mxu0 %v6399
    %8574 = vmatpush.bf16.msra.mxu0 %v6398
    %8575 = vmatpush.bf16.msra.mxu0 %v6397
    %8576 = vmatpush.bf16.msra.mxu0 %v6396
    %8577 = vmatpush.bf16.msra.mxu0 %v6395
    %8578 = vmatpush.bf16.msra.mxu0 %v6394
    %8579 = vmatpush.bf16.msra.mxu0 %v6393
    %8580 = vmatpush.bf16.msra.mxu0 %v6392
    %8581 = vmatmul.bf16.gmra.mxu0 %v1981
    %v8582 = vpop.f32.mrf.mxu0
    %v8583 = vadd.f32 %v8570, %v8582
    %v8584 = vpop.f32.mrf.mxu0
    %8585 = vdwg.mxu0
    %8586 = vmatpush.bf16.msra.mxu0 %v6407
    %8587 = vmatpush.bf16.msra.mxu0 %v6406
    %8588 = vmatpush.bf16.msra.mxu0 %v6405
    %8589 = vmatpush.bf16.msra.mxu0 %v6404
    %8590 = vmatpush.bf16.msra.mxu0 %v6403
    %8591 = vmatpush.bf16.msra.mxu0 %v6402
    %8592 = vmatpush.bf16.msra.mxu0 %v6401
    %8593 = vmatpush.bf16.msra.mxu0 %v6400
    %8594 = vmatmul.bf16.gmra.mxu0 %v1982
    %v8595 = vpop.f32.mrf.mxu0
    %v8596 = vadd.f32 %v8583, %v8595
    %v8597 = vpop.f32.mrf.mxu0
    %8598 = vdwg.mxu0
    %8599 = vmatpush.bf16.msra.mxu0 %v6415
    %8600 = vmatpush.bf16.msra.mxu0 %v6414
    %8601 = vmatpush.bf16.msra.mxu0 %v6413
    %8602 = vmatpush.bf16.msra.mxu0 %v6412
    %8603 = vmatpush.bf16.msra.mxu0 %v6411
    %8604 = vmatpush.bf16.msra.mxu0 %v6410
    %8605 = vmatpush.bf16.msra.mxu0 %v6409
    %8606 = vmatpush.bf16.msra.mxu0 %v6408
    %8607 = vmatmul.bf16.gmra.mxu0 %v1983
    %v8608 = vpop.f32.mrf.mxu0
    %v8609 = vadd.f32 %v8596, %v8608
    %v8610 = vpop.f32.mrf.mxu0
    %8611 = vdwg.mxu0
    %8612 = vmatpush.bf16.msra.mxu0 %v6423
    %8613 = vmatpush.bf16.msra.mxu0 %v6422
    %8614 = vmatpush.bf16.msra.mxu0 %v6421
    %8615 = vmatpush.bf16.msra.mxu0 %v6420
    %8616 = vmatpush.bf16.msra.mxu0 %v6419
    %8617 = vmatpush.bf16.msra.mxu0 %v6418
    %8618 = vmatpush.bf16.msra.mxu0 %v6417
    %8619 = vmatpush.bf16.msra.mxu0 %v6416
    %8620 = vmatmul.bf16.gmra.mxu0 %v1984
    %v8621 = vpop.f32.mrf.mxu0
    %v8622 = vadd.f32 %v8609, %v8621
    %v8623 = vpop.f32.mrf.mxu0
    %8624 = vdwg.mxu0
    %8625 = vmatpush.bf16.msra.mxu0 %v6431
    %8626 = vmatpush.bf16.msra.mxu0 %v6430
    %8627 = vmatpush.bf16.msra.mxu0 %v6429
    %8628 = vmatpush.bf16.msra.mxu0 %v6428
    %8629 = vmatpush.bf16.msra.mxu0 %v6427
    %8630 = vmatpush.bf16.msra.mxu0 %v6426
    %8631 = vmatpush.bf16.msra.mxu0 %v6425
    %8632 = vmatpush.bf16.msra.mxu0 %v6424
    %8633 = vmatmul.bf16.gmra.mxu0 %v1985
    %v8634 = vpop.f32.mrf.mxu0
    %v8635 = vadd.f32 %v8622, %v8634
    %v8636 = vpop.f32.mrf.mxu0
    %8637 = vdwg.mxu0
    %8638 = vmatpush.bf16.msra.mxu0 %v6439
    %8639 = vmatpush.bf16.msra.mxu0 %v6438
    %8640 = vmatpush.bf16.msra.mxu0 %v6437
    %8641 = vmatpush.bf16.msra.mxu0 %v6436
    %8642 = vmatpush.bf16.msra.mxu0 %v6435
    %8643 = vmatpush.bf16.msra.mxu0 %v6434
    %8644 = vmatpush.bf16.msra.mxu0 %v6433
    %8645 = vmatpush.bf16.msra.mxu0 %v6432
    %8646 = vmatmul.bf16.gmra.mxu0 %v1986
    %v8647 = vpop.f32.mrf.mxu0
    %v8648 = vadd.f32 %v8635, %v8647
    %v8649 = vpop.f32.mrf.mxu0
    %8650 = vdwg.mxu0
    %8651 = vmatpush.bf16.msra.mxu0 %v6447
    %8652 = vmatpush.bf16.msra.mxu0 %v6446
    %8653 = vmatpush.bf16.msra.mxu0 %v6445
    %8654 = vmatpush.bf16.msra.mxu0 %v6444
    %8655 = vmatpush.bf16.msra.mxu0 %v6443
    %8656 = vmatpush.bf16.msra.mxu0 %v6442
    %8657 = vmatpush.bf16.msra.mxu0 %v6441
    %8658 = vmatpush.bf16.msra.mxu0 %v6440
    %8659 = vmatmul.bf16.gmra.mxu0 %v1987
    %v8660 = vpop.f32.mrf.mxu0
    %v8661 = vadd.f32 %v8648, %v8660
    %v8662 = vpop.f32.mrf.mxu0
    %8663 = vdwg.mxu0
    %8664 = vmatpush.bf16.msra.mxu0 %v6455
    %8665 = vmatpush.bf16.msra.mxu0 %v6454
    %8666 = vmatpush.bf16.msra.mxu0 %v6453
    %8667 = vmatpush.bf16.msra.mxu0 %v6452
    %8668 = vmatpush.bf16.msra.mxu0 %v6451
    %8669 = vmatpush.bf16.msra.mxu0 %v6450
    %8670 = vmatpush.bf16.msra.mxu0 %v6449
    %8671 = vmatpush.bf16.msra.mxu0 %v6448
    %8672 = vmatmul.bf16.gmra.mxu0 %v1990
    %v8673 = vpop.f32.mrf.mxu0
    %v8674 = vadd.f32 %v8661, %v8673
    %v8675 = vpop.f32.mrf.mxu0
    %8676 = vdwg.mxu0
    %8677 = vmatpush.bf16.msra.mxu0 %v6463
    %8678 = vmatpush.bf16.msra.mxu0 %v6462
    %8679 = vmatpush.bf16.msra.mxu0 %v6461
    %8680 = vmatpush.bf16.msra.mxu0 %v6460
    %8681 = vmatpush.bf16.msra.mxu0 %v6459
    %8682 = vmatpush.bf16.msra.mxu0 %v6458
    %8683 = vmatpush.bf16.msra.mxu0 %v6457
    %8684 = vmatpush.bf16.msra.mxu0 %v6456
    %8685 = vmatmul.bf16.gmra.mxu0 %v1991
    %v8686 = vpop.f32.mrf.mxu0
    %v8687 = vadd.f32 %v8674, %v8686
    %v8688 = vpop.f32.mrf.mxu0
    %8689 = vdwg.mxu0
    %8690 = vmatpush.bf16.msra.mxu0 %v6471
    %8691 = vmatpush.bf16.msra.mxu0 %v6470
    %8692 = vmatpush.bf16.msra.mxu0 %v6469
    %8693 = vmatpush.bf16.msra.mxu0 %v6468
    %8694 = vmatpush.bf16.msra.mxu0 %v6467
    %8695 = vmatpush.bf16.msra.mxu0 %v6466
    %8696 = vmatpush.bf16.msra.mxu0 %v6465
    %8697 = vmatpush.bf16.msra.mxu0 %v6464
    %8698 = vmatmul.bf16.gmra.mxu0 %v1992
    %v8699 = vpop.f32.mrf.mxu0
    %v8700 = vadd.f32 %v8687, %v8699
    %v8701 = vpop.f32.mrf.mxu0
    %8702 = vdwg.mxu0
    %8703 = vmatpush.bf16.msra.mxu0 %v6479
    %8704 = vmatpush.bf16.msra.mxu0 %v6478
    %8705 = vmatpush.bf16.msra.mxu0 %v6477
    %8706 = vmatpush.bf16.msra.mxu0 %v6476
    %8707 = vmatpush.bf16.msra.mxu0 %v6475
    %8708 = vmatpush.bf16.msra.mxu0 %v6474
    %8709 = vmatpush.bf16.msra.mxu0 %v6473
    %8710 = vmatpush.bf16.msra.mxu0 %v6472
    %8711 = vmatmul.bf16.gmra.mxu0 %v1993
    %v8712 = vpop.f32.mrf.mxu0
    %v8713 = vadd.f32 %v8700, %v8712
    %v8714 = vpop.f32.mrf.mxu0
    %8715 = vdwg.mxu0
    %8716 = vmatpush.bf16.msra.mxu0 %v6487
    %8717 = vmatpush.bf16.msra.mxu0 %v6486
    %8718 = vmatpush.bf16.msra.mxu0 %v6485
    %8719 = vmatpush.bf16.msra.mxu0 %v6484
    %8720 = vmatpush.bf16.msra.mxu0 %v6483
    %8721 = vmatpush.bf16.msra.mxu0 %v6482
    %8722 = vmatpush.bf16.msra.mxu0 %v6481
    %8723 = vmatpush.bf16.msra.mxu0 %v6480
    %8724 = vmatmul.bf16.gmra.mxu0 %v1994
    %v8725 = vpop.f32.mrf.mxu0
    %v8726 = vadd.f32 %v8713, %v8725
    %v8727 = vpop.f32.mrf.mxu0
    %8728 = vdwg.mxu0
    %8729 = vmatpush.bf16.msra.mxu0 %v6495
    %8730 = vmatpush.bf16.msra.mxu0 %v6494
    %8731 = vmatpush.bf16.msra.mxu0 %v6493
    %8732 = vmatpush.bf16.msra.mxu0 %v6492
    %8733 = vmatpush.bf16.msra.mxu0 %v6491
    %8734 = vmatpush.bf16.msra.mxu0 %v6490
    %8735 = vmatpush.bf16.msra.mxu0 %v6489
    %8736 = vmatpush.bf16.msra.mxu0 %v6488
    %8737 = vmatmul.bf16.gmra.mxu0 %v1995
    %v8738 = vpop.f32.mrf.mxu0
    %v8739 = vadd.f32 %v8726, %v8738
    %v8740 = vpop.f32.mrf.mxu0
    %8741 = vdwg.mxu0
    %8742 = vmatpush.bf16.msra.mxu0 %v6503
    %8743 = vmatpush.bf16.msra.mxu0 %v6502
    %8744 = vmatpush.bf16.msra.mxu0 %v6501
    %8745 = vmatpush.bf16.msra.mxu0 %v6500
    %8746 = vmatpush.bf16.msra.mxu0 %v6499
    %8747 = vmatpush.bf16.msra.mxu0 %v6498
    %8748 = vmatpush.bf16.msra.mxu0 %v6497
    %8749 = vmatpush.bf16.msra.mxu0 %v6496
    %8750 = vmatmul.bf16.gmra.mxu0 %v1996
    %v8751 = vpop.f32.mrf.mxu0
    %v8752 = vadd.f32 %v8739, %v8751
    %v8753 = vpop.f32.mrf.mxu0
    %8754 = vdwg.mxu0
    %8755 = vmatpush.bf16.msra.mxu0 %v6511
    %8756 = vmatpush.bf16.msra.mxu0 %v6510
    %8757 = vmatpush.bf16.msra.mxu0 %v6509
    %8758 = vmatpush.bf16.msra.mxu0 %v6508
    %8759 = vmatpush.bf16.msra.mxu0 %v6507
    %8760 = vmatpush.bf16.msra.mxu0 %v6506
    %8761 = vmatpush.bf16.msra.mxu0 %v6505
    %8762 = vmatpush.bf16.msra.mxu0 %v6504
    %8763 = vmatmul.bf16.gmra.mxu0 %v1997
    %v8764 = vpop.f32.mrf.mxu0
    %v8765 = vadd.f32 %v8752, %v8764
    %v8766 = vpop.f32.mrf.mxu0
    %8767 = vdwg.mxu0
    %8768 = vmatpush.bf16.msra.mxu0 %v6519
    %8769 = vmatpush.bf16.msra.mxu0 %v6518
    %8770 = vmatpush.bf16.msra.mxu0 %v6517
    %8771 = vmatpush.bf16.msra.mxu0 %v6516
    %8772 = vmatpush.bf16.msra.mxu0 %v6515
    %8773 = vmatpush.bf16.msra.mxu0 %v6514
    %8774 = vmatpush.bf16.msra.mxu0 %v6513
    %8775 = vmatpush.bf16.msra.mxu0 %v6512
    %8776 = vmatmul.bf16.gmra.mxu0 %v2000
    %v8777 = vpop.f32.mrf.mxu0
    %v8778 = vadd.f32 %v8765, %v8777
    %v8779 = vpop.f32.mrf.mxu0
    %8780 = vdwg.mxu0
    %8781 = vmatpush.bf16.msra.mxu0 %v6527
    %8782 = vmatpush.bf16.msra.mxu0 %v6526
    %8783 = vmatpush.bf16.msra.mxu0 %v6525
    %8784 = vmatpush.bf16.msra.mxu0 %v6524
    %8785 = vmatpush.bf16.msra.mxu0 %v6523
    %8786 = vmatpush.bf16.msra.mxu0 %v6522
    %8787 = vmatpush.bf16.msra.mxu0 %v6521
    %8788 = vmatpush.bf16.msra.mxu0 %v6520
    %8789 = vmatmul.bf16.gmra.mxu0 %v2001
    %v8790 = vpop.f32.mrf.mxu0
    %v8791 = vadd.f32 %v8778, %v8790
    %v8792 = vpop.f32.mrf.mxu0
    %8793 = vdwg.mxu0
    %8794 = vmatpush.bf16.msra.mxu0 %v6535
    %8795 = vmatpush.bf16.msra.mxu0 %v6534
    %8796 = vmatpush.bf16.msra.mxu0 %v6533
    %8797 = vmatpush.bf16.msra.mxu0 %v6532
    %8798 = vmatpush.bf16.msra.mxu0 %v6531
    %8799 = vmatpush.bf16.msra.mxu0 %v6530
    %8800 = vmatpush.bf16.msra.mxu0 %v6529
    %8801 = vmatpush.bf16.msra.mxu0 %v6528
    %8802 = vmatmul.bf16.gmra.mxu0 %v2002
    %v8803 = vpop.f32.mrf.mxu0
    %v8804 = vadd.f32 %v8791, %v8803
    %v8805 = vpop.f32.mrf.mxu0
    %8806 = vdwg.mxu0
    %8807 = vmatpush.bf16.msra.mxu0 %v6543
    %8808 = vmatpush.bf16.msra.mxu0 %v6542
    %8809 = vmatpush.bf16.msra.mxu0 %v6541
    %8810 = vmatpush.bf16.msra.mxu0 %v6540
    %8811 = vmatpush.bf16.msra.mxu0 %v6539
    %8812 = vmatpush.bf16.msra.mxu0 %v6538
    %8813 = vmatpush.bf16.msra.mxu0 %v6537
    %8814 = vmatpush.bf16.msra.mxu0 %v6536
    %8815 = vmatmul.bf16.gmra.mxu0 %v2003
    %v8816 = vpop.f32.mrf.mxu0
    %v8817 = vadd.f32 %v8804, %v8816
    %v8818 = vpop.f32.mrf.mxu0
    %8819 = vdwg.mxu0
    %8820 = vmatpush.bf16.msra.mxu0 %v6551
    %8821 = vmatpush.bf16.msra.mxu0 %v6550
    %8822 = vmatpush.bf16.msra.mxu0 %v6549
    %8823 = vmatpush.bf16.msra.mxu0 %v6548
    %8824 = vmatpush.bf16.msra.mxu0 %v6547
    %8825 = vmatpush.bf16.msra.mxu0 %v6546
    %8826 = vmatpush.bf16.msra.mxu0 %v6545
    %8827 = vmatpush.bf16.msra.mxu0 %v6544
    %8828 = vmatmul.bf16.gmra.mxu0 %v2004
    %v8829 = vpop.f32.mrf.mxu0
    %v8830 = vadd.f32 %v8817, %v8829
    %v8831 = vpop.f32.mrf.mxu0
    %8832 = vdwg.mxu0
    %8833 = vmatpush.bf16.msra.mxu0 %v6559
    %8834 = vmatpush.bf16.msra.mxu0 %v6558
    %8835 = vmatpush.bf16.msra.mxu0 %v6557
    %8836 = vmatpush.bf16.msra.mxu0 %v6556
    %8837 = vmatpush.bf16.msra.mxu0 %v6555
    %8838 = vmatpush.bf16.msra.mxu0 %v6554
    %8839 = vmatpush.bf16.msra.mxu0 %v6553
    %8840 = vmatpush.bf16.msra.mxu0 %v6552
    %8841 = vmatmul.bf16.gmra.mxu0 %v2005
    %v8842 = vpop.f32.mrf.mxu0
    %v8843 = vadd.f32 %v8830, %v8842
    %v8844 = vpop.f32.mrf.mxu0
    %8845 = vdwg.mxu0
    %8846 = vmatpush.bf16.msra.mxu0 %v6567
    %8847 = vmatpush.bf16.msra.mxu0 %v6566
    %8848 = vmatpush.bf16.msra.mxu0 %v6565
    %8849 = vmatpush.bf16.msra.mxu0 %v6564
    %8850 = vmatpush.bf16.msra.mxu0 %v6563
    %8851 = vmatpush.bf16.msra.mxu0 %v6562
    %8852 = vmatpush.bf16.msra.mxu0 %v6561
    %8853 = vmatpush.bf16.msra.mxu0 %v6560
    %8854 = vmatmul.bf16.gmra.mxu0 %v2006
    %v8855 = vpop.f32.mrf.mxu0
    %v8856 = vadd.f32 %v8843, %v8855
    %v8857 = vpop.f32.mrf.mxu0
    %8858 = vdwg.mxu0
    %8859 = vmatpush.bf16.msra.mxu0 %v6575
    %8860 = vmatpush.bf16.msra.mxu0 %v6574
    %8861 = vmatpush.bf16.msra.mxu0 %v6573
    %8862 = vmatpush.bf16.msra.mxu0 %v6572
    %8863 = vmatpush.bf16.msra.mxu0 %v6571
    %8864 = vmatpush.bf16.msra.mxu0 %v6570
    %8865 = vmatpush.bf16.msra.mxu0 %v6569
    %8866 = vmatpush.bf16.msra.mxu0 %v6568
    %8867 = vmatmul.bf16.gmra.mxu0 %v2007
    %v8868 = vpop.f32.mrf.mxu0
    %v8869 = vadd.f32 %v8856, %v8868
    %v8870 = vpop.f32.mrf.mxu0
    %8871 = vdwg.mxu0
    %8872 = vmatpush.bf16.msra.mxu0 %v6583
    %8873 = vmatpush.bf16.msra.mxu0 %v6582
    %8874 = vmatpush.bf16.msra.mxu0 %v6581
    %8875 = vmatpush.bf16.msra.mxu0 %v6580
    %8876 = vmatpush.bf16.msra.mxu0 %v6579
    %8877 = vmatpush.bf16.msra.mxu0 %v6578
    %8878 = vmatpush.bf16.msra.mxu0 %v6577
    %8879 = vmatpush.bf16.msra.mxu0 %v6576
    %8880 = vmatmul.bf16.gmra.mxu0 %v2010
    %v8881 = vpop.f32.mrf.mxu0
    %v8882 = vadd.f32 %v8869, %v8881
    %v8883 = vpop.f32.mrf.mxu0
    %8884 = vdwg.mxu0
    %8885 = vmatpush.bf16.msra.mxu0 %v6591
    %8886 = vmatpush.bf16.msra.mxu0 %v6590
    %8887 = vmatpush.bf16.msra.mxu0 %v6589
    %8888 = vmatpush.bf16.msra.mxu0 %v6588
    %8889 = vmatpush.bf16.msra.mxu0 %v6587
    %8890 = vmatpush.bf16.msra.mxu0 %v6586
    %8891 = vmatpush.bf16.msra.mxu0 %v6585
    %8892 = vmatpush.bf16.msra.mxu0 %v6584
    %8893 = vmatmul.bf16.gmra.mxu0 %v2011
    %v8894 = vpop.f32.mrf.mxu0
    %v8895 = vadd.f32 %v8882, %v8894
    %v8896 = vpop.f32.mrf.mxu0
    %8897 = vdwg.mxu0
    %8898 = vmatpush.bf16.msra.mxu0 %v6599
    %8899 = vmatpush.bf16.msra.mxu0 %v6598
    %8900 = vmatpush.bf16.msra.mxu0 %v6597
    %8901 = vmatpush.bf16.msra.mxu0 %v6596
    %8902 = vmatpush.bf16.msra.mxu0 %v6595
    %8903 = vmatpush.bf16.msra.mxu0 %v6594
    %8904 = vmatpush.bf16.msra.mxu0 %v6593
    %8905 = vmatpush.bf16.msra.mxu0 %v6592
    %8906 = vmatmul.bf16.gmra.mxu0 %v2012
    %v8907 = vpop.f32.mrf.mxu0
    %v8908 = vadd.f32 %v8895, %v8907
    %v8909 = vpop.f32.mrf.mxu0
    %8910 = vdwg.mxu0
    %8911 = vmatpush.bf16.msra.mxu0 %v6607
    %8912 = vmatpush.bf16.msra.mxu0 %v6606
    %8913 = vmatpush.bf16.msra.mxu0 %v6605
    %8914 = vmatpush.bf16.msra.mxu0 %v6604
    %8915 = vmatpush.bf16.msra.mxu0 %v6603
    %8916 = vmatpush.bf16.msra.mxu0 %v6602
    %8917 = vmatpush.bf16.msra.mxu0 %v6601
    %8918 = vmatpush.bf16.msra.mxu0 %v6600
    %8919 = vmatmul.bf16.gmra.mxu0 %v2013
    %v8920 = vpop.f32.mrf.mxu0
    %v8921 = vadd.f32 %v8908, %v8920
    %v8922 = vpop.f32.mrf.mxu0
    %8923 = vdwg.mxu0
    %8924 = vmatpush.bf16.msra.mxu0 %v6615
    %8925 = vmatpush.bf16.msra.mxu0 %v6614
    %8926 = vmatpush.bf16.msra.mxu0 %v6613
    %8927 = vmatpush.bf16.msra.mxu0 %v6612
    %8928 = vmatpush.bf16.msra.mxu0 %v6611
    %8929 = vmatpush.bf16.msra.mxu0 %v6610
    %8930 = vmatpush.bf16.msra.mxu0 %v6609
    %8931 = vmatpush.bf16.msra.mxu0 %v6608
    %8932 = vmatmul.bf16.gmra.mxu0 %v2014
    %v8933 = vpop.f32.mrf.mxu0
    %v8934 = vadd.f32 %v8921, %v8933
    %v8935 = vpop.f32.mrf.mxu0
    %8936 = vdwg.mxu0
    %8937 = vmatpush.bf16.msra.mxu0 %v6623
    %8938 = vmatpush.bf16.msra.mxu0 %v6622
    %8939 = vmatpush.bf16.msra.mxu0 %v6621
    %8940 = vmatpush.bf16.msra.mxu0 %v6620
    %8941 = vmatpush.bf16.msra.mxu0 %v6619
    %8942 = vmatpush.bf16.msra.mxu0 %v6618
    %8943 = vmatpush.bf16.msra.mxu0 %v6617
    %8944 = vmatpush.bf16.msra.mxu0 %v6616
    %8945 = vmatmul.bf16.gmra.mxu0 %v2015
    %v8946 = vpop.f32.mrf.mxu0
    %v8947 = vadd.f32 %v8934, %v8946
    %v8948 = vpop.f32.mrf.mxu0
    %8949 = vdwg.mxu0
    %8950 = vmatpush.bf16.msra.mxu0 %v6631
    %8951 = vmatpush.bf16.msra.mxu0 %v6630
    %8952 = vmatpush.bf16.msra.mxu0 %v6629
    %8953 = vmatpush.bf16.msra.mxu0 %v6628
    %8954 = vmatpush.bf16.msra.mxu0 %v6627
    %8955 = vmatpush.bf16.msra.mxu0 %v6626
    %8956 = vmatpush.bf16.msra.mxu0 %v6625
    %8957 = vmatpush.bf16.msra.mxu0 %v6624
    %8958 = vmatmul.bf16.gmra.mxu0 %v2016
    %v8959 = vpop.f32.mrf.mxu0
    %v8960 = vadd.f32 %v8947, %v8959
    %v8961 = vpop.f32.mrf.mxu0
    %8962 = vdwg.mxu0
    %8963 = vmatpush.bf16.msra.mxu0 %v6639
    %8964 = vmatpush.bf16.msra.mxu0 %v6638
    %8965 = vmatpush.bf16.msra.mxu0 %v6637
    %8966 = vmatpush.bf16.msra.mxu0 %v6636
    %8967 = vmatpush.bf16.msra.mxu0 %v6635
    %8968 = vmatpush.bf16.msra.mxu0 %v6634
    %8969 = vmatpush.bf16.msra.mxu0 %v6633
    %8970 = vmatpush.bf16.msra.mxu0 %v6632
    %8971 = vmatmul.bf16.gmra.mxu0 %v2017
    %v8972 = vpop.f32.mrf.mxu0
    %v8973 = vadd.f32 %v8960, %v8972
    %v8974 = vpop.f32.mrf.mxu0
    %8975 = vdwg.mxu0
    %8976 = vmatpush.bf16.msra.mxu0 %v6647
    %8977 = vmatpush.bf16.msra.mxu0 %v6646
    %8978 = vmatpush.bf16.msra.mxu0 %v6645
    %8979 = vmatpush.bf16.msra.mxu0 %v6644
    %8980 = vmatpush.bf16.msra.mxu0 %v6643
    %8981 = vmatpush.bf16.msra.mxu0 %v6642
    %8982 = vmatpush.bf16.msra.mxu0 %v6641
    %8983 = vmatpush.bf16.msra.mxu0 %v6640
    %8984 = vmatmul.bf16.gmra.mxu0 %v2020
    %v8985 = vpop.f32.mrf.mxu0
    %v8986 = vadd.f32 %v8973, %v8985
    %v8987 = vpop.f32.mrf.mxu0
    %8988 = vdwg.mxu0
    %8989 = vmatpush.bf16.msra.mxu0 %v6655
    %8990 = vmatpush.bf16.msra.mxu0 %v6654
    %8991 = vmatpush.bf16.msra.mxu0 %v6653
    %8992 = vmatpush.bf16.msra.mxu0 %v6652
    %8993 = vmatpush.bf16.msra.mxu0 %v6651
    %8994 = vmatpush.bf16.msra.mxu0 %v6650
    %8995 = vmatpush.bf16.msra.mxu0 %v6649
    %8996 = vmatpush.bf16.msra.mxu0 %v6648
    %8997 = vmatmul.bf16.gmra.mxu0 %v2021
    %v8998 = vpop.f32.mrf.mxu0
    %v8999 = vadd.f32 %v8986, %v8998
    %v9000 = vpop.f32.mrf.mxu0
    %9001 = vdwg.mxu0
    %9002 = vmatpush.bf16.msra.mxu0 %v6663
    %9003 = vmatpush.bf16.msra.mxu0 %v6662
    %9004 = vmatpush.bf16.msra.mxu0 %v6661
    %9005 = vmatpush.bf16.msra.mxu0 %v6660
    %9006 = vmatpush.bf16.msra.mxu0 %v6659
    %9007 = vmatpush.bf16.msra.mxu0 %v6658
    %9008 = vmatpush.bf16.msra.mxu0 %v6657
    %9009 = vmatpush.bf16.msra.mxu0 %v6656
    %9010 = vmatmul.bf16.gmra.mxu0 %v2022
    %v9011 = vpop.f32.mrf.mxu0
    %v9012 = vadd.f32 %v8999, %v9011
    %v9013 = vpop.f32.mrf.mxu0
    %9014 = vdwg.mxu0
    %9015 = vmatpush.bf16.msra.mxu0 %v6671
    %9016 = vmatpush.bf16.msra.mxu0 %v6670
    %9017 = vmatpush.bf16.msra.mxu0 %v6669
    %9018 = vmatpush.bf16.msra.mxu0 %v6668
    %9019 = vmatpush.bf16.msra.mxu0 %v6667
    %9020 = vmatpush.bf16.msra.mxu0 %v6666
    %9021 = vmatpush.bf16.msra.mxu0 %v6665
    %9022 = vmatpush.bf16.msra.mxu0 %v6664
    %9023 = vmatmul.bf16.gmra.mxu0 %v2023
    %v9024 = vpop.f32.mrf.mxu0
    %v9025 = vadd.f32 %v9012, %v9024
    %v9026 = vpop.f32.mrf.mxu0
    %9027 = vdwg.mxu0
    %9028 = vmatpush.bf16.msra.mxu0 %v6679
    %9029 = vmatpush.bf16.msra.mxu0 %v6678
    %9030 = vmatpush.bf16.msra.mxu0 %v6677
    %9031 = vmatpush.bf16.msra.mxu0 %v6676
    %9032 = vmatpush.bf16.msra.mxu0 %v6675
    %9033 = vmatpush.bf16.msra.mxu0 %v6674
    %9034 = vmatpush.bf16.msra.mxu0 %v6673
    %9035 = vmatpush.bf16.msra.mxu0 %v6672
    %9036 = vmatmul.bf16.gmra.mxu0 %v2024
    %v9037 = vpop.f32.mrf.mxu0
    %v9038 = vadd.f32 %v9025, %v9037
    %v9039 = vpop.f32.mrf.mxu0
    %9040 = vdwg.mxu0
    %9041 = vmatpush.bf16.msra.mxu0 %v6687
    %9042 = vmatpush.bf16.msra.mxu0 %v6686
    %9043 = vmatpush.bf16.msra.mxu0 %v6685
    %9044 = vmatpush.bf16.msra.mxu0 %v6684
    %9045 = vmatpush.bf16.msra.mxu0 %v6683
    %9046 = vmatpush.bf16.msra.mxu0 %v6682
    %9047 = vmatpush.bf16.msra.mxu0 %v6681
    %9048 = vmatpush.bf16.msra.mxu0 %v6680
    %9049 = vmatmul.bf16.gmra.mxu0 %v2025
    %v9050 = vpop.f32.mrf.mxu0
    %v9051 = vadd.f32 %v9038, %v9050
    %v9052 = vpop.f32.mrf.mxu0
    %9053 = vdwg.mxu0
    %9054 = vmatpush.bf16.msra.mxu0 %v6695
    %9055 = vmatpush.bf16.msra.mxu0 %v6694
    %9056 = vmatpush.bf16.msra.mxu0 %v6693
    %9057 = vmatpush.bf16.msra.mxu0 %v6692
    %9058 = vmatpush.bf16.msra.mxu0 %v6691
    %9059 = vmatpush.bf16.msra.mxu0 %v6690
    %9060 = vmatpush.bf16.msra.mxu0 %v6689
    %9061 = vmatpush.bf16.msra.mxu0 %v6688
    %9062 = vmatmul.bf16.gmra.mxu0 %v2026
    %v9063 = vpop.f32.mrf.mxu0
    %v9064 = vadd.f32 %v9051, %v9063
    %v9065 = vpop.f32.mrf.mxu0
    %9066 = vdwg.mxu0
    %9067 = vmatpush.bf16.msra.mxu0 %v6703
    %9068 = vmatpush.bf16.msra.mxu0 %v6702
    %9069 = vmatpush.bf16.msra.mxu0 %v6701
    %9070 = vmatpush.bf16.msra.mxu0 %v6700
    %9071 = vmatpush.bf16.msra.mxu0 %v6699
    %9072 = vmatpush.bf16.msra.mxu0 %v6698
    %9073 = vmatpush.bf16.msra.mxu0 %v6697
    %9074 = vmatpush.bf16.msra.mxu0 %v6696
    %9075 = vmatmul.bf16.gmra.mxu0 %v2027
    %v9076 = vpop.f32.mrf.mxu0
    %v9077 = vadd.f32 %v9064, %v9076
    %v9078 = vpop.f32.mrf.mxu0
    %9079 = vdwg.mxu0
    %9080 = vmatpush.bf16.msra.mxu0 %v6711
    %9081 = vmatpush.bf16.msra.mxu0 %v6710
    %9082 = vmatpush.bf16.msra.mxu0 %v6709
    %9083 = vmatpush.bf16.msra.mxu0 %v6708
    %9084 = vmatpush.bf16.msra.mxu0 %v6707
    %9085 = vmatpush.bf16.msra.mxu0 %v6706
    %9086 = vmatpush.bf16.msra.mxu0 %v6705
    %9087 = vmatpush.bf16.msra.mxu0 %v6704
    %9088 = vmatmul.bf16.gmra.mxu0 %v2030
    %v9089 = vpop.f32.mrf.mxu0
    %v9090 = vadd.f32 %v9077, %v9089
    %v9091 = vpop.f32.mrf.mxu0
    %9092 = vdwg.mxu0
    %9093 = vmatpush.bf16.msra.mxu0 %v6719
    %9094 = vmatpush.bf16.msra.mxu0 %v6718
    %9095 = vmatpush.bf16.msra.mxu0 %v6717
    %9096 = vmatpush.bf16.msra.mxu0 %v6716
    %9097 = vmatpush.bf16.msra.mxu0 %v6715
    %9098 = vmatpush.bf16.msra.mxu0 %v6714
    %9099 = vmatpush.bf16.msra.mxu0 %v6713
    %9100 = vmatpush.bf16.msra.mxu0 %v6712
    %9101 = vmatmul.bf16.gmra.mxu0 %v2031
    %v9102 = vpop.f32.mrf.mxu0
    %v9103 = vadd.f32 %v9090, %v9102
    %v9104 = vpop.f32.mrf.mxu0
    %9105 = vdwg.mxu0
    %9106 = vmatpush.bf16.msra.mxu0 %v6727
    %9107 = vmatpush.bf16.msra.mxu0 %v6726
    %9108 = vmatpush.bf16.msra.mxu0 %v6725
    %9109 = vmatpush.bf16.msra.mxu0 %v6724
    %9110 = vmatpush.bf16.msra.mxu0 %v6723
    %9111 = vmatpush.bf16.msra.mxu0 %v6722
    %9112 = vmatpush.bf16.msra.mxu0 %v6721
    %9113 = vmatpush.bf16.msra.mxu0 %v6720
    %9114 = vmatmul.bf16.gmra.mxu0 %v2032
    %v9115 = vpop.f32.mrf.mxu0
    %v9116 = vadd.f32 %v9103, %v9115
    %v9117 = vpop.f32.mrf.mxu0
    %9118 = vdwg.mxu0
    %9119 = vmatpush.bf16.msra.mxu0 %v6735
    %9120 = vmatpush.bf16.msra.mxu0 %v6734
    %9121 = vmatpush.bf16.msra.mxu0 %v6733
    %9122 = vmatpush.bf16.msra.mxu0 %v6732
    %9123 = vmatpush.bf16.msra.mxu0 %v6731
    %9124 = vmatpush.bf16.msra.mxu0 %v6730
    %9125 = vmatpush.bf16.msra.mxu0 %v6729
    %9126 = vmatpush.bf16.msra.mxu0 %v6728
    %9127 = vmatmul.bf16.gmra.mxu0 %v2033
    %v9128 = vpop.f32.mrf.mxu0
    %v9129 = vadd.f32 %v9116, %v9128
    %v9130 = vpop.f32.mrf.mxu0
    %9131 = vdwg.mxu0
    %9132 = vmatpush.bf16.msra.mxu0 %v6743
    %9133 = vmatpush.bf16.msra.mxu0 %v6742
    %9134 = vmatpush.bf16.msra.mxu0 %v6741
    %9135 = vmatpush.bf16.msra.mxu0 %v6740
    %9136 = vmatpush.bf16.msra.mxu0 %v6739
    %9137 = vmatpush.bf16.msra.mxu0 %v6738
    %9138 = vmatpush.bf16.msra.mxu0 %v6737
    %9139 = vmatpush.bf16.msra.mxu0 %v6736
    %9140 = vmatmul.bf16.gmra.mxu0 %v2034
    %v9141 = vpop.f32.mrf.mxu0
    %v9142 = vadd.f32 %v9129, %v9141
    %v9143 = vpop.f32.mrf.mxu0
    %9144 = vdwg.mxu0
    %9145 = vmatpush.bf16.msra.mxu0 %v6751
    %9146 = vmatpush.bf16.msra.mxu0 %v6750
    %9147 = vmatpush.bf16.msra.mxu0 %v6749
    %9148 = vmatpush.bf16.msra.mxu0 %v6748
    %9149 = vmatpush.bf16.msra.mxu0 %v6747
    %9150 = vmatpush.bf16.msra.mxu0 %v6746
    %9151 = vmatpush.bf16.msra.mxu0 %v6745
    %9152 = vmatpush.bf16.msra.mxu0 %v6744
    %9153 = vmatmul.bf16.gmra.mxu0 %v2035
    %v9154 = vpop.f32.mrf.mxu0
    %v9155 = vadd.f32 %v9142, %v9154
    %v9156 = vpop.f32.mrf.mxu0
    %9157 = vdwg.mxu0
    %9158 = vmatpush.bf16.msra.mxu0 %v6759
    %9159 = vmatpush.bf16.msra.mxu0 %v6758
    %9160 = vmatpush.bf16.msra.mxu0 %v6757
    %9161 = vmatpush.bf16.msra.mxu0 %v6756
    %9162 = vmatpush.bf16.msra.mxu0 %v6755
    %9163 = vmatpush.bf16.msra.mxu0 %v6754
    %9164 = vmatpush.bf16.msra.mxu0 %v6753
    %9165 = vmatpush.bf16.msra.mxu0 %v6752
    %9166 = vmatmul.bf16.gmra.mxu0 %v2036
    %v9167 = vpop.f32.mrf.mxu0
    %v9168 = vadd.f32 %v9155, %v9167
    %v9169 = vpop.f32.mrf.mxu0
    %9170 = vdwg.mxu0
    %9171 = vmatpush.bf16.msra.mxu0 %v6767
    %9172 = vmatpush.bf16.msra.mxu0 %v6766
    %9173 = vmatpush.bf16.msra.mxu0 %v6765
    %9174 = vmatpush.bf16.msra.mxu0 %v6764
    %9175 = vmatpush.bf16.msra.mxu0 %v6763
    %9176 = vmatpush.bf16.msra.mxu0 %v6762
    %9177 = vmatpush.bf16.msra.mxu0 %v6761
    %9178 = vmatpush.bf16.msra.mxu0 %v6760
    %9179 = vmatmul.bf16.gmra.mxu0 %v2037
    %v9180 = vpop.f32.mrf.mxu0
    %v9181 = vadd.f32 %v9168, %v9180
    %v9182 = vpop.f32.mrf.mxu0
    %9183 = vdwg.mxu0
    %9184 = vmatpush.bf16.msra.mxu0 %v6775
    %9185 = vmatpush.bf16.msra.mxu0 %v6774
    %9186 = vmatpush.bf16.msra.mxu0 %v6773
    %9187 = vmatpush.bf16.msra.mxu0 %v6772
    %9188 = vmatpush.bf16.msra.mxu0 %v6771
    %9189 = vmatpush.bf16.msra.mxu0 %v6770
    %9190 = vmatpush.bf16.msra.mxu0 %v6769
    %9191 = vmatpush.bf16.msra.mxu0 %v6768
    %9192 = vmatmul.bf16.gmra.mxu0 %v2040
    %v9193 = vpop.f32.mrf.mxu0
    %v9194 = vadd.f32 %v9181, %v9193
    %v9195 = vpop.f32.mrf.mxu0
    %9196 = vdwg.mxu0
    %9197 = vmatpush.bf16.msra.mxu0 %v6783
    %9198 = vmatpush.bf16.msra.mxu0 %v6782
    %9199 = vmatpush.bf16.msra.mxu0 %v6781
    %9200 = vmatpush.bf16.msra.mxu0 %v6780
    %9201 = vmatpush.bf16.msra.mxu0 %v6779
    %9202 = vmatpush.bf16.msra.mxu0 %v6778
    %9203 = vmatpush.bf16.msra.mxu0 %v6777
    %9204 = vmatpush.bf16.msra.mxu0 %v6776
    %9205 = vmatmul.bf16.gmra.mxu0 %v2041
    %v9206 = vpop.f32.mrf.mxu0
    %v9207 = vadd.f32 %v9194, %v9206
    %v9208 = vpop.f32.mrf.mxu0
    %9209 = vdwg.mxu0
    %9210 = vmatpush.bf16.msra.mxu0 %v6791
    %9211 = vmatpush.bf16.msra.mxu0 %v6790
    %9212 = vmatpush.bf16.msra.mxu0 %v6789
    %9213 = vmatpush.bf16.msra.mxu0 %v6788
    %9214 = vmatpush.bf16.msra.mxu0 %v6787
    %9215 = vmatpush.bf16.msra.mxu0 %v6786
    %9216 = vmatpush.bf16.msra.mxu0 %v6785
    %9217 = vmatpush.bf16.msra.mxu0 %v6784
    %9218 = vmatmul.bf16.gmra.mxu0 %v2042
    %v9219 = vpop.f32.mrf.mxu0
    %v9220 = vadd.f32 %v9207, %v9219
    %v9221 = vpop.f32.mrf.mxu0
    %9222 = vdwg.mxu0
    %9223 = vmatpush.bf16.msra.mxu0 %v6799
    %9224 = vmatpush.bf16.msra.mxu0 %v6798
    %9225 = vmatpush.bf16.msra.mxu0 %v6797
    %9226 = vmatpush.bf16.msra.mxu0 %v6796
    %9227 = vmatpush.bf16.msra.mxu0 %v6795
    %9228 = vmatpush.bf16.msra.mxu0 %v6794
    %9229 = vmatpush.bf16.msra.mxu0 %v6793
    %9230 = vmatpush.bf16.msra.mxu0 %v6792
    %9231 = vmatmul.bf16.gmra.mxu0 %v2043
    %v9232 = vpop.f32.mrf.mxu0
    %v9233 = vadd.f32 %v9220, %v9232
    %v9234 = vpop.f32.mrf.mxu0
    %9235 = vdwg.mxu0
    %v9236 = vadd.f32 %v26, %v9233
    %9237 = vst [vmem:[#allocation2] sm:$0x3] %v9236
    // Predicated region
    $region26: #{soft_pi_forward.3} parent=1 // pred_check
      %p9238 = pneg %p21
    $region27: #{soft_pi_forward.3} parent=1 // pred_check_branch
      %9240 = sbr.rel (%p9238) target = $region29
    $region28: #{soft_pi_forward.3} parent=1 // pred_region
      %v9241 = vld [vmem:[#allocation2] sm:$0x3]
      %v9242 = vld [vmem:[%s2] sm:$0x1]
      %v9244 = vperm.slane %v9242, 0
      %v9246 = vadd.f32 %v9241, %v9244
      %v9247 = vmax.f32 %v9246, 0.0
      %v9248 = vpack.c.bf16 %v9247, %v9247
      %v9249 = vld [vmem:[%s3] sm:$0xf]
      %v9250 = vld [vmem:[%s3 + $0x4] sm:$0xf]
      %v9251 = vld [vmem:[%s3 + $0x8] sm:$0xf]
      %v9252 = vld [vmem:[%s3 + $0xc] sm:$0xf]
      %v9253 = vld [vmem:[%s3 + $0x10] sm:$0xf]
      %v9254 = vld [vmem:[%s3 + $0x14] sm:$0xf]
      %v9255 = vld [vmem:[%s3 + $0x18] sm:$0xf]
      %v9256 = vld [vmem:[%s3 + $0x1c] sm:$0xf]
      %v9257 = vld [vmem:[%s3 + $0x20] sm:$0xf]
      %v9258 = vld [vmem:[%s3 + $0x24] sm:$0xf]
      %v9259 = vld [vmem:[%s3 + $0x28] sm:$0xf]
      %v9260 = vld [vmem:[%s3 + $0x2c] sm:$0xf]
      %v9261 = vld [vmem:[%s3 + $0x30] sm:$0xf]
      %v9262 = vld [vmem:[%s3 + $0x34] sm:$0xf]
      %v9263 = vld [vmem:[%s3 + $0x38] sm:$0xf]
      %v9264 = vld [vmem:[%s3 + $0x3c] sm:$0xf]
      %v9265 = vld [vmem:[%s4] sm:$0x1]
      %v9267 = vperm.slane %v9265, 0
      %v9285 = vunpack.c.l.b16 %v9249
      %v9286 = vunpack.c.l.b16 %v9250
      %v9287 = vunpack.c.l.b16 %v9251
      %v9288 = vunpack.c.l.b16 %v9252
      %v9289 = vunpack.c.l.b16 %v9253
      %v9290 = vunpack.c.l.b16 %v9254
      %v9291 = vunpack.c.l.b16 %v9255
      %v9292 = vunpack.c.l.b16 %v9256
      %v9293 = vunpack.c.l.b16 %v9257
      %v9294 = vunpack.c.l.b16 %v9258
      %v9295 = vunpack.c.l.b16 %v9259
      %v9296 = vunpack.c.l.b16 %v9260
      %v9297 = vunpack.c.l.b16 %v9261
      %v9298 = vunpack.c.l.b16 %v9262
      %v9299 = vunpack.c.l.b16 %v9263
      %v9300 = vunpack.c.l.b16 %v9264
      %v9301 = vpack.c.b16 %v9286, %v9285
      %v9302 = vpack.c.b16 %v9288, %v9287
      %v9303 = vpack.c.b16 %v9290, %v9289
      %v9304 = vpack.c.b16 %v9292, %v9291
      %v9305 = vpack.c.b16 %v9294, %v9293
      %v9306 = vpack.c.b16 %v9296, %v9295
      %v9307 = vpack.c.b16 %v9298, %v9297
      %v9308 = vpack.c.b16 %v9300, %v9299
      %9317 = vmatpush.bf16.msra.mxu0 %v9308
      %9318 = vmatpush.bf16.msra.mxu0 %v9307
      %9319 = vmatpush.bf16.msra.mxu0 %v9306
      %9320 = vmatpush.bf16.msra.mxu0 %v9305
      %9321 = vmatpush.bf16.msra.mxu0 %v9304
      %9322 = vmatpush.bf16.msra.mxu0 %v9303
      %9323 = vmatpush.bf16.msra.mxu0 %v9302
      %9324 = vmatpush.bf16.msra.mxu0 %v9301
      %9325 = vmatmul.bf16.gmra.mxu0 %v9248
      %v9326 = vpop.f32.mrf.mxu0
      %v9327 = vadd.f32 %v9267, %v9326
      %v9328 = vpop.f32.mrf.mxu0
      %9329 = vdwg.mxu0
      %v9330 = vmax.f32 %v9327, -10.0
      %v9331 = vmin.f32 %v9330, 10.0
      %vm9332 = vcmask 58368
      %v9333 = vsel %vm9332, %v9331, -inf
      %9334 = vmax.xlane.f32.xlu0 %v9333
      %v9335 = vpop.xlane.xlu0 %9334
      %v9336 = vsub.f32 %v9331, %v9335
      %v9337 = vmul.f32 %v9336, 1.442695
      %v9338 = vpow.pop %v9337
      %v9339 = vsel %vm9332, %v9338, 0.0
      %9340 = vadd.xlane.f32.xlu0 %v9339
      %v9341 = vpop.xlane.xlu0 %9340
      %v9342 = vrcp.pop %v9341
      %v9343 = vmul.f32 %v9341, %v9342
      %v9344 = vsub.f32 1.0, %v9343
      %v9345 = vmul.f32 %v9342, %v9344
      %v9346 = vadd.f32 %v9342, %v9345
      %vm9347 = vweird.f32 %v9341
      %vm9348 = vweird.f32 %v9342
      %vm9349 = vmor %vm9347, %vm9348
      %v9350 = vsel %vm9349, %v9342, %v9346
      %v9351 = vand.u32 2147483647, %v9341
      %vm9352 = vcmp.eq.f32.partialorder %v9351, 8.507059e+37
      %v9353 = vand.u32 %v9341, 2147483648
      %v9354 = vor.u32 1.1754944e-38, %v9353
      %v9355 = vsel %vm9352, %v9354, %v9350
      %v9356 = vmul.f32 %v9338, %v9355
      %9357 = vst.msk [vmem:[#allocation3] sm:$0x3] %vm9332, %v9356
    $region29: #{soft_pi_forward.3} parent=1 // pred_fallthru
      _
    // Predicated region
    $region30: #{soft_pi_forward.3} parent=1 // pred_check
      _
    $region31: #{soft_pi_forward.3} parent=1 // pred_check_branch
      %9359 = sbr.rel (0) target = $region33
    $region32: #{soft_pi_forward.3} parent=1 // pred_region
      %9361 = vsyncadd [#allocation4], 0
      %s9363 = sshll.u32 [#allocation3], 4
      %s9364 = int_to_ptr.vmem [resolvable:$true] %s9363
      %s9365 = sshll.u32 %s5, 4
      %s9366 = int_to_ptr.hbm [resolvable:$true] %s9365
      %9368 = dma.vmem_to_hbm [thread:$0]  %s9364, 32, %s9366, [#allocation4]
    $region33: #{soft_pi_forward.3} parent=1 // pred_fallthru
      _
    // Predicated region
    $region34: #{soft_pi_forward.3} parent=1 // pred_check
      _
    $region35: #{soft_pi_forward.3} parent=1 // pred_check_branch
      %9370 = sbr.rel (0) target = $region37
    $region36: #{soft_pi_forward.3} parent=1 // pred_region
      %9372 = dma.done [#allocation4], 32
    $region37: #{soft_pi_forward.3} parent=1 // pred_fallthru
      _
    %9373 = vsyncpa [#allocation4], 1

</llo_original>
